<compile_context>
chip_gen: v7x
topology: tpu7x:2x2x1
jax: 0.10.0
libtpu: 0.0.40
codegen_flags: <defaults>
</compile_context>

<pallas_src>
import functools
import math

import jax
import jax.numpy as jnp
from jax import lax
from jax.experimental import pallas as pl
from jax.experimental.pallas import tpu as pltpu

BN_EPS = 1e-5
CPAD = 128      # lane-dense padded channel width (12/24/48 -> 128)
CIN_PAD = 16    # padded input channels (3 -> 16)
ONE_CH = 48     # constant-1 channel that carries the head bias


def _round_up(x, m):
    return ((x + m - 1) // m) * m


# ---------------------------------------------------------------------------
# In-kernel helpers
# ---------------------------------------------------------------------------
def _conv3x3(in_ref, w_ref, m_out, width):
    """3x3 valid conv on a row-major (rows, C) map ref with stored width
    `width`: 9 contiguous-slice MXU dots accumulated in f32.  Outputs are
    row-major at the same stored width; trailing columns are garbage by
    construction and never feed a valid result downstream."""
    acc = jnp.zeros((m_out, CPAD), jnp.float32)
    for kh in range(3):
        for kw in range(3):
            xs = in_ref[pl.ds(kh * width + kw, m_out), :]      # contiguous slice
            acc = acc + jnp.dot(xs.astype(jnp.bfloat16), w_ref[kh * 3 + kw],
                                preferred_element_type=jnp.float32)
    return acc


def _bn_prelu(y, pp_ref, base):
    """y*scale + shift (conv bias already folded into shift), then PReLU."""
    s = pp_ref[base:base + 1, :]       # (1, 128)
    t = pp_ref[base + 1:base + 2, :]
    a = pp_ref[base + 2:base + 3, :]
    y = y * s + t
    return jnp.where(y >= 0.0, y, a * y)


# ---------------------------------------------------------------------------
# Fused PNet kernel: one batch image per grid step, everything in VMEM
# ---------------------------------------------------------------------------
def _pnet_kernel(x_ref, w1_ref, w2_ref, w3_ref, wht_ref, pp_ref,
                 o_ref, mp_ref, m2_ref, *, h, ws, m3pad):
    ph = (h - 2) // 2          # pooled rows (floor, MaxPool2d default)
    wp = ws // 2               # stored pooled width (multiple of 8)
    m1 = 2 * ph * ws           # conv1 rows actually consumed by the pool
    mp = ph * wp               # pooled map rows
    m2 = (ph - 2) * wp         # conv2 output rows
    a2 = mp_ref.shape[0]
    a3 = m2_ref.shape[0]

    # zero the scratch tails that are read only by garbage output positions
    mp_ref[pl.ds(mp, a2 - mp), :] = jnp.zeros((a2 - mp, CPAD), jnp.float32)
    m2_ref[pl.ds(m2, a3 - m2), :] = jnp.zeros((a3 - m2, CPAD), jnp.float32)

    # conv1 + BN + PReLU (input normalization folded into w1 / shift)
    y = _bn_prelu(_conv3x3(x_ref, w1_ref, m1, ws), pp_ref, 0)     # (m1,128) f32

    # MaxPool2d(kernel=2, stride=2); reshapes are layout-preserving (ws%16==0)
    yr = y.reshape(ph, 2 * ws, CPAD)
    v = jnp.maximum(yr[:, :ws, :], yr[:, ws:, :])                 # vertical max
    vv = v.reshape(mp, 2, CPAD)
    mp_ref[pl.ds(0, mp), :] = jnp.maximum(vv[:, 0, :], vv[:, 1, :])

    # conv2 + BN + PReLU
    m2_ref[pl.ds(0, m2), :] = _bn_prelu(_conv3x3(mp_ref, w2_ref, m2, wp),
                                        pp_ref, 3)

    # conv3 + BN + PReLU (computed straight out to m3pad rows; extras garbage,
    # and channel ONE_CH is forced to 1.0 to carry the head bias)
    y3 = _bn_prelu(_conv3x3(m2_ref, w3_ref, m3pad, wp), pp_ref, 6)

    # fused 1x1 heads, channels-in-sublanes: (8, m3pad) = wht @ y3^T
    hlog = lax.dot_general(wht_ref[...], y3.astype(jnp.bfloat16),
                           dimension_numbers=(((1,), (1,)), ((), ())),
                           preferred_element_type=jnp.float32)    # (8, m3pad)
    row = lax.broadcasted_iota(jnp.int32, hlog.shape, 0)
    sig = 1.0 / (1.0 + jnp.exp(-hlog))
    o_ref[...] = jnp.where(row == 0, sig, hlog)   # row 0 = sigmoid label


# ---------------------------------------------------------------------------
# Parameter init / packing (matches PyTorch weights_init + BN eval folding)
# ---------------------------------------------------------------------------
def init_params(key):
    ks = jax.random.split(key, 5)

    def xavier(k, cout, cin, kh, kw):
        fan_in, fan_out = cin * kh * kw, cout * kh * kw
        bound = math.sqrt(6.0 / (fan_in + fan_out))
        return jax.random.uniform(k, (cout, cin, kh, kw), jnp.float32, -bound, bound)

    w1 = xavier(ks[0], 12, 3, 3, 3)
    w2 = xavier(ks[1], 24, 12, 3, 3)
    w3 = xavier(ks[2], 48, 24, 3, 3)
    w41 = xavier(ks[3], 1, 48, 1, 1)
    w42 = xavier(ks[4], 4, 48, 1, 1)
    b1 = jnp.full((12,), 0.01, jnp.float32)
    b2 = jnp.full((24,), 0.01, jnp.float32)
    b3 = jnp.full((48,), 0.01, jnp.float32)
    b41 = jnp.full((1,), 0.01, jnp.float32)
    b42 = jnp.full((4,), 0.01, jnp.float32)

    # fold input normalization (x - 127.5)/128 into conv1
    w1f = w1 / 128.0
    b1f = b1 - (127.5 / 128.0) * jnp.sum(w1, axis=(1, 2, 3))

    # eval-mode BatchNorm (gamma=1, beta=0, mean=0, var=1) folded with bias
    def bn_fold(bias):
        scale = jnp.full(bias.shape, 1.0 / math.sqrt(1.0 + BN_EPS), jnp.float32)
        return scale, scale * bias

    s1, t1 = bn_fold(b1f)
    s2, t2 = bn_fold(b2)
    s3, t3 = bn_fold(b3)

    def pack_w(wt, cin_pad):
        # torch (cout, cin, 3, 3) -> (9, cin_pad, 128) bf16, (kh,kw) row-major
        cout, cin = wt.shape[0], wt.shape[1]
        m = jnp.transpose(wt, (2, 3, 1, 0)).reshape(9, cin, cout)
        m = jnp.pad(m, ((0, 0), (0, cin_pad - cin), (0, CPAD - cout)))
        return m.astype(jnp.bfloat16)

    def row(v):
        return jnp.pad(v, (0, CPAD - v.shape[0]))

    # conv3 BN shift gets a constant-1 channel carrying the head bias
    t3_row = row(t3).at[ONE_CH].set(1.0)

    # transposed fused heads (8, 128): row 0 = conv4_1, rows 1..4 = conv4_2;
    # column ONE_CH = bias (multiplied by the constant-1 channel of y3)
    wht = jnp.zeros((8, CPAD), jnp.float32)
    wht = wht.at[0, :48].set(w41[0, :, 0, 0])
    wht = wht.at[1:5, :48].set(w42[:, :, 0, 0])
    wht = wht.at[0, ONE_CH].set(b41[0])
    wht = wht.at[1:5, ONE_CH].set(b42)

    # per-channel parameter table: rows 0..2 = (s,t,a) layer1, 3..5 layer2,
    # 6..8 layer3, rest zero padding
    pp = jnp.stack([row(s1), row(t1), row(jnp.full((12,), 0.25, jnp.float32)),
                    row(s2), row(t2), row(jnp.full((24,), 0.25, jnp.float32)),
                    row(s3), t3_row, row(jnp.full((48,), 0.25, jnp.float32))]
                   + [jnp.zeros((CPAD,), jnp.float32)] * 7)

    return {"w1": pack_w(w1f, CIN_PAD), "w2": pack_w(w2, CPAD),
            "w3": pack_w(w3, CPAD), "wht": wht.astype(jnp.bfloat16),
            "pp": pp.astype(jnp.float32)}


# ---------------------------------------------------------------------------
# Forward pass (matches PyTorch PNet.forward)
# ---------------------------------------------------------------------------
def pnet_forward(params, x_nchw):
    n, c, h, w = x_nchw.shape
    ws = _round_up(w, 16)                 # stored width (even, multiple of 16)
    ph, pw = (h - 2) // 2, (w - 2) // 2
    wp = ws // 2
    oh3, ow3 = ph - 4, pw - 4
    m1 = 2 * ph * ws
    m2 = (ph - 2) * wp
    m3 = oh3 * wp
    m3pad = _round_up(m3, 128)
    flatp = (h + 1) * ws                  # >= h*ws + 2 rows for the last tap
    a2 = ph * wp + 8                      # pooled-map scratch rows
    a3 = m3pad + 2 * wp + 8               # conv2-map scratch rows

    # NCHW -> row-major (rows, channels) with padded width / channels
    x = jnp.transpose(x_nchw, (0, 2, 3, 1)).astype(jnp.float32)
    x = jnp.pad(x, ((0, 0), (0, 1), (0, ws - w), (0, CIN_PAD - c)))
    x = x.reshape(n * flatp, CIN_PAD)

    try:
        cap = int(pltpu.get_tpu_info().vmem_capacity_bytes)
        vmem_limit = max(min(cap * 3 // 4, 100 * 1024 * 1024), 32 * 1024 * 1024)
    except Exception:  # pragma: no cover - defensive fallback
        vmem_limit = 64 * 1024 * 1024

    flops = 2 * n * (m1 * 9 * CIN_PAD * CPAD + m2 * 9 * CPAD * CPAD
                     + m3pad * 9 * CPAD * CPAD + 8 * m3pad * CPAD)
    bytes_accessed = int(n * flatp * CIN_PAD * 4 + n * 8 * m3pad * 4
                         + 2 * (params["w1"].size + params["w2"].size
                                + params["w3"].size + params["wht"].size)
                         + params["pp"].size * 4)

    out = pl.pallas_call(
        functools.partial(_pnet_kernel, h=h, ws=ws, m3pad=m3pad),
        grid=(n,),
        out_shape=jax.ShapeDtypeStruct((n * 8, m3pad), jnp.float32),
        in_specs=[
            pl.BlockSpec((flatp, CIN_PAD), lambda i: (i, 0)),        # image i
            pl.BlockSpec((9, CIN_PAD, CPAD), lambda i: (0, 0, 0)),   # w1
            pl.BlockSpec((9, CPAD, CPAD), lambda i: (0, 0, 0)),      # w2
            pl.BlockSpec((9, CPAD, CPAD), lambda i: (0, 0, 0)),      # w3
            pl.BlockSpec((8, CPAD), lambda i: (0, 0)),               # heads^T
            pl.BlockSpec((16, CPAD), lambda i: (0, 0)),              # per-chan
        ],
        out_specs=pl.BlockSpec((8, m3pad), lambda i: (i, 0)),
        scratch_shapes=[pltpu.VMEM((a2, CPAD), jnp.float32),         # pooled map
                        pltpu.VMEM((a3, CPAD), jnp.float32)],        # conv2 map
        compiler_params=pltpu.CompilerParams(
            dimension_semantics=("parallel",),
            vmem_limit_bytes=vmem_limit),
        cost_estimate=pl.CostEstimate(flops=flops,
                                      transcendentals=n * 8 * m3pad,
                                      bytes_accessed=bytes_accessed),
    )(x, params["w1"], params["w2"], params["w3"], params["wht"], params["pp"])

    res = out.reshape(n, 8, m3pad)[:, :5, :m3]
    res = res.reshape(n, 5, oh3, wp)[:, :, :, :ow3]
    label = res[:, 0:1]            # (n, 1, oh3, ow3), sigmoid already applied
    offset = res[:, 1:5]           # (n, 4, oh3, ow3)
    return label, offset


# ---------------------------------------------------------------------------
if __name__ == "__main__":
    key = jax.random.PRNGKey(0)
    k_param, k_x = jax.random.split(key)

    params = init_params(k_param)
    # image-like input in [0, 255], NCHW, small spatial size
    x = jax.random.uniform(k_x, (2, 3, 16, 16), jnp.float32, 0.0, 255.0)

    fwd = jax.jit(pnet_forward)
    label, offset = fwd(params, x)
    jax.block_until_ready((label, offset))

    assert label.shape == (2, 1, 3, 3), label.shape
    assert offset.shape == (2, 4, 3, 3), offset.shape
    assert bool(jnp.all((label >= 0.0) & (label <= 1.0)))
    assert bool(jnp.all(jnp.isfinite(offset)))
    assert bool(jnp.all(jnp.isfinite(label)))

    print("KERNEL_OK")
</pallas_src>

<mosaic_0001>
module attributes {stable_mosaic.version = 11 : i64} {
  func.func @_pnet_kernel(%arg0: i32, %arg1: memref<272x16xf32, #tpu.memory_space<vmem>>, %arg2: memref<9x16x128xbf16, #tpu.memory_space<vmem>>, %arg3: memref<9x128x128xbf16, #tpu.memory_space<vmem>>, %arg4: memref<9x128x128xbf16, #tpu.memory_space<vmem>>, %arg5: memref<8x128xbf16, #tpu.memory_space<vmem>>, %arg6: memref<16x128xf32, #tpu.memory_space<vmem>>, %arg7: memref<8x128xf32, #tpu.memory_space<vmem>>, %arg8: memref<64x128xf32, #tpu.memory_space<vmem>>, %arg9: memref<152x128xf32, #tpu.memory_space<vmem>>) attributes {dimension_semantics = [#tpu.dimension_semantics<parallel>], iteration_bounds = array<i64: 2>, scalar_prefetch = 0 : i64, scratch_operands = 2 : i64, tpu.core_type = #tpu.core_type<tc>, window_params = [{transform_indices = @transform_0, window_bounds = array<i64: 272, 16>}, {pipeline_mode = #tpu.pipeline_mode<synchronous>, transform_indices = @transform_1, window_bounds = array<i64: 9, 16, 128>}, {pipeline_mode = #tpu.pipeline_mode<synchronous>, transform_indices = @transform_2, window_bounds = array<i64: 9, 128, 128>}, {pipeline_mode = #tpu.pipeline_mode<synchronous>, transform_indices = @transform_3, window_bounds = array<i64: 9, 128, 128>}, {pipeline_mode = #tpu.pipeline_mode<synchronous>, transform_indices = @transform_4, window_bounds = array<i64: 8, 128>}, {pipeline_mode = #tpu.pipeline_mode<synchronous>, transform_indices = @transform_5, window_bounds = array<i64: 16, 128>}, {transform_indices = @transform_6, window_bounds = array<i64: 8, 128>}]} {
    %cst = arith.constant 0.000000e+00 : f32
    %0 = vector.broadcast %cst : f32 to vector<8x128xf32>
    %c56 = arith.constant 56 : index
    %c0 = arith.constant 0 : index
    %1 = vector.load %arg8[%c56, %c0] : memref<64x128xf32, #tpu.memory_space<vmem>>, vector<8x128xf32>
    tpu.vector_store %arg8[%c56, %c0], %0 {strides = array<i32>} : memref<64x128xf32, #tpu.memory_space<vmem>>, vector<8x128xf32>,
    %cst_0 = arith.constant 0.000000e+00 : f32
    %2 = vector.broadcast %cst_0 : f32 to vector<112x128xf32>
    %c40 = arith.constant 40 : index
    %c0_1 = arith.constant 0 : index
    %3 = vector.load %arg9[%c40, %c0_1] : memref<152x128xf32, #tpu.memory_space<vmem>>, vector<112x128xf32>
    tpu.vector_store %arg9[%c40, %c0_1], %2 {strides = array<i32>} : memref<152x128xf32, #tpu.memory_space<vmem>>, vector<112x128xf32>,
    %cst_2 = arith.constant 0.000000e+00 : f32
    %4 = vector.broadcast %cst_2 : f32 to vector<224x128xf32>
    %c0_3 = arith.constant 0 : index
    %c0_4 = arith.constant 0 : index
    %5 = vector.load %arg1[%c0_3, %c0_4] : memref<272x16xf32, #tpu.memory_space<vmem>>, vector<224x16xf32>
    %6 = arith.truncf %5 : vector<224x16xf32> to vector<224x16xbf16>
    %c0_5 = arith.constant 0 : index
    %c0_6 = arith.constant 0 : index
    %c0_7 = arith.constant 0 : index
    %7 = vector.load %arg2[%c0_5, %c0_6, %c0_7] : memref<9x16x128xbf16, #tpu.memory_space<vmem>>, vector<1x16x128xbf16>
    %8 = vector.shape_cast %7 : vector<1x16x128xbf16> to vector<16x128xbf16>
    %cst_8 = arith.constant dense<0.000000e+00> : vector<224x128xf32>
    %9 = tpu.matmul %6, %8, %cst_8 {dimension_numbers = #tpu.dot_dimension_numbers<[1], [0], [0], [1], [0, 0, 1, 1], [], []>} : vector<224x16xbf16>, vector<16x128xbf16>, vector<224x128xf32> -> vector<224x128xf32>
    %10 = arith.addf %4, %9 : vector<224x128xf32>
    %c1 = arith.constant 1 : index
    %c0_9 = arith.constant 0 : index
    %11 = vector.load %arg1[%c1, %c0_9] : memref<272x16xf32, #tpu.memory_space<vmem>>, vector<224x16xf32>
    %12 = arith.truncf %11 : vector<224x16xf32> to vector<224x16xbf16>
    %c1_10 = arith.constant 1 : index
    %c0_11 = arith.constant 0 : index
    %c0_12 = arith.constant 0 : index
    %13 = vector.load %arg2[%c1_10, %c0_11, %c0_12] : memref<9x16x128xbf16, #tpu.memory_space<vmem>>, vector<1x16x128xbf16>
    %14 = vector.shape_cast %13 : vector<1x16x128xbf16> to vector<16x128xbf16>
    %cst_13 = arith.constant dense<0.000000e+00> : vector<224x128xf32>
    %15 = tpu.matmul %12, %14, %cst_13 {dimension_numbers = #tpu.dot_dimension_numbers<[1], [0], [0], [1], [0, 0, 1, 1], [], []>} : vector<224x16xbf16>, vector<16x128xbf16>, vector<224x128xf32> -> vector<224x128xf32>
    %16 = arith.addf %10, %15 : vector<224x128xf32>
    %c2 = arith.constant 2 : index
    %c0_14 = arith.constant 0 : index
    %17 = vector.load %arg1[%c2, %c0_14] : memref<272x16xf32, #tpu.memory_space<vmem>>, vector<224x16xf32>
    %18 = arith.truncf %17 : vector<224x16xf32> to vector<224x16xbf16>
    %c2_15 = arith.constant 2 : index
    %c0_16 = arith.constant 0 : index
    %c0_17 = arith.constant 0 : index
    %19 = vector.load %arg2[%c2_15, %c0_16, %c0_17] : memref<9x16x128xbf16, #tpu.memory_space<vmem>>, vector<1x16x128xbf16>
    %20 = vector.shape_cast %19 : vector<1x16x128xbf16> to vector<16x128xbf16>
    %cst_18 = arith.constant dense<0.000000e+00> : vector<224x128xf32>
    %21 = tpu.matmul %18, %20, %cst_18 {dimension_numbers = #tpu.dot_dimension_numbers<[1], [0], [0], [1], [0, 0, 1, 1], [], []>} : vector<224x16xbf16>, vector<16x128xbf16>, vector<224x128xf32> -> vector<224x128xf32>
    %22 = arith.addf %16, %21 : vector<224x128xf32>
    %c16 = arith.constant 16 : index
    %c0_19 = arith.constant 0 : index
    %23 = vector.load %arg1[%c16, %c0_19] : memref<272x16xf32, #tpu.memory_space<vmem>>, vector<224x16xf32>
    %24 = arith.truncf %23 : vector<224x16xf32> to vector<224x16xbf16>
    %c3 = arith.constant 3 : index
    %c0_20 = arith.constant 0 : index
    %c0_21 = arith.constant 0 : index
    %25 = vector.load %arg2[%c3, %c0_20, %c0_21] : memref<9x16x128xbf16, #tpu.memory_space<vmem>>, vector<1x16x128xbf16>
    %26 = vector.shape_cast %25 : vector<1x16x128xbf16> to vector<16x128xbf16>
    %cst_22 = arith.constant dense<0.000000e+00> : vector<224x128xf32>
    %27 = tpu.matmul %24, %26, %cst_22 {dimension_numbers = #tpu.dot_dimension_numbers<[1], [0], [0], [1], [0, 0, 1, 1], [], []>} : vector<224x16xbf16>, vector<16x128xbf16>, vector<224x128xf32> -> vector<224x128xf32>
    %28 = arith.addf %22, %27 : vector<224x128xf32>
    %c17 = arith.constant 17 : index
    %c0_23 = arith.constant 0 : index
    %29 = vector.load %arg1[%c17, %c0_23] : memref<272x16xf32, #tpu.memory_space<vmem>>, vector<224x16xf32>
    %30 = arith.truncf %29 : vector<224x16xf32> to vector<224x16xbf16>
    %c4 = arith.constant 4 : index
    %c0_24 = arith.constant 0 : index
    %c0_25 = arith.constant 0 : index
    %31 = vector.load %arg2[%c4, %c0_24, %c0_25] : memref<9x16x128xbf16, #tpu.memory_space<vmem>>, vector<1x16x128xbf16>
    %32 = vector.shape_cast %31 : vector<1x16x128xbf16> to vector<16x128xbf16>
    %cst_26 = arith.constant dense<0.000000e+00> : vector<224x128xf32>
    %33 = tpu.matmul %30, %32, %cst_26 {dimension_numbers = #tpu.dot_dimension_numbers<[1], [0], [0], [1], [0, 0, 1, 1], [], []>} : vector<224x16xbf16>, vector<16x128xbf16>, vector<224x128xf32> -> vector<224x128xf32>
    %34 = arith.addf %28, %33 : vector<224x128xf32>
    %c18 = arith.constant 18 : index
    %c0_27 = arith.constant 0 : index
    %35 = vector.load %arg1[%c18, %c0_27] : memref<272x16xf32, #tpu.memory_space<vmem>>, vector<224x16xf32>
    %36 = arith.truncf %35 : vector<224x16xf32> to vector<224x16xbf16>
    %c5 = arith.constant 5 : index
    %c0_28 = arith.constant 0 : index
    %c0_29 = arith.constant 0 : index
    %37 = vector.load %arg2[%c5, %c0_28, %c0_29] : memref<9x16x128xbf16, #tpu.memory_space<vmem>>, vector<1x16x128xbf16>
    %38 = vector.shape_cast %37 : vector<1x16x128xbf16> to vector<16x128xbf16>
    %cst_30 = arith.constant dense<0.000000e+00> : vector<224x128xf32>
    %39 = tpu.matmul %36, %38, %cst_30 {dimension_numbers = #tpu.dot_dimension_numbers<[1], [0], [0], [1], [0, 0, 1, 1], [], []>} : vector<224x16xbf16>, vector<16x128xbf16>, vector<224x128xf32> -> vector<224x128xf32>
    %40 = arith.addf %34, %39 : vector<224x128xf32>
    %c32 = arith.constant 32 : index
    %c0_31 = arith.constant 0 : index
    %41 = vector.load %arg1[%c32, %c0_31] : memref<272x16xf32, #tpu.memory_space<vmem>>, vector<224x16xf32>
    %42 = arith.truncf %41 : vector<224x16xf32> to vector<224x16xbf16>
    %c6 = arith.constant 6 : index
    %c0_32 = arith.constant 0 : index
    %c0_33 = arith.constant 0 : index
    %43 = vector.load %arg2[%c6, %c0_32, %c0_33] : memref<9x16x128xbf16, #tpu.memory_space<vmem>>, vector<1x16x128xbf16>
    %44 = vector.shape_cast %43 : vector<1x16x128xbf16> to vector<16x128xbf16>
    %cst_34 = arith.constant dense<0.000000e+00> : vector<224x128xf32>
    %45 = tpu.matmul %42, %44, %cst_34 {dimension_numbers = #tpu.dot_dimension_numbers<[1], [0], [0], [1], [0, 0, 1, 1], [], []>} : vector<224x16xbf16>, vector<16x128xbf16>, vector<224x128xf32> -> vector<224x128xf32>
    %46 = arith.addf %40, %45 : vector<224x128xf32>
    %c33 = arith.constant 33 : index
    %c0_35 = arith.constant 0 : index
    %47 = vector.load %arg1[%c33, %c0_35] : memref<272x16xf32, #tpu.memory_space<vmem>>, vector<224x16xf32>
    %48 = arith.truncf %47 : vector<224x16xf32> to vector<224x16xbf16>
    %c7 = arith.constant 7 : index
    %c0_36 = arith.constant 0 : index
    %c0_37 = arith.constant 0 : index
    %49 = vector.load %arg2[%c7, %c0_36, %c0_37] : memref<9x16x128xbf16, #tpu.memory_space<vmem>>, vector<1x16x128xbf16>
    %50 = vector.shape_cast %49 : vector<1x16x128xbf16> to vector<16x128xbf16>
    %cst_38 = arith.constant dense<0.000000e+00> : vector<224x128xf32>
    %51 = tpu.matmul %48, %50, %cst_38 {dimension_numbers = #tpu.dot_dimension_numbers<[1], [0], [0], [1], [0, 0, 1, 1], [], []>} : vector<224x16xbf16>, vector<16x128xbf16>, vector<224x128xf32> -> vector<224x128xf32>
    %52 = arith.addf %46, %51 : vector<224x128xf32>
    %c34 = arith.constant 34 : index
    %c0_39 = arith.constant 0 : index
    %53 = vector.load %arg1[%c34, %c0_39] : memref<272x16xf32, #tpu.memory_space<vmem>>, vector<224x16xf32>
    %54 = arith.truncf %53 : vector<224x16xf32> to vector<224x16xbf16>
    %c8 = arith.constant 8 : index
    %c0_40 = arith.constant 0 : index
    %c0_41 = arith.constant 0 : index
    %55 = vector.load %arg2[%c8, %c0_40, %c0_41] : memref<9x16x128xbf16, #tpu.memory_space<vmem>>, vector<1x16x128xbf16>
    %56 = vector.shape_cast %55 : vector<1x16x128xbf16> to vector<16x128xbf16>
    %cst_42 = arith.constant dense<0.000000e+00> : vector<224x128xf32>
    %57 = tpu.matmul %54, %56, %cst_42 {dimension_numbers = #tpu.dot_dimension_numbers<[1], [0], [0], [1], [0, 0, 1, 1], [], []>} : vector<224x16xbf16>, vector<16x128xbf16>, vector<224x128xf32> -> vector<224x128xf32>
    %58 = arith.addf %52, %57 : vector<224x128xf32>
    %c0_43 = arith.constant 0 : index
    %c0_44 = arith.constant 0 : index
    %59 = vector.load %arg6[%c0_43, %c0_44] : memref<16x128xf32, #tpu.memory_space<vmem>>, vector<1x128xf32>
    %c1_45 = arith.constant 1 : index
    %c0_46 = arith.constant 0 : index
    %60 = vector.load %arg6[%c1_45, %c0_46] : memref<16x128xf32, #tpu.memory_space<vmem>>, vector<1x128xf32>
    %c2_47 = arith.constant 2 : index
    %c0_48 = arith.constant 0 : index
    %61 = vector.load %arg6[%c2_47, %c0_48] : memref<16x128xf32, #tpu.memory_space<vmem>>, vector<1x128xf32>
    %62 = vector.broadcast %59 : vector<1x128xf32> to vector<224x128xf32>
    %63 = arith.mulf %58, %62 : vector<224x128xf32>
    %64 = vector.broadcast %60 : vector<1x128xf32> to vector<224x128xf32>
    %65 = arith.addf %63, %64 : vector<224x128xf32>
    %cst_49 = arith.constant 0.000000e+00 : f32
    %66 = vector.broadcast %cst_49 : f32 to vector<224x128xf32>
    %67 = arith.cmpf oge, %65, %66 : vector<224x128xf32>
    %68 = vector.broadcast %61 : vector<1x128xf32> to vector<224x128xf32>
    %69 = arith.mulf %68, %65 : vector<224x128xf32>
    %70 = arith.select %67, %65, %69 : vector<224x128xi1>, vector<224x128xf32>
    %71 = vector.shape_cast %70 : vector<224x128xf32> to vector<7x32x128xf32>
    %72 = vector.extract_strided_slice %71 {offsets = [0, 0, 0], sizes = [7, 16, 128], strides = [1, 1, 1]} : vector<7x32x128xf32> to vector<7x16x128xf32>
    %73 = vector.extract_strided_slice %71 {offsets = [0, 16, 0], sizes = [7, 16, 128], strides = [1, 1, 1]} : vector<7x32x128xf32> to vector<7x16x128xf32>
    %74 = arith.maximumf %72, %73 : vector<7x16x128xf32>
    %75 = vector.shape_cast %74 : vector<7x16x128xf32> to vector<56x2x128xf32>
    %76 = vector.extract_strided_slice %75 {offsets = [0, 0, 0], sizes = [56, 1, 128], strides = [1, 1, 1]} : vector<56x2x128xf32> to vector<56x1x128xf32>
    %77 = vector.shape_cast %76 : vector<56x1x128xf32> to vector<56x128xf32>
    %78 = vector.extract_strided_slice %75 {offsets = [0, 1, 0], sizes = [56, 1, 128], strides = [1, 1, 1]} : vector<56x2x128xf32> to vector<56x1x128xf32>
    %79 = vector.shape_cast %78 : vector<56x1x128xf32> to vector<56x128xf32>
    %80 = arith.maximumf %77, %79 : vector<56x128xf32>
    %c0_50 = arith.constant 0 : index
    %c0_51 = arith.constant 0 : index
    %81 = vector.load %arg8[%c0_50, %c0_51] : memref<64x128xf32, #tpu.memory_space<vmem>>, vector<56x128xf32>
    tpu.vector_store %arg8[%c0_50, %c0_51], %80 {strides = array<i32>} : memref<64x128xf32, #tpu.memory_space<vmem>>, vector<56x128xf32>,
    %cst_52 = arith.constant 0.000000e+00 : f32
    %82 = vector.broadcast %cst_52 : f32 to vector<40x128xf32>
    %c0_53 = arith.constant 0 : index
    %c0_54 = arith.constant 0 : index
    %83 = vector.load %arg8[%c0_53, %c0_54] : memref<64x128xf32, #tpu.memory_space<vmem>>, vector<40x128xf32>
    %84 = arith.truncf %83 : vector<40x128xf32> to vector<40x128xbf16>
    %c0_55 = arith.constant 0 : index
    %c0_56 = arith.constant 0 : index
    %c0_57 = arith.constant 0 : index
    %85 = vector.load %arg3[%c0_55, %c0_56, %c0_57] : memref<9x128x128xbf16, #tpu.memory_space<vmem>>, vector<1x128x128xbf16>
    %86 = vector.shape_cast %85 : vector<1x128x128xbf16> to vector<128x128xbf16>
    %cst_58 = arith.constant dense<0.000000e+00> : vector<40x128xf32>
    %87 = tpu.matmul %84, %86, %cst_58 {dimension_numbers = #tpu.dot_dimension_numbers<[1], [0], [0], [1], [0, 0, 1, 1], [], []>} : vector<40x128xbf16>, vector<128x128xbf16>, vector<40x128xf32> -> vector<40x128xf32>
    %88 = arith.addf %82, %87 : vector<40x128xf32>
    %c1_59 = arith.constant 1 : index
    %c0_60 = arith.constant 0 : index
    %89 = vector.load %arg8[%c1_59, %c0_60] : memref<64x128xf32, #tpu.memory_space<vmem>>, vector<40x128xf32>
    %90 = arith.truncf %89 : vector<40x128xf32> to vector<40x128xbf16>
    %c1_61 = arith.constant 1 : index
    %c0_62 = arith.constant 0 : index
    %c0_63 = arith.constant 0 : index
    %91 = vector.load %arg3[%c1_61, %c0_62, %c0_63] : memref<9x128x128xbf16, #tpu.memory_space<vmem>>, vector<1x128x128xbf16>
    %92 = vector.shape_cast %91 : vector<1x128x128xbf16> to vector<128x128xbf16>
    %cst_64 = arith.constant dense<0.000000e+00> : vector<40x128xf32>
    %93 = tpu.matmul %90, %92, %cst_64 {dimension_numbers = #tpu.dot_dimension_numbers<[1], [0], [0], [1], [0, 0, 1, 1], [], []>} : vector<40x128xbf16>, vector<128x128xbf16>, vector<40x128xf32> -> vector<40x128xf32>
    %94 = arith.addf %88, %93 : vector<40x128xf32>
    %c2_65 = arith.constant 2 : index
    %c0_66 = arith.constant 0 : index
    %95 = vector.load %arg8[%c2_65, %c0_66] : memref<64x128xf32, #tpu.memory_space<vmem>>, vector<40x128xf32>
    %96 = arith.truncf %95 : vector<40x128xf32> to vector<40x128xbf16>
    %c2_67 = arith.constant 2 : index
    %c0_68 = arith.constant 0 : index
    %c0_69 = arith.constant 0 : index
    %97 = vector.load %arg3[%c2_67, %c0_68, %c0_69] : memref<9x128x128xbf16, #tpu.memory_space<vmem>>, vector<1x128x128xbf16>
    %98 = vector.shape_cast %97 : vector<1x128x128xbf16> to vector<128x128xbf16>
    %cst_70 = arith.constant dense<0.000000e+00> : vector<40x128xf32>
    %99 = tpu.matmul %96, %98, %cst_70 {dimension_numbers = #tpu.dot_dimension_numbers<[1], [0], [0], [1], [0, 0, 1, 1], [], []>} : vector<40x128xbf16>, vector<128x128xbf16>, vector<40x128xf32> -> vector<40x128xf32>
    %100 = arith.addf %94, %99 : vector<40x128xf32>
    %c8_71 = arith.constant 8 : index
    %c0_72 = arith.constant 0 : index
    %101 = vector.load %arg8[%c8_71, %c0_72] : memref<64x128xf32, #tpu.memory_space<vmem>>, vector<40x128xf32>
    %102 = arith.truncf %101 : vector<40x128xf32> to vector<40x128xbf16>
    %c3_73 = arith.constant 3 : index
    %c0_74 = arith.constant 0 : index
    %c0_75 = arith.constant 0 : index
    %103 = vector.load %arg3[%c3_73, %c0_74, %c0_75] : memref<9x128x128xbf16, #tpu.memory_space<vmem>>, vector<1x128x128xbf16>
    %104 = vector.shape_cast %103 : vector<1x128x128xbf16> to vector<128x128xbf16>
    %cst_76 = arith.constant dense<0.000000e+00> : vector<40x128xf32>
    %105 = tpu.matmul %102, %104, %cst_76 {dimension_numbers = #tpu.dot_dimension_numbers<[1], [0], [0], [1], [0, 0, 1, 1], [], []>} : vector<40x128xbf16>, vector<128x128xbf16>, vector<40x128xf32> -> vector<40x128xf32>
    %106 = arith.addf %100, %105 : vector<40x128xf32>
    %c9 = arith.constant 9 : index
    %c0_77 = arith.constant 0 : index
    %107 = vector.load %arg8[%c9, %c0_77] : memref<64x128xf32, #tpu.memory_space<vmem>>, vector<40x128xf32>
    %108 = arith.truncf %107 : vector<40x128xf32> to vector<40x128xbf16>
    %c4_78 = arith.constant 4 : index
    %c0_79 = arith.constant 0 : index
    %c0_80 = arith.constant 0 : index
    %109 = vector.load %arg3[%c4_78, %c0_79, %c0_80] : memref<9x128x128xbf16, #tpu.memory_space<vmem>>, vector<1x128x128xbf16>
    %110 = vector.shape_cast %109 : vector<1x128x128xbf16> to vector<128x128xbf16>
    %cst_81 = arith.constant dense<0.000000e+00> : vector<40x128xf32>
    %111 = tpu.matmul %108, %110, %cst_81 {dimension_numbers = #tpu.dot_dimension_numbers<[1], [0], [0], [1], [0, 0, 1, 1], [], []>} : vector<40x128xbf16>, vector<128x128xbf16>, vector<40x128xf32> -> vector<40x128xf32>
    %112 = arith.addf %106, %111 : vector<40x128xf32>
    %c10 = arith.constant 10 : index
    %c0_82 = arith.constant 0 : index
    %113 = vector.load %arg8[%c10, %c0_82] : memref<64x128xf32, #tpu.memory_space<vmem>>, vector<40x128xf32>
    %114 = arith.truncf %113 : vector<40x128xf32> to vector<40x128xbf16>
    %c5_83 = arith.constant 5 : index
    %c0_84 = arith.constant 0 : index
    %c0_85 = arith.constant 0 : index
    %115 = vector.load %arg3[%c5_83, %c0_84, %c0_85] : memref<9x128x128xbf16, #tpu.memory_space<vmem>>, vector<1x128x128xbf16>
    %116 = vector.shape_cast %115 : vector<1x128x128xbf16> to vector<128x128xbf16>
    %cst_86 = arith.constant dense<0.000000e+00> : vector<40x128xf32>
    %117 = tpu.matmul %114, %116, %cst_86 {dimension_numbers = #tpu.dot_dimension_numbers<[1], [0], [0], [1], [0, 0, 1, 1], [], []>} : vector<40x128xbf16>, vector<128x128xbf16>, vector<40x128xf32> -> vector<40x128xf32>
    %118 = arith.addf %112, %117 : vector<40x128xf32>
    %c16_87 = arith.constant 16 : index
    %c0_88 = arith.constant 0 : index
    %119 = vector.load %arg8[%c16_87, %c0_88] : memref<64x128xf32, #tpu.memory_space<vmem>>, vector<40x128xf32>
    %120 = arith.truncf %119 : vector<40x128xf32> to vector<40x128xbf16>
    %c6_89 = arith.constant 6 : index
    %c0_90 = arith.constant 0 : index
    %c0_91 = arith.constant 0 : index
    %121 = vector.load %arg3[%c6_89, %c0_90, %c0_91] : memref<9x128x128xbf16, #tpu.memory_space<vmem>>, vector<1x128x128xbf16>
    %122 = vector.shape_cast %121 : vector<1x128x128xbf16> to vector<128x128xbf16>
    %cst_92 = arith.constant dense<0.000000e+00> : vector<40x128xf32>
    %123 = tpu.matmul %120, %122, %cst_92 {dimension_numbers = #tpu.dot_dimension_numbers<[1], [0], [0], [1], [0, 0, 1, 1], [], []>} : vector<40x128xbf16>, vector<128x128xbf16>, vector<40x128xf32> -> vector<40x128xf32>
    %124 = arith.addf %118, %123 : vector<40x128xf32>
    %c17_93 = arith.constant 17 : index
    %c0_94 = arith.constant 0 : index
    %125 = vector.load %arg8[%c17_93, %c0_94] : memref<64x128xf32, #tpu.memory_space<vmem>>, vector<40x128xf32>
    %126 = arith.truncf %125 : vector<40x128xf32> to vector<40x128xbf16>
    %c7_95 = arith.constant 7 : index
    %c0_96 = arith.constant 0 : index
    %c0_97 = arith.constant 0 : index
    %127 = vector.load %arg3[%c7_95, %c0_96, %c0_97] : memref<9x128x128xbf16, #tpu.memory_space<vmem>>, vector<1x128x128xbf16>
    %128 = vector.shape_cast %127 : vector<1x128x128xbf16> to vector<128x128xbf16>
    %cst_98 = arith.constant dense<0.000000e+00> : vector<40x128xf32>
    %129 = tpu.matmul %126, %128, %cst_98 {dimension_numbers = #tpu.dot_dimension_numbers<[1], [0], [0], [1], [0, 0, 1, 1], [], []>} : vector<40x128xbf16>, vector<128x128xbf16>, vector<40x128xf32> -> vector<40x128xf32>
    %130 = arith.addf %124, %129 : vector<40x128xf32>
    %c18_99 = arith.constant 18 : index
    %c0_100 = arith.constant 0 : index
    %131 = vector.load %arg8[%c18_99, %c0_100] : memref<64x128xf32, #tpu.memory_space<vmem>>, vector<40x128xf32>
    %132 = arith.truncf %131 : vector<40x128xf32> to vector<40x128xbf16>
    %c8_101 = arith.constant 8 : index
    %c0_102 = arith.constant 0 : index
    %c0_103 = arith.constant 0 : index
    %133 = vector.load %arg3[%c8_101, %c0_102, %c0_103] : memref<9x128x128xbf16, #tpu.memory_space<vmem>>, vector<1x128x128xbf16>
    %134 = vector.shape_cast %133 : vector<1x128x128xbf16> to vector<128x128xbf16>
    %cst_104 = arith.constant dense<0.000000e+00> : vector<40x128xf32>
    %135 = tpu.matmul %132, %134, %cst_104 {dimension_numbers = #tpu.dot_dimension_numbers<[1], [0], [0], [1], [0, 0, 1, 1], [], []>} : vector<40x128xbf16>, vector<128x128xbf16>, vector<40x128xf32> -> vector<40x128xf32>
    %136 = arith.addf %130, %135 : vector<40x128xf32>
    %c3_105 = arith.constant 3 : index
    %c0_106 = arith.constant 0 : index
    %137 = vector.load %arg6[%c3_105, %c0_106] : memref<16x128xf32, #tpu.memory_space<vmem>>, vector<1x128xf32>
    %c4_107 = arith.constant 4 : index
    %c0_108 = arith.constant 0 : index
    %138 = vector.load %arg6[%c4_107, %c0_108] : memref<16x128xf32, #tpu.memory_space<vmem>>, vector<1x128xf32>
    %c5_109 = arith.constant 5 : index
    %c0_110 = arith.constant 0 : index
    %139 = vector.load %arg6[%c5_109, %c0_110] : memref<16x128xf32, #tpu.memory_space<vmem>>, vector<1x128xf32>
    %140 = vector.broadcast %137 : vector<1x128xf32> to vector<40x128xf32>
    %141 = arith.mulf %136, %140 : vector<40x128xf32>
    %142 = vector.broadcast %138 : vector<1x128xf32> to vector<40x128xf32>
    %143 = arith.addf %141, %142 : vector<40x128xf32>
    %cst_111 = arith.constant 0.000000e+00 : f32
    %144 = vector.broadcast %cst_111 : f32 to vector<40x128xf32>
    %145 = arith.cmpf oge, %143, %144 : vector<40x128xf32>
    %146 = vector.broadcast %139 : vector<1x128xf32> to vector<40x128xf32>
    %147 = arith.mulf %146, %143 : vector<40x128xf32>
    %148 = arith.select %145, %143, %147 : vector<40x128xi1>, vector<40x128xf32>
    %c0_112 = arith.constant 0 : index
    %c0_113 = arith.constant 0 : index
    %149 = vector.load %arg9[%c0_112, %c0_113] : memref<152x128xf32, #tpu.memory_space<vmem>>, vector<40x128xf32>
    tpu.vector_store %arg9[%c0_112, %c0_113], %148 {strides = array<i32>} : memref<152x128xf32, #tpu.memory_space<vmem>>, vector<40x128xf32>,
    %cst_114 = arith.constant 0.000000e+00 : f32
    %150 = vector.broadcast %cst_114 : f32 to vector<128x128xf32>
    %c0_115 = arith.constant 0 : index
    %c0_116 = arith.constant 0 : index
    %151 = vector.load %arg9[%c0_115, %c0_116] : memref<152x128xf32, #tpu.memory_space<vmem>>, vector<128x128xf32>
    %152 = arith.truncf %151 : vector<128x128xf32> to vector<128x128xbf16>
    %c0_117 = arith.constant 0 : index
    %c0_118 = arith.constant 0 : index
    %c0_119 = arith.constant 0 : index
    %153 = vector.load %arg4[%c0_117, %c0_118, %c0_119] : memref<9x128x128xbf16, #tpu.memory_space<vmem>>, vector<1x128x128xbf16>
    %154 = vector.shape_cast %153 : vector<1x128x128xbf16> to vector<128x128xbf16>
    %cst_120 = arith.constant dense<0.000000e+00> : vector<128x128xf32>
    %155 = tpu.matmul %152, %154, %cst_120 {dimension_numbers = #tpu.dot_dimension_numbers<[1], [0], [0], [1], [0, 0, 1, 1], [], []>} : vector<128x128xbf16>, vector<128x128xbf16>, vector<128x128xf32> -> vector<128x128xf32>
    %156 = arith.addf %150, %155 : vector<128x128xf32>
    %c1_121 = arith.constant 1 : index
    %c0_122 = arith.constant 0 : index
    %157 = vector.load %arg9[%c1_121, %c0_122] : memref<152x128xf32, #tpu.memory_space<vmem>>, vector<128x128xf32>
    %158 = arith.truncf %157 : vector<128x128xf32> to vector<128x128xbf16>
    %c1_123 = arith.constant 1 : index
    %c0_124 = arith.constant 0 : index
    %c0_125 = arith.constant 0 : index
    %159 = vector.load %arg4[%c1_123, %c0_124, %c0_125] : memref<9x128x128xbf16, #tpu.memory_space<vmem>>, vector<1x128x128xbf16>
    %160 = vector.shape_cast %159 : vector<1x128x128xbf16> to vector<128x128xbf16>
    %cst_126 = arith.constant dense<0.000000e+00> : vector<128x128xf32>
    %161 = tpu.matmul %158, %160, %cst_126 {dimension_numbers = #tpu.dot_dimension_numbers<[1], [0], [0], [1], [0, 0, 1, 1], [], []>} : vector<128x128xbf16>, vector<128x128xbf16>, vector<128x128xf32> -> vector<128x128xf32>
    %162 = arith.addf %156, %161 : vector<128x128xf32>
    %c2_127 = arith.constant 2 : index
    %c0_128 = arith.constant 0 : index
    %163 = vector.load %arg9[%c2_127, %c0_128] : memref<152x128xf32, #tpu.memory_space<vmem>>, vector<128x128xf32>
    %164 = arith.truncf %163 : vector<128x128xf32> to vector<128x128xbf16>
    %c2_129 = arith.constant 2 : index
    %c0_130 = arith.constant 0 : index
    %c0_131 = arith.constant 0 : index
    %165 = vector.load %arg4[%c2_129, %c0_130, %c0_131] : memref<9x128x128xbf16, #tpu.memory_space<vmem>>, vector<1x128x128xbf16>
    %166 = vector.shape_cast %165 : vector<1x128x128xbf16> to vector<128x128xbf16>
    %cst_132 = arith.constant dense<0.000000e+00> : vector<128x128xf32>
    %167 = tpu.matmul %164, %166, %cst_132 {dimension_numbers = #tpu.dot_dimension_numbers<[1], [0], [0], [1], [0, 0, 1, 1], [], []>} : vector<128x128xbf16>, vector<128x128xbf16>, vector<128x128xf32> -> vector<128x128xf32>
    %168 = arith.addf %162, %167 : vector<128x128xf32>
    %c8_133 = arith.constant 8 : index
    %c0_134 = arith.constant 0 : index
    %169 = vector.load %arg9[%c8_133, %c0_134] : memref<152x128xf32, #tpu.memory_space<vmem>>, vector<128x128xf32>
    %170 = arith.truncf %169 : vector<128x128xf32> to vector<128x128xbf16>
    %c3_135 = arith.constant 3 : index
    %c0_136 = arith.constant 0 : index
    %c0_137 = arith.constant 0 : index
    %171 = vector.load %arg4[%c3_135, %c0_136, %c0_137] : memref<9x128x128xbf16, #tpu.memory_space<vmem>>, vector<1x128x128xbf16>
    %172 = vector.shape_cast %171 : vector<1x128x128xbf16> to vector<128x128xbf16>
    %cst_138 = arith.constant dense<0.000000e+00> : vector<128x128xf32>
    %173 = tpu.matmul %170, %172, %cst_138 {dimension_numbers = #tpu.dot_dimension_numbers<[1], [0], [0], [1], [0, 0, 1, 1], [], []>} : vector<128x128xbf16>, vector<128x128xbf16>, vector<128x128xf32> -> vector<128x128xf32>
    %174 = arith.addf %168, %173 : vector<128x128xf32>
    %c9_139 = arith.constant 9 : index
    %c0_140 = arith.constant 0 : index
    %175 = vector.load %arg9[%c9_139, %c0_140] : memref<152x128xf32, #tpu.memory_space<vmem>>, vector<128x128xf32>
    %176 = arith.truncf %175 : vector<128x128xf32> to vector<128x128xbf16>
    %c4_141 = arith.constant 4 : index
    %c0_142 = arith.constant 0 : index
    %c0_143 = arith.constant 0 : index
    %177 = vector.load %arg4[%c4_141, %c0_142, %c0_143] : memref<9x128x128xbf16, #tpu.memory_space<vmem>>, vector<1x128x128xbf16>
    %178 = vector.shape_cast %177 : vector<1x128x128xbf16> to vector<128x128xbf16>
    %cst_144 = arith.constant dense<0.000000e+00> : vector<128x128xf32>
    %179 = tpu.matmul %176, %178, %cst_144 {dimension_numbers = #tpu.dot_dimension_numbers<[1], [0], [0], [1], [0, 0, 1, 1], [], []>} : vector<128x128xbf16>, vector<128x128xbf16>, vector<128x128xf32> -> vector<128x128xf32>
    %180 = arith.addf %174, %179 : vector<128x128xf32>
    %c10_145 = arith.constant 10 : index
    %c0_146 = arith.constant 0 : index
    %181 = vector.load %arg9[%c10_145, %c0_146] : memref<152x128xf32, #tpu.memory_space<vmem>>, vector<128x128xf32>
    %182 = arith.truncf %181 : vector<128x128xf32> to vector<128x128xbf16>
    %c5_147 = arith.constant 5 : index
    %c0_148 = arith.constant 0 : index
    %c0_149 = arith.constant 0 : index
    %183 = vector.load %arg4[%c5_147, %c0_148, %c0_149] : memref<9x128x128xbf16, #tpu.memory_space<vmem>>, vector<1x128x128xbf16>
    %184 = vector.shape_cast %183 : vector<1x128x128xbf16> to vector<128x128xbf16>
    %cst_150 = arith.constant dense<0.000000e+00> : vector<128x128xf32>
    %185 = tpu.matmul %182, %184, %cst_150 {dimension_numbers = #tpu.dot_dimension_numbers<[1], [0], [0], [1], [0, 0, 1, 1], [], []>} : vector<128x128xbf16>, vector<128x128xbf16>, vector<128x128xf32> -> vector<128x128xf32>
    %186 = arith.addf %180, %185 : vector<128x128xf32>
    %c16_151 = arith.constant 16 : index
    %c0_152 = arith.constant 0 : index
    %187 = vector.load %arg9[%c16_151, %c0_152] : memref<152x128xf32, #tpu.memory_space<vmem>>, vector<128x128xf32>
    %188 = arith.truncf %187 : vector<128x128xf32> to vector<128x128xbf16>
    %c6_153 = arith.constant 6 : index
    %c0_154 = arith.constant 0 : index
    %c0_155 = arith.constant 0 : index
    %189 = vector.load %arg4[%c6_153, %c0_154, %c0_155] : memref<9x128x128xbf16, #tpu.memory_space<vmem>>, vector<1x128x128xbf16>
    %190 = vector.shape_cast %189 : vector<1x128x128xbf16> to vector<128x128xbf16>
    %cst_156 = arith.constant dense<0.000000e+00> : vector<128x128xf32>
    %191 = tpu.matmul %188, %190, %cst_156 {dimension_numbers = #tpu.dot_dimension_numbers<[1], [0], [0], [1], [0, 0, 1, 1], [], []>} : vector<128x128xbf16>, vector<128x128xbf16>, vector<128x128xf32> -> vector<128x128xf32>
    %192 = arith.addf %186, %191 : vector<128x128xf32>
    %c17_157 = arith.constant 17 : index
    %c0_158 = arith.constant 0 : index
    %193 = vector.load %arg9[%c17_157, %c0_158] : memref<152x128xf32, #tpu.memory_space<vmem>>, vector<128x128xf32>
    %194 = arith.truncf %193 : vector<128x128xf32> to vector<128x128xbf16>
    %c7_159 = arith.constant 7 : index
    %c0_160 = arith.constant 0 : index
    %c0_161 = arith.constant 0 : index
    %195 = vector.load %arg4[%c7_159, %c0_160, %c0_161] : memref<9x128x128xbf16, #tpu.memory_space<vmem>>, vector<1x128x128xbf16>
    %196 = vector.shape_cast %195 : vector<1x128x128xbf16> to vector<128x128xbf16>
    %cst_162 = arith.constant dense<0.000000e+00> : vector<128x128xf32>
    %197 = tpu.matmul %194, %196, %cst_162 {dimension_numbers = #tpu.dot_dimension_numbers<[1], [0], [0], [1], [0, 0, 1, 1], [], []>} : vector<128x128xbf16>, vector<128x128xbf16>, vector<128x128xf32> -> vector<128x128xf32>
    %198 = arith.addf %192, %197 : vector<128x128xf32>
    %c18_163 = arith.constant 18 : index
    %c0_164 = arith.constant 0 : index
    %199 = vector.load %arg9[%c18_163, %c0_164] : memref<152x128xf32, #tpu.memory_space<vmem>>, vector<128x128xf32>
    %200 = arith.truncf %199 : vector<128x128xf32> to vector<128x128xbf16>
    %c8_165 = arith.constant 8 : index
    %c0_166 = arith.constant 0 : index
    %c0_167 = arith.constant 0 : index
    %201 = vector.load %arg4[%c8_165, %c0_166, %c0_167] : memref<9x128x128xbf16, #tpu.memory_space<vmem>>, vector<1x128x128xbf16>
    %202 = vector.shape_cast %201 : vector<1x128x128xbf16> to vector<128x128xbf16>
    %cst_168 = arith.constant dense<0.000000e+00> : vector<128x128xf32>
    %203 = tpu.matmul %200, %202, %cst_168 {dimension_numbers = #tpu.dot_dimension_numbers<[1], [0], [0], [1], [0, 0, 1, 1], [], []>} : vector<128x128xbf16>, vector<128x128xbf16>, vector<128x128xf32> -> vector<128x128xf32>
    %204 = arith.addf %198, %203 : vector<128x128xf32>
    %c6_169 = arith.constant 6 : index
    %c0_170 = arith.constant 0 : index
    %205 = vector.load %arg6[%c6_169, %c0_170] : memref<16x128xf32, #tpu.memory_space<vmem>>, vector<1x128xf32>
    %c7_171 = arith.constant 7 : index
    %c0_172 = arith.constant 0 : index
    %206 = vector.load %arg6[%c7_171, %c0_172] : memref<16x128xf32, #tpu.memory_space<vmem>>, vector<1x128xf32>
    %c8_173 = arith.constant 8 : index
    %c0_174 = arith.constant 0 : index
    %207 = vector.load %arg6[%c8_173, %c0_174] : memref<16x128xf32, #tpu.memory_space<vmem>>, vector<1x128xf32>
    %208 = vector.broadcast %205 : vector<1x128xf32> to vector<128x128xf32>
    %209 = arith.mulf %204, %208 : vector<128x128xf32>
    %210 = vector.broadcast %206 : vector<1x128xf32> to vector<128x128xf32>
    %211 = arith.addf %209, %210 : vector<128x128xf32>
    %cst_175 = arith.constant 0.000000e+00 : f32
    %212 = vector.broadcast %cst_175 : f32 to vector<128x128xf32>
    %213 = arith.cmpf oge, %211, %212 : vector<128x128xf32>
    %214 = vector.broadcast %207 : vector<1x128xf32> to vector<128x128xf32>
    %215 = arith.mulf %214, %211 : vector<128x128xf32>
    %216 = arith.select %213, %211, %215 : vector<128x128xi1>, vector<128x128xf32>
    %c0_176 = arith.constant 0 : index
    %c0_177 = arith.constant 0 : index
    %217 = vector.load %arg5[%c0_176, %c0_177] : memref<8x128xbf16, #tpu.memory_space<vmem>>, vector<8x128xbf16>
    %218 = arith.truncf %216 : vector<128x128xf32> to vector<128x128xbf16>
    %cst_178 = arith.constant dense<0.000000e+00> : vector<8x128xf32>
    %219 = tpu.matmul %217, %218, %cst_178 {dimension_numbers = #tpu.dot_dimension_numbers<[1], [1], [0], [0], [0, 0, 1, 0], [], []>} : vector<8x128xbf16>, vector<128x128xbf16>, vector<8x128xf32> -> vector<8x128xf32>
    %220 = tpu.iota {dimensions = array<i32: 0>} : vector<8x128xi32>
    %cst_179 = arith.constant 0.000000e+00 : f32
    %221 = vector.broadcast %cst_179 : f32 to vector<8x128xf32>
    %222 = arith.subf %221, %219 : vector<8x128xf32>
    %223 = math.exp %222 : vector<8x128xf32>
    %cst_180 = arith.constant 1.000000e+00 : f32
    %224 = vector.broadcast %cst_180 : f32 to vector<8x128xf32>
    %225 = arith.addf %224, %223 : vector<8x128xf32>
    %cst_181 = arith.constant 1.000000e+00 : f32
    %226 = vector.broadcast %cst_181 : f32 to vector<8x128xf32>
    %227 = arith.divf %226, %225 : vector<8x128xf32>
    %c0_i32 = arith.constant 0 : i32
    %228 = vector.broadcast %c0_i32 : i32 to vector<8x128xi32>
    %229 = arith.cmpi eq, %220, %228 : vector<8x128xi32>
    %230 = arith.select %229, %227, %219 : vector<8x128xi1>, vector<8x128xf32>
    %c0_182 = arith.constant 0 : index
    %c0_183 = arith.constant 0 : index
    %231 = vector.load %arg7[%c0_182, %c0_183] : memref<8x128xf32, #tpu.memory_space<vmem>>, vector<8x128xf32>
    tpu.vector_store %arg7[%c0_182, %c0_183], %230 {strides = array<i32>} : memref<8x128xf32, #tpu.memory_space<vmem>>, vector<8x128xf32>,
    return
  }
  func.func @transform_0(%arg0: i32) -> (i32, i32) {
    %c0_i32 = arith.constant 0 : i32
    %c0_i32_0 = arith.constant 0 : i32
    return %arg0, %c0_i32 : i32, i32
  }
  func.func @transform_1(%arg0: i32) -> (i32, i32, i32) {
    %c0_i32 = arith.constant 0 : i32
    %c0_i32_0 = arith.constant 0 : i32
    %c0_i32_1 = arith.constant 0 : i32
    %c0_i32_2 = arith.constant 0 : i32
    return %c0_i32, %c0_i32_0, %c0_i32_1 : i32, i32, i32
  }
  func.func @transform_2(%arg0: i32) -> (i32, i32, i32) {
    %c0_i32 = arith.constant 0 : i32
    %c0_i32_0 = arith.constant 0 : i32
    %c0_i32_1 = arith.constant 0 : i32
    %c0_i32_2 = arith.constant 0 : i32
    return %c0_i32, %c0_i32_0, %c0_i32_1 : i32, i32, i32
  }
  func.func @transform_3(%arg0: i32) -> (i32, i32, i32) {
    %c0_i32 = arith.constant 0 : i32
    %c0_i32_0 = arith.constant 0 : i32
    %c0_i32_1 = arith.constant 0 : i32
    %c0_i32_2 = arith.constant 0 : i32
    return %c0_i32, %c0_i32_0, %c0_i32_1 : i32, i32, i32
  }
  func.func @transform_4(%arg0: i32) -> (i32, i32) {
    %c0_i32 = arith.constant 0 : i32
    %c0_i32_0 = arith.constant 0 : i32
    %c0_i32_1 = arith.constant 0 : i32
    return %c0_i32, %c0_i32_0 : i32, i32
  }
  func.func @transform_5(%arg0: i32) -> (i32, i32) {
    %c0_i32 = arith.constant 0 : i32
    %c0_i32_0 = arith.constant 0 : i32
    %c0_i32_1 = arith.constant 0 : i32
    return %c0_i32, %c0_i32_0 : i32, i32
  }
  func.func @transform_6(%arg0: i32) -> (i32, i32) {
    %c0_i32 = arith.constant 0 : i32
    %c0_i32_0 = arith.constant 0 : i32
    return %arg0, %c0_i32 : i32, i32
  }
}

</mosaic_0001>

<llo_original>
// kernel: pnet_forward.1
$region0: #{pnet_forward.1}
  #allocation0 [shape = 'u32[]', space=smem, size = 0x4, offset = 0x4, fixed_abs, tag = 'smem constant byte address 0x4 - core index']
  #allocation1 [shape = 'u32[144,128]{1,0:T(1,128)}', space=vmem, size = 0x12000, scoped, tag = 'internal scratch']
  #allocation2 [shape = 'f32[64,128]{1,0:T(8,128)}', space=vmem, size = 0x8000, scoped, tag = 'scratch operand']
  #allocation3 [shape = 'f32[152,128]{1,0:T(8,128)}', space=vmem, size = 0x13000, scoped, tag = 'scratch operand']
  %s0 = inlined_call_operand.hbm [shape: f32[544,16], index: 0, kind: input, shape index: {}]
  %s1 = inlined_call_operand.hbm [shape: bf16[9,16,128], index: 1, kind: input, shape index: {}]
  %s2 = inlined_call_operand.hbm [shape: bf16[9,128,128], index: 2, kind: input, shape index: {}]
  %s3 = inlined_call_operand.hbm [shape: bf16[9,128,128], index: 3, kind: input, shape index: {}]
  %s4 = inlined_call_operand.hbm [shape: bf16[8,128], index: 4, kind: input, shape index: {}]
  %s5 = inlined_call_operand.hbm [shape: f32[16,128], index: 5, kind: input, shape index: {}]
  %s6 = inlined_call_operand.hbm [shape: f32[16,128], index: 6, kind: output, shape index: {}]
  %s7 = sld [smem:[#allocation0]]
  $region81: #{pnet_forward.1} parent=0
    _
  %s9 = ssub.s32 1, %s7
  %s10 = scalar_select 0, %s9, %s7
  $region1: #{pnet_forward.1} parent=0
    #allocation4 [shape = 'u8[278528]{0}', space=vmem, size = 0x44000, scoped, tag = 'input window, operand 0']
    #allocation5 [shape = 's32[2]{0}', space=sflag, size = 0x8, scoped, tag = 'scoped memory for pnet_forward.1']
    #allocation6 [shape = 's32[2]{0}', space=sflag, size = 0x8, scoped, tag = 'scoped memory for pnet_forward.1']
    #allocation7 [shape = 'u8[36864]{0}', space=vmem, size = 0x9000, scoped, tag = 'input window, operand 1, single buffered']
    #allocation8 [shape = 's32[1]{0}', space=sflag, size = 0x4, scoped, tag = 'scoped memory for pnet_forward.1']
    #allocation9 [shape = 'u8[294912]{0}', space=vmem, size = 0x48000, scoped, tag = 'input window, operand 2, single buffered']
    #allocation10 [shape = 'u8[294912]{0}', space=vmem, size = 0x48000, scoped, tag = 'input window, operand 3, single buffered']
    #allocation11 [shape = 's32[1]{0}', space=sflag, size = 0x4, scoped, tag = 'scoped memory for pnet_forward.1']
    #allocation12 [shape = 'u8[2048]{0}', space=vmem, size = 0x800, scoped, tag = 'input window, operand 4, single buffered']
    #allocation13 [shape = 'u8[8192]{0}', space=vmem, size = 0x2000, scoped, tag = 'input window, operand 5, single buffered']
    #allocation14 [shape = 's32[1]{0}', space=sflag, size = 0x4, scoped, tag = 'scoped memory for pnet_forward.1']
    #allocation15 [shape = 'u8[8192]{0}', space=vmem, size = 0x2000, scoped, tag = 'output window, operand 0']
    %11 = vsyncpa [#allocation5], 0
    %s12 = scalar_lea.sflag [#allocation5], 1
    %13 = vsyncpa %s12, 0
    %14 = vsyncpa [#allocation8], 0
    %15 = vsyncpa [#allocation11], 0
    %16 = vsyncpa [#allocation14], 0
    %17 = vsyncpa [#allocation6], 0
    %s18 = scalar_lea.sflag [#allocation6], 1
    %19 = vsyncpa %s18, 0
    loop: start=0, step=1, limit=4
    $region2: #{pnet_forward.1} parent=1 // loop_pre_header
      _
    $region3: #{pnet_forward.1} parent=1 // loop_header
      %s21 = sphi 0, %s25
      %p22 = scmp.ge.s32.totalorder %s21, 4
      %s31 = sphi 0, %s33
      %s34 = sphi 0, %s31
      %s35 = sphi 0, %s34
      %s51 = sphi 0, %s35
      %s55 = sphi 0, %s55
      %s57 = sphi 0, %s55
      %s58 = sphi 0, %s57
      %s72 = sphi 0, %s58
      %s76 = sphi 0, %s76
      %s78 = sphi 0, %s76
      %s79 = sphi 0, %s78
      %s93 = sphi 0, %s79
      %s97 = sphi 0, %s97
      %s99 = sphi 0, %s97
      %s100 = sphi 0, %s99
      %s114 = sphi 0, %s100
      %s118 = sphi 0, %s118
      %s120 = sphi 0, %s118
      %s121 = sphi 0, %s120
      %s135 = sphi 0, %s121
      %s139 = sphi 0, %s139
      %s141 = sphi 0, %s139
      %s142 = sphi 0, %s141
      %s156 = sphi 0, %s142
      %s162 = sphi 0, %s164
      %s165 = sphi 0, %s162
      %s166 = sphi 0, %s165
      %s182 = sphi 0, %s166
    $region4: #{pnet_forward.1} parent=1 // loop_header_branch
      %24 = sbr.rel (%p22) target = $region8
    $region5: #{pnet_forward.1} parent=1 // loop_body
      %s26 = ssub.s32 %s21, 1
      %s27 = ssub.s32 %s21, 2
      %s28 = sadd.s32 %s21, 1
      %s29 = ssub.s32 %s21, %s28
      %p30 = scmp.eq.s32.totalorder %s29, 0
      %s32 = sadd.s32 %s31, 1
      %s33 = scalar_select %p30, %s31, %s32
      %p36 = pneg %p30
      %p37 = scmp.eq.s32.totalorder %s21, 1
      %p38 = por %p36, %p37
      %p39 = scmp.ne.s32.totalorder %s31, %s34
      %p40 = scmp.eq.s32.totalorder %s21, 0
      %p41 = por %p39, %p40
      %p42 = scmp.ne.s32.totalorder %s31, %s34
      %p43 = scmp.eq.s32.totalorder %s26, 1
      %p44 = por %p42, %p43
      %p45 = scmp.ne.s32.totalorder %s34, %s35
      %p46 = scmp.eq.s32.totalorder %s26, 0
      %p47 = por %p45, %p46
      %p48 = scmp.ne.s32.totalorder %s34, %s35
      %p49 = scmp.eq.s32.totalorder %s27, 1
      %p50 = por %p48, %p49
      %p52 = scmp.ne.s32.totalorder %s35, %s51
      %p53 = scmp.eq.s32.totalorder %s27, 0
      %p54 = por %p52, %p53
      %s56 = sadd.s32 %s55, 1
      %p59 = scmp.eq.s32.totalorder %s21, 1
      %p60 = scmp.ne.s32.totalorder %s55, %s57
      %p61 = scmp.eq.s32.totalorder %s21, 0
      %p62 = por %p60, %p61
      %p63 = scmp.ne.s32.totalorder %s55, %s57
      %p64 = scmp.eq.s32.totalorder %s26, 1
      %p65 = por %p63, %p64
      %p66 = scmp.ne.s32.totalorder %s57, %s58
      %p67 = scmp.eq.s32.totalorder %s26, 0
      %p68 = por %p66, %p67
      %p69 = scmp.ne.s32.totalorder %s57, %s58
      %p70 = scmp.eq.s32.totalorder %s27, 1
      %p71 = por %p69, %p70
      %p73 = scmp.ne.s32.totalorder %s58, %s72
      %p74 = scmp.eq.s32.totalorder %s27, 0
      %p75 = por %p73, %p74
      %s77 = sadd.s32 %s76, 1
      %p80 = scmp.eq.s32.totalorder %s21, 1
      %p81 = scmp.ne.s32.totalorder %s76, %s78
      %p82 = scmp.eq.s32.totalorder %s21, 0
      %p83 = por %p81, %p82
      %p84 = scmp.ne.s32.totalorder %s76, %s78
      %p85 = scmp.eq.s32.totalorder %s26, 1
      %p86 = por %p84, %p85
      %p87 = scmp.ne.s32.totalorder %s78, %s79
      %p88 = scmp.eq.s32.totalorder %s26, 0
      %p89 = por %p87, %p88
      %p90 = scmp.ne.s32.totalorder %s78, %s79
      %p91 = scmp.eq.s32.totalorder %s27, 1
      %p92 = por %p90, %p91
      %p94 = scmp.ne.s32.totalorder %s79, %s93
      %p95 = scmp.eq.s32.totalorder %s27, 0
      %p96 = por %p94, %p95
      %s98 = sadd.s32 %s97, 1
      %p101 = scmp.eq.s32.totalorder %s21, 1
      %p102 = scmp.ne.s32.totalorder %s97, %s99
      %p103 = scmp.eq.s32.totalorder %s21, 0
      %p104 = por %p102, %p103
      %p105 = scmp.ne.s32.totalorder %s97, %s99
      %p106 = scmp.eq.s32.totalorder %s26, 1
      %p107 = por %p105, %p106
      %p108 = scmp.ne.s32.totalorder %s99, %s100
      %p109 = scmp.eq.s32.totalorder %s26, 0
      %p110 = por %p108, %p109
      %p111 = scmp.ne.s32.totalorder %s99, %s100
      %p112 = scmp.eq.s32.totalorder %s27, 1
      %p113 = por %p111, %p112
      %p115 = scmp.ne.s32.totalorder %s100, %s114
      %p116 = scmp.eq.s32.totalorder %s27, 0
      %p117 = por %p115, %p116
      %s119 = sadd.s32 %s118, 1
      %p122 = scmp.eq.s32.totalorder %s21, 1
      %p123 = scmp.ne.s32.totalorder %s118, %s120
      %p124 = scmp.eq.s32.totalorder %s21, 0
      %p125 = por %p123, %p124
      %p126 = scmp.ne.s32.totalorder %s118, %s120
      %p127 = scmp.eq.s32.totalorder %s26, 1
      %p128 = por %p126, %p127
      %p129 = scmp.ne.s32.totalorder %s120, %s121
      %p130 = scmp.eq.s32.totalorder %s26, 0
      %p131 = por %p129, %p130
      %p132 = scmp.ne.s32.totalorder %s120, %s121
      %p133 = scmp.eq.s32.totalorder %s27, 1
      %p134 = por %p132, %p133
      %p136 = scmp.ne.s32.totalorder %s121, %s135
      %p137 = scmp.eq.s32.totalorder %s27, 0
      %p138 = por %p136, %p137
      %s140 = sadd.s32 %s139, 1
      %p143 = scmp.eq.s32.totalorder %s21, 1
      %p144 = scmp.ne.s32.totalorder %s139, %s141
      %p145 = scmp.eq.s32.totalorder %s21, 0
      %p146 = por %p144, %p145
      %p147 = scmp.ne.s32.totalorder %s139, %s141
      %p148 = scmp.eq.s32.totalorder %s26, 1
      %p149 = por %p147, %p148
      %p150 = scmp.ne.s32.totalorder %s141, %s142
      %p151 = scmp.eq.s32.totalorder %s26, 0
      %p152 = por %p150, %p151
      %p153 = scmp.ne.s32.totalorder %s141, %s142
      %p154 = scmp.eq.s32.totalorder %s27, 1
      %p155 = por %p153, %p154
      %p157 = scmp.ne.s32.totalorder %s142, %s156
      %p158 = scmp.eq.s32.totalorder %s27, 0
      %p159 = por %p157, %p158
      %s160 = ssub.s32 %s21, %s28
      %p161 = scmp.eq.s32.totalorder %s160, 0
      %s163 = sadd.s32 %s162, 1
      %s164 = scalar_select %p161, %s162, %s163
      %p167 = pneg %p161
      %p168 = scmp.eq.s32.totalorder %s21, 1
      %p169 = por %p167, %p168
      %p170 = scmp.ne.s32.totalorder %s162, %s165
      %p171 = scmp.eq.s32.totalorder %s21, 0
      %p172 = por %p170, %p171
      %p173 = scmp.ne.s32.totalorder %s162, %s165
      %p174 = scmp.eq.s32.totalorder %s26, 1
      %p175 = por %p173, %p174
      %p176 = scmp.ne.s32.totalorder %s165, %s166
      %p177 = scmp.eq.s32.totalorder %s26, 0
      %p178 = por %p176, %p177
      %p179 = scmp.ne.s32.totalorder %s165, %s166
      %p180 = scmp.eq.s32.totalorder %s27, 1
      %p181 = por %p179, %p180
      %p183 = scmp.ne.s32.totalorder %s166, %s182
      %p184 = scmp.eq.s32.totalorder %s27, 0
      %p185 = por %p183, %p184
      %p186 = scmp.le.s32.totalorder 1, %s21
      %p187 = scmp.lt.s32.totalorder %s21, 3
      %p188 = pnand %p186, %p187
      %p189 = pneg %p188
      // Predicated region
      $region9: #{pnet_forward.1} parent=5 // pred_check
        _
      $region10: #{pnet_forward.1} parent=5 // pred_check_branch
        %191 = sbr.rel (%p188) target = $region12
      $region11: #{pnet_forward.1} parent=5 // pred_region
        %s192 = ssub.s32 %s21, 1
        // Predicated region
        $region13: #{pnet_forward.1} parent=11 // pred_check
          %p193 = pneg %p68
        $region14: #{pnet_forward.1} parent=11 // pred_check_branch
          %195 = sbr.rel (%p193) target = $region16
        $region15: #{pnet_forward.1} parent=11 // pred_region
          %s197 = ssub.s32 1152, 1152
          %198 = vsyncadd [#allocation8], %s197
          %s199 = sshll.u32 [#allocation7], 4
          %s200 = int_to_ptr.vmem [resolvable:$true] %s199
          %205 = dma.hbm_to_vmem [thread:$0]  %s1, 1152, %s200, [#allocation8], 64, 64, 4
        $region16: #{pnet_forward.1} parent=11 // pred_fallthru
          _
        // Predicated region
        $region17: #{pnet_forward.1} parent=11 // pred_check
          %p206 = pneg %p89
        $region18: #{pnet_forward.1} parent=11 // pred_check_branch
          %208 = sbr.rel (%p206) target = $region20
        $region19: #{pnet_forward.1} parent=11 // pred_region
          %s210 = ssub.s32 9216, 9216
          %211 = vsyncadd [#allocation8], %s210
          %s212 = sshll.u32 [#allocation9], 4
          %s213 = int_to_ptr.vmem [resolvable:$true] %s212
          %218 = dma.hbm_to_vmem [thread:$0]  %s2, 9216, %s213, [#allocation8], 64, 64, 4
        $region20: #{pnet_forward.1} parent=11 // pred_fallthru
          _
        // Predicated region
        $region21: #{pnet_forward.1} parent=11 // pred_check
          %p219 = pneg %p110
        $region22: #{pnet_forward.1} parent=11 // pred_check_branch
          %221 = sbr.rel (%p219) target = $region24
        $region23: #{pnet_forward.1} parent=11 // pred_region
          %s223 = ssub.s32 9216, 9216
          %224 = vsyncadd [#allocation11], %s223
          %s225 = sshll.u32 [#allocation10], 4
          %s226 = int_to_ptr.vmem [resolvable:$true] %s225
          %231 = dma.hbm_to_vmem [thread:$0]  %s3, 9216, %s226, [#allocation11], 64, 64, 4
        $region24: #{pnet_forward.1} parent=11 // pred_fallthru
          _
        // Predicated region
        $region25: #{pnet_forward.1} parent=11 // pred_check
          %p232 = pneg %p131
        $region26: #{pnet_forward.1} parent=11 // pred_check_branch
          %234 = sbr.rel (%p232) target = $region28
        $region27: #{pnet_forward.1} parent=11 // pred_region
          %s236 = ssub.s32 64, 64
          %237 = vsyncadd [#allocation11], %s236
          %s239 = sshll.u32 [#allocation12], 4
          %s240 = int_to_ptr.vmem [resolvable:$true] %s239
          %242 = dma.hbm_to_vmem [thread:$0]  %s4, 64, %s240, [#allocation11]
        $region28: #{pnet_forward.1} parent=11 // pred_fallthru
          _
        // Predicated region
        $region29: #{pnet_forward.1} parent=11 // pred_check
          %p243 = pneg %p152
        $region30: #{pnet_forward.1} parent=11 // pred_check_branch
          %245 = sbr.rel (%p243) target = $region32
        $region31: #{pnet_forward.1} parent=11 // pred_region
          %s247 = ssub.s32 256, 256
          %248 = vsyncadd [#allocation14], %s247
          %s249 = sshll.u32 [#allocation13], 4
          %s250 = int_to_ptr.vmem [resolvable:$true] %s249
          %255 = dma.hbm_to_vmem [thread:$0]  %s5, 256, %s250, [#allocation14], 128, 128, 8
        $region32: #{pnet_forward.1} parent=11 // pred_fallthru
          _
      $region12: #{pnet_forward.1} parent=5 // pred_fallthru
        _
      %p256 = scmp.lt.s32.totalorder %s21, 2
      // Predicated region
      $region33: #{pnet_forward.1} parent=5 // pred_check
        %p257 = pneg %p256
      $region34: #{pnet_forward.1} parent=5 // pred_check_branch
        %259 = sbr.rel (%p257) target = $region36
      $region35: #{pnet_forward.1} parent=5 // pred_region
        // Predicated region
        $region37: #{pnet_forward.1} parent=35 // pred_check
          %p260 = pneg %p41
        $region38: #{pnet_forward.1} parent=35 // pred_check_branch
          %262 = sbr.rel (%p260) target = $region40
        $region39: #{pnet_forward.1} parent=35 // pred_region
          %s263 = sand.u32 %s31, 1
          %s264 = scalar_lea.sflag [#allocation5], %s263
          %s265 = sand.u32 %s31, 1
          %s266 = smul.addr %s265, 272
          %s267 = scalar_lea.vmem [#allocation4], %s266
          %s268 = smul.u32 34, %s21
          %s270 = ssub.s32 4352, 4352
          %271 = vsyncadd %s264, %s270
          %s272 = smul.addr %s268, 128
          %s273 = scalar_lea.hbm %s0, %s272
          %s274 = sshll.u32 %s267, 4
          %s275 = int_to_ptr.vmem [resolvable:$true] %s274
          %280 = dma.hbm_to_vmem [thread:$0]  %s273, 4352, %s275, %s264, 128, 128, 8
        $region40: #{pnet_forward.1} parent=35 // pred_fallthru
          _
      $region36: #{pnet_forward.1} parent=5 // pred_fallthru
        _
      %p281 = scmp.le.s32.totalorder 1, %s21
      %p282 = scmp.lt.s32.totalorder %s21, 3
      %p283 = pnand %p281, %p282
      %p284 = pneg %p283
      // Predicated region
      $region41: #{pnet_forward.1} parent=5 // pred_check
        _
      $region42: #{pnet_forward.1} parent=5 // pred_check_branch
        %286 = sbr.rel (%p283) target = $region44
      $region43: #{pnet_forward.1} parent=5 // pred_region
        %s287 = ssub.s32 %s21, 1
        %s288 = sand.u32 %s34, 1
        %s289 = scalar_lea.sflag [#allocation5], %s288
        %s290 = sand.u32 %s34, 1
        %s291 = smul.addr %s290, 272
        %s292 = scalar_lea.vmem [#allocation4], %s291
        // Predicated region
        $region45: #{pnet_forward.1} parent=43 // pred_check
          %p293 = pneg %p47
        $region46: #{pnet_forward.1} parent=43 // pred_check_branch
          %295 = sbr.rel (%p293) target = $region48
        $region47: #{pnet_forward.1} parent=43 // pred_region
          %296 = dma.done %s289, 4352
        $region48: #{pnet_forward.1} parent=43 // pred_fallthru
          _
        // Predicated region
        $region49: #{pnet_forward.1} parent=43 // pred_check
          %p297 = pneg %p68
        $region50: #{pnet_forward.1} parent=43 // pred_check_branch
          %299 = sbr.rel (%p297) target = $region52
        $region51: #{pnet_forward.1} parent=43 // pred_region
          %300 = dma.done [#allocation8], 1152
        $region52: #{pnet_forward.1} parent=43 // pred_fallthru
          _
        // Predicated region
        $region53: #{pnet_forward.1} parent=43 // pred_check
          %p301 = pneg %p89
        $region54: #{pnet_forward.1} parent=43 // pred_check_branch
          %303 = sbr.rel (%p301) target = $region56
        $region55: #{pnet_forward.1} parent=43 // pred_region
          %304 = dma.done [#allocation8], 9216
        $region56: #{pnet_forward.1} parent=43 // pred_fallthru
          _
        // Predicated region
        $region57: #{pnet_forward.1} parent=43 // pred_check
          %p305 = pneg %p110
        $region58: #{pnet_forward.1} parent=43 // pred_check_branch
          %307 = sbr.rel (%p305) target = $region60
        $region59: #{pnet_forward.1} parent=43 // pred_region
          %308 = dma.done [#allocation11], 9216
        $region60: #{pnet_forward.1} parent=43 // pred_fallthru
          _
        // Predicated region
        $region61: #{pnet_forward.1} parent=43 // pred_check
          %p309 = pneg %p131
        $region62: #{pnet_forward.1} parent=43 // pred_check_branch
          %311 = sbr.rel (%p309) target = $region64
        $region63: #{pnet_forward.1} parent=43 // pred_region
          %312 = dma.done [#allocation11], 64
        $region64: #{pnet_forward.1} parent=43 // pred_fallthru
          _
        // Predicated region
        $region65: #{pnet_forward.1} parent=43 // pred_check
          %p313 = pneg %p152
        $region66: #{pnet_forward.1} parent=43 // pred_check_branch
          %315 = sbr.rel (%p313) target = $region68
        $region67: #{pnet_forward.1} parent=43 // pred_region
          %316 = dma.done [#allocation14], 256
        $region68: #{pnet_forward.1} parent=43 // pred_fallthru
          _
        %s317 = sand.u32 %s34, 1
        %s318 = scalar_lea.sflag [#allocation5], %s317
        %s319 = sand.u32 %s34, 1
        %s320 = smul.addr %s319, 272
        %s321 = scalar_lea.vmem [#allocation4], %s320
        %p322 = pneg %p47
        %p323 = pneg %p44
        %p324 = pneg %p68
        %p325 = pneg %p65
        %p326 = pneg %p89
        %p327 = pneg %p86
        %p328 = pneg %p110
        %p329 = pneg %p107
        %p330 = pneg %p131
        %p331 = pneg %p128
        %p332 = pneg %p152
        %p333 = pneg %p149
        %p334 = pneg %p178
        %p335 = pneg %p175
        %s336 = sand.u32 %s165, 1
        %s337 = scalar_lea.sflag [#allocation6], %s336
        %s338 = sand.u32 %s165, 1
        %s339 = smul.addr %s338, 8
        %s340 = scalar_lea.vmem [#allocation15], %s339
        %s341 = smul.u32 34, %s26
        %343 = vst [vmem:[#allocation2 + $0x38] sm:$0xff] 0.0
        %344 = vst [vmem:[#allocation3 + $0x28] sm:$0xff] 0.0
        %345 = vst [vmem:[#allocation3 + $0x30] sm:$0xff] 0.0
        %346 = vst [vmem:[#allocation3 + $0x38] sm:$0xff] 0.0
        %347 = vst [vmem:[#allocation3 + $0x40] sm:$0xff] 0.0
        %348 = vst [vmem:[#allocation3 + $0x48] sm:$0xff] 0.0
        %349 = vst [vmem:[#allocation3 + $0x50] sm:$0xff] 0.0
        %350 = vst [vmem:[#allocation3 + $0x58] sm:$0xff] 0.0
        %351 = vst [vmem:[#allocation3 + $0x60] sm:$0xff] 0.0
        %352 = vst [vmem:[#allocation3 + $0x68] sm:$0xff] 0.0
        %353 = vst [vmem:[#allocation3 + $0x70] sm:$0xff] 0.0
        %354 = vst [vmem:[#allocation3 + $0x78] sm:$0xff] 0.0
        %355 = vst [vmem:[#allocation3 + $0x80] sm:$0xff] 0.0
        %356 = vst [vmem:[#allocation3 + $0x88] sm:$0xff] 0.0
        %357 = vst [vmem:[#allocation3 + $0x90] sm:$0xff] 0.0
        %v358 = vld [vmem:[%s292] sm:$0xff]
        %v359 = vld [vmem:[%s292 + $0x8] sm:$0xff]
        %v360 = vld [vmem:[%s292 + $0x10] sm:$0xff]
        %v361 = vld [vmem:[%s292 + $0x18] sm:$0xff]
        %v362 = vld [vmem:[%s292 + $0x20] sm:$0xff]
        %v363 = vld [vmem:[%s292 + $0x28] sm:$0xff]
        %v364 = vld [vmem:[%s292 + $0x30] sm:$0xff]
        %v365 = vld [vmem:[%s292 + $0x38] sm:$0xff]
        %v366 = vld [vmem:[%s292 + $0x40] sm:$0xff]
        %v367 = vld [vmem:[%s292 + $0x48] sm:$0xff]
        %v368 = vld [vmem:[%s292 + $0x50] sm:$0xff]
        %v369 = vld [vmem:[%s292 + $0x58] sm:$0xff]
        %v370 = vld [vmem:[%s292 + $0x60] sm:$0xff]
        %v371 = vld [vmem:[%s292 + $0x68] sm:$0xff]
        %v372 = vld [vmem:[%s292 + $0x70] sm:$0xff]
        %v373 = vld [vmem:[%s292 + $0x78] sm:$0xff]
        %v374 = vld [vmem:[%s292 + $0x80] sm:$0xff]
        %v375 = vld [vmem:[%s292 + $0x88] sm:$0xff]
        %v376 = vld [vmem:[%s292 + $0x90] sm:$0xff]
        %v377 = vld [vmem:[%s292 + $0x98] sm:$0xff]
        %v378 = vld [vmem:[%s292 + $0xa0] sm:$0xff]
        %v379 = vld [vmem:[%s292 + $0xa8] sm:$0xff]
        %v380 = vld [vmem:[%s292 + $0xb0] sm:$0xff]
        %v381 = vld [vmem:[%s292 + $0xb8] sm:$0xff]
        %v382 = vld [vmem:[%s292 + $0xc0] sm:$0xff]
        %v383 = vld [vmem:[%s292 + $0xc8] sm:$0xff]
        %v384 = vld [vmem:[%s292 + $0xd0] sm:$0xff]
        %v385 = vld [vmem:[%s292 + $0xd8] sm:$0xff]
        %v386 = vpack.c.bf16 %v359, %v358
        %v387 = vpack.c.bf16 %v361, %v360
        %v388 = vpack.c.bf16 %v363, %v362
        %v389 = vpack.c.bf16 %v365, %v364
        %v390 = vpack.c.bf16 %v367, %v366
        %v391 = vpack.c.bf16 %v369, %v368
        %v392 = vpack.c.bf16 %v371, %v370
        %v393 = vpack.c.bf16 %v373, %v372
        %v394 = vpack.c.bf16 %v375, %v374
        %v395 = vpack.c.bf16 %v377, %v376
        %v396 = vpack.c.bf16 %v379, %v378
        %v397 = vpack.c.bf16 %v381, %v380
        %v398 = vpack.c.bf16 %v383, %v382
        %v399 = vpack.c.bf16 %v385, %v384
        %v400 = vld [vmem:[#allocation7] sm:$0xf]
        %v401 = vld [vmem:[#allocation7 + $0x4] sm:$0xf]
        %v402 = vld [vmem:[%s292 + $0x1] sm:$0xff]
        %v403 = vld [vmem:[%s292 + $0x9] sm:$0xff]
        %v404 = vld [vmem:[%s292 + $0x11] sm:$0xff]
        %v405 = vld [vmem:[%s292 + $0x19] sm:$0xff]
        %v406 = vld [vmem:[%s292 + $0x21] sm:$0xff]
        %v407 = vld [vmem:[%s292 + $0x29] sm:$0xff]
        %v408 = vld [vmem:[%s292 + $0x31] sm:$0xff]
        %v409 = vld [vmem:[%s292 + $0x39] sm:$0xff]
        %v410 = vld [vmem:[%s292 + $0x41] sm:$0xff]
        %v411 = vld [vmem:[%s292 + $0x49] sm:$0xff]
        %v412 = vld [vmem:[%s292 + $0x51] sm:$0xff]
        %v413 = vld [vmem:[%s292 + $0x59] sm:$0xff]
        %v414 = vld [vmem:[%s292 + $0x61] sm:$0xff]
        %v415 = vld [vmem:[%s292 + $0x69] sm:$0xff]
        %v416 = vld [vmem:[%s292 + $0x71] sm:$0xff]
        %v417 = vld [vmem:[%s292 + $0x79] sm:$0xff]
        %v418 = vld [vmem:[%s292 + $0x81] sm:$0xff]
        %v419 = vld [vmem:[%s292 + $0x89] sm:$0xff]
        %v420 = vld [vmem:[%s292 + $0x91] sm:$0xff]
        %v421 = vld [vmem:[%s292 + $0x99] sm:$0xff]
        %v422 = vld [vmem:[%s292 + $0xa1] sm:$0xff]
        %v423 = vld [vmem:[%s292 + $0xa9] sm:$0xff]
        %v424 = vld [vmem:[%s292 + $0xb1] sm:$0xff]
        %v425 = vld [vmem:[%s292 + $0xb9] sm:$0xff]
        %v426 = vld [vmem:[%s292 + $0xc1] sm:$0xff]
        %v427 = vld [vmem:[%s292 + $0xc9] sm:$0xff]
        %v428 = vld [vmem:[%s292 + $0xd1] sm:$0xff]
        %v429 = vld [vmem:[%s292 + $0xd9] sm:$0xff]
        %v430 = vpack.c.bf16 %v403, %v402
        %v431 = vpack.c.bf16 %v405, %v404
        %v432 = vpack.c.bf16 %v407, %v406
        %v433 = vpack.c.bf16 %v409, %v408
        %v434 = vpack.c.bf16 %v411, %v410
        %v435 = vpack.c.bf16 %v413, %v412
        %v436 = vpack.c.bf16 %v415, %v414
        %v437 = vpack.c.bf16 %v417, %v416
        %v438 = vpack.c.bf16 %v419, %v418
        %v439 = vpack.c.bf16 %v421, %v420
        %v440 = vpack.c.bf16 %v423, %v422
        %v441 = vpack.c.bf16 %v425, %v424
        %v442 = vpack.c.bf16 %v427, %v426
        %v443 = vpack.c.bf16 %v429, %v428
        %s444 = scalar_lea.vmem [#allocation7], 8
        %v445 = vld [vmem:[%s444] sm:$0xf]
        %v446 = vld [vmem:[%s444 + $0x4] sm:$0xf]
        %v449 = vunpack.c.l.b16 %v445
        %v450 = vunpack.c.l.b16 %v446
        %v451 = vpack.c.b16 %v450, %v449
        %vm453 = vcmask 130048
        %v455 = vsel %vm453, %v430, 0
        %v458 = vsel %vm453, %v431, 0
        %v461 = vsel %vm453, %v432, 0
        %v464 = vsel %vm453, %v433, 0
        %v467 = vsel %vm453, %v434, 0
        %v470 = vsel %vm453, %v435, 0
        %v473 = vsel %vm453, %v436, 0
        %v476 = vsel %vm453, %v437, 0
        %v479 = vsel %vm453, %v438, 0
        %v482 = vsel %vm453, %v439, 0
        %v485 = vsel %vm453, %v440, 0
        %v488 = vsel %vm453, %v441, 0
        %v491 = vsel %vm453, %v442, 0
        %v494 = vsel %vm453, %v443, 0
        %496 = vmatprep.subr.bf16.mxu0 0
        %497 = vmatpush1.bf16.msra.mxu0 %v451
        %498 = vmatprep.subr.bf16.mxu0 0
        %499 = vmatpush1.bf16.msra.mxu0 0
        %500 = vmatprep.subr.bf16.mxu0 0
        %501 = vmatpush1.bf16.msra.mxu0 0
        %502 = vmatprep.subr.bf16.mxu0 0
        %503 = vmatpush1.bf16.msra.mxu0 0
        %504 = vmatprep.subr.bf16.mxu0 0
        %505 = vmatpush1.bf16.msra.mxu0 0
        %506 = vmatprep.subr.bf16.mxu0 0
        %507 = vmatpush1.bf16.msra.mxu0 0
        %508 = vmatprep.subr.bf16.mxu0 0
        %509 = vmatpush1.bf16.msra.mxu0 0
        %510 = vmatprep.subr.bf16.mxu0 0
        %511 = vmatpush1.bf16.msra.mxu0 0
        %512 = vmatprep.subr.bf16.mxu0 0
        %513 = vmatpush1.bf16.msra.mxu0 0
        %514 = vmatprep.subr.bf16.mxu0 0
        %515 = vmatpush1.bf16.msra.mxu0 0
        %516 = vmatprep.subr.bf16.mxu0 0
        %517 = vmatpush1.bf16.msra.mxu0 0
        %518 = vmatprep.subr.bf16.mxu0 0
        %519 = vmatpush1.bf16.msra.mxu0 0
        %520 = vmatprep.subr.bf16.mxu0 0
        %521 = vmatpush1.bf16.msra.mxu0 0
        %522 = vmatprep.subr.bf16.mxu0 0
        %523 = vmatpush1.bf16.msra.mxu0 0
        %524 = vmatprep.subr.bf16.mxu0 0
        %525 = vmatpush1.bf16.msra.mxu0 0
        %526 = vmatprep.subr.bf16.mxu0 0
        %527 = vmatpush1.bf16.msra.mxu0 0
        %528 = vmatprep.mubr.bf16.mxu0 0
        %529 = vmatmul.mubr.bf16.gmra.mrb[0].mxu0 %v455
        %v530 = vpop.f32.mrb[0].mxu0
        %v531 = vadd.f32 0.0, %v530
        %v532 = vpop.f32.mrb[0].mxu0
        %v533 = vpop.f32.mrb[0].mxu0
        %v534 = vadd.f32 0.0, %v533
        %v535 = vpop.f32.mrb[0].mxu0
        %536 = vmatprep.mubr.bf16.mxu0 0
        %537 = vmatmul.mubr.bf16.gmra.mrb[0].mxu0 %v458
        %v538 = vpop.f32.mrb[0].mxu0
        %v539 = vadd.f32 0.0, %v538
        %v540 = vpop.f32.mrb[0].mxu0
        %v541 = vpop.f32.mrb[0].mxu0
        %v542 = vadd.f32 0.0, %v541
        %v543 = vpop.f32.mrb[0].mxu0
        %544 = vmatprep.mubr.bf16.mxu0 0
        %545 = vmatmul.mubr.bf16.gmra.mrb[0].mxu0 %v461
        %v546 = vpop.f32.mrb[0].mxu0
        %v547 = vadd.f32 0.0, %v546
        %v548 = vpop.f32.mrb[0].mxu0
        %v549 = vpop.f32.mrb[0].mxu0
        %v550 = vadd.f32 0.0, %v549
        %v551 = vpop.f32.mrb[0].mxu0
        %552 = vmatprep.mubr.bf16.mxu0 0
        %553 = vmatmul.mubr.bf16.gmra.mrb[0].mxu0 %v464
        %v554 = vpop.f32.mrb[0].mxu0
        %v555 = vadd.f32 0.0, %v554
        %v556 = vpop.f32.mrb[0].mxu0
        %v557 = vpop.f32.mrb[0].mxu0
        %v558 = vadd.f32 0.0, %v557
        %v559 = vpop.f32.mrb[0].mxu0
        %560 = vmatprep.mubr.bf16.mxu0 0
        %561 = vmatmul.mubr.bf16.gmra.mrb[0].mxu0 %v467
        %v562 = vpop.f32.mrb[0].mxu0
        %v563 = vadd.f32 0.0, %v562
        %v564 = vpop.f32.mrb[0].mxu0
        %v565 = vpop.f32.mrb[0].mxu0
        %v566 = vadd.f32 0.0, %v565
        %v567 = vpop.f32.mrb[0].mxu0
        %568 = vmatprep.mubr.bf16.mxu0 0
        %569 = vmatmul.mubr.bf16.gmra.mrb[0].mxu0 %v470
        %v570 = vpop.f32.mrb[0].mxu0
        %v571 = vadd.f32 0.0, %v570
        %v572 = vpop.f32.mrb[0].mxu0
        %v573 = vpop.f32.mrb[0].mxu0
        %v574 = vadd.f32 0.0, %v573
        %v575 = vpop.f32.mrb[0].mxu0
        %576 = vmatprep.mubr.bf16.mxu0 0
        %577 = vmatmul.mubr.bf16.gmra.mrb[0].mxu0 %v473
        %v578 = vpop.f32.mrb[0].mxu0
        %v579 = vadd.f32 0.0, %v578
        %v580 = vpop.f32.mrb[0].mxu0
        %v581 = vpop.f32.mrb[0].mxu0
        %v582 = vadd.f32 0.0, %v581
        %v583 = vpop.f32.mrb[0].mxu0
        %584 = vmatprep.mubr.bf16.mxu0 0
        %585 = vmatmul.mubr.bf16.gmra.mrb[0].mxu0 %v476
        %v586 = vpop.f32.mrb[0].mxu0
        %v587 = vadd.f32 0.0, %v586
        %v588 = vpop.f32.mrb[0].mxu0
        %v589 = vpop.f32.mrb[0].mxu0
        %v590 = vadd.f32 0.0, %v589
        %v591 = vpop.f32.mrb[0].mxu0
        %592 = vmatprep.mubr.bf16.mxu0 0
        %593 = vmatmul.mubr.bf16.gmra.mrb[0].mxu0 %v479
        %v594 = vpop.f32.mrb[0].mxu0
        %v595 = vadd.f32 0.0, %v594
        %v596 = vpop.f32.mrb[0].mxu0
        %v597 = vpop.f32.mrb[0].mxu0
        %v598 = vadd.f32 0.0, %v597
        %v599 = vpop.f32.mrb[0].mxu0
        %600 = vmatprep.mubr.bf16.mxu0 0
        %601 = vmatmul.mubr.bf16.gmra.mrb[0].mxu0 %v482
        %v602 = vpop.f32.mrb[0].mxu0
        %v603 = vadd.f32 0.0, %v602
        %v604 = vpop.f32.mrb[0].mxu0
        %v605 = vpop.f32.mrb[0].mxu0
        %v606 = vadd.f32 0.0, %v605
        %v607 = vpop.f32.mrb[0].mxu0
        %608 = vmatprep.mubr.bf16.mxu0 0
        %609 = vmatmul.mubr.bf16.gmra.mrb[0].mxu0 %v485
        %v610 = vpop.f32.mrb[0].mxu0
        %v611 = vadd.f32 0.0, %v610
        %v612 = vpop.f32.mrb[0].mxu0
        %v613 = vpop.f32.mrb[0].mxu0
        %v614 = vadd.f32 0.0, %v613
        %v615 = vpop.f32.mrb[0].mxu0
        %616 = vmatprep.mubr.bf16.mxu0 0
        %617 = vmatmul.mubr.bf16.gmra.mrb[0].mxu0 %v488
        %v618 = vpop.f32.mrb[0].mxu0
        %v619 = vadd.f32 0.0, %v618
        %v620 = vpop.f32.mrb[0].mxu0
        %v621 = vpop.f32.mrb[0].mxu0
        %v622 = vadd.f32 0.0, %v621
        %v623 = vpop.f32.mrb[0].mxu0
        %624 = vmatprep.mubr.bf16.mxu0 0
        %625 = vmatmul.mubr.bf16.gmra.mrb[0].mxu0 %v491
        %v626 = vpop.f32.mrb[0].mxu0
        %v627 = vadd.f32 0.0, %v626
        %v628 = vpop.f32.mrb[0].mxu0
        %v629 = vpop.f32.mrb[0].mxu0
        %v630 = vadd.f32 0.0, %v629
        %v631 = vpop.f32.mrb[0].mxu0
        %632 = vmatprep.mubr.bf16.mxu0 0
        %633 = vmatmul.mubr.bf16.gmra.mrb[0].mxu0 %v494
        %v634 = vpop.f32.mrb[0].mxu0
        %v635 = vadd.f32 0.0, %v634
        %v636 = vpop.f32.mrb[0].mxu0
        %v637 = vpop.f32.mrb[0].mxu0
        %v638 = vadd.f32 0.0, %v637
        %v639 = vpop.f32.mrb[0].mxu0
        %640 = vdwg.mxu0
        %v643 = vunpack.c.l.b16 %v400
        %v644 = vunpack.c.l.b16 %v401
        %v645 = vpack.c.b16 %v644, %v643
        %v648 = vsel %vm453, %v386, 0
        %v651 = vsel %vm453, %v387, 0
        %v654 = vsel %vm453, %v388, 0
        %v657 = vsel %vm453, %v389, 0
        %v660 = vsel %vm453, %v390, 0
        %v663 = vsel %vm453, %v391, 0
        %v666 = vsel %vm453, %v392, 0
        %v669 = vsel %vm453, %v393, 0
        %v672 = vsel %vm453, %v394, 0
        %v675 = vsel %vm453, %v395, 0
        %v678 = vsel %vm453, %v396, 0
        %v681 = vsel %vm453, %v397, 0
        %v684 = vsel %vm453, %v398, 0
        %v687 = vsel %vm453, %v399, 0
        %689 = vmatprep.subr.bf16.mxu0 0
        %690 = vmatpush1.bf16.msra.mxu0 %v645
        %691 = vmatprep.subr.bf16.mxu0 0
        %692 = vmatpush1.bf16.msra.mxu0 0
        %693 = vmatprep.subr.bf16.mxu0 0
        %694 = vmatpush1.bf16.msra.mxu0 0
        %695 = vmatprep.subr.bf16.mxu0 0
        %696 = vmatpush1.bf16.msra.mxu0 0
        %697 = vmatprep.subr.bf16.mxu0 0
        %698 = vmatpush1.bf16.msra.mxu0 0
        %699 = vmatprep.subr.bf16.mxu0 0
        %700 = vmatpush1.bf16.msra.mxu0 0
        %701 = vmatprep.subr.bf16.mxu0 0
        %702 = vmatpush1.bf16.msra.mxu0 0
        %703 = vmatprep.subr.bf16.mxu0 0
        %704 = vmatpush1.bf16.msra.mxu0 0
        %705 = vmatprep.subr.bf16.mxu0 0
        %706 = vmatpush1.bf16.msra.mxu0 0
        %707 = vmatprep.subr.bf16.mxu0 0
        %708 = vmatpush1.bf16.msra.mxu0 0
        %709 = vmatprep.subr.bf16.mxu0 0
        %710 = vmatpush1.bf16.msra.mxu0 0
        %711 = vmatprep.subr.bf16.mxu0 0
        %712 = vmatpush1.bf16.msra.mxu0 0
        %713 = vmatprep.subr.bf16.mxu0 0
        %714 = vmatpush1.bf16.msra.mxu0 0
        %715 = vmatprep.subr.bf16.mxu0 0
        %716 = vmatpush1.bf16.msra.mxu0 0
        %717 = vmatprep.subr.bf16.mxu0 0
        %718 = vmatpush1.bf16.msra.mxu0 0
        %719 = vmatprep.subr.bf16.mxu0 0
        %720 = vmatpush1.bf16.msra.mxu0 0
        %721 = vmatprep.mubr.bf16.mxu0 0
        %722 = vmatmul.mubr.bf16.gmra.mrb[0].mxu0 %v648
        %v723 = vpop.f32.mrb[0].mxu0
        %v724 = vadd.f32 %v531, %v723
        %v725 = vpop.f32.mrb[0].mxu0
        %v726 = vpop.f32.mrb[0].mxu0
        %v727 = vadd.f32 %v534, %v726
        %v728 = vpop.f32.mrb[0].mxu0
        %729 = vmatprep.mubr.bf16.mxu0 0
        %730 = vmatmul.mubr.bf16.gmra.mrb[0].mxu0 %v651
        %v731 = vpop.f32.mrb[0].mxu0
        %v732 = vadd.f32 %v539, %v731
        %v733 = vpop.f32.mrb[0].mxu0
        %v734 = vpop.f32.mrb[0].mxu0
        %v735 = vadd.f32 %v542, %v734
        %v736 = vpop.f32.mrb[0].mxu0
        %737 = vmatprep.mubr.bf16.mxu0 0
        %738 = vmatmul.mubr.bf16.gmra.mrb[0].mxu0 %v654
        %v739 = vpop.f32.mrb[0].mxu0
        %v740 = vadd.f32 %v547, %v739
        %v741 = vpop.f32.mrb[0].mxu0
        %v742 = vpop.f32.mrb[0].mxu0
        %v743 = vadd.f32 %v550, %v742
        %v744 = vpop.f32.mrb[0].mxu0
        %745 = vmatprep.mubr.bf16.mxu0 0
        %746 = vmatmul.mubr.bf16.gmra.mrb[0].mxu0 %v657
        %v747 = vpop.f32.mrb[0].mxu0
        %v748 = vadd.f32 %v555, %v747
        %v749 = vpop.f32.mrb[0].mxu0
        %v750 = vpop.f32.mrb[0].mxu0
        %v751 = vadd.f32 %v558, %v750
        %v752 = vpop.f32.mrb[0].mxu0
        %753 = vmatprep.mubr.bf16.mxu0 0
        %754 = vmatmul.mubr.bf16.gmra.mrb[0].mxu0 %v660
        %v755 = vpop.f32.mrb[0].mxu0
        %v756 = vadd.f32 %v563, %v755
        %v757 = vpop.f32.mrb[0].mxu0
        %v758 = vpop.f32.mrb[0].mxu0
        %v759 = vadd.f32 %v566, %v758
        %v760 = vpop.f32.mrb[0].mxu0
        %761 = vmatprep.mubr.bf16.mxu0 0
        %762 = vmatmul.mubr.bf16.gmra.mrb[0].mxu0 %v663
        %v763 = vpop.f32.mrb[0].mxu0
        %v764 = vadd.f32 %v571, %v763
        %v765 = vpop.f32.mrb[0].mxu0
        %v766 = vpop.f32.mrb[0].mxu0
        %v767 = vadd.f32 %v574, %v766
        %v768 = vpop.f32.mrb[0].mxu0
        %769 = vmatprep.mubr.bf16.mxu0 0
        %770 = vmatmul.mubr.bf16.gmra.mrb[0].mxu0 %v666
        %v771 = vpop.f32.mrb[0].mxu0
        %v772 = vadd.f32 %v579, %v771
        %v773 = vpop.f32.mrb[0].mxu0
        %v774 = vpop.f32.mrb[0].mxu0
        %v775 = vadd.f32 %v582, %v774
        %v776 = vpop.f32.mrb[0].mxu0
        %777 = vmatprep.mubr.bf16.mxu0 0
        %778 = vmatmul.mubr.bf16.gmra.mrb[0].mxu0 %v669
        %v779 = vpop.f32.mrb[0].mxu0
        %v780 = vadd.f32 %v587, %v779
        %v781 = vpop.f32.mrb[0].mxu0
        %v782 = vpop.f32.mrb[0].mxu0
        %v783 = vadd.f32 %v590, %v782
        %v784 = vpop.f32.mrb[0].mxu0
        %785 = vmatprep.mubr.bf16.mxu0 0
        %786 = vmatmul.mubr.bf16.gmra.mrb[0].mxu0 %v672
        %v787 = vpop.f32.mrb[0].mxu0
        %v788 = vadd.f32 %v595, %v787
        %v789 = vpop.f32.mrb[0].mxu0
        %v790 = vpop.f32.mrb[0].mxu0
        %v791 = vadd.f32 %v598, %v790
        %v792 = vpop.f32.mrb[0].mxu0
        %793 = vmatprep.mubr.bf16.mxu0 0
        %794 = vmatmul.mubr.bf16.gmra.mrb[0].mxu0 %v675
        %v795 = vpop.f32.mrb[0].mxu0
        %v796 = vadd.f32 %v603, %v795
        %v797 = vpop.f32.mrb[0].mxu0
        %v798 = vpop.f32.mrb[0].mxu0
        %v799 = vadd.f32 %v606, %v798
        %v800 = vpop.f32.mrb[0].mxu0
        %801 = vmatprep.mubr.bf16.mxu0 0
        %802 = vmatmul.mubr.bf16.gmra.mrb[0].mxu0 %v678
        %v803 = vpop.f32.mrb[0].mxu0
        %v804 = vadd.f32 %v611, %v803
        %v805 = vpop.f32.mrb[0].mxu0
        %v806 = vpop.f32.mrb[0].mxu0
        %v807 = vadd.f32 %v614, %v806
        %v808 = vpop.f32.mrb[0].mxu0
        %809 = vmatprep.mubr.bf16.mxu0 0
        %810 = vmatmul.mubr.bf16.gmra.mrb[0].mxu0 %v681
        %v811 = vpop.f32.mrb[0].mxu0
        %v812 = vadd.f32 %v619, %v811
        %v813 = vpop.f32.mrb[0].mxu0
        %v814 = vpop.f32.mrb[0].mxu0
        %v815 = vadd.f32 %v622, %v814
        %v816 = vpop.f32.mrb[0].mxu0
        %817 = vmatprep.mubr.bf16.mxu0 0
        %818 = vmatmul.mubr.bf16.gmra.mrb[0].mxu0 %v684
        %v819 = vpop.f32.mrb[0].mxu0
        %v820 = vadd.f32 %v627, %v819
        %v821 = vpop.f32.mrb[0].mxu0
        %v822 = vpop.f32.mrb[0].mxu0
        %v823 = vadd.f32 %v630, %v822
        %v824 = vpop.f32.mrb[0].mxu0
        %825 = vmatprep.mubr.bf16.mxu0 0
        %826 = vmatmul.mubr.bf16.gmra.mrb[0].mxu0 %v687
        %v827 = vpop.f32.mrb[0].mxu0
        %v828 = vadd.f32 %v635, %v827
        %v829 = vpop.f32.mrb[0].mxu0
        %v830 = vpop.f32.mrb[0].mxu0
        %v831 = vadd.f32 %v638, %v830
        %v832 = vpop.f32.mrb[0].mxu0
        %833 = vdwg.mxu0
        %v834 = vld [vmem:[%s292 + $0x2] sm:$0xff]
        %v835 = vld [vmem:[%s292 + $0xa] sm:$0xff]
        %v836 = vld [vmem:[%s292 + $0x12] sm:$0xff]
        %v837 = vld [vmem:[%s292 + $0x1a] sm:$0xff]
        %v838 = vld [vmem:[%s292 + $0x22] sm:$0xff]
        %v839 = vld [vmem:[%s292 + $0x2a] sm:$0xff]
        %v840 = vld [vmem:[%s292 + $0x32] sm:$0xff]
        %v841 = vld [vmem:[%s292 + $0x3a] sm:$0xff]
        %v842 = vld [vmem:[%s292 + $0x42] sm:$0xff]
        %v843 = vld [vmem:[%s292 + $0x4a] sm:$0xff]
        %v844 = vld [vmem:[%s292 + $0x52] sm:$0xff]
        %v845 = vld [vmem:[%s292 + $0x5a] sm:$0xff]
        %v846 = vld [vmem:[%s292 + $0x62] sm:$0xff]
        %v847 = vld [vmem:[%s292 + $0x6a] sm:$0xff]
        %v848 = vld [vmem:[%s292 + $0x72] sm:$0xff]
        %v849 = vld [vmem:[%s292 + $0x7a] sm:$0xff]
        %v850 = vld [vmem:[%s292 + $0x82] sm:$0xff]
        %v851 = vld [vmem:[%s292 + $0x8a] sm:$0xff]
        %v852 = vld [vmem:[%s292 + $0x92] sm:$0xff]
        %v853 = vld [vmem:[%s292 + $0x9a] sm:$0xff]
        %v854 = vld [vmem:[%s292 + $0xa2] sm:$0xff]
        %v855 = vld [vmem:[%s292 + $0xaa] sm:$0xff]
        %v856 = vld [vmem:[%s292 + $0xb2] sm:$0xff]
        %v857 = vld [vmem:[%s292 + $0xba] sm:$0xff]
        %v858 = vld [vmem:[%s292 + $0xc2] sm:$0xff]
        %v859 = vld [vmem:[%s292 + $0xca] sm:$0xff]
        %v860 = vld [vmem:[%s292 + $0xd2] sm:$0xff]
        %v861 = vld [vmem:[%s292 + $0xda] sm:$0xff]
        %v862 = vpack.c.bf16 %v835, %v834
        %v863 = vpack.c.bf16 %v837, %v836
        %v864 = vpack.c.bf16 %v839, %v838
        %v865 = vpack.c.bf16 %v841, %v840
        %v866 = vpack.c.bf16 %v843, %v842
        %v867 = vpack.c.bf16 %v845, %v844
        %v868 = vpack.c.bf16 %v847, %v846
        %v869 = vpack.c.bf16 %v849, %v848
        %v870 = vpack.c.bf16 %v851, %v850
        %v871 = vpack.c.bf16 %v853, %v852
        %v872 = vpack.c.bf16 %v855, %v854
        %v873 = vpack.c.bf16 %v857, %v856
        %v874 = vpack.c.bf16 %v859, %v858
        %v875 = vpack.c.bf16 %v861, %v860
        %s876 = scalar_lea.vmem [#allocation7], 16
        %v877 = vld [vmem:[%s876] sm:$0xf]
        %v878 = vld [vmem:[%s876 + $0x4] sm:$0xf]
        %v881 = vunpack.c.l.b16 %v877
        %v882 = vunpack.c.l.b16 %v878
        %v883 = vpack.c.b16 %v882, %v881
        %v886 = vsel %vm453, %v862, 0
        %v889 = vsel %vm453, %v863, 0
        %v892 = vsel %vm453, %v864, 0
        %v895 = vsel %vm453, %v865, 0
        %v898 = vsel %vm453, %v866, 0
        %v901 = vsel %vm453, %v867, 0
        %v904 = vsel %vm453, %v868, 0
        %v907 = vsel %vm453, %v869, 0
        %v910 = vsel %vm453, %v870, 0
        %v913 = vsel %vm453, %v871, 0
        %v916 = vsel %vm453, %v872, 0
        %v919 = vsel %vm453, %v873, 0
        %v922 = vsel %vm453, %v874, 0
        %v925 = vsel %vm453, %v875, 0
        %927 = vmatprep.subr.bf16.mxu0 0
        %928 = vmatpush1.bf16.msra.mxu0 %v883
        %929 = vmatprep.subr.bf16.mxu0 0
        %930 = vmatpush1.bf16.msra.mxu0 0
        %931 = vmatprep.subr.bf16.mxu0 0
        %932 = vmatpush1.bf16.msra.mxu0 0
        %933 = vmatprep.subr.bf16.mxu0 0
        %934 = vmatpush1.bf16.msra.mxu0 0
        %935 = vmatprep.subr.bf16.mxu0 0
        %936 = vmatpush1.bf16.msra.mxu0 0
        %937 = vmatprep.subr.bf16.mxu0 0
        %938 = vmatpush1.bf16.msra.mxu0 0
        %939 = vmatprep.subr.bf16.mxu0 0
        %940 = vmatpush1.bf16.msra.mxu0 0
        %941 = vmatprep.subr.bf16.mxu0 0
        %942 = vmatpush1.bf16.msra.mxu0 0
        %943 = vmatprep.subr.bf16.mxu0 0
        %944 = vmatpush1.bf16.msra.mxu0 0
        %945 = vmatprep.subr.bf16.mxu0 0
        %946 = vmatpush1.bf16.msra.mxu0 0
        %947 = vmatprep.subr.bf16.mxu0 0
        %948 = vmatpush1.bf16.msra.mxu0 0
        %949 = vmatprep.subr.bf16.mxu0 0
        %950 = vmatpush1.bf16.msra.mxu0 0
        %951 = vmatprep.subr.bf16.mxu0 0
        %952 = vmatpush1.bf16.msra.mxu0 0
        %953 = vmatprep.subr.bf16.mxu0 0
        %954 = vmatpush1.bf16.msra.mxu0 0
        %955 = vmatprep.subr.bf16.mxu0 0
        %956 = vmatpush1.bf16.msra.mxu0 0
        %957 = vmatprep.subr.bf16.mxu0 0
        %958 = vmatpush1.bf16.msra.mxu0 0
        %959 = vmatprep.mubr.bf16.mxu0 0
        %960 = vmatmul.mubr.bf16.gmra.mrb[0].mxu0 %v886
        %v961 = vpop.f32.mrb[0].mxu0
        %v962 = vadd.f32 0.0, %v961
        %v963 = vpop.f32.mrb[0].mxu0
        %v964 = vpop.f32.mrb[0].mxu0
        %v965 = vadd.f32 0.0, %v964
        %v966 = vpop.f32.mrb[0].mxu0
        %967 = vmatprep.mubr.bf16.mxu0 0
        %968 = vmatmul.mubr.bf16.gmra.mrb[0].mxu0 %v889
        %v969 = vpop.f32.mrb[0].mxu0
        %v970 = vadd.f32 0.0, %v969
        %v971 = vpop.f32.mrb[0].mxu0
        %v972 = vpop.f32.mrb[0].mxu0
        %v973 = vadd.f32 0.0, %v972
        %v974 = vpop.f32.mrb[0].mxu0
        %975 = vmatprep.mubr.bf16.mxu0 0
        %976 = vmatmul.mubr.bf16.gmra.mrb[0].mxu0 %v892
        %v977 = vpop.f32.mrb[0].mxu0
        %v978 = vadd.f32 0.0, %v977
        %v979 = vpop.f32.mrb[0].mxu0
        %v980 = vpop.f32.mrb[0].mxu0
        %v981 = vadd.f32 0.0, %v980
        %v982 = vpop.f32.mrb[0].mxu0
        %983 = vmatprep.mubr.bf16.mxu0 0
        %984 = vmatmul.mubr.bf16.gmra.mrb[0].mxu0 %v895
        %v985 = vpop.f32.mrb[0].mxu0
        %v986 = vadd.f32 0.0, %v985
        %v987 = vpop.f32.mrb[0].mxu0
        %v988 = vpop.f32.mrb[0].mxu0
        %v989 = vadd.f32 0.0, %v988
        %v990 = vpop.f32.mrb[0].mxu0
        %991 = vmatprep.mubr.bf16.mxu0 0
        %992 = vmatmul.mubr.bf16.gmra.mrb[0].mxu0 %v898
        %v993 = vpop.f32.mrb[0].mxu0
        %v994 = vadd.f32 0.0, %v993
        %v995 = vpop.f32.mrb[0].mxu0
        %v996 = vpop.f32.mrb[0].mxu0
        %v997 = vadd.f32 0.0, %v996
        %v998 = vpop.f32.mrb[0].mxu0
        %999 = vmatprep.mubr.bf16.mxu0 0
        %1000 = vmatmul.mubr.bf16.gmra.mrb[0].mxu0 %v901
        %v1001 = vpop.f32.mrb[0].mxu0
        %v1002 = vadd.f32 0.0, %v1001
        %v1003 = vpop.f32.mrb[0].mxu0
        %v1004 = vpop.f32.mrb[0].mxu0
        %v1005 = vadd.f32 0.0, %v1004
        %v1006 = vpop.f32.mrb[0].mxu0
        %1007 = vmatprep.mubr.bf16.mxu0 0
        %1008 = vmatmul.mubr.bf16.gmra.mrb[0].mxu0 %v904
        %v1009 = vpop.f32.mrb[0].mxu0
        %v1010 = vadd.f32 0.0, %v1009
        %v1011 = vpop.f32.mrb[0].mxu0
        %v1012 = vpop.f32.mrb[0].mxu0
        %v1013 = vadd.f32 0.0, %v1012
        %v1014 = vpop.f32.mrb[0].mxu0
        %1015 = vmatprep.mubr.bf16.mxu0 0
        %1016 = vmatmul.mubr.bf16.gmra.mrb[0].mxu0 %v907
        %v1017 = vpop.f32.mrb[0].mxu0
        %v1018 = vadd.f32 0.0, %v1017
        %v1019 = vpop.f32.mrb[0].mxu0
        %v1020 = vpop.f32.mrb[0].mxu0
        %v1021 = vadd.f32 0.0, %v1020
        %v1022 = vpop.f32.mrb[0].mxu0
        %1023 = vmatprep.mubr.bf16.mxu0 0
        %1024 = vmatmul.mubr.bf16.gmra.mrb[0].mxu0 %v910
        %v1025 = vpop.f32.mrb[0].mxu0
        %v1026 = vadd.f32 0.0, %v1025
        %v1027 = vpop.f32.mrb[0].mxu0
        %v1028 = vpop.f32.mrb[0].mxu0
        %v1029 = vadd.f32 0.0, %v1028
        %v1030 = vpop.f32.mrb[0].mxu0
        %1031 = vmatprep.mubr.bf16.mxu0 0
        %1032 = vmatmul.mubr.bf16.gmra.mrb[0].mxu0 %v913
        %v1033 = vpop.f32.mrb[0].mxu0
        %v1034 = vadd.f32 0.0, %v1033
        %v1035 = vpop.f32.mrb[0].mxu0
        %v1036 = vpop.f32.mrb[0].mxu0
        %v1037 = vadd.f32 0.0, %v1036
        %v1038 = vpop.f32.mrb[0].mxu0
        %1039 = vmatprep.mubr.bf16.mxu0 0
        %1040 = vmatmul.mubr.bf16.gmra.mrb[0].mxu0 %v916
        %v1041 = vpop.f32.mrb[0].mxu0
        %v1042 = vadd.f32 0.0, %v1041
        %v1043 = vpop.f32.mrb[0].mxu0
        %v1044 = vpop.f32.mrb[0].mxu0
        %v1045 = vadd.f32 0.0, %v1044
        %v1046 = vpop.f32.mrb[0].mxu0
        %1047 = vmatprep.mubr.bf16.mxu0 0
        %1048 = vmatmul.mubr.bf16.gmra.mrb[0].mxu0 %v919
        %v1049 = vpop.f32.mrb[0].mxu0
        %v1050 = vadd.f32 0.0, %v1049
        %v1051 = vpop.f32.mrb[0].mxu0
        %v1052 = vpop.f32.mrb[0].mxu0
        %v1053 = vadd.f32 0.0, %v1052
        %v1054 = vpop.f32.mrb[0].mxu0
        %1055 = vmatprep.mubr.bf16.mxu0 0
        %1056 = vmatmul.mubr.bf16.gmra.mrb[0].mxu0 %v922
        %v1057 = vpop.f32.mrb[0].mxu0
        %v1058 = vadd.f32 0.0, %v1057
        %v1059 = vpop.f32.mrb[0].mxu0
        %v1060 = vpop.f32.mrb[0].mxu0
        %v1061 = vadd.f32 0.0, %v1060
        %v1062 = vpop.f32.mrb[0].mxu0
        %1063 = vmatprep.mubr.bf16.mxu0 0
        %1064 = vmatmul.mubr.bf16.gmra.mrb[0].mxu0 %v925
        %v1065 = vpop.f32.mrb[0].mxu0
        %v1066 = vadd.f32 0.0, %v1065
        %v1067 = vpop.f32.mrb[0].mxu0
        %v1068 = vpop.f32.mrb[0].mxu0
        %v1069 = vadd.f32 0.0, %v1068
        %v1070 = vpop.f32.mrb[0].mxu0
        %1071 = vdwg.mxu0
        %v1072 = vadd.f32 %v724, %v962
        %v1073 = vadd.f32 %v727, %v965
        %v1074 = vadd.f32 %v732, %v970
        %v1075 = vadd.f32 %v735, %v973
        %v1076 = vadd.f32 %v740, %v978
        %v1077 = vadd.f32 %v743, %v981
        %v1078 = vadd.f32 %v748, %v986
        %v1079 = vadd.f32 %v751, %v989
        %v1080 = vadd.f32 %v756, %v994
        %v1081 = vadd.f32 %v759, %v997
        %v1082 = vadd.f32 %v764, %v1002
        %v1083 = vadd.f32 %v767, %v1005
        %v1084 = vadd.f32 %v772, %v1010
        %v1085 = vadd.f32 %v775, %v1013
        %v1086 = vadd.f32 %v780, %v1018
        %v1087 = vadd.f32 %v783, %v1021
        %v1088 = vadd.f32 %v788, %v1026
        %v1089 = vadd.f32 %v791, %v1029
        %v1090 = vadd.f32 %v796, %v1034
        %v1091 = vadd.f32 %v799, %v1037
        %v1092 = vadd.f32 %v804, %v1042
        %v1093 = vadd.f32 %v807, %v1045
        %v1094 = vadd.f32 %v812, %v1050
        %v1095 = vadd.f32 %v815, %v1053
        %v1096 = vadd.f32 %v820, %v1058
        %v1097 = vadd.f32 %v823, %v1061
        %v1098 = vadd.f32 %v828, %v1066
        %v1099 = vadd.f32 %v831, %v1069
        %v1100 = vld [vmem:[%s292 + $0x10] sm:$0xff]
        %v1101 = vld [vmem:[%s292 + $0x18] sm:$0xff]
        %v1102 = vld [vmem:[%s292 + $0x20] sm:$0xff]
        %v1103 = vld [vmem:[%s292 + $0x28] sm:$0xff]
        %v1104 = vld [vmem:[%s292 + $0x30] sm:$0xff]
        %v1105 = vld [vmem:[%s292 + $0x38] sm:$0xff]
        %v1106 = vld [vmem:[%s292 + $0x40] sm:$0xff]
        %v1107 = vld [vmem:[%s292 + $0x48] sm:$0xff]
        %v1108 = vld [vmem:[%s292 + $0x50] sm:$0xff]
        %v1109 = vld [vmem:[%s292 + $0x58] sm:$0xff]
        %v1110 = vld [vmem:[%s292 + $0x60] sm:$0xff]
        %v1111 = vld [vmem:[%s292 + $0x68] sm:$0xff]
        %v1112 = vld [vmem:[%s292 + $0x70] sm:$0xff]
        %v1113 = vld [vmem:[%s292 + $0x78] sm:$0xff]
        %v1114 = vld [vmem:[%s292 + $0x80] sm:$0xff]
        %v1115 = vld [vmem:[%s292 + $0x88] sm:$0xff]
        %v1116 = vld [vmem:[%s292 + $0x90] sm:$0xff]
        %v1117 = vld [vmem:[%s292 + $0x98] sm:$0xff]
        %v1118 = vld [vmem:[%s292 + $0xa0] sm:$0xff]
        %v1119 = vld [vmem:[%s292 + $0xa8] sm:$0xff]
        %v1120 = vld [vmem:[%s292 + $0xb0] sm:$0xff]
        %v1121 = vld [vmem:[%s292 + $0xb8] sm:$0xff]
        %v1122 = vld [vmem:[%s292 + $0xc0] sm:$0xff]
        %v1123 = vld [vmem:[%s292 + $0xc8] sm:$0xff]
        %v1124 = vld [vmem:[%s292 + $0xd0] sm:$0xff]
        %v1125 = vld [vmem:[%s292 + $0xd8] sm:$0xff]
        %v1126 = vld [vmem:[%s292 + $0xe0] sm:$0xff]
        %v1127 = vld [vmem:[%s292 + $0xe8] sm:$0xff]
        %v1128 = vpack.c.bf16 %v1101, %v1100
        %v1129 = vpack.c.bf16 %v1103, %v1102
        %v1130 = vpack.c.bf16 %v1105, %v1104
        %v1131 = vpack.c.bf16 %v1107, %v1106
        %v1132 = vpack.c.bf16 %v1109, %v1108
        %v1133 = vpack.c.bf16 %v1111, %v1110
        %v1134 = vpack.c.bf16 %v1113, %v1112
        %v1135 = vpack.c.bf16 %v1115, %v1114
        %v1136 = vpack.c.bf16 %v1117, %v1116
        %v1137 = vpack.c.bf16 %v1119, %v1118
        %v1138 = vpack.c.bf16 %v1121, %v1120
        %v1139 = vpack.c.bf16 %v1123, %v1122
        %v1140 = vpack.c.bf16 %v1125, %v1124
        %v1141 = vpack.c.bf16 %v1127, %v1126
        %s1142 = scalar_lea.vmem [#allocation7], 24
        %v1143 = vld [vmem:[%s1142] sm:$0xf]
        %v1144 = vld [vmem:[%s1142 + $0x4] sm:$0xf]
        %v1147 = vunpack.c.l.b16 %v1143
        %v1148 = vunpack.c.l.b16 %v1144
        %v1149 = vpack.c.b16 %v1148, %v1147
        %v1152 = vsel %vm453, %v1128, 0
        %v1155 = vsel %vm453, %v1129, 0
        %v1158 = vsel %vm453, %v1130, 0
        %v1161 = vsel %vm453, %v1131, 0
        %v1164 = vsel %vm453, %v1132, 0
        %v1167 = vsel %vm453, %v1133, 0
        %v1170 = vsel %vm453, %v1134, 0
        %v1173 = vsel %vm453, %v1135, 0
        %v1176 = vsel %vm453, %v1136, 0
        %v1179 = vsel %vm453, %v1137, 0
        %v1182 = vsel %vm453, %v1138, 0
        %v1185 = vsel %vm453, %v1139, 0
        %v1188 = vsel %vm453, %v1140, 0
        %v1191 = vsel %vm453, %v1141, 0
        %1193 = vmatprep.subr.bf16.mxu0 0
        %1194 = vmatpush1.bf16.msra.mxu0 %v1149
        %1195 = vmatprep.subr.bf16.mxu0 0
        %1196 = vmatpush1.bf16.msra.mxu0 0
        %1197 = vmatprep.subr.bf16.mxu0 0
        %1198 = vmatpush1.bf16.msra.mxu0 0
        %1199 = vmatprep.subr.bf16.mxu0 0
        %1200 = vmatpush1.bf16.msra.mxu0 0
        %1201 = vmatprep.subr.bf16.mxu0 0
        %1202 = vmatpush1.bf16.msra.mxu0 0
        %1203 = vmatprep.subr.bf16.mxu0 0
        %1204 = vmatpush1.bf16.msra.mxu0 0
        %1205 = vmatprep.subr.bf16.mxu0 0
        %1206 = vmatpush1.bf16.msra.mxu0 0
        %1207 = vmatprep.subr.bf16.mxu0 0
        %1208 = vmatpush1.bf16.msra.mxu0 0
        %1209 = vmatprep.subr.bf16.mxu0 0
        %1210 = vmatpush1.bf16.msra.mxu0 0
        %1211 = vmatprep.subr.bf16.mxu0 0
        %1212 = vmatpush1.bf16.msra.mxu0 0
        %1213 = vmatprep.subr.bf16.mxu0 0
        %1214 = vmatpush1.bf16.msra.mxu0 0
        %1215 = vmatprep.subr.bf16.mxu0 0
        %1216 = vmatpush1.bf16.msra.mxu0 0
        %1217 = vmatprep.subr.bf16.mxu0 0
        %1218 = vmatpush1.bf16.msra.mxu0 0
        %1219 = vmatprep.subr.bf16.mxu0 0
        %1220 = vmatpush1.bf16.msra.mxu0 0
        %1221 = vmatprep.subr.bf16.mxu0 0
        %1222 = vmatpush1.bf16.msra.mxu0 0
        %1223 = vmatprep.subr.bf16.mxu0 0
        %1224 = vmatpush1.bf16.msra.mxu0 0
        %1225 = vmatprep.mubr.bf16.mxu0 0
        %1226 = vmatmul.mubr.bf16.gmra.mrb[0].mxu0 %v1152
        %v1227 = vpop.f32.mrb[0].mxu0
        %v1228 = vadd.f32 0.0, %v1227
        %v1229 = vpop.f32.mrb[0].mxu0
        %v1230 = vpop.f32.mrb[0].mxu0
        %v1231 = vadd.f32 0.0, %v1230
        %v1232 = vpop.f32.mrb[0].mxu0
        %1233 = vmatprep.mubr.bf16.mxu0 0
        %1234 = vmatmul.mubr.bf16.gmra.mrb[0].mxu0 %v1155
        %v1235 = vpop.f32.mrb[0].mxu0
        %v1236 = vadd.f32 0.0, %v1235
        %v1237 = vpop.f32.mrb[0].mxu0
        %v1238 = vpop.f32.mrb[0].mxu0
        %v1239 = vadd.f32 0.0, %v1238
        %v1240 = vpop.f32.mrb[0].mxu0
        %1241 = vmatprep.mubr.bf16.mxu0 0
        %1242 = vmatmul.mubr.bf16.gmra.mrb[0].mxu0 %v1158
        %v1243 = vpop.f32.mrb[0].mxu0
        %v1244 = vadd.f32 0.0, %v1243
        %v1245 = vpop.f32.mrb[0].mxu0
        %v1246 = vpop.f32.mrb[0].mxu0
        %v1247 = vadd.f32 0.0, %v1246
        %v1248 = vpop.f32.mrb[0].mxu0
        %1249 = vmatprep.mubr.bf16.mxu0 0
        %1250 = vmatmul.mubr.bf16.gmra.mrb[0].mxu0 %v1161
        %v1251 = vpop.f32.mrb[0].mxu0
        %v1252 = vadd.f32 0.0, %v1251
        %v1253 = vpop.f32.mrb[0].mxu0
        %v1254 = vpop.f32.mrb[0].mxu0
        %v1255 = vadd.f32 0.0, %v1254
        %v1256 = vpop.f32.mrb[0].mxu0
        %1257 = vmatprep.mubr.bf16.mxu0 0
        %1258 = vmatmul.mubr.bf16.gmra.mrb[0].mxu0 %v1164
        %v1259 = vpop.f32.mrb[0].mxu0
        %v1260 = vadd.f32 0.0, %v1259
        %v1261 = vpop.f32.mrb[0].mxu0
        %v1262 = vpop.f32.mrb[0].mxu0
        %v1263 = vadd.f32 0.0, %v1262
        %v1264 = vpop.f32.mrb[0].mxu0
        %1265 = vmatprep.mubr.bf16.mxu0 0
        %1266 = vmatmul.mubr.bf16.gmra.mrb[0].mxu0 %v1167
        %v1267 = vpop.f32.mrb[0].mxu0
        %v1268 = vadd.f32 0.0, %v1267
        %v1269 = vpop.f32.mrb[0].mxu0
        %v1270 = vpop.f32.mrb[0].mxu0
        %v1271 = vadd.f32 0.0, %v1270
        %v1272 = vpop.f32.mrb[0].mxu0
        %1273 = vmatprep.mubr.bf16.mxu0 0
        %1274 = vmatmul.mubr.bf16.gmra.mrb[0].mxu0 %v1170
        %v1275 = vpop.f32.mrb[0].mxu0
        %v1276 = vadd.f32 0.0, %v1275
        %v1277 = vpop.f32.mrb[0].mxu0
        %v1278 = vpop.f32.mrb[0].mxu0
        %v1279 = vadd.f32 0.0, %v1278
        %v1280 = vpop.f32.mrb[0].mxu0
        %1281 = vmatprep.mubr.bf16.mxu0 0
        %1282 = vmatmul.mubr.bf16.gmra.mrb[0].mxu0 %v1173
        %v1283 = vpop.f32.mrb[0].mxu0
        %v1284 = vadd.f32 0.0, %v1283
        %v1285 = vpop.f32.mrb[0].mxu0
        %v1286 = vpop.f32.mrb[0].mxu0
        %v1287 = vadd.f32 0.0, %v1286
        %v1288 = vpop.f32.mrb[0].mxu0
        %1289 = vmatprep.mubr.bf16.mxu0 0
        %1290 = vmatmul.mubr.bf16.gmra.mrb[0].mxu0 %v1176
        %v1291 = vpop.f32.mrb[0].mxu0
        %v1292 = vadd.f32 0.0, %v1291
        %v1293 = vpop.f32.mrb[0].mxu0
        %v1294 = vpop.f32.mrb[0].mxu0
        %v1295 = vadd.f32 0.0, %v1294
        %v1296 = vpop.f32.mrb[0].mxu0
        %1297 = vmatprep.mubr.bf16.mxu0 0
        %1298 = vmatmul.mubr.bf16.gmra.mrb[0].mxu0 %v1179
        %v1299 = vpop.f32.mrb[0].mxu0
        %v1300 = vadd.f32 0.0, %v1299
        %v1301 = vpop.f32.mrb[0].mxu0
        %v1302 = vpop.f32.mrb[0].mxu0
        %v1303 = vadd.f32 0.0, %v1302
        %v1304 = vpop.f32.mrb[0].mxu0
        %1305 = vmatprep.mubr.bf16.mxu0 0
        %1306 = vmatmul.mubr.bf16.gmra.mrb[0].mxu0 %v1182
        %v1307 = vpop.f32.mrb[0].mxu0
        %v1308 = vadd.f32 0.0, %v1307
        %v1309 = vpop.f32.mrb[0].mxu0
        %v1310 = vpop.f32.mrb[0].mxu0
        %v1311 = vadd.f32 0.0, %v1310
        %v1312 = vpop.f32.mrb[0].mxu0
        %1313 = vmatprep.mubr.bf16.mxu0 0
        %1314 = vmatmul.mubr.bf16.gmra.mrb[0].mxu0 %v1185
        %v1315 = vpop.f32.mrb[0].mxu0
        %v1316 = vadd.f32 0.0, %v1315
        %v1317 = vpop.f32.mrb[0].mxu0
        %v1318 = vpop.f32.mrb[0].mxu0
        %v1319 = vadd.f32 0.0, %v1318
        %v1320 = vpop.f32.mrb[0].mxu0
        %1321 = vmatprep.mubr.bf16.mxu0 0
        %1322 = vmatmul.mubr.bf16.gmra.mrb[0].mxu0 %v1188
        %v1323 = vpop.f32.mrb[0].mxu0
        %v1324 = vadd.f32 0.0, %v1323
        %v1325 = vpop.f32.mrb[0].mxu0
        %v1326 = vpop.f32.mrb[0].mxu0
        %v1327 = vadd.f32 0.0, %v1326
        %v1328 = vpop.f32.mrb[0].mxu0
        %1329 = vmatprep.mubr.bf16.mxu0 0
        %1330 = vmatmul.mubr.bf16.gmra.mrb[0].mxu0 %v1191
        %v1331 = vpop.f32.mrb[0].mxu0
        %v1332 = vadd.f32 0.0, %v1331
        %v1333 = vpop.f32.mrb[0].mxu0
        %v1334 = vpop.f32.mrb[0].mxu0
        %v1335 = vadd.f32 0.0, %v1334
        %v1336 = vpop.f32.mrb[0].mxu0
        %1337 = vdwg.mxu0
        %v1338 = vadd.f32 %v1072, %v1228
        %v1339 = vadd.f32 %v1073, %v1231
        %v1340 = vadd.f32 %v1074, %v1236
        %v1341 = vadd.f32 %v1075, %v1239
        %v1342 = vadd.f32 %v1076, %v1244
        %v1343 = vadd.f32 %v1077, %v1247
        %v1344 = vadd.f32 %v1078, %v1252
        %v1345 = vadd.f32 %v1079, %v1255
        %v1346 = vadd.f32 %v1080, %v1260
        %v1347 = vadd.f32 %v1081, %v1263
        %v1348 = vadd.f32 %v1082, %v1268
        %v1349 = vadd.f32 %v1083, %v1271
        %v1350 = vadd.f32 %v1084, %v1276
        %v1351 = vadd.f32 %v1085, %v1279
        %v1352 = vadd.f32 %v1086, %v1284
        %v1353 = vadd.f32 %v1087, %v1287
        %v1354 = vadd.f32 %v1088, %v1292
        %v1355 = vadd.f32 %v1089, %v1295
        %v1356 = vadd.f32 %v1090, %v1300
        %v1357 = vadd.f32 %v1091, %v1303
        %v1358 = vadd.f32 %v1092, %v1308
        %v1359 = vadd.f32 %v1093, %v1311
        %v1360 = vadd.f32 %v1094, %v1316
        %v1361 = vadd.f32 %v1095, %v1319
        %v1362 = vadd.f32 %v1096, %v1324
        %v1363 = vadd.f32 %v1097, %v1327
        %v1364 = vadd.f32 %v1098, %v1332
        %v1365 = vadd.f32 %v1099, %v1335
        %v1366 = vld [vmem:[%s292 + $0x11] sm:$0xff]
        %v1367 = vld [vmem:[%s292 + $0x19] sm:$0xff]
        %v1368 = vld [vmem:[%s292 + $0x21] sm:$0xff]
        %v1369 = vld [vmem:[%s292 + $0x29] sm:$0xff]
        %v1370 = vld [vmem:[%s292 + $0x31] sm:$0xff]
        %v1371 = vld [vmem:[%s292 + $0x39] sm:$0xff]
        %v1372 = vld [vmem:[%s292 + $0x41] sm:$0xff]
        %v1373 = vld [vmem:[%s292 + $0x49] sm:$0xff]
        %v1374 = vld [vmem:[%s292 + $0x51] sm:$0xff]
        %v1375 = vld [vmem:[%s292 + $0x59] sm:$0xff]
        %v1376 = vld [vmem:[%s292 + $0x61] sm:$0xff]
        %v1377 = vld [vmem:[%s292 + $0x69] sm:$0xff]
        %v1378 = vld [vmem:[%s292 + $0x71] sm:$0xff]
        %v1379 = vld [vmem:[%s292 + $0x79] sm:$0xff]
        %v1380 = vld [vmem:[%s292 + $0x81] sm:$0xff]
        %v1381 = vld [vmem:[%s292 + $0x89] sm:$0xff]
        %v1382 = vld [vmem:[%s292 + $0x91] sm:$0xff]
        %v1383 = vld [vmem:[%s292 + $0x99] sm:$0xff]
        %v1384 = vld [vmem:[%s292 + $0xa1] sm:$0xff]
        %v1385 = vld [vmem:[%s292 + $0xa9] sm:$0xff]
        %v1386 = vld [vmem:[%s292 + $0xb1] sm:$0xff]
        %v1387 = vld [vmem:[%s292 + $0xb9] sm:$0xff]
        %v1388 = vld [vmem:[%s292 + $0xc1] sm:$0xff]
        %v1389 = vld [vmem:[%s292 + $0xc9] sm:$0xff]
        %v1390 = vld [vmem:[%s292 + $0xd1] sm:$0xff]
        %v1391 = vld [vmem:[%s292 + $0xd9] sm:$0xff]
        %v1392 = vld [vmem:[%s292 + $0xe1] sm:$0xff]
        %v1393 = vld [vmem:[%s292 + $0xe9] sm:$0xff]
        %v1394 = vpack.c.bf16 %v1367, %v1366
        %v1395 = vpack.c.bf16 %v1369, %v1368
        %v1396 = vpack.c.bf16 %v1371, %v1370
        %v1397 = vpack.c.bf16 %v1373, %v1372
        %v1398 = vpack.c.bf16 %v1375, %v1374
        %v1399 = vpack.c.bf16 %v1377, %v1376
        %v1400 = vpack.c.bf16 %v1379, %v1378
        %v1401 = vpack.c.bf16 %v1381, %v1380
        %v1402 = vpack.c.bf16 %v1383, %v1382
        %v1403 = vpack.c.bf16 %v1385, %v1384
        %v1404 = vpack.c.bf16 %v1387, %v1386
        %v1405 = vpack.c.bf16 %v1389, %v1388
        %v1406 = vpack.c.bf16 %v1391, %v1390
        %v1407 = vpack.c.bf16 %v1393, %v1392
        %s1408 = scalar_lea.vmem [#allocation7], 32
        %v1409 = vld [vmem:[%s1408] sm:$0xf]
        %v1410 = vld [vmem:[%s1408 + $0x4] sm:$0xf]
        %v1413 = vunpack.c.l.b16 %v1409
        %v1414 = vunpack.c.l.b16 %v1410
        %v1415 = vpack.c.b16 %v1414, %v1413
        %v1418 = vsel %vm453, %v1394, 0
        %v1421 = vsel %vm453, %v1395, 0
        %v1424 = vsel %vm453, %v1396, 0
        %v1427 = vsel %vm453, %v1397, 0
        %v1430 = vsel %vm453, %v1398, 0
        %v1433 = vsel %vm453, %v1399, 0
        %v1436 = vsel %vm453, %v1400, 0
        %v1439 = vsel %vm453, %v1401, 0
        %v1442 = vsel %vm453, %v1402, 0
        %v1445 = vsel %vm453, %v1403, 0
        %v1448 = vsel %vm453, %v1404, 0
        %v1451 = vsel %vm453, %v1405, 0
        %v1454 = vsel %vm453, %v1406, 0
        %v1457 = vsel %vm453, %v1407, 0
        %1459 = vmatprep.subr.bf16.mxu0 0
        %1460 = vmatpush1.bf16.msra.mxu0 %v1415
        %1461 = vmatprep.subr.bf16.mxu0 0
        %1462 = vmatpush1.bf16.msra.mxu0 0
        %1463 = vmatprep.subr.bf16.mxu0 0
        %1464 = vmatpush1.bf16.msra.mxu0 0
        %1465 = vmatprep.subr.bf16.mxu0 0
        %1466 = vmatpush1.bf16.msra.mxu0 0
        %1467 = vmatprep.subr.bf16.mxu0 0
        %1468 = vmatpush1.bf16.msra.mxu0 0
        %1469 = vmatprep.subr.bf16.mxu0 0
        %1470 = vmatpush1.bf16.msra.mxu0 0
        %1471 = vmatprep.subr.bf16.mxu0 0
        %1472 = vmatpush1.bf16.msra.mxu0 0
        %1473 = vmatprep.subr.bf16.mxu0 0
        %1474 = vmatpush1.bf16.msra.mxu0 0
        %1475 = vmatprep.subr.bf16.mxu0 0
        %1476 = vmatpush1.bf16.msra.mxu0 0
        %1477 = vmatprep.subr.bf16.mxu0 0
        %1478 = vmatpush1.bf16.msra.mxu0 0
        %1479 = vmatprep.subr.bf16.mxu0 0
        %1480 = vmatpush1.bf16.msra.mxu0 0
        %1481 = vmatprep.subr.bf16.mxu0 0
        %1482 = vmatpush1.bf16.msra.mxu0 0
        %1483 = vmatprep.subr.bf16.mxu0 0
        %1484 = vmatpush1.bf16.msra.mxu0 0
        %1485 = vmatprep.subr.bf16.mxu0 0
        %1486 = vmatpush1.bf16.msra.mxu0 0
        %1487 = vmatprep.subr.bf16.mxu0 0
        %1488 = vmatpush1.bf16.msra.mxu0 0
        %1489 = vmatprep.subr.bf16.mxu0 0
        %1490 = vmatpush1.bf16.msra.mxu0 0
        %1491 = vmatprep.mubr.bf16.mxu0 0
        %1492 = vmatmul.mubr.bf16.gmra.mrb[0].mxu0 %v1418
        %v1493 = vpop.f32.mrb[0].mxu0
        %v1494 = vadd.f32 0.0, %v1493
        %v1495 = vpop.f32.mrb[0].mxu0
        %v1496 = vpop.f32.mrb[0].mxu0
        %v1497 = vadd.f32 0.0, %v1496
        %v1498 = vpop.f32.mrb[0].mxu0
        %1499 = vmatprep.mubr.bf16.mxu0 0
        %1500 = vmatmul.mubr.bf16.gmra.mrb[0].mxu0 %v1421
        %v1501 = vpop.f32.mrb[0].mxu0
        %v1502 = vadd.f32 0.0, %v1501
        %v1503 = vpop.f32.mrb[0].mxu0
        %v1504 = vpop.f32.mrb[0].mxu0
        %v1505 = vadd.f32 0.0, %v1504
        %v1506 = vpop.f32.mrb[0].mxu0
        %1507 = vmatprep.mubr.bf16.mxu0 0
        %1508 = vmatmul.mubr.bf16.gmra.mrb[0].mxu0 %v1424
        %v1509 = vpop.f32.mrb[0].mxu0
        %v1510 = vadd.f32 0.0, %v1509
        %v1511 = vpop.f32.mrb[0].mxu0
        %v1512 = vpop.f32.mrb[0].mxu0
        %v1513 = vadd.f32 0.0, %v1512
        %v1514 = vpop.f32.mrb[0].mxu0
        %1515 = vmatprep.mubr.bf16.mxu0 0
        %1516 = vmatmul.mubr.bf16.gmra.mrb[0].mxu0 %v1427
        %v1517 = vpop.f32.mrb[0].mxu0
        %v1518 = vadd.f32 0.0, %v1517
        %v1519 = vpop.f32.mrb[0].mxu0
        %v1520 = vpop.f32.mrb[0].mxu0
        %v1521 = vadd.f32 0.0, %v1520
        %v1522 = vpop.f32.mrb[0].mxu0
        %1523 = vmatprep.mubr.bf16.mxu0 0
        %1524 = vmatmul.mubr.bf16.gmra.mrb[0].mxu0 %v1430
        %v1525 = vpop.f32.mrb[0].mxu0
        %v1526 = vadd.f32 0.0, %v1525
        %v1527 = vpop.f32.mrb[0].mxu0
        %v1528 = vpop.f32.mrb[0].mxu0
        %v1529 = vadd.f32 0.0, %v1528
        %v1530 = vpop.f32.mrb[0].mxu0
        %1531 = vmatprep.mubr.bf16.mxu0 0
        %1532 = vmatmul.mubr.bf16.gmra.mrb[0].mxu0 %v1433
        %v1533 = vpop.f32.mrb[0].mxu0
        %v1534 = vadd.f32 0.0, %v1533
        %v1535 = vpop.f32.mrb[0].mxu0
        %v1536 = vpop.f32.mrb[0].mxu0
        %v1537 = vadd.f32 0.0, %v1536
        %v1538 = vpop.f32.mrb[0].mxu0
        %1539 = vmatprep.mubr.bf16.mxu0 0
        %1540 = vmatmul.mubr.bf16.gmra.mrb[0].mxu0 %v1436
        %v1541 = vpop.f32.mrb[0].mxu0
        %v1542 = vadd.f32 0.0, %v1541
        %v1543 = vpop.f32.mrb[0].mxu0
        %v1544 = vpop.f32.mrb[0].mxu0
        %v1545 = vadd.f32 0.0, %v1544
        %v1546 = vpop.f32.mrb[0].mxu0
        %1547 = vmatprep.mubr.bf16.mxu0 0
        %1548 = vmatmul.mubr.bf16.gmra.mrb[0].mxu0 %v1439
        %v1549 = vpop.f32.mrb[0].mxu0
        %v1550 = vadd.f32 0.0, %v1549
        %v1551 = vpop.f32.mrb[0].mxu0
        %v1552 = vpop.f32.mrb[0].mxu0
        %v1553 = vadd.f32 0.0, %v1552
        %v1554 = vpop.f32.mrb[0].mxu0
        %1555 = vmatprep.mubr.bf16.mxu0 0
        %1556 = vmatmul.mubr.bf16.gmra.mrb[0].mxu0 %v1442
        %v1557 = vpop.f32.mrb[0].mxu0
        %v1558 = vadd.f32 0.0, %v1557
        %v1559 = vpop.f32.mrb[0].mxu0
        %v1560 = vpop.f32.mrb[0].mxu0
        %v1561 = vadd.f32 0.0, %v1560
        %v1562 = vpop.f32.mrb[0].mxu0
        %1563 = vmatprep.mubr.bf16.mxu0 0
        %1564 = vmatmul.mubr.bf16.gmra.mrb[0].mxu0 %v1445
        %v1565 = vpop.f32.mrb[0].mxu0
        %v1566 = vadd.f32 0.0, %v1565
        %v1567 = vpop.f32.mrb[0].mxu0
        %v1568 = vpop.f32.mrb[0].mxu0
        %v1569 = vadd.f32 0.0, %v1568
        %v1570 = vpop.f32.mrb[0].mxu0
        %1571 = vmatprep.mubr.bf16.mxu0 0
        %1572 = vmatmul.mubr.bf16.gmra.mrb[0].mxu0 %v1448
        %v1573 = vpop.f32.mrb[0].mxu0
        %v1574 = vadd.f32 0.0, %v1573
        %v1575 = vpop.f32.mrb[0].mxu0
        %v1576 = vpop.f32.mrb[0].mxu0
        %v1577 = vadd.f32 0.0, %v1576
        %v1578 = vpop.f32.mrb[0].mxu0
        %1579 = vmatprep.mubr.bf16.mxu0 0
        %1580 = vmatmul.mubr.bf16.gmra.mrb[0].mxu0 %v1451
        %v1581 = vpop.f32.mrb[0].mxu0
        %v1582 = vadd.f32 0.0, %v1581
        %v1583 = vpop.f32.mrb[0].mxu0
        %v1584 = vpop.f32.mrb[0].mxu0
        %v1585 = vadd.f32 0.0, %v1584
        %v1586 = vpop.f32.mrb[0].mxu0
        %1587 = vmatprep.mubr.bf16.mxu0 0
        %1588 = vmatmul.mubr.bf16.gmra.mrb[0].mxu0 %v1454
        %v1589 = vpop.f32.mrb[0].mxu0
        %v1590 = vadd.f32 0.0, %v1589
        %v1591 = vpop.f32.mrb[0].mxu0
        %v1592 = vpop.f32.mrb[0].mxu0
        %v1593 = vadd.f32 0.0, %v1592
        %v1594 = vpop.f32.mrb[0].mxu0
        %1595 = vmatprep.mubr.bf16.mxu0 0
        %1596 = vmatmul.mubr.bf16.gmra.mrb[0].mxu0 %v1457
        %v1597 = vpop.f32.mrb[0].mxu0
        %v1598 = vadd.f32 0.0, %v1597
        %v1599 = vpop.f32.mrb[0].mxu0
        %v1600 = vpop.f32.mrb[0].mxu0
        %v1601 = vadd.f32 0.0, %v1600
        %v1602 = vpop.f32.mrb[0].mxu0
        %1603 = vdwg.mxu0
        %v1604 = vadd.f32 %v1338, %v1494
        %v1605 = vadd.f32 %v1339, %v1497
        %v1606 = vadd.f32 %v1340, %v1502
        %v1607 = vadd.f32 %v1341, %v1505
        %v1608 = vadd.f32 %v1342, %v1510
        %v1609 = vadd.f32 %v1343, %v1513
        %v1610 = vadd.f32 %v1344, %v1518
        %v1611 = vadd.f32 %v1345, %v1521
        %v1612 = vadd.f32 %v1346, %v1526
        %v1613 = vadd.f32 %v1347, %v1529
        %v1614 = vadd.f32 %v1348, %v1534
        %v1615 = vadd.f32 %v1349, %v1537
        %v1616 = vadd.f32 %v1350, %v1542
        %v1617 = vadd.f32 %v1351, %v1545
        %v1618 = vadd.f32 %v1352, %v1550
        %v1619 = vadd.f32 %v1353, %v1553
        %v1620 = vadd.f32 %v1354, %v1558
        %v1621 = vadd.f32 %v1355, %v1561
        %v1622 = vadd.f32 %v1356, %v1566
        %v1623 = vadd.f32 %v1357, %v1569
        %v1624 = vadd.f32 %v1358, %v1574
        %v1625 = vadd.f32 %v1359, %v1577
        %v1626 = vadd.f32 %v1360, %v1582
        %v1627 = vadd.f32 %v1361, %v1585
        %v1628 = vadd.f32 %v1362, %v1590
        %v1629 = vadd.f32 %v1363, %v1593
        %v1630 = vadd.f32 %v1364, %v1598
        %v1631 = vadd.f32 %v1365, %v1601
        %v1632 = vld [vmem:[%s292 + $0x12] sm:$0xff]
        %v1633 = vld [vmem:[%s292 + $0x1a] sm:$0xff]
        %v1634 = vld [vmem:[%s292 + $0x22] sm:$0xff]
        %v1635 = vld [vmem:[%s292 + $0x2a] sm:$0xff]
        %v1636 = vld [vmem:[%s292 + $0x32] sm:$0xff]
        %v1637 = vld [vmem:[%s292 + $0x3a] sm:$0xff]
        %v1638 = vld [vmem:[%s292 + $0x42] sm:$0xff]
        %v1639 = vld [vmem:[%s292 + $0x4a] sm:$0xff]
        %v1640 = vld [vmem:[%s292 + $0x52] sm:$0xff]
        %v1641 = vld [vmem:[%s292 + $0x5a] sm:$0xff]
        %v1642 = vld [vmem:[%s292 + $0x62] sm:$0xff]
        %v1643 = vld [vmem:[%s292 + $0x6a] sm:$0xff]
        %v1644 = vld [vmem:[%s292 + $0x72] sm:$0xff]
        %v1645 = vld [vmem:[%s292 + $0x7a] sm:$0xff]
        %v1646 = vld [vmem:[%s292 + $0x82] sm:$0xff]
        %v1647 = vld [vmem:[%s292 + $0x8a] sm:$0xff]
        %v1648 = vld [vmem:[%s292 + $0x92] sm:$0xff]
        %v1649 = vld [vmem:[%s292 + $0x9a] sm:$0xff]
        %v1650 = vld [vmem:[%s292 + $0xa2] sm:$0xff]
        %v1651 = vld [vmem:[%s292 + $0xaa] sm:$0xff]
        %v1652 = vld [vmem:[%s292 + $0xb2] sm:$0xff]
        %v1653 = vld [vmem:[%s292 + $0xba] sm:$0xff]
        %v1654 = vld [vmem:[%s292 + $0xc2] sm:$0xff]
        %v1655 = vld [vmem:[%s292 + $0xca] sm:$0xff]
        %v1656 = vld [vmem:[%s292 + $0xd2] sm:$0xff]
        %v1657 = vld [vmem:[%s292 + $0xda] sm:$0xff]
        %v1658 = vld [vmem:[%s292 + $0xe2] sm:$0xff]
        %v1659 = vld [vmem:[%s292 + $0xea] sm:$0xff]
        %v1660 = vpack.c.bf16 %v1633, %v1632
        %v1661 = vpack.c.bf16 %v1635, %v1634
        %v1662 = vpack.c.bf16 %v1637, %v1636
        %v1663 = vpack.c.bf16 %v1639, %v1638
        %v1664 = vpack.c.bf16 %v1641, %v1640
        %v1665 = vpack.c.bf16 %v1643, %v1642
        %v1666 = vpack.c.bf16 %v1645, %v1644
        %v1667 = vpack.c.bf16 %v1647, %v1646
        %v1668 = vpack.c.bf16 %v1649, %v1648
        %v1669 = vpack.c.bf16 %v1651, %v1650
        %v1670 = vpack.c.bf16 %v1653, %v1652
        %v1671 = vpack.c.bf16 %v1655, %v1654
        %v1672 = vpack.c.bf16 %v1657, %v1656
        %v1673 = vpack.c.bf16 %v1659, %v1658
        %s1674 = scalar_lea.vmem [#allocation7], 40
        %v1675 = vld [vmem:[%s1674] sm:$0xf]
        %v1676 = vld [vmem:[%s1674 + $0x4] sm:$0xf]
        %v1679 = vunpack.c.l.b16 %v1675
        %v1680 = vunpack.c.l.b16 %v1676
        %v1681 = vpack.c.b16 %v1680, %v1679
        %v1684 = vsel %vm453, %v1660, 0
        %v1687 = vsel %vm453, %v1661, 0
        %v1690 = vsel %vm453, %v1662, 0
        %v1693 = vsel %vm453, %v1663, 0
        %v1696 = vsel %vm453, %v1664, 0
        %v1699 = vsel %vm453, %v1665, 0
        %v1702 = vsel %vm453, %v1666, 0
        %v1705 = vsel %vm453, %v1667, 0
        %v1708 = vsel %vm453, %v1668, 0
        %v1711 = vsel %vm453, %v1669, 0
        %v1714 = vsel %vm453, %v1670, 0
        %v1717 = vsel %vm453, %v1671, 0
        %v1720 = vsel %vm453, %v1672, 0
        %v1723 = vsel %vm453, %v1673, 0
        %1725 = vmatprep.subr.bf16.mxu0 0
        %1726 = vmatpush1.bf16.msra.mxu0 %v1681
        %1727 = vmatprep.subr.bf16.mxu0 0
        %1728 = vmatpush1.bf16.msra.mxu0 0
        %1729 = vmatprep.subr.bf16.mxu0 0
        %1730 = vmatpush1.bf16.msra.mxu0 0
        %1731 = vmatprep.subr.bf16.mxu0 0
        %1732 = vmatpush1.bf16.msra.mxu0 0
        %1733 = vmatprep.subr.bf16.mxu0 0
        %1734 = vmatpush1.bf16.msra.mxu0 0
        %1735 = vmatprep.subr.bf16.mxu0 0
        %1736 = vmatpush1.bf16.msra.mxu0 0
        %1737 = vmatprep.subr.bf16.mxu0 0
        %1738 = vmatpush1.bf16.msra.mxu0 0
        %1739 = vmatprep.subr.bf16.mxu0 0
        %1740 = vmatpush1.bf16.msra.mxu0 0
        %1741 = vmatprep.subr.bf16.mxu0 0
        %1742 = vmatpush1.bf16.msra.mxu0 0
        %1743 = vmatprep.subr.bf16.mxu0 0
        %1744 = vmatpush1.bf16.msra.mxu0 0
        %1745 = vmatprep.subr.bf16.mxu0 0
        %1746 = vmatpush1.bf16.msra.mxu0 0
        %1747 = vmatprep.subr.bf16.mxu0 0
        %1748 = vmatpush1.bf16.msra.mxu0 0
        %1749 = vmatprep.subr.bf16.mxu0 0
        %1750 = vmatpush1.bf16.msra.mxu0 0
        %1751 = vmatprep.subr.bf16.mxu0 0
        %1752 = vmatpush1.bf16.msra.mxu0 0
        %1753 = vmatprep.subr.bf16.mxu0 0
        %1754 = vmatpush1.bf16.msra.mxu0 0
        %1755 = vmatprep.subr.bf16.mxu0 0
        %1756 = vmatpush1.bf16.msra.mxu0 0
        %1757 = vmatprep.mubr.bf16.mxu0 0
        %1758 = vmatmul.mubr.bf16.gmra.mrb[0].mxu0 %v1684
        %v1759 = vpop.f32.mrb[0].mxu0
        %v1760 = vadd.f32 0.0, %v1759
        %v1761 = vpop.f32.mrb[0].mxu0
        %v1762 = vpop.f32.mrb[0].mxu0
        %v1763 = vadd.f32 0.0, %v1762
        %v1764 = vpop.f32.mrb[0].mxu0
        %1765 = vmatprep.mubr.bf16.mxu0 0
        %1766 = vmatmul.mubr.bf16.gmra.mrb[0].mxu0 %v1687
        %v1767 = vpop.f32.mrb[0].mxu0
        %v1768 = vadd.f32 0.0, %v1767
        %v1769 = vpop.f32.mrb[0].mxu0
        %v1770 = vpop.f32.mrb[0].mxu0
        %v1771 = vadd.f32 0.0, %v1770
        %v1772 = vpop.f32.mrb[0].mxu0
        %1773 = vmatprep.mubr.bf16.mxu0 0
        %1774 = vmatmul.mubr.bf16.gmra.mrb[0].mxu0 %v1690
        %v1775 = vpop.f32.mrb[0].mxu0
        %v1776 = vadd.f32 0.0, %v1775
        %v1777 = vpop.f32.mrb[0].mxu0
        %v1778 = vpop.f32.mrb[0].mxu0
        %v1779 = vadd.f32 0.0, %v1778
        %v1780 = vpop.f32.mrb[0].mxu0
        %1781 = vmatprep.mubr.bf16.mxu0 0
        %1782 = vmatmul.mubr.bf16.gmra.mrb[0].mxu0 %v1693
        %v1783 = vpop.f32.mrb[0].mxu0
        %v1784 = vadd.f32 0.0, %v1783
        %v1785 = vpop.f32.mrb[0].mxu0
        %v1786 = vpop.f32.mrb[0].mxu0
        %v1787 = vadd.f32 0.0, %v1786
        %v1788 = vpop.f32.mrb[0].mxu0
        %1789 = vmatprep.mubr.bf16.mxu0 0
        %1790 = vmatmul.mubr.bf16.gmra.mrb[0].mxu0 %v1696
        %v1791 = vpop.f32.mrb[0].mxu0
        %v1792 = vadd.f32 0.0, %v1791
        %v1793 = vpop.f32.mrb[0].mxu0
        %v1794 = vpop.f32.mrb[0].mxu0
        %v1795 = vadd.f32 0.0, %v1794
        %v1796 = vpop.f32.mrb[0].mxu0
        %1797 = vmatprep.mubr.bf16.mxu0 0
        %1798 = vmatmul.mubr.bf16.gmra.mrb[0].mxu0 %v1699
        %v1799 = vpop.f32.mrb[0].mxu0
        %v1800 = vadd.f32 0.0, %v1799
        %v1801 = vpop.f32.mrb[0].mxu0
        %v1802 = vpop.f32.mrb[0].mxu0
        %v1803 = vadd.f32 0.0, %v1802
        %v1804 = vpop.f32.mrb[0].mxu0
        %1805 = vmatprep.mubr.bf16.mxu0 0
        %1806 = vmatmul.mubr.bf16.gmra.mrb[0].mxu0 %v1702
        %v1807 = vpop.f32.mrb[0].mxu0
        %v1808 = vadd.f32 0.0, %v1807
        %v1809 = vpop.f32.mrb[0].mxu0
        %v1810 = vpop.f32.mrb[0].mxu0
        %v1811 = vadd.f32 0.0, %v1810
        %v1812 = vpop.f32.mrb[0].mxu0
        %1813 = vmatprep.mubr.bf16.mxu0 0
        %1814 = vmatmul.mubr.bf16.gmra.mrb[0].mxu0 %v1705
        %v1815 = vpop.f32.mrb[0].mxu0
        %v1816 = vadd.f32 0.0, %v1815
        %v1817 = vpop.f32.mrb[0].mxu0
        %v1818 = vpop.f32.mrb[0].mxu0
        %v1819 = vadd.f32 0.0, %v1818
        %v1820 = vpop.f32.mrb[0].mxu0
        %1821 = vmatprep.mubr.bf16.mxu0 0
        %1822 = vmatmul.mubr.bf16.gmra.mrb[0].mxu0 %v1708
        %v1823 = vpop.f32.mrb[0].mxu0
        %v1824 = vadd.f32 0.0, %v1823
        %v1825 = vpop.f32.mrb[0].mxu0
        %v1826 = vpop.f32.mrb[0].mxu0
        %v1827 = vadd.f32 0.0, %v1826
        %v1828 = vpop.f32.mrb[0].mxu0
        %1829 = vmatprep.mubr.bf16.mxu0 0
        %1830 = vmatmul.mubr.bf16.gmra.mrb[0].mxu0 %v1711
        %v1831 = vpop.f32.mrb[0].mxu0
        %v1832 = vadd.f32 0.0, %v1831
        %v1833 = vpop.f32.mrb[0].mxu0
        %v1834 = vpop.f32.mrb[0].mxu0
        %v1835 = vadd.f32 0.0, %v1834
        %v1836 = vpop.f32.mrb[0].mxu0
        %1837 = vmatprep.mubr.bf16.mxu0 0
        %1838 = vmatmul.mubr.bf16.gmra.mrb[0].mxu0 %v1714
        %v1839 = vpop.f32.mrb[0].mxu0
        %v1840 = vadd.f32 0.0, %v1839
        %v1841 = vpop.f32.mrb[0].mxu0
        %v1842 = vpop.f32.mrb[0].mxu0
        %v1843 = vadd.f32 0.0, %v1842
        %v1844 = vpop.f32.mrb[0].mxu0
        %1845 = vmatprep.mubr.bf16.mxu0 0
        %1846 = vmatmul.mubr.bf16.gmra.mrb[0].mxu0 %v1717
        %v1847 = vpop.f32.mrb[0].mxu0
        %v1848 = vadd.f32 0.0, %v1847
        %v1849 = vpop.f32.mrb[0].mxu0
        %v1850 = vpop.f32.mrb[0].mxu0
        %v1851 = vadd.f32 0.0, %v1850
        %v1852 = vpop.f32.mrb[0].mxu0
        %1853 = vmatprep.mubr.bf16.mxu0 0
        %1854 = vmatmul.mubr.bf16.gmra.mrb[0].mxu0 %v1720
        %v1855 = vpop.f32.mrb[0].mxu0
        %v1856 = vadd.f32 0.0, %v1855
        %v1857 = vpop.f32.mrb[0].mxu0
        %v1858 = vpop.f32.mrb[0].mxu0
        %v1859 = vadd.f32 0.0, %v1858
        %v1860 = vpop.f32.mrb[0].mxu0
        %1861 = vmatprep.mubr.bf16.mxu0 0
        %1862 = vmatmul.mubr.bf16.gmra.mrb[0].mxu0 %v1723
        %v1863 = vpop.f32.mrb[0].mxu0
        %v1864 = vadd.f32 0.0, %v1863
        %v1865 = vpop.f32.mrb[0].mxu0
        %v1866 = vpop.f32.mrb[0].mxu0
        %v1867 = vadd.f32 0.0, %v1866
        %v1868 = vpop.f32.mrb[0].mxu0
        %1869 = vdwg.mxu0
        %v1870 = vadd.f32 %v1604, %v1760
        %v1871 = vadd.f32 %v1605, %v1763
        %v1872 = vadd.f32 %v1606, %v1768
        %v1873 = vadd.f32 %v1607, %v1771
        %v1874 = vadd.f32 %v1608, %v1776
        %v1875 = vadd.f32 %v1609, %v1779
        %v1876 = vadd.f32 %v1610, %v1784
        %v1877 = vadd.f32 %v1611, %v1787
        %v1878 = vadd.f32 %v1612, %v1792
        %v1879 = vadd.f32 %v1613, %v1795
        %v1880 = vadd.f32 %v1614, %v1800
        %v1881 = vadd.f32 %v1615, %v1803
        %v1882 = vadd.f32 %v1616, %v1808
        %v1883 = vadd.f32 %v1617, %v1811
        %v1884 = vadd.f32 %v1618, %v1816
        %v1885 = vadd.f32 %v1619, %v1819
        %v1886 = vadd.f32 %v1620, %v1824
        %v1887 = vadd.f32 %v1621, %v1827
        %v1888 = vadd.f32 %v1622, %v1832
        %v1889 = vadd.f32 %v1623, %v1835
        %v1890 = vadd.f32 %v1624, %v1840
        %v1891 = vadd.f32 %v1625, %v1843
        %v1892 = vadd.f32 %v1626, %v1848
        %v1893 = vadd.f32 %v1627, %v1851
        %v1894 = vadd.f32 %v1628, %v1856
        %v1895 = vadd.f32 %v1629, %v1859
        %v1896 = vadd.f32 %v1630, %v1864
        %v1897 = vadd.f32 %v1631, %v1867
        %v1898 = vld [vmem:[%s292 + $0x20] sm:$0xff]
        %v1899 = vld [vmem:[%s292 + $0x28] sm:$0xff]
        %v1900 = vld [vmem:[%s292 + $0x30] sm:$0xff]
        %v1901 = vld [vmem:[%s292 + $0x38] sm:$0xff]
        %v1902 = vld [vmem:[%s292 + $0x40] sm:$0xff]
        %v1903 = vld [vmem:[%s292 + $0x48] sm:$0xff]
        %v1904 = vld [vmem:[%s292 + $0x50] sm:$0xff]
        %v1905 = vld [vmem:[%s292 + $0x58] sm:$0xff]
        %v1906 = vld [vmem:[%s292 + $0x60] sm:$0xff]
        %v1907 = vld [vmem:[%s292 + $0x68] sm:$0xff]
        %v1908 = vld [vmem:[%s292 + $0x70] sm:$0xff]
        %v1909 = vld [vmem:[%s292 + $0x78] sm:$0xff]
        %v1910 = vld [vmem:[%s292 + $0x80] sm:$0xff]
        %v1911 = vld [vmem:[%s292 + $0x88] sm:$0xff]
        %v1912 = vld [vmem:[%s292 + $0x90] sm:$0xff]
        %v1913 = vld [vmem:[%s292 + $0x98] sm:$0xff]
        %v1914 = vld [vmem:[%s292 + $0xa0] sm:$0xff]
        %v1915 = vld [vmem:[%s292 + $0xa8] sm:$0xff]
        %v1916 = vld [vmem:[%s292 + $0xb0] sm:$0xff]
        %v1917 = vld [vmem:[%s292 + $0xb8] sm:$0xff]
        %v1918 = vld [vmem:[%s292 + $0xc0] sm:$0xff]
        %v1919 = vld [vmem:[%s292 + $0xc8] sm:$0xff]
        %v1920 = vld [vmem:[%s292 + $0xd0] sm:$0xff]
        %v1921 = vld [vmem:[%s292 + $0xd8] sm:$0xff]
        %v1922 = vld [vmem:[%s292 + $0xe0] sm:$0xff]
        %v1923 = vld [vmem:[%s292 + $0xe8] sm:$0xff]
        %v1924 = vld [vmem:[%s292 + $0xf0] sm:$0xff]
        %v1925 = vld [vmem:[%s292 + $0xf8] sm:$0xff]
        %v1926 = vpack.c.bf16 %v1899, %v1898
        %v1927 = vpack.c.bf16 %v1901, %v1900
        %v1928 = vpack.c.bf16 %v1903, %v1902
        %v1929 = vpack.c.bf16 %v1905, %v1904
        %v1930 = vpack.c.bf16 %v1907, %v1906
        %v1931 = vpack.c.bf16 %v1909, %v1908
        %v1932 = vpack.c.bf16 %v1911, %v1910
        %v1933 = vpack.c.bf16 %v1913, %v1912
        %v1934 = vpack.c.bf16 %v1915, %v1914
        %v1935 = vpack.c.bf16 %v1917, %v1916
        %v1936 = vpack.c.bf16 %v1919, %v1918
        %v1937 = vpack.c.bf16 %v1921, %v1920
        %v1938 = vpack.c.bf16 %v1923, %v1922
        %v1939 = vpack.c.bf16 %v1925, %v1924
        %s1940 = scalar_lea.vmem [#allocation7], 48
        %v1941 = vld [vmem:[%s1940] sm:$0xf]
        %v1942 = vld [vmem:[%s1940 + $0x4] sm:$0xf]
        %v1945 = vunpack.c.l.b16 %v1941
        %v1946 = vunpack.c.l.b16 %v1942
        %v1947 = vpack.c.b16 %v1946, %v1945
        %v1950 = vsel %vm453, %v1926, 0
        %v1953 = vsel %vm453, %v1927, 0
        %v1956 = vsel %vm453, %v1928, 0
        %v1959 = vsel %vm453, %v1929, 0
        %v1962 = vsel %vm453, %v1930, 0
        %v1965 = vsel %vm453, %v1931, 0
        %v1968 = vsel %vm453, %v1932, 0
        %v1971 = vsel %vm453, %v1933, 0
        %v1974 = vsel %vm453, %v1934, 0
        %v1977 = vsel %vm453, %v1935, 0
        %v1980 = vsel %vm453, %v1936, 0
        %v1983 = vsel %vm453, %v1937, 0
        %v1986 = vsel %vm453, %v1938, 0
        %v1989 = vsel %vm453, %v1939, 0
        %1991 = vmatprep.subr.bf16.mxu0 0
        %1992 = vmatpush1.bf16.msra.mxu0 %v1947
        %1993 = vmatprep.subr.bf16.mxu0 0
        %1994 = vmatpush1.bf16.msra.mxu0 0
        %1995 = vmatprep.subr.bf16.mxu0 0
        %1996 = vmatpush1.bf16.msra.mxu0 0
        %1997 = vmatprep.subr.bf16.mxu0 0
        %1998 = vmatpush1.bf16.msra.mxu0 0
        %1999 = vmatprep.subr.bf16.mxu0 0
        %2000 = vmatpush1.bf16.msra.mxu0 0
        %2001 = vmatprep.subr.bf16.mxu0 0
        %2002 = vmatpush1.bf16.msra.mxu0 0
        %2003 = vmatprep.subr.bf16.mxu0 0
        %2004 = vmatpush1.bf16.msra.mxu0 0
        %2005 = vmatprep.subr.bf16.mxu0 0
        %2006 = vmatpush1.bf16.msra.mxu0 0
        %2007 = vmatprep.subr.bf16.mxu0 0
        %2008 = vmatpush1.bf16.msra.mxu0 0
        %2009 = vmatprep.subr.bf16.mxu0 0
        %2010 = vmatpush1.bf16.msra.mxu0 0
        %2011 = vmatprep.subr.bf16.mxu0 0
        %2012 = vmatpush1.bf16.msra.mxu0 0
        %2013 = vmatprep.subr.bf16.mxu0 0
        %2014 = vmatpush1.bf16.msra.mxu0 0
        %2015 = vmatprep.subr.bf16.mxu0 0
        %2016 = vmatpush1.bf16.msra.mxu0 0
        %2017 = vmatprep.subr.bf16.mxu0 0
        %2018 = vmatpush1.bf16.msra.mxu0 0
        %2019 = vmatprep.subr.bf16.mxu0 0
        %2020 = vmatpush1.bf16.msra.mxu0 0
        %2021 = vmatprep.subr.bf16.mxu0 0
        %2022 = vmatpush1.bf16.msra.mxu0 0
        %2023 = vmatprep.mubr.bf16.mxu0 0
        %2024 = vmatmul.mubr.bf16.gmra.mrb[0].mxu0 %v1950
        %v2025 = vpop.f32.mrb[0].mxu0
        %v2026 = vadd.f32 0.0, %v2025
        %v2027 = vpop.f32.mrb[0].mxu0
        %v2028 = vpop.f32.mrb[0].mxu0
        %v2029 = vadd.f32 0.0, %v2028
        %v2030 = vpop.f32.mrb[0].mxu0
        %2031 = vmatprep.mubr.bf16.mxu0 0
        %2032 = vmatmul.mubr.bf16.gmra.mrb[0].mxu0 %v1953
        %v2033 = vpop.f32.mrb[0].mxu0
        %v2034 = vadd.f32 0.0, %v2033
        %v2035 = vpop.f32.mrb[0].mxu0
        %v2036 = vpop.f32.mrb[0].mxu0
        %v2037 = vadd.f32 0.0, %v2036
        %v2038 = vpop.f32.mrb[0].mxu0
        %2039 = vmatprep.mubr.bf16.mxu0 0
        %2040 = vmatmul.mubr.bf16.gmra.mrb[0].mxu0 %v1956
        %v2041 = vpop.f32.mrb[0].mxu0
        %v2042 = vadd.f32 0.0, %v2041
        %v2043 = vpop.f32.mrb[0].mxu0
        %v2044 = vpop.f32.mrb[0].mxu0
        %v2045 = vadd.f32 0.0, %v2044
        %v2046 = vpop.f32.mrb[0].mxu0
        %2047 = vmatprep.mubr.bf16.mxu0 0
        %2048 = vmatmul.mubr.bf16.gmra.mrb[0].mxu0 %v1959
        %v2049 = vpop.f32.mrb[0].mxu0
        %v2050 = vadd.f32 0.0, %v2049
        %v2051 = vpop.f32.mrb[0].mxu0
        %v2052 = vpop.f32.mrb[0].mxu0
        %v2053 = vadd.f32 0.0, %v2052
        %v2054 = vpop.f32.mrb[0].mxu0
        %2055 = vmatprep.mubr.bf16.mxu0 0
        %2056 = vmatmul.mubr.bf16.gmra.mrb[0].mxu0 %v1962
        %v2057 = vpop.f32.mrb[0].mxu0
        %v2058 = vadd.f32 0.0, %v2057
        %v2059 = vpop.f32.mrb[0].mxu0
        %v2060 = vpop.f32.mrb[0].mxu0
        %v2061 = vadd.f32 0.0, %v2060
        %v2062 = vpop.f32.mrb[0].mxu0
        %2063 = vmatprep.mubr.bf16.mxu0 0
        %2064 = vmatmul.mubr.bf16.gmra.mrb[0].mxu0 %v1965
        %v2065 = vpop.f32.mrb[0].mxu0
        %v2066 = vadd.f32 0.0, %v2065
        %v2067 = vpop.f32.mrb[0].mxu0
        %v2068 = vpop.f32.mrb[0].mxu0
        %v2069 = vadd.f32 0.0, %v2068
        %v2070 = vpop.f32.mrb[0].mxu0
        %2071 = vmatprep.mubr.bf16.mxu0 0
        %2072 = vmatmul.mubr.bf16.gmra.mrb[0].mxu0 %v1968
        %v2073 = vpop.f32.mrb[0].mxu0
        %v2074 = vadd.f32 0.0, %v2073
        %v2075 = vpop.f32.mrb[0].mxu0
        %v2076 = vpop.f32.mrb[0].mxu0
        %v2077 = vadd.f32 0.0, %v2076
        %v2078 = vpop.f32.mrb[0].mxu0
        %2079 = vmatprep.mubr.bf16.mxu0 0
        %2080 = vmatmul.mubr.bf16.gmra.mrb[0].mxu0 %v1971
        %v2081 = vpop.f32.mrb[0].mxu0
        %v2082 = vadd.f32 0.0, %v2081
        %v2083 = vpop.f32.mrb[0].mxu0
        %v2084 = vpop.f32.mrb[0].mxu0
        %v2085 = vadd.f32 0.0, %v2084
        %v2086 = vpop.f32.mrb[0].mxu0
        %2087 = vmatprep.mubr.bf16.mxu0 0
        %2088 = vmatmul.mubr.bf16.gmra.mrb[0].mxu0 %v1974
        %v2089 = vpop.f32.mrb[0].mxu0
        %v2090 = vadd.f32 0.0, %v2089
        %v2091 = vpop.f32.mrb[0].mxu0
        %v2092 = vpop.f32.mrb[0].mxu0
        %v2093 = vadd.f32 0.0, %v2092
        %v2094 = vpop.f32.mrb[0].mxu0
        %2095 = vmatprep.mubr.bf16.mxu0 0
        %2096 = vmatmul.mubr.bf16.gmra.mrb[0].mxu0 %v1977
        %v2097 = vpop.f32.mrb[0].mxu0
        %v2098 = vadd.f32 0.0, %v2097
        %v2099 = vpop.f32.mrb[0].mxu0
        %v2100 = vpop.f32.mrb[0].mxu0
        %v2101 = vadd.f32 0.0, %v2100
        %v2102 = vpop.f32.mrb[0].mxu0
        %2103 = vmatprep.mubr.bf16.mxu0 0
        %2104 = vmatmul.mubr.bf16.gmra.mrb[0].mxu0 %v1980
        %v2105 = vpop.f32.mrb[0].mxu0
        %v2106 = vadd.f32 0.0, %v2105
        %v2107 = vpop.f32.mrb[0].mxu0
        %v2108 = vpop.f32.mrb[0].mxu0
        %v2109 = vadd.f32 0.0, %v2108
        %v2110 = vpop.f32.mrb[0].mxu0
        %2111 = vmatprep.mubr.bf16.mxu0 0
        %2112 = vmatmul.mubr.bf16.gmra.mrb[0].mxu0 %v1983
        %v2113 = vpop.f32.mrb[0].mxu0
        %v2114 = vadd.f32 0.0, %v2113
        %v2115 = vpop.f32.mrb[0].mxu0
        %v2116 = vpop.f32.mrb[0].mxu0
        %v2117 = vadd.f32 0.0, %v2116
        %v2118 = vpop.f32.mrb[0].mxu0
        %2119 = vmatprep.mubr.bf16.mxu0 0
        %2120 = vmatmul.mubr.bf16.gmra.mrb[0].mxu0 %v1986
        %v2121 = vpop.f32.mrb[0].mxu0
        %v2122 = vadd.f32 0.0, %v2121
        %v2123 = vpop.f32.mrb[0].mxu0
        %v2124 = vpop.f32.mrb[0].mxu0
        %v2125 = vadd.f32 0.0, %v2124
        %v2126 = vpop.f32.mrb[0].mxu0
        %2127 = vmatprep.mubr.bf16.mxu0 0
        %2128 = vmatmul.mubr.bf16.gmra.mrb[0].mxu0 %v1989
        %v2129 = vpop.f32.mrb[0].mxu0
        %v2130 = vadd.f32 0.0, %v2129
        %v2131 = vpop.f32.mrb[0].mxu0
        %v2132 = vpop.f32.mrb[0].mxu0
        %v2133 = vadd.f32 0.0, %v2132
        %v2134 = vpop.f32.mrb[0].mxu0
        %2135 = vdwg.mxu0
        %v2136 = vadd.f32 %v1870, %v2026
        %v2137 = vadd.f32 %v1871, %v2029
        %v2138 = vadd.f32 %v1872, %v2034
        %v2139 = vadd.f32 %v1873, %v2037
        %v2140 = vadd.f32 %v1874, %v2042
        %v2141 = vadd.f32 %v1875, %v2045
        %v2142 = vadd.f32 %v1876, %v2050
        %v2143 = vadd.f32 %v1877, %v2053
        %v2144 = vadd.f32 %v1878, %v2058
        %v2145 = vadd.f32 %v1879, %v2061
        %v2146 = vadd.f32 %v1880, %v2066
        %v2147 = vadd.f32 %v1881, %v2069
        %v2148 = vadd.f32 %v1882, %v2074
        %v2149 = vadd.f32 %v1883, %v2077
        %v2150 = vadd.f32 %v1884, %v2082
        %v2151 = vadd.f32 %v1885, %v2085
        %v2152 = vadd.f32 %v1886, %v2090
        %v2153 = vadd.f32 %v1887, %v2093
        %v2154 = vadd.f32 %v1888, %v2098
        %v2155 = vadd.f32 %v1889, %v2101
        %v2156 = vadd.f32 %v1890, %v2106
        %v2157 = vadd.f32 %v1891, %v2109
        %v2158 = vadd.f32 %v1892, %v2114
        %v2159 = vadd.f32 %v1893, %v2117
        %v2160 = vadd.f32 %v1894, %v2122
        %v2161 = vadd.f32 %v1895, %v2125
        %v2162 = vadd.f32 %v1896, %v2130
        %v2163 = vadd.f32 %v1897, %v2133
        %v2164 = vld [vmem:[%s292 + $0x21] sm:$0xff]
        %v2165 = vld [vmem:[%s292 + $0x29] sm:$0xff]
        %v2166 = vld [vmem:[%s292 + $0x31] sm:$0xff]
        %v2167 = vld [vmem:[%s292 + $0x39] sm:$0xff]
        %v2168 = vld [vmem:[%s292 + $0x41] sm:$0xff]
        %v2169 = vld [vmem:[%s292 + $0x49] sm:$0xff]
        %v2170 = vld [vmem:[%s292 + $0x51] sm:$0xff]
        %v2171 = vld [vmem:[%s292 + $0x59] sm:$0xff]
        %v2172 = vld [vmem:[%s292 + $0x61] sm:$0xff]
        %v2173 = vld [vmem:[%s292 + $0x69] sm:$0xff]
        %v2174 = vld [vmem:[%s292 + $0x71] sm:$0xff]
        %v2175 = vld [vmem:[%s292 + $0x79] sm:$0xff]
        %v2176 = vld [vmem:[%s292 + $0x81] sm:$0xff]
        %v2177 = vld [vmem:[%s292 + $0x89] sm:$0xff]
        %v2178 = vld [vmem:[%s292 + $0x91] sm:$0xff]
        %v2179 = vld [vmem:[%s292 + $0x99] sm:$0xff]
        %v2180 = vld [vmem:[%s292 + $0xa1] sm:$0xff]
        %v2181 = vld [vmem:[%s292 + $0xa9] sm:$0xff]
        %v2182 = vld [vmem:[%s292 + $0xb1] sm:$0xff]
        %v2183 = vld [vmem:[%s292 + $0xb9] sm:$0xff]
        %v2184 = vld [vmem:[%s292 + $0xc1] sm:$0xff]
        %v2185 = vld [vmem:[%s292 + $0xc9] sm:$0xff]
        %v2186 = vld [vmem:[%s292 + $0xd1] sm:$0xff]
        %v2187 = vld [vmem:[%s292 + $0xd9] sm:$0xff]
        %v2188 = vld [vmem:[%s292 + $0xe1] sm:$0xff]
        %v2189 = vld [vmem:[%s292 + $0xe9] sm:$0xff]
        %v2190 = vld [vmem:[%s292 + $0xf1] sm:$0xff]
        %v2191 = vld [vmem:[%s292 + $0xf9] sm:$0xff]
        %v2192 = vpack.c.bf16 %v2165, %v2164
        %v2193 = vpack.c.bf16 %v2167, %v2166
        %v2194 = vpack.c.bf16 %v2169, %v2168
        %v2195 = vpack.c.bf16 %v2171, %v2170
        %v2196 = vpack.c.bf16 %v2173, %v2172
        %v2197 = vpack.c.bf16 %v2175, %v2174
        %v2198 = vpack.c.bf16 %v2177, %v2176
        %v2199 = vpack.c.bf16 %v2179, %v2178
        %v2200 = vpack.c.bf16 %v2181, %v2180
        %v2201 = vpack.c.bf16 %v2183, %v2182
        %v2202 = vpack.c.bf16 %v2185, %v2184
        %v2203 = vpack.c.bf16 %v2187, %v2186
        %v2204 = vpack.c.bf16 %v2189, %v2188
        %v2205 = vpack.c.bf16 %v2191, %v2190
        %s2206 = scalar_lea.vmem [#allocation7], 56
        %v2207 = vld [vmem:[%s2206] sm:$0xf]
        %v2208 = vld [vmem:[%s2206 + $0x4] sm:$0xf]
        %v2211 = vunpack.c.l.b16 %v2207
        %v2212 = vunpack.c.l.b16 %v2208
        %v2213 = vpack.c.b16 %v2212, %v2211
        %v2216 = vsel %vm453, %v2192, 0
        %v2219 = vsel %vm453, %v2193, 0
        %v2222 = vsel %vm453, %v2194, 0
        %v2225 = vsel %vm453, %v2195, 0
        %v2228 = vsel %vm453, %v2196, 0
        %v2231 = vsel %vm453, %v2197, 0
        %v2234 = vsel %vm453, %v2198, 0
        %v2237 = vsel %vm453, %v2199, 0
        %v2240 = vsel %vm453, %v2200, 0
        %v2243 = vsel %vm453, %v2201, 0
        %v2246 = vsel %vm453, %v2202, 0
        %v2249 = vsel %vm453, %v2203, 0
        %v2252 = vsel %vm453, %v2204, 0
        %v2255 = vsel %vm453, %v2205, 0
        %2257 = vmatprep.subr.bf16.mxu0 0
        %2258 = vmatpush1.bf16.msra.mxu0 %v2213
        %2259 = vmatprep.subr.bf16.mxu0 0
        %2260 = vmatpush1.bf16.msra.mxu0 0
        %2261 = vmatprep.subr.bf16.mxu0 0
        %2262 = vmatpush1.bf16.msra.mxu0 0
        %2263 = vmatprep.subr.bf16.mxu0 0
        %2264 = vmatpush1.bf16.msra.mxu0 0
        %2265 = vmatprep.subr.bf16.mxu0 0
        %2266 = vmatpush1.bf16.msra.mxu0 0
        %2267 = vmatprep.subr.bf16.mxu0 0
        %2268 = vmatpush1.bf16.msra.mxu0 0
        %2269 = vmatprep.subr.bf16.mxu0 0
        %2270 = vmatpush1.bf16.msra.mxu0 0
        %2271 = vmatprep.subr.bf16.mxu0 0
        %2272 = vmatpush1.bf16.msra.mxu0 0
        %2273 = vmatprep.subr.bf16.mxu0 0
        %2274 = vmatpush1.bf16.msra.mxu0 0
        %2275 = vmatprep.subr.bf16.mxu0 0
        %2276 = vmatpush1.bf16.msra.mxu0 0
        %2277 = vmatprep.subr.bf16.mxu0 0
        %2278 = vmatpush1.bf16.msra.mxu0 0
        %2279 = vmatprep.subr.bf16.mxu0 0
        %2280 = vmatpush1.bf16.msra.mxu0 0
        %2281 = vmatprep.subr.bf16.mxu0 0
        %2282 = vmatpush1.bf16.msra.mxu0 0
        %2283 = vmatprep.subr.bf16.mxu0 0
        %2284 = vmatpush1.bf16.msra.mxu0 0
        %2285 = vmatprep.subr.bf16.mxu0 0
        %2286 = vmatpush1.bf16.msra.mxu0 0
        %2287 = vmatprep.subr.bf16.mxu0 0
        %2288 = vmatpush1.bf16.msra.mxu0 0
        %2289 = vmatprep.mubr.bf16.mxu0 0
        %2290 = vmatmul.mubr.bf16.gmra.mrb[0].mxu0 %v2216
        %v2291 = vpop.f32.mrb[0].mxu0
        %v2292 = vadd.f32 0.0, %v2291
        %v2293 = vpop.f32.mrb[0].mxu0
        %v2294 = vpop.f32.mrb[0].mxu0
        %v2295 = vadd.f32 0.0, %v2294
        %v2296 = vpop.f32.mrb[0].mxu0
        %2297 = vmatprep.mubr.bf16.mxu0 0
        %2298 = vmatmul.mubr.bf16.gmra.mrb[0].mxu0 %v2219
        %v2299 = vpop.f32.mrb[0].mxu0
        %v2300 = vadd.f32 0.0, %v2299
        %v2301 = vpop.f32.mrb[0].mxu0
        %v2302 = vpop.f32.mrb[0].mxu0
        %v2303 = vadd.f32 0.0, %v2302
        %v2304 = vpop.f32.mrb[0].mxu0
        %2305 = vmatprep.mubr.bf16.mxu0 0
        %2306 = vmatmul.mubr.bf16.gmra.mrb[0].mxu0 %v2222
        %v2307 = vpop.f32.mrb[0].mxu0
        %v2308 = vadd.f32 0.0, %v2307
        %v2309 = vpop.f32.mrb[0].mxu0
        %v2310 = vpop.f32.mrb[0].mxu0
        %v2311 = vadd.f32 0.0, %v2310
        %v2312 = vpop.f32.mrb[0].mxu0
        %2313 = vmatprep.mubr.bf16.mxu0 0
        %2314 = vmatmul.mubr.bf16.gmra.mrb[0].mxu0 %v2225
        %v2315 = vpop.f32.mrb[0].mxu0
        %v2316 = vadd.f32 0.0, %v2315
        %v2317 = vpop.f32.mrb[0].mxu0
        %v2318 = vpop.f32.mrb[0].mxu0
        %v2319 = vadd.f32 0.0, %v2318
        %v2320 = vpop.f32.mrb[0].mxu0
        %2321 = vmatprep.mubr.bf16.mxu0 0
        %2322 = vmatmul.mubr.bf16.gmra.mrb[0].mxu0 %v2228
        %v2323 = vpop.f32.mrb[0].mxu0
        %v2324 = vadd.f32 0.0, %v2323
        %v2325 = vpop.f32.mrb[0].mxu0
        %v2326 = vpop.f32.mrb[0].mxu0
        %v2327 = vadd.f32 0.0, %v2326
        %v2328 = vpop.f32.mrb[0].mxu0
        %2329 = vmatprep.mubr.bf16.mxu0 0
        %2330 = vmatmul.mubr.bf16.gmra.mrb[0].mxu0 %v2231
        %v2331 = vpop.f32.mrb[0].mxu0
        %v2332 = vadd.f32 0.0, %v2331
        %v2333 = vpop.f32.mrb[0].mxu0
        %v2334 = vpop.f32.mrb[0].mxu0
        %v2335 = vadd.f32 0.0, %v2334
        %v2336 = vpop.f32.mrb[0].mxu0
        %2337 = vmatprep.mubr.bf16.mxu0 0
        %2338 = vmatmul.mubr.bf16.gmra.mrb[0].mxu0 %v2234
        %v2339 = vpop.f32.mrb[0].mxu0
        %v2340 = vadd.f32 0.0, %v2339
        %v2341 = vpop.f32.mrb[0].mxu0
        %v2342 = vpop.f32.mrb[0].mxu0
        %v2343 = vadd.f32 0.0, %v2342
        %v2344 = vpop.f32.mrb[0].mxu0
        %2345 = vmatprep.mubr.bf16.mxu0 0
        %2346 = vmatmul.mubr.bf16.gmra.mrb[0].mxu0 %v2237
        %v2347 = vpop.f32.mrb[0].mxu0
        %v2348 = vadd.f32 0.0, %v2347
        %v2349 = vpop.f32.mrb[0].mxu0
        %v2350 = vpop.f32.mrb[0].mxu0
        %v2351 = vadd.f32 0.0, %v2350
        %v2352 = vpop.f32.mrb[0].mxu0
        %2353 = vmatprep.mubr.bf16.mxu0 0
        %2354 = vmatmul.mubr.bf16.gmra.mrb[0].mxu0 %v2240
        %v2355 = vpop.f32.mrb[0].mxu0
        %v2356 = vadd.f32 0.0, %v2355
        %v2357 = vpop.f32.mrb[0].mxu0
        %v2358 = vpop.f32.mrb[0].mxu0
        %v2359 = vadd.f32 0.0, %v2358
        %v2360 = vpop.f32.mrb[0].mxu0
        %2361 = vmatprep.mubr.bf16.mxu0 0
        %2362 = vmatmul.mubr.bf16.gmra.mrb[0].mxu0 %v2243
        %v2363 = vpop.f32.mrb[0].mxu0
        %v2364 = vadd.f32 0.0, %v2363
        %v2365 = vpop.f32.mrb[0].mxu0
        %v2366 = vpop.f32.mrb[0].mxu0
        %v2367 = vadd.f32 0.0, %v2366
        %v2368 = vpop.f32.mrb[0].mxu0
        %2369 = vmatprep.mubr.bf16.mxu0 0
        %2370 = vmatmul.mubr.bf16.gmra.mrb[0].mxu0 %v2246
        %v2371 = vpop.f32.mrb[0].mxu0
        %v2372 = vadd.f32 0.0, %v2371
        %v2373 = vpop.f32.mrb[0].mxu0
        %v2374 = vpop.f32.mrb[0].mxu0
        %v2375 = vadd.f32 0.0, %v2374
        %v2376 = vpop.f32.mrb[0].mxu0
        %2377 = vmatprep.mubr.bf16.mxu0 0
        %2378 = vmatmul.mubr.bf16.gmra.mrb[0].mxu0 %v2249
        %v2379 = vpop.f32.mrb[0].mxu0
        %v2380 = vadd.f32 0.0, %v2379
        %v2381 = vpop.f32.mrb[0].mxu0
        %v2382 = vpop.f32.mrb[0].mxu0
        %v2383 = vadd.f32 0.0, %v2382
        %v2384 = vpop.f32.mrb[0].mxu0
        %2385 = vmatprep.mubr.bf16.mxu0 0
        %2386 = vmatmul.mubr.bf16.gmra.mrb[0].mxu0 %v2252
        %v2387 = vpop.f32.mrb[0].mxu0
        %v2388 = vadd.f32 0.0, %v2387
        %v2389 = vpop.f32.mrb[0].mxu0
        %v2390 = vpop.f32.mrb[0].mxu0
        %v2391 = vadd.f32 0.0, %v2390
        %v2392 = vpop.f32.mrb[0].mxu0
        %2393 = vmatprep.mubr.bf16.mxu0 0
        %2394 = vmatmul.mubr.bf16.gmra.mrb[0].mxu0 %v2255
        %v2395 = vpop.f32.mrb[0].mxu0
        %v2396 = vadd.f32 0.0, %v2395
        %v2397 = vpop.f32.mrb[0].mxu0
        %v2398 = vpop.f32.mrb[0].mxu0
        %v2399 = vadd.f32 0.0, %v2398
        %v2400 = vpop.f32.mrb[0].mxu0
        %2401 = vdwg.mxu0
        %v2402 = vadd.f32 %v2136, %v2292
        %v2403 = vadd.f32 %v2137, %v2295
        %v2404 = vadd.f32 %v2138, %v2300
        %v2405 = vadd.f32 %v2139, %v2303
        %v2406 = vadd.f32 %v2140, %v2308
        %v2407 = vadd.f32 %v2141, %v2311
        %v2408 = vadd.f32 %v2142, %v2316
        %v2409 = vadd.f32 %v2143, %v2319
        %v2410 = vadd.f32 %v2144, %v2324
        %v2411 = vadd.f32 %v2145, %v2327
        %v2412 = vadd.f32 %v2146, %v2332
        %v2413 = vadd.f32 %v2147, %v2335
        %v2414 = vadd.f32 %v2148, %v2340
        %v2415 = vadd.f32 %v2149, %v2343
        %v2416 = vadd.f32 %v2150, %v2348
        %v2417 = vadd.f32 %v2151, %v2351
        %v2418 = vadd.f32 %v2152, %v2356
        %v2419 = vadd.f32 %v2153, %v2359
        %v2420 = vadd.f32 %v2154, %v2364
        %v2421 = vadd.f32 %v2155, %v2367
        %v2422 = vadd.f32 %v2156, %v2372
        %v2423 = vadd.f32 %v2157, %v2375
        %v2424 = vadd.f32 %v2158, %v2380
        %v2425 = vadd.f32 %v2159, %v2383
        %v2426 = vadd.f32 %v2160, %v2388
        %v2427 = vadd.f32 %v2161, %v2391
        %v2428 = vadd.f32 %v2162, %v2396
        %v2429 = vadd.f32 %v2163, %v2399
        %v2430 = vld [vmem:[%s292 + $0x22] sm:$0xff]
        %v2431 = vld [vmem:[%s292 + $0x2a] sm:$0xff]
        %v2432 = vld [vmem:[%s292 + $0x32] sm:$0xff]
        %v2433 = vld [vmem:[%s292 + $0x3a] sm:$0xff]
        %v2434 = vld [vmem:[%s292 + $0x42] sm:$0xff]
        %v2435 = vld [vmem:[%s292 + $0x4a] sm:$0xff]
        %v2436 = vld [vmem:[%s292 + $0x52] sm:$0xff]
        %v2437 = vld [vmem:[%s292 + $0x5a] sm:$0xff]
        %v2438 = vld [vmem:[%s292 + $0x62] sm:$0xff]
        %v2439 = vld [vmem:[%s292 + $0x6a] sm:$0xff]
        %v2440 = vld [vmem:[%s292 + $0x72] sm:$0xff]
        %v2441 = vld [vmem:[%s292 + $0x7a] sm:$0xff]
        %v2442 = vld [vmem:[%s292 + $0x82] sm:$0xff]
        %v2443 = vld [vmem:[%s292 + $0x8a] sm:$0xff]
        %v2444 = vld [vmem:[%s292 + $0x92] sm:$0xff]
        %v2445 = vld [vmem:[%s292 + $0x9a] sm:$0xff]
        %v2446 = vld [vmem:[%s292 + $0xa2] sm:$0xff]
        %v2447 = vld [vmem:[%s292 + $0xaa] sm:$0xff]
        %v2448 = vld [vmem:[%s292 + $0xb2] sm:$0xff]
        %v2449 = vld [vmem:[%s292 + $0xba] sm:$0xff]
        %v2450 = vld [vmem:[%s292 + $0xc2] sm:$0xff]
        %v2451 = vld [vmem:[%s292 + $0xca] sm:$0xff]
        %v2452 = vld [vmem:[%s292 + $0xd2] sm:$0xff]
        %v2453 = vld [vmem:[%s292 + $0xda] sm:$0xff]
        %v2454 = vld [vmem:[%s292 + $0xe2] sm:$0xff]
        %v2455 = vld [vmem:[%s292 + $0xea] sm:$0xff]
        %v2456 = vld [vmem:[%s292 + $0xf2] sm:$0xff]
        %v2457 = vld [vmem:[%s292 + $0xfa] sm:$0xff]
        %v2458 = vpack.c.bf16 %v2431, %v2430
        %v2459 = vpack.c.bf16 %v2433, %v2432
        %v2460 = vpack.c.bf16 %v2435, %v2434
        %v2461 = vpack.c.bf16 %v2437, %v2436
        %v2462 = vpack.c.bf16 %v2439, %v2438
        %v2463 = vpack.c.bf16 %v2441, %v2440
        %v2464 = vpack.c.bf16 %v2443, %v2442
        %v2465 = vpack.c.bf16 %v2445, %v2444
        %v2466 = vpack.c.bf16 %v2447, %v2446
        %v2467 = vpack.c.bf16 %v2449, %v2448
        %v2468 = vpack.c.bf16 %v2451, %v2450
        %v2469 = vpack.c.bf16 %v2453, %v2452
        %v2470 = vpack.c.bf16 %v2455, %v2454
        %v2471 = vpack.c.bf16 %v2457, %v2456
        %s2472 = scalar_lea.vmem [#allocation7], 64
        %v2473 = vld [vmem:[%s2472] sm:$0xf]
        %v2474 = vld [vmem:[%s2472 + $0x4] sm:$0xf]
        %v2477 = vunpack.c.l.b16 %v2473
        %v2478 = vunpack.c.l.b16 %v2474
        %v2479 = vpack.c.b16 %v2478, %v2477
        %v2482 = vsel %vm453, %v2458, 0
        %v2485 = vsel %vm453, %v2459, 0
        %v2488 = vsel %vm453, %v2460, 0
        %v2491 = vsel %vm453, %v2461, 0
        %v2494 = vsel %vm453, %v2462, 0
        %v2497 = vsel %vm453, %v2463, 0
        %v2500 = vsel %vm453, %v2464, 0
        %v2503 = vsel %vm453, %v2465, 0
        %v2506 = vsel %vm453, %v2466, 0
        %v2509 = vsel %vm453, %v2467, 0
        %v2512 = vsel %vm453, %v2468, 0
        %v2515 = vsel %vm453, %v2469, 0
        %v2518 = vsel %vm453, %v2470, 0
        %v2521 = vsel %vm453, %v2471, 0
        %2523 = vmatprep.subr.bf16.mxu0 0
        %2524 = vmatpush1.bf16.msra.mxu0 %v2479
        %2525 = vmatprep.subr.bf16.mxu0 0
        %2526 = vmatpush1.bf16.msra.mxu0 0
        %2527 = vmatprep.subr.bf16.mxu0 0
        %2528 = vmatpush1.bf16.msra.mxu0 0
        %2529 = vmatprep.subr.bf16.mxu0 0
        %2530 = vmatpush1.bf16.msra.mxu0 0
        %2531 = vmatprep.subr.bf16.mxu0 0
        %2532 = vmatpush1.bf16.msra.mxu0 0
        %2533 = vmatprep.subr.bf16.mxu0 0
        %2534 = vmatpush1.bf16.msra.mxu0 0
        %2535 = vmatprep.subr.bf16.mxu0 0
        %2536 = vmatpush1.bf16.msra.mxu0 0
        %2537 = vmatprep.subr.bf16.mxu0 0
        %2538 = vmatpush1.bf16.msra.mxu0 0
        %2539 = vmatprep.subr.bf16.mxu0 0
        %2540 = vmatpush1.bf16.msra.mxu0 0
        %2541 = vmatprep.subr.bf16.mxu0 0
        %2542 = vmatpush1.bf16.msra.mxu0 0
        %2543 = vmatprep.subr.bf16.mxu0 0
        %2544 = vmatpush1.bf16.msra.mxu0 0
        %2545 = vmatprep.subr.bf16.mxu0 0
        %2546 = vmatpush1.bf16.msra.mxu0 0
        %2547 = vmatprep.subr.bf16.mxu0 0
        %2548 = vmatpush1.bf16.msra.mxu0 0
        %2549 = vmatprep.subr.bf16.mxu0 0
        %2550 = vmatpush1.bf16.msra.mxu0 0
        %2551 = vmatprep.subr.bf16.mxu0 0
        %2552 = vmatpush1.bf16.msra.mxu0 0
        %2553 = vmatprep.subr.bf16.mxu0 0
        %2554 = vmatpush1.bf16.msra.mxu0 0
        %2555 = vmatprep.mubr.bf16.mxu0 0
        %2556 = vmatmul.mubr.bf16.gmra.mrb[0].mxu0 %v2482
        %v2557 = vpop.f32.mrb[0].mxu0
        %v2558 = vadd.f32 0.0, %v2557
        %v2559 = vpop.f32.mrb[0].mxu0
        %v2560 = vpop.f32.mrb[0].mxu0
        %v2561 = vadd.f32 0.0, %v2560
        %v2562 = vpop.f32.mrb[0].mxu0
        %2563 = vmatprep.mubr.bf16.mxu0 0
        %2564 = vmatmul.mubr.bf16.gmra.mrb[0].mxu0 %v2485
        %v2565 = vpop.f32.mrb[0].mxu0
        %v2566 = vadd.f32 0.0, %v2565
        %v2567 = vpop.f32.mrb[0].mxu0
        %v2568 = vpop.f32.mrb[0].mxu0
        %v2569 = vadd.f32 0.0, %v2568
        %v2570 = vpop.f32.mrb[0].mxu0
        %2571 = vmatprep.mubr.bf16.mxu0 0
        %2572 = vmatmul.mubr.bf16.gmra.mrb[0].mxu0 %v2488
        %v2573 = vpop.f32.mrb[0].mxu0
        %v2574 = vadd.f32 0.0, %v2573
        %v2575 = vpop.f32.mrb[0].mxu0
        %v2576 = vpop.f32.mrb[0].mxu0
        %v2577 = vadd.f32 0.0, %v2576
        %v2578 = vpop.f32.mrb[0].mxu0
        %2579 = vmatprep.mubr.bf16.mxu0 0
        %2580 = vmatmul.mubr.bf16.gmra.mrb[0].mxu0 %v2491
        %v2581 = vpop.f32.mrb[0].mxu0
        %v2582 = vadd.f32 0.0, %v2581
        %v2583 = vpop.f32.mrb[0].mxu0
        %v2584 = vpop.f32.mrb[0].mxu0
        %v2585 = vadd.f32 0.0, %v2584
        %v2586 = vpop.f32.mrb[0].mxu0
        %2587 = vmatprep.mubr.bf16.mxu0 0
        %2588 = vmatmul.mubr.bf16.gmra.mrb[0].mxu0 %v2494
        %v2589 = vpop.f32.mrb[0].mxu0
        %v2590 = vadd.f32 0.0, %v2589
        %v2591 = vpop.f32.mrb[0].mxu0
        %v2592 = vpop.f32.mrb[0].mxu0
        %v2593 = vadd.f32 0.0, %v2592
        %v2594 = vpop.f32.mrb[0].mxu0
        %2595 = vmatprep.mubr.bf16.mxu0 0
        %2596 = vmatmul.mubr.bf16.gmra.mrb[0].mxu0 %v2497
        %v2597 = vpop.f32.mrb[0].mxu0
        %v2598 = vadd.f32 0.0, %v2597
        %v2599 = vpop.f32.mrb[0].mxu0
        %v2600 = vpop.f32.mrb[0].mxu0
        %v2601 = vadd.f32 0.0, %v2600
        %v2602 = vpop.f32.mrb[0].mxu0
        %2603 = vmatprep.mubr.bf16.mxu0 0
        %2604 = vmatmul.mubr.bf16.gmra.mrb[0].mxu0 %v2500
        %v2605 = vpop.f32.mrb[0].mxu0
        %v2606 = vadd.f32 0.0, %v2605
        %v2607 = vpop.f32.mrb[0].mxu0
        %v2608 = vpop.f32.mrb[0].mxu0
        %v2609 = vadd.f32 0.0, %v2608
        %v2610 = vpop.f32.mrb[0].mxu0
        %2611 = vmatprep.mubr.bf16.mxu0 0
        %2612 = vmatmul.mubr.bf16.gmra.mrb[0].mxu0 %v2503
        %v2613 = vpop.f32.mrb[0].mxu0
        %v2614 = vadd.f32 0.0, %v2613
        %v2615 = vpop.f32.mrb[0].mxu0
        %v2616 = vpop.f32.mrb[0].mxu0
        %v2617 = vadd.f32 0.0, %v2616
        %v2618 = vpop.f32.mrb[0].mxu0
        %2619 = vmatprep.mubr.bf16.mxu0 0
        %2620 = vmatmul.mubr.bf16.gmra.mrb[0].mxu0 %v2506
        %v2621 = vpop.f32.mrb[0].mxu0
        %v2622 = vadd.f32 0.0, %v2621
        %v2623 = vpop.f32.mrb[0].mxu0
        %v2624 = vpop.f32.mrb[0].mxu0
        %v2625 = vadd.f32 0.0, %v2624
        %v2626 = vpop.f32.mrb[0].mxu0
        %2627 = vmatprep.mubr.bf16.mxu0 0
        %2628 = vmatmul.mubr.bf16.gmra.mrb[0].mxu0 %v2509
        %v2629 = vpop.f32.mrb[0].mxu0
        %v2630 = vadd.f32 0.0, %v2629
        %v2631 = vpop.f32.mrb[0].mxu0
        %v2632 = vpop.f32.mrb[0].mxu0
        %v2633 = vadd.f32 0.0, %v2632
        %v2634 = vpop.f32.mrb[0].mxu0
        %2635 = vmatprep.mubr.bf16.mxu0 0
        %2636 = vmatmul.mubr.bf16.gmra.mrb[0].mxu0 %v2512
        %v2637 = vpop.f32.mrb[0].mxu0
        %v2638 = vadd.f32 0.0, %v2637
        %v2639 = vpop.f32.mrb[0].mxu0
        %v2640 = vpop.f32.mrb[0].mxu0
        %v2641 = vadd.f32 0.0, %v2640
        %v2642 = vpop.f32.mrb[0].mxu0
        %2643 = vmatprep.mubr.bf16.mxu0 0
        %2644 = vmatmul.mubr.bf16.gmra.mrb[0].mxu0 %v2515
        %v2645 = vpop.f32.mrb[0].mxu0
        %v2646 = vadd.f32 0.0, %v2645
        %v2647 = vpop.f32.mrb[0].mxu0
        %v2648 = vpop.f32.mrb[0].mxu0
        %v2649 = vadd.f32 0.0, %v2648
        %v2650 = vpop.f32.mrb[0].mxu0
        %2651 = vmatprep.mubr.bf16.mxu0 0
        %2652 = vmatmul.mubr.bf16.gmra.mrb[0].mxu0 %v2518
        %v2653 = vpop.f32.mrb[0].mxu0
        %v2654 = vadd.f32 0.0, %v2653
        %v2655 = vpop.f32.mrb[0].mxu0
        %v2656 = vpop.f32.mrb[0].mxu0
        %v2657 = vadd.f32 0.0, %v2656
        %v2658 = vpop.f32.mrb[0].mxu0
        %2659 = vmatprep.mubr.bf16.mxu0 0
        %2660 = vmatmul.mubr.bf16.gmra.mrb[0].mxu0 %v2521
        %v2661 = vpop.f32.mrb[0].mxu0
        %v2662 = vadd.f32 0.0, %v2661
        %v2663 = vpop.f32.mrb[0].mxu0
        %v2664 = vpop.f32.mrb[0].mxu0
        %v2665 = vadd.f32 0.0, %v2664
        %v2666 = vpop.f32.mrb[0].mxu0
        %2667 = vdwg.mxu0
        %v2668 = vadd.f32 %v2402, %v2558
        %v2669 = vadd.f32 %v2403, %v2561
        %v2670 = vadd.f32 %v2404, %v2566
        %v2671 = vadd.f32 %v2405, %v2569
        %v2672 = vadd.f32 %v2406, %v2574
        %v2673 = vadd.f32 %v2407, %v2577
        %v2674 = vadd.f32 %v2408, %v2582
        %v2675 = vadd.f32 %v2409, %v2585
        %v2676 = vadd.f32 %v2410, %v2590
        %v2677 = vadd.f32 %v2411, %v2593
        %v2678 = vadd.f32 %v2412, %v2598
        %v2679 = vadd.f32 %v2413, %v2601
        %v2680 = vadd.f32 %v2414, %v2606
        %v2681 = vadd.f32 %v2415, %v2609
        %v2682 = vadd.f32 %v2416, %v2614
        %v2683 = vadd.f32 %v2417, %v2617
        %v2684 = vadd.f32 %v2418, %v2622
        %v2685 = vadd.f32 %v2419, %v2625
        %v2686 = vadd.f32 %v2420, %v2630
        %v2687 = vadd.f32 %v2421, %v2633
        %v2688 = vadd.f32 %v2422, %v2638
        %v2689 = vadd.f32 %v2423, %v2641
        %v2690 = vadd.f32 %v2424, %v2646
        %v2691 = vadd.f32 %v2425, %v2649
        %v2692 = vadd.f32 %v2426, %v2654
        %v2693 = vadd.f32 %v2427, %v2657
        %v2694 = vadd.f32 %v2428, %v2662
        %v2695 = vadd.f32 %v2429, %v2665
        %v2696 = vld [vmem:[#allocation13] sm:$0x1]
        %v2697 = vld [vmem:[#allocation13 + $0x1] sm:$0x1]
        %v2698 = vld [vmem:[#allocation13 + $0x2] sm:$0x1]
        %v2699 = vlaneseq
        %v2700 = vshrl.u32 %v2699, 7
        %v2701 = vsub.s32 0, %v2700
        %v2702 = vrot.slane %v2696, %v2701
        %v2703 = vmul.f32 %v2668, %v2702
        %v2704 = vmul.f32 %v2669, %v2702
        %v2705 = vmul.f32 %v2670, %v2702
        %v2706 = vmul.f32 %v2671, %v2702
        %v2707 = vmul.f32 %v2672, %v2702
        %v2708 = vmul.f32 %v2673, %v2702
        %v2709 = vmul.f32 %v2674, %v2702
        %v2710 = vmul.f32 %v2675, %v2702
        %v2711 = vmul.f32 %v2676, %v2702
        %v2712 = vmul.f32 %v2677, %v2702
        %v2713 = vmul.f32 %v2678, %v2702
        %v2714 = vmul.f32 %v2679, %v2702
        %v2715 = vmul.f32 %v2680, %v2702
        %v2716 = vmul.f32 %v2681, %v2702
        %v2717 = vmul.f32 %v2682, %v2702
        %v2718 = vmul.f32 %v2683, %v2702
        %v2719 = vmul.f32 %v2684, %v2702
        %v2720 = vmul.f32 %v2685, %v2702
        %v2721 = vmul.f32 %v2686, %v2702
        %v2722 = vmul.f32 %v2687, %v2702
        %v2723 = vmul.f32 %v2688, %v2702
        %v2724 = vmul.f32 %v2689, %v2702
        %v2725 = vmul.f32 %v2690, %v2702
        %v2726 = vmul.f32 %v2691, %v2702
        %v2727 = vmul.f32 %v2692, %v2702
        %v2728 = vmul.f32 %v2693, %v2702
        %v2729 = vmul.f32 %v2694, %v2702
        %v2730 = vmul.f32 %v2695, %v2702
        %v2731 = vlaneseq
        %v2732 = vshrl.u32 %v2731, 7
        %v2733 = vsub.s32 0, %v2732
        %v2734 = vrot.slane %v2697, %v2733
        %v2735 = vadd.f32 %v2703, %v2734
        %v2736 = vadd.f32 %v2704, %v2734
        %v2737 = vadd.f32 %v2705, %v2734
        %v2738 = vadd.f32 %v2706, %v2734
        %v2739 = vadd.f32 %v2707, %v2734
        %v2740 = vadd.f32 %v2708, %v2734
        %v2741 = vadd.f32 %v2709, %v2734
        %v2742 = vadd.f32 %v2710, %v2734
        %v2743 = vadd.f32 %v2711, %v2734
        %v2744 = vadd.f32 %v2712, %v2734
        %v2745 = vadd.f32 %v2713, %v2734
        %v2746 = vadd.f32 %v2714, %v2734
        %v2747 = vadd.f32 %v2715, %v2734
        %v2748 = vadd.f32 %v2716, %v2734
        %v2749 = vadd.f32 %v2717, %v2734
        %v2750 = vadd.f32 %v2718, %v2734
        %v2751 = vadd.f32 %v2719, %v2734
        %v2752 = vadd.f32 %v2720, %v2734
        %v2753 = vadd.f32 %v2721, %v2734
        %v2754 = vadd.f32 %v2722, %v2734
        %v2755 = vadd.f32 %v2723, %v2734
        %v2756 = vadd.f32 %v2724, %v2734
        %v2757 = vadd.f32 %v2725, %v2734
        %v2758 = vadd.f32 %v2726, %v2734
        %v2759 = vadd.f32 %v2727, %v2734
        %v2760 = vadd.f32 %v2728, %v2734
        %v2761 = vadd.f32 %v2729, %v2734
        %v2762 = vadd.f32 %v2730, %v2734
        %vm2763 = vcmp.ge.f32.partialorder %v2735, 0.0
        %vm2764 = vcmp.ge.f32.partialorder %v2736, 0.0
        %vm2765 = vcmp.ge.f32.partialorder %v2737, 0.0
        %vm2766 = vcmp.ge.f32.partialorder %v2738, 0.0
        %vm2767 = vcmp.ge.f32.partialorder %v2739, 0.0
        %vm2768 = vcmp.ge.f32.partialorder %v2740, 0.0
        %vm2769 = vcmp.ge.f32.partialorder %v2741, 0.0
        %vm2770 = vcmp.ge.f32.partialorder %v2742, 0.0
        %vm2771 = vcmp.ge.f32.partialorder %v2743, 0.0
        %vm2772 = vcmp.ge.f32.partialorder %v2744, 0.0
        %vm2773 = vcmp.ge.f32.partialorder %v2745, 0.0
        %vm2774 = vcmp.ge.f32.partialorder %v2746, 0.0
        %vm2775 = vcmp.ge.f32.partialorder %v2747, 0.0
        %vm2776 = vcmp.ge.f32.partialorder %v2748, 0.0
        %vm2777 = vcmp.ge.f32.partialorder %v2749, 0.0
        %vm2778 = vcmp.ge.f32.partialorder %v2750, 0.0
        %vm2779 = vcmp.ge.f32.partialorder %v2751, 0.0
        %vm2780 = vcmp.ge.f32.partialorder %v2752, 0.0
        %vm2781 = vcmp.ge.f32.partialorder %v2753, 0.0
        %vm2782 = vcmp.ge.f32.partialorder %v2754, 0.0
        %vm2783 = vcmp.ge.f32.partialorder %v2755, 0.0
        %vm2784 = vcmp.ge.f32.partialorder %v2756, 0.0
        %vm2785 = vcmp.ge.f32.partialorder %v2757, 0.0
        %vm2786 = vcmp.ge.f32.partialorder %v2758, 0.0
        %vm2787 = vcmp.ge.f32.partialorder %v2759, 0.0
        %vm2788 = vcmp.ge.f32.partialorder %v2760, 0.0
        %vm2789 = vcmp.ge.f32.partialorder %v2761, 0.0
        %vm2790 = vcmp.ge.f32.partialorder %v2762, 0.0
        %v2791 = vlaneseq
        %v2792 = vshrl.u32 %v2791, 7
        %v2793 = vsub.s32 0, %v2792
        %v2794 = vrot.slane %v2698, %v2793
        %v2795 = vmul.f32 %v2794, %v2735
        %v2796 = vmul.f32 %v2794, %v2736
        %v2797 = vmul.f32 %v2794, %v2737
        %v2798 = vmul.f32 %v2794, %v2738
        %v2799 = vmul.f32 %v2794, %v2739
        %v2800 = vmul.f32 %v2794, %v2740
        %v2801 = vmul.f32 %v2794, %v2741
        %v2802 = vmul.f32 %v2794, %v2742
        %v2803 = vmul.f32 %v2794, %v2743
        %v2804 = vmul.f32 %v2794, %v2744
        %v2805 = vmul.f32 %v2794, %v2745
        %v2806 = vmul.f32 %v2794, %v2746
        %v2807 = vmul.f32 %v2794, %v2747
        %v2808 = vmul.f32 %v2794, %v2748
        %v2809 = vmul.f32 %v2794, %v2749
        %v2810 = vmul.f32 %v2794, %v2750
        %v2811 = vmul.f32 %v2794, %v2751
        %v2812 = vmul.f32 %v2794, %v2752
        %v2813 = vmul.f32 %v2794, %v2753
        %v2814 = vmul.f32 %v2794, %v2754
        %v2815 = vmul.f32 %v2794, %v2755
        %v2816 = vmul.f32 %v2794, %v2756
        %v2817 = vmul.f32 %v2794, %v2757
        %v2818 = vmul.f32 %v2794, %v2758
        %v2819 = vmul.f32 %v2794, %v2759
        %v2820 = vmul.f32 %v2794, %v2760
        %v2821 = vmul.f32 %v2794, %v2761
        %v2822 = vmul.f32 %v2794, %v2762
        %v2823 = vsel %vm2763, %v2735, %v2795
        %v2824 = vsel %vm2764, %v2736, %v2796
        %v2825 = vsel %vm2765, %v2737, %v2797
        %v2826 = vsel %vm2766, %v2738, %v2798
        %v2827 = vsel %vm2767, %v2739, %v2799
        %v2828 = vsel %vm2768, %v2740, %v2800
        %v2829 = vsel %vm2769, %v2741, %v2801
        %v2830 = vsel %vm2770, %v2742, %v2802
        %v2831 = vsel %vm2771, %v2743, %v2803
        %v2832 = vsel %vm2772, %v2744, %v2804
        %v2833 = vsel %vm2773, %v2745, %v2805
        %v2834 = vsel %vm2774, %v2746, %v2806
        %v2835 = vsel %vm2775, %v2747, %v2807
        %v2836 = vsel %vm2776, %v2748, %v2808
        %v2837 = vsel %vm2777, %v2749, %v2809
        %v2838 = vsel %vm2778, %v2750, %v2810
        %v2839 = vsel %vm2779, %v2751, %v2811
        %v2840 = vsel %vm2780, %v2752, %v2812
        %v2841 = vsel %vm2781, %v2753, %v2813
        %v2842 = vsel %vm2782, %v2754, %v2814
        %v2843 = vsel %vm2783, %v2755, %v2815
        %v2844 = vsel %vm2784, %v2756, %v2816
        %v2845 = vsel %vm2785, %v2757, %v2817
        %v2846 = vsel %vm2786, %v2758, %v2818
        %v2847 = vsel %vm2787, %v2759, %v2819
        %v2848 = vsel %vm2788, %v2760, %v2820
        %v2849 = vsel %vm2789, %v2761, %v2821
        %v2850 = vsel %vm2790, %v2762, %v2822
        %v2851 = vmax.f32 %v2823, %v2825
        %v2852 = vmax.f32 %v2824, %v2826
        %v2853 = vmax.f32 %v2827, %v2829
        %v2854 = vmax.f32 %v2828, %v2830
        %v2855 = vmax.f32 %v2831, %v2833
        %v2856 = vmax.f32 %v2832, %v2834
        %v2857 = vmax.f32 %v2835, %v2837
        %v2858 = vmax.f32 %v2836, %v2838
        %v2859 = vmax.f32 %v2839, %v2841
        %v2860 = vmax.f32 %v2840, %v2842
        %v2861 = vmax.f32 %v2843, %v2845
        %v2862 = vmax.f32 %v2844, %v2846
        %v2863 = vmax.f32 %v2847, %v2849
        %v2864 = vmax.f32 %v2848, %v2850
        %v2879 = vcombine.high %v2851, %v2851
        %v2881 = vunpack.c.l.s4 1983009808
        %v2882 = vunpack.c.0.s8 %v2881
        %v2883 = vlaneseq
        %v2884 = vshrl.u32 %v2883, 7
        %v2885 = vsub.s32 %v2882, %v2884
        %v2886 = vrot.slane %v2851, %v2885
        %v2888 = vunpack.c.l.s4 1983009808
        %v2889 = vunpack.c.0.s8 %v2888
        %v2890 = vlaneseq
        %v2891 = vshrl.u32 %v2890, 7
        %v2892 = vsub.s32 %v2889, %v2891
        %v2893 = vrot.slane %v2879, %v2892
        %v2894 = vcombine.high %v2886, %v2886
        %v2895 = vcombine.high %v2893, %v2893
        %v2896 = vcombine.high %v2852, %v2852
        %v2898 = vunpack.c.l.s4 1983009808
        %v2899 = vunpack.c.0.s8 %v2898
        %v2900 = vlaneseq
        %v2901 = vshrl.u32 %v2900, 7
        %v2902 = vsub.s32 %v2899, %v2901
        %v2903 = vrot.slane %v2852, %v2902
        %v2905 = vunpack.c.l.s4 1983009808
        %v2906 = vunpack.c.0.s8 %v2905
        %v2907 = vlaneseq
        %v2908 = vshrl.u32 %v2907, 7
        %v2909 = vsub.s32 %v2906, %v2908
        %v2910 = vrot.slane %v2896, %v2909
        %v2911 = vcombine.high %v2903, %v2903
        %v2912 = vcombine.high %v2910, %v2910
        %v2913 = vcombine.high %v2853, %v2853
        %v2915 = vunpack.c.l.s4 1983009808
        %v2916 = vunpack.c.0.s8 %v2915
        %v2917 = vlaneseq
        %v2918 = vshrl.u32 %v2917, 7
        %v2919 = vsub.s32 %v2916, %v2918
        %v2920 = vrot.slane %v2853, %v2919
        %v2922 = vunpack.c.l.s4 1983009808
        %v2923 = vunpack.c.0.s8 %v2922
        %v2924 = vlaneseq
        %v2925 = vshrl.u32 %v2924, 7
        %v2926 = vsub.s32 %v2923, %v2925
        %v2927 = vrot.slane %v2913, %v2926
        %v2928 = vcombine.high %v2920, %v2920
        %v2929 = vcombine.high %v2927, %v2927
        %v2930 = vcombine.high %v2854, %v2854
        %v2932 = vunpack.c.l.s4 1983009808
        %v2933 = vunpack.c.0.s8 %v2932
        %v2934 = vlaneseq
        %v2935 = vshrl.u32 %v2934, 7
        %v2936 = vsub.s32 %v2933, %v2935
        %v2937 = vrot.slane %v2854, %v2936
        %v2939 = vunpack.c.l.s4 1983009808
        %v2940 = vunpack.c.0.s8 %v2939
        %v2941 = vlaneseq
        %v2942 = vshrl.u32 %v2941, 7
        %v2943 = vsub.s32 %v2940, %v2942
        %v2944 = vrot.slane %v2930, %v2943
        %v2945 = vcombine.high %v2937, %v2937
        %v2946 = vcombine.high %v2944, %v2944
        %v2947 = vcombine.high %v2855, %v2855
        %v2949 = vunpack.c.l.s4 1983009808
        %v2950 = vunpack.c.0.s8 %v2949
        %v2951 = vlaneseq
        %v2952 = vshrl.u32 %v2951, 7
        %v2953 = vsub.s32 %v2950, %v2952
        %v2954 = vrot.slane %v2855, %v2953
        %v2956 = vunpack.c.l.s4 1983009808
        %v2957 = vunpack.c.0.s8 %v2956
        %v2958 = vlaneseq
        %v2959 = vshrl.u32 %v2958, 7
        %v2960 = vsub.s32 %v2957, %v2959
        %v2961 = vrot.slane %v2947, %v2960
        %v2962 = vcombine.high %v2954, %v2954
        %v2963 = vcombine.high %v2961, %v2961
        %v2964 = vcombine.high %v2856, %v2856
        %v2966 = vunpack.c.l.s4 1983009808
        %v2967 = vunpack.c.0.s8 %v2966
        %v2968 = vlaneseq
        %v2969 = vshrl.u32 %v2968, 7
        %v2970 = vsub.s32 %v2967, %v2969
        %v2971 = vrot.slane %v2856, %v2970
        %v2973 = vunpack.c.l.s4 1983009808
        %v2974 = vunpack.c.0.s8 %v2973
        %v2975 = vlaneseq
        %v2976 = vshrl.u32 %v2975, 7
        %v2977 = vsub.s32 %v2974, %v2976
        %v2978 = vrot.slane %v2964, %v2977
        %v2979 = vcombine.high %v2971, %v2971
        %v2980 = vcombine.high %v2978, %v2978
        %v2981 = vcombine.high %v2857, %v2857
        %v2983 = vunpack.c.l.s4 1983009808
        %v2984 = vunpack.c.0.s8 %v2983
        %v2985 = vlaneseq
        %v2986 = vshrl.u32 %v2985, 7
        %v2987 = vsub.s32 %v2984, %v2986
        %v2988 = vrot.slane %v2857, %v2987
        %v2990 = vunpack.c.l.s4 1983009808
        %v2991 = vunpack.c.0.s8 %v2990
        %v2992 = vlaneseq
        %v2993 = vshrl.u32 %v2992, 7
        %v2994 = vsub.s32 %v2991, %v2993
        %v2995 = vrot.slane %v2981, %v2994
        %v2996 = vcombine.high %v2988, %v2988
        %v2997 = vcombine.high %v2995, %v2995
        %v2998 = vcombine.high %v2858, %v2858
        %v3000 = vunpack.c.l.s4 1983009808
        %v3001 = vunpack.c.0.s8 %v3000
        %v3002 = vlaneseq
        %v3003 = vshrl.u32 %v3002, 7
        %v3004 = vsub.s32 %v3001, %v3003
        %v3005 = vrot.slane %v2858, %v3004
        %v3007 = vunpack.c.l.s4 1983009808
        %v3008 = vunpack.c.0.s8 %v3007
        %v3009 = vlaneseq
        %v3010 = vshrl.u32 %v3009, 7
        %v3011 = vsub.s32 %v3008, %v3010
        %v3012 = vrot.slane %v2998, %v3011
        %v3013 = vcombine.high %v3005, %v3005
        %v3014 = vcombine.high %v3012, %v3012
        %v3015 = vcombine.high %v2859, %v2859
        %v3017 = vunpack.c.l.s4 1983009808
        %v3018 = vunpack.c.0.s8 %v3017
        %v3019 = vlaneseq
        %v3020 = vshrl.u32 %v3019, 7
        %v3021 = vsub.s32 %v3018, %v3020
        %v3022 = vrot.slane %v2859, %v3021
        %v3024 = vunpack.c.l.s4 1983009808
        %v3025 = vunpack.c.0.s8 %v3024
        %v3026 = vlaneseq
        %v3027 = vshrl.u32 %v3026, 7
        %v3028 = vsub.s32 %v3025, %v3027
        %v3029 = vrot.slane %v3015, %v3028
        %v3030 = vcombine.high %v3022, %v3022
        %v3031 = vcombine.high %v3029, %v3029
        %v3032 = vcombine.high %v2860, %v2860
        %v3034 = vunpack.c.l.s4 1983009808
        %v3035 = vunpack.c.0.s8 %v3034
        %v3036 = vlaneseq
        %v3037 = vshrl.u32 %v3036, 7
        %v3038 = vsub.s32 %v3035, %v3037
        %v3039 = vrot.slane %v2860, %v3038
        %v3041 = vunpack.c.l.s4 1983009808
        %v3042 = vunpack.c.0.s8 %v3041
        %v3043 = vlaneseq
        %v3044 = vshrl.u32 %v3043, 7
        %v3045 = vsub.s32 %v3042, %v3044
        %v3046 = vrot.slane %v3032, %v3045
        %v3047 = vcombine.high %v3039, %v3039
        %v3048 = vcombine.high %v3046, %v3046
        %v3049 = vcombine.high %v2861, %v2861
        %v3051 = vunpack.c.l.s4 1983009808
        %v3052 = vunpack.c.0.s8 %v3051
        %v3053 = vlaneseq
        %v3054 = vshrl.u32 %v3053, 7
        %v3055 = vsub.s32 %v3052, %v3054
        %v3056 = vrot.slane %v2861, %v3055
        %v3058 = vunpack.c.l.s4 1983009808
        %v3059 = vunpack.c.0.s8 %v3058
        %v3060 = vlaneseq
        %v3061 = vshrl.u32 %v3060, 7
        %v3062 = vsub.s32 %v3059, %v3061
        %v3063 = vrot.slane %v3049, %v3062
        %v3064 = vcombine.high %v3056, %v3056
        %v3065 = vcombine.high %v3063, %v3063
        %v3066 = vcombine.high %v2862, %v2862
        %v3068 = vunpack.c.l.s4 1983009808
        %v3069 = vunpack.c.0.s8 %v3068
        %v3070 = vlaneseq
        %v3071 = vshrl.u32 %v3070, 7
        %v3072 = vsub.s32 %v3069, %v3071
        %v3073 = vrot.slane %v2862, %v3072
        %v3075 = vunpack.c.l.s4 1983009808
        %v3076 = vunpack.c.0.s8 %v3075
        %v3077 = vlaneseq
        %v3078 = vshrl.u32 %v3077, 7
        %v3079 = vsub.s32 %v3076, %v3078
        %v3080 = vrot.slane %v3066, %v3079
        %v3081 = vcombine.high %v3073, %v3073
        %v3082 = vcombine.high %v3080, %v3080
        %v3083 = vcombine.high %v2863, %v2863
        %v3085 = vunpack.c.l.s4 1983009808
        %v3086 = vunpack.c.0.s8 %v3085
        %v3087 = vlaneseq
        %v3088 = vshrl.u32 %v3087, 7
        %v3089 = vsub.s32 %v3086, %v3088
        %v3090 = vrot.slane %v2863, %v3089
        %v3092 = vunpack.c.l.s4 1983009808
        %v3093 = vunpack.c.0.s8 %v3092
        %v3094 = vlaneseq
        %v3095 = vshrl.u32 %v3094, 7
        %v3096 = vsub.s32 %v3093, %v3095
        %v3097 = vrot.slane %v3083, %v3096
        %v3098 = vcombine.high %v3090, %v3090
        %v3099 = vcombine.high %v3097, %v3097
        %v3100 = vcombine.high %v2864, %v2864
        %v3102 = vunpack.c.l.s4 1983009808
        %v3103 = vunpack.c.0.s8 %v3102
        %v3104 = vlaneseq
        %v3105 = vshrl.u32 %v3104, 7
        %v3106 = vsub.s32 %v3103, %v3105
        %v3107 = vrot.slane %v2864, %v3106
        %v3109 = vunpack.c.l.s4 1983009808
        %v3110 = vunpack.c.0.s8 %v3109
        %v3111 = vlaneseq
        %v3112 = vshrl.u32 %v3111, 7
        %v3113 = vsub.s32 %v3110, %v3112
        %v3114 = vrot.slane %v3100, %v3113
        %v3115 = vcombine.high %v3107, %v3107
        %v3116 = vcombine.high %v3114, %v3114
        %v3173 = vrot.slane %v2886, 7
        %v3174 = vrot.slane %v3173, 2
        %v3175 = vrot.slane %v2894, 7
        %v3176 = vrot.slane %v3175, 2
        %v3177 = vrot.slane %v2893, 7
        %v3178 = vrot.slane %v3177, 2
        %v3179 = vrot.slane %v2895, 7
        %v3180 = vrot.slane %v3179, 2
        %v3181 = vrot.slane %v2903, 7
        %v3182 = vrot.slane %v3181, 2
        %v3183 = vrot.slane %v2911, 7
        %v3184 = vrot.slane %v3183, 2
        %v3185 = vrot.slane %v2910, 7
        %v3186 = vrot.slane %v3185, 2
        %v3187 = vrot.slane %v2912, 7
        %v3188 = vrot.slane %v3187, 2
        %v3189 = vrot.slane %v2920, 7
        %v3190 = vrot.slane %v3189, 2
        %v3191 = vrot.slane %v2928, 7
        %v3192 = vrot.slane %v3191, 2
        %v3193 = vrot.slane %v2927, 7
        %v3194 = vrot.slane %v3193, 2
        %v3195 = vrot.slane %v2929, 7
        %v3196 = vrot.slane %v3195, 2
        %v3197 = vrot.slane %v2937, 7
        %v3198 = vrot.slane %v3197, 2
        %v3199 = vrot.slane %v2945, 7
        %v3200 = vrot.slane %v3199, 2
        %v3201 = vrot.slane %v2944, 7
        %v3202 = vrot.slane %v3201, 2
        %v3203 = vrot.slane %v2946, 7
        %v3204 = vrot.slane %v3203, 2
        %v3205 = vrot.slane %v2954, 7
        %v3206 = vrot.slane %v3205, 2
        %v3207 = vrot.slane %v2962, 7
        %v3208 = vrot.slane %v3207, 2
        %v3209 = vrot.slane %v2961, 7
        %v3210 = vrot.slane %v3209, 2
        %v3211 = vrot.slane %v2963, 7
        %v3212 = vrot.slane %v3211, 2
        %v3213 = vrot.slane %v2971, 7
        %v3214 = vrot.slane %v3213, 2
        %v3215 = vrot.slane %v2979, 7
        %v3216 = vrot.slane %v3215, 2
        %v3217 = vrot.slane %v2978, 7
        %v3218 = vrot.slane %v3217, 2
        %v3219 = vrot.slane %v2980, 7
        %v3220 = vrot.slane %v3219, 2
        %v3221 = vrot.slane %v2988, 7
        %v3222 = vrot.slane %v3221, 2
        %v3223 = vrot.slane %v2996, 7
        %v3224 = vrot.slane %v3223, 2
        %v3225 = vrot.slane %v2995, 7
        %v3226 = vrot.slane %v3225, 2
        %v3227 = vrot.slane %v2997, 7
        %v3228 = vrot.slane %v3227, 2
        %v3229 = vrot.slane %v3005, 7
        %v3230 = vrot.slane %v3229, 2
        %v3231 = vrot.slane %v3013, 7
        %v3232 = vrot.slane %v3231, 2
        %v3233 = vrot.slane %v3012, 7
        %v3234 = vrot.slane %v3233, 2
        %v3235 = vrot.slane %v3014, 7
        %v3236 = vrot.slane %v3235, 2
        %v3237 = vrot.slane %v3022, 7
        %v3238 = vrot.slane %v3237, 2
        %v3239 = vrot.slane %v3030, 7
        %v3240 = vrot.slane %v3239, 2
        %v3241 = vrot.slane %v3029, 7
        %v3242 = vrot.slane %v3241, 2
        %v3243 = vrot.slane %v3031, 7
        %v3244 = vrot.slane %v3243, 2
        %v3245 = vrot.slane %v3039, 7
        %v3246 = vrot.slane %v3245, 2
        %v3247 = vrot.slane %v3047, 7
        %v3248 = vrot.slane %v3247, 2
        %v3249 = vrot.slane %v3046, 7
        %v3250 = vrot.slane %v3249, 2
        %v3251 = vrot.slane %v3048, 7
        %v3252 = vrot.slane %v3251, 2
        %v3253 = vrot.slane %v3056, 7
        %v3254 = vrot.slane %v3253, 2
        %v3255 = vrot.slane %v3064, 7
        %v3256 = vrot.slane %v3255, 2
        %v3257 = vrot.slane %v3063, 7
        %v3258 = vrot.slane %v3257, 2
        %v3259 = vrot.slane %v3065, 7
        %v3260 = vrot.slane %v3259, 2
        %v3261 = vrot.slane %v3073, 7
        %v3262 = vrot.slane %v3261, 2
        %v3263 = vrot.slane %v3081, 7
        %v3264 = vrot.slane %v3263, 2
        %v3265 = vrot.slane %v3080, 7
        %v3266 = vrot.slane %v3265, 2
        %v3267 = vrot.slane %v3082, 7
        %v3268 = vrot.slane %v3267, 2
        %v3269 = vrot.slane %v3090, 7
        %v3270 = vrot.slane %v3269, 2
        %v3271 = vrot.slane %v3098, 7
        %v3272 = vrot.slane %v3271, 2
        %v3273 = vrot.slane %v3097, 7
        %v3274 = vrot.slane %v3273, 2
        %v3275 = vrot.slane %v3099, 7
        %v3276 = vrot.slane %v3275, 2
        %v3277 = vrot.slane %v3107, 7
        %v3278 = vrot.slane %v3277, 2
        %v3279 = vrot.slane %v3115, 7
        %v3280 = vrot.slane %v3279, 2
        %v3281 = vrot.slane %v3114, 7
        %v3282 = vrot.slane %v3281, 2
        %v3283 = vrot.slane %v3116, 7
        %v3284 = vrot.slane %v3283, 2
        %v3341 = vmax.f32 %v2886, %v3174
        %v3342 = vmax.f32 %v2894, %v3176
        %v3343 = vmax.f32 %v2893, %v3178
        %v3344 = vmax.f32 %v2895, %v3180
        %v3345 = vmax.f32 %v2903, %v3182
        %v3346 = vmax.f32 %v2911, %v3184
        %v3347 = vmax.f32 %v2910, %v3186
        %v3348 = vmax.f32 %v2912, %v3188
        %v3349 = vmax.f32 %v2920, %v3190
        %v3350 = vmax.f32 %v2928, %v3192
        %v3351 = vmax.f32 %v2927, %v3194
        %v3352 = vmax.f32 %v2929, %v3196
        %v3353 = vmax.f32 %v2937, %v3198
        %v3354 = vmax.f32 %v2945, %v3200
        %v3355 = vmax.f32 %v2944, %v3202
        %v3356 = vmax.f32 %v2946, %v3204
        %v3357 = vmax.f32 %v2954, %v3206
        %v3358 = vmax.f32 %v2962, %v3208
        %v3359 = vmax.f32 %v2961, %v3210
        %v3360 = vmax.f32 %v2963, %v3212
        %v3361 = vmax.f32 %v2971, %v3214
        %v3362 = vmax.f32 %v2979, %v3216
        %v3363 = vmax.f32 %v2978, %v3218
        %v3364 = vmax.f32 %v2980, %v3220
        %v3365 = vmax.f32 %v2988, %v3222
        %v3366 = vmax.f32 %v2996, %v3224
        %v3367 = vmax.f32 %v2995, %v3226
        %v3368 = vmax.f32 %v2997, %v3228
        %v3369 = vmax.f32 %v3005, %v3230
        %v3370 = vmax.f32 %v3013, %v3232
        %v3371 = vmax.f32 %v3012, %v3234
        %v3372 = vmax.f32 %v3014, %v3236
        %v3373 = vmax.f32 %v3022, %v3238
        %v3374 = vmax.f32 %v3030, %v3240
        %v3375 = vmax.f32 %v3029, %v3242
        %v3376 = vmax.f32 %v3031, %v3244
        %v3377 = vmax.f32 %v3039, %v3246
        %v3378 = vmax.f32 %v3047, %v3248
        %v3379 = vmax.f32 %v3046, %v3250
        %v3380 = vmax.f32 %v3048, %v3252
        %v3381 = vmax.f32 %v3056, %v3254
        %v3382 = vmax.f32 %v3064, %v3256
        %v3383 = vmax.f32 %v3063, %v3258
        %v3384 = vmax.f32 %v3065, %v3260
        %v3385 = vmax.f32 %v3073, %v3262
        %v3386 = vmax.f32 %v3081, %v3264
        %v3387 = vmax.f32 %v3080, %v3266
        %v3388 = vmax.f32 %v3082, %v3268
        %v3389 = vmax.f32 %v3090, %v3270
        %v3390 = vmax.f32 %v3098, %v3272
        %v3391 = vmax.f32 %v3097, %v3274
        %v3392 = vmax.f32 %v3099, %v3276
        %v3393 = vmax.f32 %v3107, %v3278
        %v3394 = vmax.f32 %v3115, %v3280
        %v3395 = vmax.f32 %v3114, %v3282
        %v3396 = vmax.f32 %v3116, %v3284
        %v3453 = vlaneseq
        %v3454 = vshrl.u32 %v3453, 7
        %v3455 = vsub.s32 0, %v3454
        %v3456 = vrot.slane %v3341, %v3455
        %v3457 = vlaneseq
        %v3458 = vshrl.u32 %v3457, 7
        %v3459 = vsub.s32 0, %v3458
        %v3460 = vrot.slane %v3342, %v3459
        %v3461 = vlaneseq
        %v3462 = vshrl.u32 %v3461, 7
        %v3463 = vsub.s32 0, %v3462
        %v3464 = vrot.slane %v3343, %v3463
        %v3465 = vlaneseq
        %v3466 = vshrl.u32 %v3465, 7
        %v3467 = vsub.s32 0, %v3466
        %v3468 = vrot.slane %v3344, %v3467
        %v3469 = vlaneseq
        %v3470 = vshrl.u32 %v3469, 7
        %v3471 = vsub.s32 0, %v3470
        %v3472 = vrot.slane %v3345, %v3471
        %v3473 = vlaneseq
        %v3474 = vshrl.u32 %v3473, 7
        %v3475 = vsub.s32 0, %v3474
        %v3476 = vrot.slane %v3346, %v3475
        %v3477 = vlaneseq
        %v3478 = vshrl.u32 %v3477, 7
        %v3479 = vsub.s32 0, %v3478
        %v3480 = vrot.slane %v3347, %v3479
        %v3481 = vlaneseq
        %v3482 = vshrl.u32 %v3481, 7
        %v3483 = vsub.s32 0, %v3482
        %v3484 = vrot.slane %v3348, %v3483
        %v3485 = vlaneseq
        %v3486 = vshrl.u32 %v3485, 7
        %v3487 = vsub.s32 0, %v3486
        %v3488 = vrot.slane %v3349, %v3487
        %v3489 = vlaneseq
        %v3490 = vshrl.u32 %v3489, 7
        %v3491 = vsub.s32 0, %v3490
        %v3492 = vrot.slane %v3350, %v3491
        %v3493 = vlaneseq
        %v3494 = vshrl.u32 %v3493, 7
        %v3495 = vsub.s32 0, %v3494
        %v3496 = vrot.slane %v3351, %v3495
        %v3497 = vlaneseq
        %v3498 = vshrl.u32 %v3497, 7
        %v3499 = vsub.s32 0, %v3498
        %v3500 = vrot.slane %v3352, %v3499
        %v3501 = vlaneseq
        %v3502 = vshrl.u32 %v3501, 7
        %v3503 = vsub.s32 0, %v3502
        %v3504 = vrot.slane %v3353, %v3503
        %v3505 = vlaneseq
        %v3506 = vshrl.u32 %v3505, 7
        %v3507 = vsub.s32 0, %v3506
        %v3508 = vrot.slane %v3354, %v3507
        %v3509 = vlaneseq
        %v3510 = vshrl.u32 %v3509, 7
        %v3511 = vsub.s32 0, %v3510
        %v3512 = vrot.slane %v3355, %v3511
        %v3513 = vlaneseq
        %v3514 = vshrl.u32 %v3513, 7
        %v3515 = vsub.s32 0, %v3514
        %v3516 = vrot.slane %v3356, %v3515
        %v3517 = vlaneseq
        %v3518 = vshrl.u32 %v3517, 7
        %v3519 = vsub.s32 0, %v3518
        %v3520 = vrot.slane %v3357, %v3519
        %v3521 = vlaneseq
        %v3522 = vshrl.u32 %v3521, 7
        %v3523 = vsub.s32 0, %v3522
        %v3524 = vrot.slane %v3358, %v3523
        %v3525 = vlaneseq
        %v3526 = vshrl.u32 %v3525, 7
        %v3527 = vsub.s32 0, %v3526
        %v3528 = vrot.slane %v3359, %v3527
        %v3529 = vlaneseq
        %v3530 = vshrl.u32 %v3529, 7
        %v3531 = vsub.s32 0, %v3530
        %v3532 = vrot.slane %v3360, %v3531
        %v3533 = vlaneseq
        %v3534 = vshrl.u32 %v3533, 7
        %v3535 = vsub.s32 0, %v3534
        %v3536 = vrot.slane %v3361, %v3535
        %v3537 = vlaneseq
        %v3538 = vshrl.u32 %v3537, 7
        %v3539 = vsub.s32 0, %v3538
        %v3540 = vrot.slane %v3362, %v3539
        %v3541 = vlaneseq
        %v3542 = vshrl.u32 %v3541, 7
        %v3543 = vsub.s32 0, %v3542
        %v3544 = vrot.slane %v3363, %v3543
        %v3545 = vlaneseq
        %v3546 = vshrl.u32 %v3545, 7
        %v3547 = vsub.s32 0, %v3546
        %v3548 = vrot.slane %v3364, %v3547
        %v3549 = vlaneseq
        %v3550 = vshrl.u32 %v3549, 7
        %v3551 = vsub.s32 0, %v3550
        %v3552 = vrot.slane %v3365, %v3551
        %v3553 = vlaneseq
        %v3554 = vshrl.u32 %v3553, 7
        %v3555 = vsub.s32 0, %v3554
        %v3556 = vrot.slane %v3366, %v3555
        %v3557 = vlaneseq
        %v3558 = vshrl.u32 %v3557, 7
        %v3559 = vsub.s32 0, %v3558
        %v3560 = vrot.slane %v3367, %v3559
        %v3561 = vlaneseq
        %v3562 = vshrl.u32 %v3561, 7
        %v3563 = vsub.s32 0, %v3562
        %v3564 = vrot.slane %v3368, %v3563
        %v3565 = vlaneseq
        %v3566 = vshrl.u32 %v3565, 7
        %v3567 = vsub.s32 0, %v3566
        %v3568 = vrot.slane %v3369, %v3567
        %v3569 = vlaneseq
        %v3570 = vshrl.u32 %v3569, 7
        %v3571 = vsub.s32 0, %v3570
        %v3572 = vrot.slane %v3370, %v3571
        %v3573 = vlaneseq
        %v3574 = vshrl.u32 %v3573, 7
        %v3575 = vsub.s32 0, %v3574
        %v3576 = vrot.slane %v3371, %v3575
        %v3577 = vlaneseq
        %v3578 = vshrl.u32 %v3577, 7
        %v3579 = vsub.s32 0, %v3578
        %v3580 = vrot.slane %v3372, %v3579
        %v3581 = vlaneseq
        %v3582 = vshrl.u32 %v3581, 7
        %v3583 = vsub.s32 0, %v3582
        %v3584 = vrot.slane %v3373, %v3583
        %v3585 = vlaneseq
        %v3586 = vshrl.u32 %v3585, 7
        %v3587 = vsub.s32 0, %v3586
        %v3588 = vrot.slane %v3374, %v3587
        %v3589 = vlaneseq
        %v3590 = vshrl.u32 %v3589, 7
        %v3591 = vsub.s32 0, %v3590
        %v3592 = vrot.slane %v3375, %v3591
        %v3593 = vlaneseq
        %v3594 = vshrl.u32 %v3593, 7
        %v3595 = vsub.s32 0, %v3594
        %v3596 = vrot.slane %v3376, %v3595
        %v3597 = vlaneseq
        %v3598 = vshrl.u32 %v3597, 7
        %v3599 = vsub.s32 0, %v3598
        %v3600 = vrot.slane %v3377, %v3599
        %v3601 = vlaneseq
        %v3602 = vshrl.u32 %v3601, 7
        %v3603 = vsub.s32 0, %v3602
        %v3604 = vrot.slane %v3378, %v3603
        %v3605 = vlaneseq
        %v3606 = vshrl.u32 %v3605, 7
        %v3607 = vsub.s32 0, %v3606
        %v3608 = vrot.slane %v3379, %v3607
        %v3609 = vlaneseq
        %v3610 = vshrl.u32 %v3609, 7
        %v3611 = vsub.s32 0, %v3610
        %v3612 = vrot.slane %v3380, %v3611
        %v3613 = vlaneseq
        %v3614 = vshrl.u32 %v3613, 7
        %v3615 = vsub.s32 0, %v3614
        %v3616 = vrot.slane %v3381, %v3615
        %v3617 = vlaneseq
        %v3618 = vshrl.u32 %v3617, 7
        %v3619 = vsub.s32 0, %v3618
        %v3620 = vrot.slane %v3382, %v3619
        %v3621 = vlaneseq
        %v3622 = vshrl.u32 %v3621, 7
        %v3623 = vsub.s32 0, %v3622
        %v3624 = vrot.slane %v3383, %v3623
        %v3625 = vlaneseq
        %v3626 = vshrl.u32 %v3625, 7
        %v3627 = vsub.s32 0, %v3626
        %v3628 = vrot.slane %v3384, %v3627
        %v3629 = vlaneseq
        %v3630 = vshrl.u32 %v3629, 7
        %v3631 = vsub.s32 0, %v3630
        %v3632 = vrot.slane %v3385, %v3631
        %v3633 = vlaneseq
        %v3634 = vshrl.u32 %v3633, 7
        %v3635 = vsub.s32 0, %v3634
        %v3636 = vrot.slane %v3386, %v3635
        %v3637 = vlaneseq
        %v3638 = vshrl.u32 %v3637, 7
        %v3639 = vsub.s32 0, %v3638
        %v3640 = vrot.slane %v3387, %v3639
        %v3641 = vlaneseq
        %v3642 = vshrl.u32 %v3641, 7
        %v3643 = vsub.s32 0, %v3642
        %v3644 = vrot.slane %v3388, %v3643
        %v3645 = vlaneseq
        %v3646 = vshrl.u32 %v3645, 7
        %v3647 = vsub.s32 0, %v3646
        %v3648 = vrot.slane %v3389, %v3647
        %v3649 = vlaneseq
        %v3650 = vshrl.u32 %v3649, 7
        %v3651 = vsub.s32 0, %v3650
        %v3652 = vrot.slane %v3390, %v3651
        %v3653 = vlaneseq
        %v3654 = vshrl.u32 %v3653, 7
        %v3655 = vsub.s32 0, %v3654
        %v3656 = vrot.slane %v3391, %v3655
        %v3657 = vlaneseq
        %v3658 = vshrl.u32 %v3657, 7
        %v3659 = vsub.s32 0, %v3658
        %v3660 = vrot.slane %v3392, %v3659
        %v3661 = vlaneseq
        %v3662 = vshrl.u32 %v3661, 7
        %v3663 = vsub.s32 0, %v3662
        %v3664 = vrot.slane %v3393, %v3663
        %v3665 = vlaneseq
        %v3666 = vshrl.u32 %v3665, 7
        %v3667 = vsub.s32 0, %v3666
        %v3668 = vrot.slane %v3394, %v3667
        %v3669 = vlaneseq
        %v3670 = vshrl.u32 %v3669, 7
        %v3671 = vsub.s32 0, %v3670
        %v3672 = vrot.slane %v3395, %v3671
        %v3673 = vlaneseq
        %v3674 = vshrl.u32 %v3673, 7
        %v3675 = vsub.s32 0, %v3674
        %v3676 = vrot.slane %v3396, %v3675
        %vm3677 = vcmask 1041409
        %v3678 = vsel %vm3677, %v3460, %v3456
        %vm3679 = vcmask 1042434
        %v3680 = vsel %vm3679, %v3464, %v3678
        %vm3681 = vcmask 1043459
        %v3682 = vsel %vm3681, %v3468, %v3680
        %vm3683 = vcmask 1044484
        %v3684 = vsel %vm3683, %v3472, %v3682
        %vm3685 = vcmask 1045509
        %v3686 = vsel %vm3685, %v3476, %v3684
        %vm3687 = vcmask 1046534
        %v3688 = vsel %vm3687, %v3480, %v3686
        %vm3689 = vcmask 1047559
        %v3690 = vsel %vm3689, %v3484, %v3688
        %v3691 = vsel %vm3677, %v3492, %v3488
        %v3692 = vsel %vm3679, %v3496, %v3691
        %v3693 = vsel %vm3681, %v3500, %v3692
        %v3694 = vsel %vm3683, %v3504, %v3693
        %v3695 = vsel %vm3685, %v3508, %v3694
        %v3696 = vsel %vm3687, %v3512, %v3695
        %v3697 = vsel %vm3689, %v3516, %v3696
        %v3698 = vsel %vm3677, %v3524, %v3520
        %v3699 = vsel %vm3679, %v3528, %v3698
        %v3700 = vsel %vm3681, %v3532, %v3699
        %v3701 = vsel %vm3683, %v3536, %v3700
        %v3702 = vsel %vm3685, %v3540, %v3701
        %v3703 = vsel %vm3687, %v3544, %v3702
        %v3704 = vsel %vm3689, %v3548, %v3703
        %v3705 = vsel %vm3677, %v3556, %v3552
        %v3706 = vsel %vm3679, %v3560, %v3705
        %v3707 = vsel %vm3681, %v3564, %v3706
        %v3708 = vsel %vm3683, %v3568, %v3707
        %v3709 = vsel %vm3685, %v3572, %v3708
        %v3710 = vsel %vm3687, %v3576, %v3709
        %v3711 = vsel %vm3689, %v3580, %v3710
        %v3712 = vsel %vm3677, %v3588, %v3584
        %v3713 = vsel %vm3679, %v3592, %v3712
        %v3714 = vsel %vm3681, %v3596, %v3713
        %v3715 = vsel %vm3683, %v3600, %v3714
        %v3716 = vsel %vm3685, %v3604, %v3715
        %v3717 = vsel %vm3687, %v3608, %v3716
        %v3718 = vsel %vm3689, %v3612, %v3717
        %v3719 = vsel %vm3677, %v3620, %v3616
        %v3720 = vsel %vm3679, %v3624, %v3719
        %v3721 = vsel %vm3681, %v3628, %v3720
        %v3722 = vsel %vm3683, %v3632, %v3721
        %v3723 = vsel %vm3685, %v3636, %v3722
        %v3724 = vsel %vm3687, %v3640, %v3723
        %v3725 = vsel %vm3689, %v3644, %v3724
        %v3726 = vsel %vm3677, %v3652, %v3648
        %v3727 = vsel %vm3679, %v3656, %v3726
        %v3728 = vsel %vm3681, %v3660, %v3727
        %v3729 = vsel %vm3683, %v3664, %v3728
        %v3730 = vsel %vm3685, %v3668, %v3729
        %v3731 = vsel %vm3687, %v3672, %v3730
        %v3732 = vsel %vm3689, %v3676, %v3731
        %3740 = vst [vmem:[#allocation2] sm:$0xff] %v3690
        %3741 = vst [vmem:[#allocation2 + $0x8] sm:$0xff] %v3697
        %3742 = vst [vmem:[#allocation2 + $0x10] sm:$0xff] %v3704
        %3743 = vst [vmem:[#allocation2 + $0x18] sm:$0xff] %v3711
        %3744 = vst [vmem:[#allocation2 + $0x20] sm:$0xff] %v3718
        %3745 = vst [vmem:[#allocation2 + $0x28] sm:$0xff] %v3725
        %3746 = vst [vmem:[#allocation2 + $0x30] sm:$0xff] %v3732
        %v3747 = vld [vmem:[#allocation2] sm:$0xff]
        %v3748 = vld [vmem:[#allocation2 + $0x8] sm:$0xff]
        %v3749 = vld [vmem:[#allocation2 + $0x10] sm:$0xff]
        %v3750 = vld [vmem:[#allocation2 + $0x18] sm:$0xff]
        %v3751 = vld [vmem:[#allocation2 + $0x20] sm:$0xff]
        %v3752 = vpack.c.bf16 %v3748, %v3747
        %v3753 = vpack.c.bf16 %v3750, %v3749
        %v3754 = vpack.c.bf16 %v3751, %v3751
        %v3755 = vld [vmem:[#allocation9] sm:$0xf]
        %v3756 = vld [vmem:[#allocation9 + $0x4] sm:$0xf]
        %v3757 = vld [vmem:[#allocation9 + $0x8] sm:$0xf]
        %v3758 = vld [vmem:[#allocation9 + $0xc] sm:$0xf]
        %v3759 = vld [vmem:[#allocation9 + $0x10] sm:$0xf]
        %v3760 = vld [vmem:[#allocation9 + $0x14] sm:$0xf]
        %v3761 = vld [vmem:[#allocation9 + $0x18] sm:$0xf]
        %v3762 = vld [vmem:[#allocation9 + $0x1c] sm:$0xf]
        %v3763 = vld [vmem:[#allocation9 + $0x20] sm:$0xf]
        %v3764 = vld [vmem:[#allocation9 + $0x24] sm:$0xf]
        %v3765 = vld [vmem:[#allocation9 + $0x28] sm:$0xf]
        %v3766 = vld [vmem:[#allocation9 + $0x2c] sm:$0xf]
        %v3767 = vld [vmem:[#allocation9 + $0x30] sm:$0xf]
        %v3768 = vld [vmem:[#allocation9 + $0x34] sm:$0xf]
        %v3769 = vld [vmem:[#allocation9 + $0x38] sm:$0xf]
        %v3770 = vld [vmem:[#allocation9 + $0x3c] sm:$0xf]
        %v3771 = vld [vmem:[#allocation2 + $0x1] sm:$0xff]
        %v3772 = vld [vmem:[#allocation2 + $0x9] sm:$0xff]
        %v3773 = vld [vmem:[#allocation2 + $0x11] sm:$0xff]
        %v3774 = vld [vmem:[#allocation2 + $0x19] sm:$0xff]
        %v3775 = vld [vmem:[#allocation2 + $0x21] sm:$0xff]
        %v3776 = vpack.c.bf16 %v3772, %v3771
        %v3777 = vpack.c.bf16 %v3774, %v3773
        %v3778 = vpack.c.bf16 %v3775, %v3775
        %s3779 = scalar_lea.vmem [#allocation9], 64
        %v3780 = vld [vmem:[%s3779] sm:$0xf]
        %v3781 = vld [vmem:[%s3779 + $0x4] sm:$0xf]
        %v3782 = vld [vmem:[%s3779 + $0x8] sm:$0xf]
        %v3783 = vld [vmem:[%s3779 + $0xc] sm:$0xf]
        %v3784 = vld [vmem:[%s3779 + $0x10] sm:$0xf]
        %v3785 = vld [vmem:[%s3779 + $0x14] sm:$0xf]
        %v3786 = vld [vmem:[%s3779 + $0x18] sm:$0xf]
        %v3787 = vld [vmem:[%s3779 + $0x1c] sm:$0xf]
        %v3788 = vld [vmem:[%s3779 + $0x20] sm:$0xf]
        %v3789 = vld [vmem:[%s3779 + $0x24] sm:$0xf]
        %v3790 = vld [vmem:[%s3779 + $0x28] sm:$0xf]
        %v3791 = vld [vmem:[%s3779 + $0x2c] sm:$0xf]
        %v3792 = vld [vmem:[%s3779 + $0x30] sm:$0xf]
        %v3793 = vld [vmem:[%s3779 + $0x34] sm:$0xf]
        %v3794 = vld [vmem:[%s3779 + $0x38] sm:$0xf]
        %v3795 = vld [vmem:[%s3779 + $0x3c] sm:$0xf]
        %v3812 = vunpack.c.l.b16 %v3780
        %v3813 = vunpack.c.l.b16 %v3781
        %v3814 = vunpack.c.l.b16 %v3782
        %v3815 = vunpack.c.l.b16 %v3783
        %v3816 = vunpack.c.l.b16 %v3784
        %v3817 = vunpack.c.l.b16 %v3785
        %v3818 = vunpack.c.l.b16 %v3786
        %v3819 = vunpack.c.l.b16 %v3787
        %v3820 = vunpack.c.l.b16 %v3788
        %v3821 = vunpack.c.l.b16 %v3789
        %v3822 = vunpack.c.l.b16 %v3790
        %v3823 = vunpack.c.l.b16 %v3791
        %v3824 = vunpack.c.l.b16 %v3792
        %v3825 = vunpack.c.l.b16 %v3793
        %v3826 = vunpack.c.l.b16 %v3794
        %v3827 = vunpack.c.l.b16 %v3795
        %v3828 = vpack.c.b16 %v3813, %v3812
        %v3829 = vpack.c.b16 %v3815, %v3814
        %v3830 = vpack.c.b16 %v3817, %v3816
        %v3831 = vpack.c.b16 %v3819, %v3818
        %v3832 = vpack.c.b16 %v3821, %v3820
        %v3833 = vpack.c.b16 %v3823, %v3822
        %v3834 = vpack.c.b16 %v3825, %v3824
        %v3835 = vpack.c.b16 %v3827, %v3826
        %3844 = vmatprep.subr.bf16.mxu0 0
        %3845 = vmatpush1.bf16.msra.mxu0 %v3828
        %3846 = vmatprep.subr.bf16.mxu0 0
        %3847 = vmatpush1.bf16.msra.mxu0 %v3829
        %3848 = vmatprep.subr.bf16.mxu0 0
        %3849 = vmatpush1.bf16.msra.mxu0 %v3830
        %3850 = vmatprep.subr.bf16.mxu0 0
        %3851 = vmatpush1.bf16.msra.mxu0 %v3831
        %3852 = vmatprep.subr.bf16.mxu0 0
        %3853 = vmatpush1.bf16.msra.mxu0 %v3832
        %3854 = vmatprep.subr.bf16.mxu0 0
        %3855 = vmatpush1.bf16.msra.mxu0 %v3833
        %3856 = vmatprep.subr.bf16.mxu0 0
        %3857 = vmatpush1.bf16.msra.mxu0 %v3834
        %3858 = vmatprep.subr.bf16.mxu0 0
        %3859 = vmatpush1.bf16.msra.mxu0 %v3835
        %3860 = vmatprep.subr.bf16.mxu0 0
        %3861 = vmatpush1.bf16.msra.mxu0 0
        %3862 = vmatprep.subr.bf16.mxu0 0
        %3863 = vmatpush1.bf16.msra.mxu0 0
        %3864 = vmatprep.subr.bf16.mxu0 0
        %3865 = vmatpush1.bf16.msra.mxu0 0
        %3866 = vmatprep.subr.bf16.mxu0 0
        %3867 = vmatpush1.bf16.msra.mxu0 0
        %3868 = vmatprep.subr.bf16.mxu0 0
        %3869 = vmatpush1.bf16.msra.mxu0 0
        %3870 = vmatprep.subr.bf16.mxu0 0
        %3871 = vmatpush1.bf16.msra.mxu0 0
        %3872 = vmatprep.subr.bf16.mxu0 0
        %3873 = vmatpush1.bf16.msra.mxu0 0
        %3874 = vmatprep.subr.bf16.mxu0 0
        %3875 = vmatpush1.bf16.msra.mxu0 0
        %3876 = vmatprep.mubr.bf16.mxu0 0
        %3877 = vmatmul.mubr.bf16.gmra.mrb[0].mxu0 %v3776
        %v3878 = vpop.f32.mrb[0].mxu0
        %v3879 = vadd.f32 0.0, %v3878
        %v3880 = vpop.f32.mrb[0].mxu0
        %v3881 = vpop.f32.mrb[0].mxu0
        %v3882 = vadd.f32 0.0, %v3881
        %v3883 = vpop.f32.mrb[0].mxu0
        %3884 = vmatprep.mubr.bf16.mxu0 0
        %3885 = vmatmul.mubr.bf16.gmra.mrb[0].mxu0 %v3777
        %v3886 = vpop.f32.mrb[0].mxu0
        %v3887 = vadd.f32 0.0, %v3886
        %v3888 = vpop.f32.mrb[0].mxu0
        %v3889 = vpop.f32.mrb[0].mxu0
        %v3890 = vadd.f32 0.0, %v3889
        %v3891 = vpop.f32.mrb[0].mxu0
        %3892 = vmatprep.mubr.bf16.mxu0 0
        %3893 = vmatmul.mubr.bf16.gmra.mrb[0].mxu0 %v3778
        %v3894 = vpop.f32.mrb[0].mxu0
        %v3895 = vadd.f32 0.0, %v3894
        %v3896 = vpop.f32.mrb[0].mxu0
        %v3897 = vpop.f32.mrb[0].mxu0
        %v3898 = vpop.f32.mrb[0].mxu0
        %3899 = vdwg.mxu0
        %v3916 = vunpack.c.l.b16 %v3755
        %v3917 = vunpack.c.l.b16 %v3756
        %v3918 = vunpack.c.l.b16 %v3757
        %v3919 = vunpack.c.l.b16 %v3758
        %v3920 = vunpack.c.l.b16 %v3759
        %v3921 = vunpack.c.l.b16 %v3760
        %v3922 = vunpack.c.l.b16 %v3761
        %v3923 = vunpack.c.l.b16 %v3762
        %v3924 = vunpack.c.l.b16 %v3763
        %v3925 = vunpack.c.l.b16 %v3764
        %v3926 = vunpack.c.l.b16 %v3765
        %v3927 = vunpack.c.l.b16 %v3766
        %v3928 = vunpack.c.l.b16 %v3767
        %v3929 = vunpack.c.l.b16 %v3768
        %v3930 = vunpack.c.l.b16 %v3769
        %v3931 = vunpack.c.l.b16 %v3770
        %v3932 = vpack.c.b16 %v3917, %v3916
        %v3933 = vpack.c.b16 %v3919, %v3918
        %v3934 = vpack.c.b16 %v3921, %v3920
        %v3935 = vpack.c.b16 %v3923, %v3922
        %v3936 = vpack.c.b16 %v3925, %v3924
        %v3937 = vpack.c.b16 %v3927, %v3926
        %v3938 = vpack.c.b16 %v3929, %v3928
        %v3939 = vpack.c.b16 %v3931, %v3930
        %3948 = vmatprep.subr.bf16.mxu0 0
        %3949 = vmatpush1.bf16.msra.mxu0 %v3932
        %3950 = vmatprep.subr.bf16.mxu0 0
        %3951 = vmatpush1.bf16.msra.mxu0 %v3933
        %3952 = vmatprep.subr.bf16.mxu0 0
        %3953 = vmatpush1.bf16.msra.mxu0 %v3934
        %3954 = vmatprep.subr.bf16.mxu0 0
        %3955 = vmatpush1.bf16.msra.mxu0 %v3935
        %3956 = vmatprep.subr.bf16.mxu0 0
        %3957 = vmatpush1.bf16.msra.mxu0 %v3936
        %3958 = vmatprep.subr.bf16.mxu0 0
        %3959 = vmatpush1.bf16.msra.mxu0 %v3937
        %3960 = vmatprep.subr.bf16.mxu0 0
        %3961 = vmatpush1.bf16.msra.mxu0 %v3938
        %3962 = vmatprep.subr.bf16.mxu0 0
        %3963 = vmatpush1.bf16.msra.mxu0 %v3939
        %3964 = vmatprep.subr.bf16.mxu0 0
        %3965 = vmatpush1.bf16.msra.mxu0 0
        %3966 = vmatprep.subr.bf16.mxu0 0
        %3967 = vmatpush1.bf16.msra.mxu0 0
        %3968 = vmatprep.subr.bf16.mxu0 0
        %3969 = vmatpush1.bf16.msra.mxu0 0
        %3970 = vmatprep.subr.bf16.mxu0 0
        %3971 = vmatpush1.bf16.msra.mxu0 0
        %3972 = vmatprep.subr.bf16.mxu0 0
        %3973 = vmatpush1.bf16.msra.mxu0 0
        %3974 = vmatprep.subr.bf16.mxu0 0
        %3975 = vmatpush1.bf16.msra.mxu0 0
        %3976 = vmatprep.subr.bf16.mxu0 0
        %3977 = vmatpush1.bf16.msra.mxu0 0
        %3978 = vmatprep.subr.bf16.mxu0 0
        %3979 = vmatpush1.bf16.msra.mxu0 0
        %3980 = vmatprep.mubr.bf16.mxu0 0
        %3981 = vmatmul.mubr.bf16.gmra.mrb[0].mxu0 %v3752
        %v3982 = vpop.f32.mrb[0].mxu0
        %v3983 = vadd.f32 %v3879, %v3982
        %v3984 = vpop.f32.mrb[0].mxu0
        %v3985 = vpop.f32.mrb[0].mxu0
        %v3986 = vadd.f32 %v3882, %v3985
        %v3987 = vpop.f32.mrb[0].mxu0
        %3988 = vmatprep.mubr.bf16.mxu0 0
        %3989 = vmatmul.mubr.bf16.gmra.mrb[0].mxu0 %v3753
        %v3990 = vpop.f32.mrb[0].mxu0
        %v3991 = vadd.f32 %v3887, %v3990
        %v3992 = vpop.f32.mrb[0].mxu0
        %v3993 = vpop.f32.mrb[0].mxu0
        %v3994 = vadd.f32 %v3890, %v3993
        %v3995 = vpop.f32.mrb[0].mxu0
        %3996 = vmatprep.mubr.bf16.mxu0 0
        %3997 = vmatmul.mubr.bf16.gmra.mrb[0].mxu0 %v3754
        %v3998 = vpop.f32.mrb[0].mxu0
        %v3999 = vadd.f32 %v3895, %v3998
        %v4000 = vpop.f32.mrb[0].mxu0
        %v4001 = vpop.f32.mrb[0].mxu0
        %v4002 = vpop.f32.mrb[0].mxu0
        %4003 = vdwg.mxu0
        %v4004 = vld [vmem:[#allocation2 + $0x2] sm:$0xff]
        %v4005 = vld [vmem:[#allocation2 + $0xa] sm:$0xff]
        %v4006 = vld [vmem:[#allocation2 + $0x12] sm:$0xff]
        %v4007 = vld [vmem:[#allocation2 + $0x1a] sm:$0xff]
        %v4008 = vld [vmem:[#allocation2 + $0x22] sm:$0xff]
        %v4009 = vpack.c.bf16 %v4005, %v4004
        %v4010 = vpack.c.bf16 %v4007, %v4006
        %v4011 = vpack.c.bf16 %v4008, %v4008
        %s4012 = scalar_lea.vmem [#allocation9], 128
        %v4013 = vld [vmem:[%s4012] sm:$0xf]
        %v4014 = vld [vmem:[%s4012 + $0x4] sm:$0xf]
        %v4015 = vld [vmem:[%s4012 + $0x8] sm:$0xf]
        %v4016 = vld [vmem:[%s4012 + $0xc] sm:$0xf]
        %v4017 = vld [vmem:[%s4012 + $0x10] sm:$0xf]
        %v4018 = vld [vmem:[%s4012 + $0x14] sm:$0xf]
        %v4019 = vld [vmem:[%s4012 + $0x18] sm:$0xf]
        %v4020 = vld [vmem:[%s4012 + $0x1c] sm:$0xf]
        %v4021 = vld [vmem:[%s4012 + $0x20] sm:$0xf]
        %v4022 = vld [vmem:[%s4012 + $0x24] sm:$0xf]
        %v4023 = vld [vmem:[%s4012 + $0x28] sm:$0xf]
        %v4024 = vld [vmem:[%s4012 + $0x2c] sm:$0xf]
        %v4025 = vld [vmem:[%s4012 + $0x30] sm:$0xf]
        %v4026 = vld [vmem:[%s4012 + $0x34] sm:$0xf]
        %v4027 = vld [vmem:[%s4012 + $0x38] sm:$0xf]
        %v4028 = vld [vmem:[%s4012 + $0x3c] sm:$0xf]
        %v4045 = vunpack.c.l.b16 %v4013
        %v4046 = vunpack.c.l.b16 %v4014
        %v4047 = vunpack.c.l.b16 %v4015
        %v4048 = vunpack.c.l.b16 %v4016
        %v4049 = vunpack.c.l.b16 %v4017
        %v4050 = vunpack.c.l.b16 %v4018
        %v4051 = vunpack.c.l.b16 %v4019
        %v4052 = vunpack.c.l.b16 %v4020
        %v4053 = vunpack.c.l.b16 %v4021
        %v4054 = vunpack.c.l.b16 %v4022
        %v4055 = vunpack.c.l.b16 %v4023
        %v4056 = vunpack.c.l.b16 %v4024
        %v4057 = vunpack.c.l.b16 %v4025
        %v4058 = vunpack.c.l.b16 %v4026
        %v4059 = vunpack.c.l.b16 %v4027
        %v4060 = vunpack.c.l.b16 %v4028
        %v4061 = vpack.c.b16 %v4046, %v4045
        %v4062 = vpack.c.b16 %v4048, %v4047
        %v4063 = vpack.c.b16 %v4050, %v4049
        %v4064 = vpack.c.b16 %v4052, %v4051
        %v4065 = vpack.c.b16 %v4054, %v4053
        %v4066 = vpack.c.b16 %v4056, %v4055
        %v4067 = vpack.c.b16 %v4058, %v4057
        %v4068 = vpack.c.b16 %v4060, %v4059
        %4077 = vmatprep.subr.bf16.mxu0 0
        %4078 = vmatpush1.bf16.msra.mxu0 %v4061
        %4079 = vmatprep.subr.bf16.mxu0 0
        %4080 = vmatpush1.bf16.msra.mxu0 %v4062
        %4081 = vmatprep.subr.bf16.mxu0 0
        %4082 = vmatpush1.bf16.msra.mxu0 %v4063
        %4083 = vmatprep.subr.bf16.mxu0 0
        %4084 = vmatpush1.bf16.msra.mxu0 %v4064
        %4085 = vmatprep.subr.bf16.mxu0 0
        %4086 = vmatpush1.bf16.msra.mxu0 %v4065
        %4087 = vmatprep.subr.bf16.mxu0 0
        %4088 = vmatpush1.bf16.msra.mxu0 %v4066
        %4089 = vmatprep.subr.bf16.mxu0 0
        %4090 = vmatpush1.bf16.msra.mxu0 %v4067
        %4091 = vmatprep.subr.bf16.mxu0 0
        %4092 = vmatpush1.bf16.msra.mxu0 %v4068
        %4093 = vmatprep.subr.bf16.mxu0 0
        %4094 = vmatpush1.bf16.msra.mxu0 0
        %4095 = vmatprep.subr.bf16.mxu0 0
        %4096 = vmatpush1.bf16.msra.mxu0 0
        %4097 = vmatprep.subr.bf16.mxu0 0
        %4098 = vmatpush1.bf16.msra.mxu0 0
        %4099 = vmatprep.subr.bf16.mxu0 0
        %4100 = vmatpush1.bf16.msra.mxu0 0
        %4101 = vmatprep.subr.bf16.mxu0 0
        %4102 = vmatpush1.bf16.msra.mxu0 0
        %4103 = vmatprep.subr.bf16.mxu0 0
        %4104 = vmatpush1.bf16.msra.mxu0 0
        %4105 = vmatprep.subr.bf16.mxu0 0
        %4106 = vmatpush1.bf16.msra.mxu0 0
        %4107 = vmatprep.subr.bf16.mxu0 0
        %4108 = vmatpush1.bf16.msra.mxu0 0
        %4109 = vmatprep.mubr.bf16.mxu0 0
        %4110 = vmatmul.mubr.bf16.gmra.mrb[0].mxu0 %v4009
        %v4111 = vpop.f32.mrb[0].mxu0
        %v4112 = vadd.f32 0.0, %v4111
        %v4113 = vpop.f32.mrb[0].mxu0
        %v4114 = vpop.f32.mrb[0].mxu0
        %v4115 = vadd.f32 0.0, %v4114
        %v4116 = vpop.f32.mrb[0].mxu0
        %4117 = vmatprep.mubr.bf16.mxu0 0
        %4118 = vmatmul.mubr.bf16.gmra.mrb[0].mxu0 %v4010
        %v4119 = vpop.f32.mrb[0].mxu0
        %v4120 = vadd.f32 0.0, %v4119
        %v4121 = vpop.f32.mrb[0].mxu0
        %v4122 = vpop.f32.mrb[0].mxu0
        %v4123 = vadd.f32 0.0, %v4122
        %v4124 = vpop.f32.mrb[0].mxu0
        %4125 = vmatprep.mubr.bf16.mxu0 0
        %4126 = vmatmul.mubr.bf16.gmra.mrb[0].mxu0 %v4011
        %v4127 = vpop.f32.mrb[0].mxu0
        %v4128 = vadd.f32 0.0, %v4127
        %v4129 = vpop.f32.mrb[0].mxu0
        %v4130 = vpop.f32.mrb[0].mxu0
        %v4131 = vpop.f32.mrb[0].mxu0
        %4132 = vdwg.mxu0
        %v4133 = vadd.f32 %v3983, %v4112
        %v4134 = vadd.f32 %v3986, %v4115
        %v4135 = vadd.f32 %v3991, %v4120
        %v4136 = vadd.f32 %v3994, %v4123
        %v4137 = vadd.f32 %v3999, %v4128
        %v4138 = vld [vmem:[#allocation2 + $0x8] sm:$0xff]
        %v4139 = vld [vmem:[#allocation2 + $0x10] sm:$0xff]
        %v4140 = vld [vmem:[#allocation2 + $0x18] sm:$0xff]
        %v4141 = vld [vmem:[#allocation2 + $0x20] sm:$0xff]
        %v4142 = vld [vmem:[#allocation2 + $0x28] sm:$0xff]
        %v4143 = vpack.c.bf16 %v4139, %v4138
        %v4144 = vpack.c.bf16 %v4141, %v4140
        %v4145 = vpack.c.bf16 %v4142, %v4142
        %s4146 = scalar_lea.vmem [#allocation9], 192
        %v4147 = vld [vmem:[%s4146] sm:$0xf]
        %v4148 = vld [vmem:[%s4146 + $0x4] sm:$0xf]
        %v4149 = vld [vmem:[%s4146 + $0x8] sm:$0xf]
        %v4150 = vld [vmem:[%s4146 + $0xc] sm:$0xf]
        %v4151 = vld [vmem:[%s4146 + $0x10] sm:$0xf]
        %v4152 = vld [vmem:[%s4146 + $0x14] sm:$0xf]
        %v4153 = vld [vmem:[%s4146 + $0x18] sm:$0xf]
        %v4154 = vld [vmem:[%s4146 + $0x1c] sm:$0xf]
        %v4155 = vld [vmem:[%s4146 + $0x20] sm:$0xf]
        %v4156 = vld [vmem:[%s4146 + $0x24] sm:$0xf]
        %v4157 = vld [vmem:[%s4146 + $0x28] sm:$0xf]
        %v4158 = vld [vmem:[%s4146 + $0x2c] sm:$0xf]
        %v4159 = vld [vmem:[%s4146 + $0x30] sm:$0xf]
        %v4160 = vld [vmem:[%s4146 + $0x34] sm:$0xf]
        %v4161 = vld [vmem:[%s4146 + $0x38] sm:$0xf]
        %v4162 = vld [vmem:[%s4146 + $0x3c] sm:$0xf]
        %v4179 = vunpack.c.l.b16 %v4147
        %v4180 = vunpack.c.l.b16 %v4148
        %v4181 = vunpack.c.l.b16 %v4149
        %v4182 = vunpack.c.l.b16 %v4150
        %v4183 = vunpack.c.l.b16 %v4151
        %v4184 = vunpack.c.l.b16 %v4152
        %v4185 = vunpack.c.l.b16 %v4153
        %v4186 = vunpack.c.l.b16 %v4154
        %v4187 = vunpack.c.l.b16 %v4155
        %v4188 = vunpack.c.l.b16 %v4156
        %v4189 = vunpack.c.l.b16 %v4157
        %v4190 = vunpack.c.l.b16 %v4158
        %v4191 = vunpack.c.l.b16 %v4159
        %v4192 = vunpack.c.l.b16 %v4160
        %v4193 = vunpack.c.l.b16 %v4161
        %v4194 = vunpack.c.l.b16 %v4162
        %v4195 = vpack.c.b16 %v4180, %v4179
        %v4196 = vpack.c.b16 %v4182, %v4181
        %v4197 = vpack.c.b16 %v4184, %v4183
        %v4198 = vpack.c.b16 %v4186, %v4185
        %v4199 = vpack.c.b16 %v4188, %v4187
        %v4200 = vpack.c.b16 %v4190, %v4189
        %v4201 = vpack.c.b16 %v4192, %v4191
        %v4202 = vpack.c.b16 %v4194, %v4193
        %4211 = vmatprep.subr.bf16.mxu0 0
        %4212 = vmatpush1.bf16.msra.mxu0 %v4195
        %4213 = vmatprep.subr.bf16.mxu0 0
        %4214 = vmatpush1.bf16.msra.mxu0 %v4196
        %4215 = vmatprep.subr.bf16.mxu0 0
        %4216 = vmatpush1.bf16.msra.mxu0 %v4197
        %4217 = vmatprep.subr.bf16.mxu0 0
        %4218 = vmatpush1.bf16.msra.mxu0 %v4198
        %4219 = vmatprep.subr.bf16.mxu0 0
        %4220 = vmatpush1.bf16.msra.mxu0 %v4199
        %4221 = vmatprep.subr.bf16.mxu0 0
        %4222 = vmatpush1.bf16.msra.mxu0 %v4200
        %4223 = vmatprep.subr.bf16.mxu0 0
        %4224 = vmatpush1.bf16.msra.mxu0 %v4201
        %4225 = vmatprep.subr.bf16.mxu0 0
        %4226 = vmatpush1.bf16.msra.mxu0 %v4202
        %4227 = vmatprep.subr.bf16.mxu0 0
        %4228 = vmatpush1.bf16.msra.mxu0 0
        %4229 = vmatprep.subr.bf16.mxu0 0
        %4230 = vmatpush1.bf16.msra.mxu0 0
        %4231 = vmatprep.subr.bf16.mxu0 0
        %4232 = vmatpush1.bf16.msra.mxu0 0
        %4233 = vmatprep.subr.bf16.mxu0 0
        %4234 = vmatpush1.bf16.msra.mxu0 0
        %4235 = vmatprep.subr.bf16.mxu0 0
        %4236 = vmatpush1.bf16.msra.mxu0 0
        %4237 = vmatprep.subr.bf16.mxu0 0
        %4238 = vmatpush1.bf16.msra.mxu0 0
        %4239 = vmatprep.subr.bf16.mxu0 0
        %4240 = vmatpush1.bf16.msra.mxu0 0
        %4241 = vmatprep.subr.bf16.mxu0 0
        %4242 = vmatpush1.bf16.msra.mxu0 0
        %4243 = vmatprep.mubr.bf16.mxu0 0
        %4244 = vmatmul.mubr.bf16.gmra.mrb[0].mxu0 %v4143
        %v4245 = vpop.f32.mrb[0].mxu0
        %v4246 = vadd.f32 0.0, %v4245
        %v4247 = vpop.f32.mrb[0].mxu0
        %v4248 = vpop.f32.mrb[0].mxu0
        %v4249 = vadd.f32 0.0, %v4248
        %v4250 = vpop.f32.mrb[0].mxu0
        %4251 = vmatprep.mubr.bf16.mxu0 0
        %4252 = vmatmul.mubr.bf16.gmra.mrb[0].mxu0 %v4144
        %v4253 = vpop.f32.mrb[0].mxu0
        %v4254 = vadd.f32 0.0, %v4253
        %v4255 = vpop.f32.mrb[0].mxu0
        %v4256 = vpop.f32.mrb[0].mxu0
        %v4257 = vadd.f32 0.0, %v4256
        %v4258 = vpop.f32.mrb[0].mxu0
        %4259 = vmatprep.mubr.bf16.mxu0 0
        %4260 = vmatmul.mubr.bf16.gmra.mrb[0].mxu0 %v4145
        %v4261 = vpop.f32.mrb[0].mxu0
        %v4262 = vadd.f32 0.0, %v4261
        %v4263 = vpop.f32.mrb[0].mxu0
        %v4264 = vpop.f32.mrb[0].mxu0
        %v4265 = vpop.f32.mrb[0].mxu0
        %4266 = vdwg.mxu0
        %v4267 = vadd.f32 %v4133, %v4246
        %v4268 = vadd.f32 %v4134, %v4249
        %v4269 = vadd.f32 %v4135, %v4254
        %v4270 = vadd.f32 %v4136, %v4257
        %v4271 = vadd.f32 %v4137, %v4262
        %v4272 = vld [vmem:[#allocation2 + $0x9] sm:$0xff]
        %v4273 = vld [vmem:[#allocation2 + $0x11] sm:$0xff]
        %v4274 = vld [vmem:[#allocation2 + $0x19] sm:$0xff]
        %v4275 = vld [vmem:[#allocation2 + $0x21] sm:$0xff]
        %v4276 = vld [vmem:[#allocation2 + $0x29] sm:$0xff]
        %v4277 = vpack.c.bf16 %v4273, %v4272
        %v4278 = vpack.c.bf16 %v4275, %v4274
        %v4279 = vpack.c.bf16 %v4276, %v4276
        %s4280 = scalar_lea.vmem [#allocation9], 256
        %v4281 = vld [vmem:[%s4280] sm:$0xf]
        %v4282 = vld [vmem:[%s4280 + $0x4] sm:$0xf]
        %v4283 = vld [vmem:[%s4280 + $0x8] sm:$0xf]
        %v4284 = vld [vmem:[%s4280 + $0xc] sm:$0xf]
        %v4285 = vld [vmem:[%s4280 + $0x10] sm:$0xf]
        %v4286 = vld [vmem:[%s4280 + $0x14] sm:$0xf]
        %v4287 = vld [vmem:[%s4280 + $0x18] sm:$0xf]
        %v4288 = vld [vmem:[%s4280 + $0x1c] sm:$0xf]
        %v4289 = vld [vmem:[%s4280 + $0x20] sm:$0xf]
        %v4290 = vld [vmem:[%s4280 + $0x24] sm:$0xf]
        %v4291 = vld [vmem:[%s4280 + $0x28] sm:$0xf]
        %v4292 = vld [vmem:[%s4280 + $0x2c] sm:$0xf]
        %v4293 = vld [vmem:[%s4280 + $0x30] sm:$0xf]
        %v4294 = vld [vmem:[%s4280 + $0x34] sm:$0xf]
        %v4295 = vld [vmem:[%s4280 + $0x38] sm:$0xf]
        %v4296 = vld [vmem:[%s4280 + $0x3c] sm:$0xf]
        %v4313 = vunpack.c.l.b16 %v4281
        %v4314 = vunpack.c.l.b16 %v4282
        %v4315 = vunpack.c.l.b16 %v4283
        %v4316 = vunpack.c.l.b16 %v4284
        %v4317 = vunpack.c.l.b16 %v4285
        %v4318 = vunpack.c.l.b16 %v4286
        %v4319 = vunpack.c.l.b16 %v4287
        %v4320 = vunpack.c.l.b16 %v4288
        %v4321 = vunpack.c.l.b16 %v4289
        %v4322 = vunpack.c.l.b16 %v4290
        %v4323 = vunpack.c.l.b16 %v4291
        %v4324 = vunpack.c.l.b16 %v4292
        %v4325 = vunpack.c.l.b16 %v4293
        %v4326 = vunpack.c.l.b16 %v4294
        %v4327 = vunpack.c.l.b16 %v4295
        %v4328 = vunpack.c.l.b16 %v4296
        %v4329 = vpack.c.b16 %v4314, %v4313
        %v4330 = vpack.c.b16 %v4316, %v4315
        %v4331 = vpack.c.b16 %v4318, %v4317
        %v4332 = vpack.c.b16 %v4320, %v4319
        %v4333 = vpack.c.b16 %v4322, %v4321
        %v4334 = vpack.c.b16 %v4324, %v4323
        %v4335 = vpack.c.b16 %v4326, %v4325
        %v4336 = vpack.c.b16 %v4328, %v4327
        %4345 = vmatprep.subr.bf16.mxu0 0
        %4346 = vmatpush1.bf16.msra.mxu0 %v4329
        %4347 = vmatprep.subr.bf16.mxu0 0
        %4348 = vmatpush1.bf16.msra.mxu0 %v4330
        %4349 = vmatprep.subr.bf16.mxu0 0
        %4350 = vmatpush1.bf16.msra.mxu0 %v4331
        %4351 = vmatprep.subr.bf16.mxu0 0
        %4352 = vmatpush1.bf16.msra.mxu0 %v4332
        %4353 = vmatprep.subr.bf16.mxu0 0
        %4354 = vmatpush1.bf16.msra.mxu0 %v4333
        %4355 = vmatprep.subr.bf16.mxu0 0
        %4356 = vmatpush1.bf16.msra.mxu0 %v4334
        %4357 = vmatprep.subr.bf16.mxu0 0
        %4358 = vmatpush1.bf16.msra.mxu0 %v4335
        %4359 = vmatprep.subr.bf16.mxu0 0
        %4360 = vmatpush1.bf16.msra.mxu0 %v4336
        %4361 = vmatprep.subr.bf16.mxu0 0
        %4362 = vmatpush1.bf16.msra.mxu0 0
        %4363 = vmatprep.subr.bf16.mxu0 0
        %4364 = vmatpush1.bf16.msra.mxu0 0
        %4365 = vmatprep.subr.bf16.mxu0 0
        %4366 = vmatpush1.bf16.msra.mxu0 0
        %4367 = vmatprep.subr.bf16.mxu0 0
        %4368 = vmatpush1.bf16.msra.mxu0 0
        %4369 = vmatprep.subr.bf16.mxu0 0
        %4370 = vmatpush1.bf16.msra.mxu0 0
        %4371 = vmatprep.subr.bf16.mxu0 0
        %4372 = vmatpush1.bf16.msra.mxu0 0
        %4373 = vmatprep.subr.bf16.mxu0 0
        %4374 = vmatpush1.bf16.msra.mxu0 0
        %4375 = vmatprep.subr.bf16.mxu0 0
        %4376 = vmatpush1.bf16.msra.mxu0 0
        %4377 = vmatprep.mubr.bf16.mxu0 0
        %4378 = vmatmul.mubr.bf16.gmra.mrb[0].mxu0 %v4277
        %v4379 = vpop.f32.mrb[0].mxu0
        %v4380 = vadd.f32 0.0, %v4379
        %v4381 = vpop.f32.mrb[0].mxu0
        %v4382 = vpop.f32.mrb[0].mxu0
        %v4383 = vadd.f32 0.0, %v4382
        %v4384 = vpop.f32.mrb[0].mxu0
        %4385 = vmatprep.mubr.bf16.mxu0 0
        %4386 = vmatmul.mubr.bf16.gmra.mrb[0].mxu0 %v4278
        %v4387 = vpop.f32.mrb[0].mxu0
        %v4388 = vadd.f32 0.0, %v4387
        %v4389 = vpop.f32.mrb[0].mxu0
        %v4390 = vpop.f32.mrb[0].mxu0
        %v4391 = vadd.f32 0.0, %v4390
        %v4392 = vpop.f32.mrb[0].mxu0
        %4393 = vmatprep.mubr.bf16.mxu0 0
        %4394 = vmatmul.mubr.bf16.gmra.mrb[0].mxu0 %v4279
        %v4395 = vpop.f32.mrb[0].mxu0
        %v4396 = vadd.f32 0.0, %v4395
        %v4397 = vpop.f32.mrb[0].mxu0
        %v4398 = vpop.f32.mrb[0].mxu0
        %v4399 = vpop.f32.mrb[0].mxu0
        %4400 = vdwg.mxu0
        %v4401 = vadd.f32 %v4267, %v4380
        %v4402 = vadd.f32 %v4268, %v4383
        %v4403 = vadd.f32 %v4269, %v4388
        %v4404 = vadd.f32 %v4270, %v4391
        %v4405 = vadd.f32 %v4271, %v4396
        %v4406 = vld [vmem:[#allocation2 + $0xa] sm:$0xff]
        %v4407 = vld [vmem:[#allocation2 + $0x12] sm:$0xff]
        %v4408 = vld [vmem:[#allocation2 + $0x1a] sm:$0xff]
        %v4409 = vld [vmem:[#allocation2 + $0x22] sm:$0xff]
        %v4410 = vld [vmem:[#allocation2 + $0x2a] sm:$0xff]
        %v4411 = vpack.c.bf16 %v4407, %v4406
        %v4412 = vpack.c.bf16 %v4409, %v4408
        %v4413 = vpack.c.bf16 %v4410, %v4410
        %s4414 = scalar_lea.vmem [#allocation9], 320
        %v4415 = vld [vmem:[%s4414] sm:$0xf]
        %v4416 = vld [vmem:[%s4414 + $0x4] sm:$0xf]
        %v4417 = vld [vmem:[%s4414 + $0x8] sm:$0xf]
        %v4418 = vld [vmem:[%s4414 + $0xc] sm:$0xf]
        %v4419 = vld [vmem:[%s4414 + $0x10] sm:$0xf]
        %v4420 = vld [vmem:[%s4414 + $0x14] sm:$0xf]
        %v4421 = vld [vmem:[%s4414 + $0x18] sm:$0xf]
        %v4422 = vld [vmem:[%s4414 + $0x1c] sm:$0xf]
        %v4423 = vld [vmem:[%s4414 + $0x20] sm:$0xf]
        %v4424 = vld [vmem:[%s4414 + $0x24] sm:$0xf]
        %v4425 = vld [vmem:[%s4414 + $0x28] sm:$0xf]
        %v4426 = vld [vmem:[%s4414 + $0x2c] sm:$0xf]
        %v4427 = vld [vmem:[%s4414 + $0x30] sm:$0xf]
        %v4428 = vld [vmem:[%s4414 + $0x34] sm:$0xf]
        %v4429 = vld [vmem:[%s4414 + $0x38] sm:$0xf]
        %v4430 = vld [vmem:[%s4414 + $0x3c] sm:$0xf]
        %v4447 = vunpack.c.l.b16 %v4415
        %v4448 = vunpack.c.l.b16 %v4416
        %v4449 = vunpack.c.l.b16 %v4417
        %v4450 = vunpack.c.l.b16 %v4418
        %v4451 = vunpack.c.l.b16 %v4419
        %v4452 = vunpack.c.l.b16 %v4420
        %v4453 = vunpack.c.l.b16 %v4421
        %v4454 = vunpack.c.l.b16 %v4422
        %v4455 = vunpack.c.l.b16 %v4423
        %v4456 = vunpack.c.l.b16 %v4424
        %v4457 = vunpack.c.l.b16 %v4425
        %v4458 = vunpack.c.l.b16 %v4426
        %v4459 = vunpack.c.l.b16 %v4427
        %v4460 = vunpack.c.l.b16 %v4428
        %v4461 = vunpack.c.l.b16 %v4429
        %v4462 = vunpack.c.l.b16 %v4430
        %v4463 = vpack.c.b16 %v4448, %v4447
        %v4464 = vpack.c.b16 %v4450, %v4449
        %v4465 = vpack.c.b16 %v4452, %v4451
        %v4466 = vpack.c.b16 %v4454, %v4453
        %v4467 = vpack.c.b16 %v4456, %v4455
        %v4468 = vpack.c.b16 %v4458, %v4457
        %v4469 = vpack.c.b16 %v4460, %v4459
        %v4470 = vpack.c.b16 %v4462, %v4461
        %4479 = vmatprep.subr.bf16.mxu0 0
        %4480 = vmatpush1.bf16.msra.mxu0 %v4463
        %4481 = vmatprep.subr.bf16.mxu0 0
        %4482 = vmatpush1.bf16.msra.mxu0 %v4464
        %4483 = vmatprep.subr.bf16.mxu0 0
        %4484 = vmatpush1.bf16.msra.mxu0 %v4465
        %4485 = vmatprep.subr.bf16.mxu0 0
        %4486 = vmatpush1.bf16.msra.mxu0 %v4466
        %4487 = vmatprep.subr.bf16.mxu0 0
        %4488 = vmatpush1.bf16.msra.mxu0 %v4467
        %4489 = vmatprep.subr.bf16.mxu0 0
        %4490 = vmatpush1.bf16.msra.mxu0 %v4468
        %4491 = vmatprep.subr.bf16.mxu0 0
        %4492 = vmatpush1.bf16.msra.mxu0 %v4469
        %4493 = vmatprep.subr.bf16.mxu0 0
        %4494 = vmatpush1.bf16.msra.mxu0 %v4470
        %4495 = vmatprep.subr.bf16.mxu0 0
        %4496 = vmatpush1.bf16.msra.mxu0 0
        %4497 = vmatprep.subr.bf16.mxu0 0
        %4498 = vmatpush1.bf16.msra.mxu0 0
        %4499 = vmatprep.subr.bf16.mxu0 0
        %4500 = vmatpush1.bf16.msra.mxu0 0
        %4501 = vmatprep.subr.bf16.mxu0 0
        %4502 = vmatpush1.bf16.msra.mxu0 0
        %4503 = vmatprep.subr.bf16.mxu0 0
        %4504 = vmatpush1.bf16.msra.mxu0 0
        %4505 = vmatprep.subr.bf16.mxu0 0
        %4506 = vmatpush1.bf16.msra.mxu0 0
        %4507 = vmatprep.subr.bf16.mxu0 0
        %4508 = vmatpush1.bf16.msra.mxu0 0
        %4509 = vmatprep.subr.bf16.mxu0 0
        %4510 = vmatpush1.bf16.msra.mxu0 0
        %4511 = vmatprep.mubr.bf16.mxu0 0
        %4512 = vmatmul.mubr.bf16.gmra.mrb[0].mxu0 %v4411
        %v4513 = vpop.f32.mrb[0].mxu0
        %v4514 = vadd.f32 0.0, %v4513
        %v4515 = vpop.f32.mrb[0].mxu0
        %v4516 = vpop.f32.mrb[0].mxu0
        %v4517 = vadd.f32 0.0, %v4516
        %v4518 = vpop.f32.mrb[0].mxu0
        %4519 = vmatprep.mubr.bf16.mxu0 0
        %4520 = vmatmul.mubr.bf16.gmra.mrb[0].mxu0 %v4412
        %v4521 = vpop.f32.mrb[0].mxu0
        %v4522 = vadd.f32 0.0, %v4521
        %v4523 = vpop.f32.mrb[0].mxu0
        %v4524 = vpop.f32.mrb[0].mxu0
        %v4525 = vadd.f32 0.0, %v4524
        %v4526 = vpop.f32.mrb[0].mxu0
        %4527 = vmatprep.mubr.bf16.mxu0 0
        %4528 = vmatmul.mubr.bf16.gmra.mrb[0].mxu0 %v4413
        %v4529 = vpop.f32.mrb[0].mxu0
        %v4530 = vadd.f32 0.0, %v4529
        %v4531 = vpop.f32.mrb[0].mxu0
        %v4532 = vpop.f32.mrb[0].mxu0
        %v4533 = vpop.f32.mrb[0].mxu0
        %4534 = vdwg.mxu0
        %v4535 = vadd.f32 %v4401, %v4514
        %v4536 = vadd.f32 %v4402, %v4517
        %v4537 = vadd.f32 %v4403, %v4522
        %v4538 = vadd.f32 %v4404, %v4525
        %v4539 = vadd.f32 %v4405, %v4530
        %v4540 = vld [vmem:[#allocation2 + $0x10] sm:$0xff]
        %v4541 = vld [vmem:[#allocation2 + $0x18] sm:$0xff]
        %v4542 = vld [vmem:[#allocation2 + $0x20] sm:$0xff]
        %v4543 = vld [vmem:[#allocation2 + $0x28] sm:$0xff]
        %v4544 = vld [vmem:[#allocation2 + $0x30] sm:$0xff]
        %v4545 = vpack.c.bf16 %v4541, %v4540
        %v4546 = vpack.c.bf16 %v4543, %v4542
        %v4547 = vpack.c.bf16 %v4544, %v4544
        %s4548 = scalar_lea.vmem [#allocation9], 384
        %v4549 = vld [vmem:[%s4548] sm:$0xf]
        %v4550 = vld [vmem:[%s4548 + $0x4] sm:$0xf]
        %v4551 = vld [vmem:[%s4548 + $0x8] sm:$0xf]
        %v4552 = vld [vmem:[%s4548 + $0xc] sm:$0xf]
        %v4553 = vld [vmem:[%s4548 + $0x10] sm:$0xf]
        %v4554 = vld [vmem:[%s4548 + $0x14] sm:$0xf]
        %v4555 = vld [vmem:[%s4548 + $0x18] sm:$0xf]
        %v4556 = vld [vmem:[%s4548 + $0x1c] sm:$0xf]
        %v4557 = vld [vmem:[%s4548 + $0x20] sm:$0xf]
        %v4558 = vld [vmem:[%s4548 + $0x24] sm:$0xf]
        %v4559 = vld [vmem:[%s4548 + $0x28] sm:$0xf]
        %v4560 = vld [vmem:[%s4548 + $0x2c] sm:$0xf]
        %v4561 = vld [vmem:[%s4548 + $0x30] sm:$0xf]
        %v4562 = vld [vmem:[%s4548 + $0x34] sm:$0xf]
        %v4563 = vld [vmem:[%s4548 + $0x38] sm:$0xf]
        %v4564 = vld [vmem:[%s4548 + $0x3c] sm:$0xf]
        %v4581 = vunpack.c.l.b16 %v4549
        %v4582 = vunpack.c.l.b16 %v4550
        %v4583 = vunpack.c.l.b16 %v4551
        %v4584 = vunpack.c.l.b16 %v4552
        %v4585 = vunpack.c.l.b16 %v4553
        %v4586 = vunpack.c.l.b16 %v4554
        %v4587 = vunpack.c.l.b16 %v4555
        %v4588 = vunpack.c.l.b16 %v4556
        %v4589 = vunpack.c.l.b16 %v4557
        %v4590 = vunpack.c.l.b16 %v4558
        %v4591 = vunpack.c.l.b16 %v4559
        %v4592 = vunpack.c.l.b16 %v4560
        %v4593 = vunpack.c.l.b16 %v4561
        %v4594 = vunpack.c.l.b16 %v4562
        %v4595 = vunpack.c.l.b16 %v4563
        %v4596 = vunpack.c.l.b16 %v4564
        %v4597 = vpack.c.b16 %v4582, %v4581
        %v4598 = vpack.c.b16 %v4584, %v4583
        %v4599 = vpack.c.b16 %v4586, %v4585
        %v4600 = vpack.c.b16 %v4588, %v4587
        %v4601 = vpack.c.b16 %v4590, %v4589
        %v4602 = vpack.c.b16 %v4592, %v4591
        %v4603 = vpack.c.b16 %v4594, %v4593
        %v4604 = vpack.c.b16 %v4596, %v4595
        %4613 = vmatprep.subr.bf16.mxu0 0
        %4614 = vmatpush1.bf16.msra.mxu0 %v4597
        %4615 = vmatprep.subr.bf16.mxu0 0
        %4616 = vmatpush1.bf16.msra.mxu0 %v4598
        %4617 = vmatprep.subr.bf16.mxu0 0
        %4618 = vmatpush1.bf16.msra.mxu0 %v4599
        %4619 = vmatprep.subr.bf16.mxu0 0
        %4620 = vmatpush1.bf16.msra.mxu0 %v4600
        %4621 = vmatprep.subr.bf16.mxu0 0
        %4622 = vmatpush1.bf16.msra.mxu0 %v4601
        %4623 = vmatprep.subr.bf16.mxu0 0
        %4624 = vmatpush1.bf16.msra.mxu0 %v4602
        %4625 = vmatprep.subr.bf16.mxu0 0
        %4626 = vmatpush1.bf16.msra.mxu0 %v4603
        %4627 = vmatprep.subr.bf16.mxu0 0
        %4628 = vmatpush1.bf16.msra.mxu0 %v4604
        %4629 = vmatprep.subr.bf16.mxu0 0
        %4630 = vmatpush1.bf16.msra.mxu0 0
        %4631 = vmatprep.subr.bf16.mxu0 0
        %4632 = vmatpush1.bf16.msra.mxu0 0
        %4633 = vmatprep.subr.bf16.mxu0 0
        %4634 = vmatpush1.bf16.msra.mxu0 0
        %4635 = vmatprep.subr.bf16.mxu0 0
        %4636 = vmatpush1.bf16.msra.mxu0 0
        %4637 = vmatprep.subr.bf16.mxu0 0
        %4638 = vmatpush1.bf16.msra.mxu0 0
        %4639 = vmatprep.subr.bf16.mxu0 0
        %4640 = vmatpush1.bf16.msra.mxu0 0
        %4641 = vmatprep.subr.bf16.mxu0 0
        %4642 = vmatpush1.bf16.msra.mxu0 0
        %4643 = vmatprep.subr.bf16.mxu0 0
        %4644 = vmatpush1.bf16.msra.mxu0 0
        %4645 = vmatprep.mubr.bf16.mxu0 0
        %4646 = vmatmul.mubr.bf16.gmra.mrb[0].mxu0 %v4545
        %v4647 = vpop.f32.mrb[0].mxu0
        %v4648 = vadd.f32 0.0, %v4647
        %v4649 = vpop.f32.mrb[0].mxu0
        %v4650 = vpop.f32.mrb[0].mxu0
        %v4651 = vadd.f32 0.0, %v4650
        %v4652 = vpop.f32.mrb[0].mxu0
        %4653 = vmatprep.mubr.bf16.mxu0 0
        %4654 = vmatmul.mubr.bf16.gmra.mrb[0].mxu0 %v4546
        %v4655 = vpop.f32.mrb[0].mxu0
        %v4656 = vadd.f32 0.0, %v4655
        %v4657 = vpop.f32.mrb[0].mxu0
        %v4658 = vpop.f32.mrb[0].mxu0
        %v4659 = vadd.f32 0.0, %v4658
        %v4660 = vpop.f32.mrb[0].mxu0
        %4661 = vmatprep.mubr.bf16.mxu0 0
        %4662 = vmatmul.mubr.bf16.gmra.mrb[0].mxu0 %v4547
        %v4663 = vpop.f32.mrb[0].mxu0
        %v4664 = vadd.f32 0.0, %v4663
        %v4665 = vpop.f32.mrb[0].mxu0
        %v4666 = vpop.f32.mrb[0].mxu0
        %v4667 = vpop.f32.mrb[0].mxu0
        %4668 = vdwg.mxu0
        %v4669 = vadd.f32 %v4535, %v4648
        %v4670 = vadd.f32 %v4536, %v4651
        %v4671 = vadd.f32 %v4537, %v4656
        %v4672 = vadd.f32 %v4538, %v4659
        %v4673 = vadd.f32 %v4539, %v4664
        %v4674 = vld [vmem:[#allocation2 + $0x11] sm:$0xff]
        %v4675 = vld [vmem:[#allocation2 + $0x19] sm:$0xff]
        %v4676 = vld [vmem:[#allocation2 + $0x21] sm:$0xff]
        %v4677 = vld [vmem:[#allocation2 + $0x29] sm:$0xff]
        %v4678 = vld [vmem:[#allocation2 + $0x31] sm:$0xff]
        %v4679 = vpack.c.bf16 %v4675, %v4674
        %v4680 = vpack.c.bf16 %v4677, %v4676
        %v4681 = vpack.c.bf16 %v4678, %v4678
        %s4682 = scalar_lea.vmem [#allocation9], 448
        %v4683 = vld [vmem:[%s4682] sm:$0xf]
        %v4684 = vld [vmem:[%s4682 + $0x4] sm:$0xf]
        %v4685 = vld [vmem:[%s4682 + $0x8] sm:$0xf]
        %v4686 = vld [vmem:[%s4682 + $0xc] sm:$0xf]
        %v4687 = vld [vmem:[%s4682 + $0x10] sm:$0xf]
        %v4688 = vld [vmem:[%s4682 + $0x14] sm:$0xf]
        %v4689 = vld [vmem:[%s4682 + $0x18] sm:$0xf]
        %v4690 = vld [vmem:[%s4682 + $0x1c] sm:$0xf]
        %v4691 = vld [vmem:[%s4682 + $0x20] sm:$0xf]
        %v4692 = vld [vmem:[%s4682 + $0x24] sm:$0xf]
        %v4693 = vld [vmem:[%s4682 + $0x28] sm:$0xf]
        %v4694 = vld [vmem:[%s4682 + $0x2c] sm:$0xf]
        %v4695 = vld [vmem:[%s4682 + $0x30] sm:$0xf]
        %v4696 = vld [vmem:[%s4682 + $0x34] sm:$0xf]
        %v4697 = vld [vmem:[%s4682 + $0x38] sm:$0xf]
        %v4698 = vld [vmem:[%s4682 + $0x3c] sm:$0xf]
        %v4715 = vunpack.c.l.b16 %v4683
        %v4716 = vunpack.c.l.b16 %v4684
        %v4717 = vunpack.c.l.b16 %v4685
        %v4718 = vunpack.c.l.b16 %v4686
        %v4719 = vunpack.c.l.b16 %v4687
        %v4720 = vunpack.c.l.b16 %v4688
        %v4721 = vunpack.c.l.b16 %v4689
        %v4722 = vunpack.c.l.b16 %v4690
        %v4723 = vunpack.c.l.b16 %v4691
        %v4724 = vunpack.c.l.b16 %v4692
        %v4725 = vunpack.c.l.b16 %v4693
        %v4726 = vunpack.c.l.b16 %v4694
        %v4727 = vunpack.c.l.b16 %v4695
        %v4728 = vunpack.c.l.b16 %v4696
        %v4729 = vunpack.c.l.b16 %v4697
        %v4730 = vunpack.c.l.b16 %v4698
        %v4731 = vpack.c.b16 %v4716, %v4715
        %v4732 = vpack.c.b16 %v4718, %v4717
        %v4733 = vpack.c.b16 %v4720, %v4719
        %v4734 = vpack.c.b16 %v4722, %v4721
        %v4735 = vpack.c.b16 %v4724, %v4723
        %v4736 = vpack.c.b16 %v4726, %v4725
        %v4737 = vpack.c.b16 %v4728, %v4727
        %v4738 = vpack.c.b16 %v4730, %v4729
        %4747 = vmatprep.subr.bf16.mxu0 0
        %4748 = vmatpush1.bf16.msra.mxu0 %v4731
        %4749 = vmatprep.subr.bf16.mxu0 0
        %4750 = vmatpush1.bf16.msra.mxu0 %v4732
        %4751 = vmatprep.subr.bf16.mxu0 0
        %4752 = vmatpush1.bf16.msra.mxu0 %v4733
        %4753 = vmatprep.subr.bf16.mxu0 0
        %4754 = vmatpush1.bf16.msra.mxu0 %v4734
        %4755 = vmatprep.subr.bf16.mxu0 0
        %4756 = vmatpush1.bf16.msra.mxu0 %v4735
        %4757 = vmatprep.subr.bf16.mxu0 0
        %4758 = vmatpush1.bf16.msra.mxu0 %v4736
        %4759 = vmatprep.subr.bf16.mxu0 0
        %4760 = vmatpush1.bf16.msra.mxu0 %v4737
        %4761 = vmatprep.subr.bf16.mxu0 0
        %4762 = vmatpush1.bf16.msra.mxu0 %v4738
        %4763 = vmatprep.subr.bf16.mxu0 0
        %4764 = vmatpush1.bf16.msra.mxu0 0
        %4765 = vmatprep.subr.bf16.mxu0 0
        %4766 = vmatpush1.bf16.msra.mxu0 0
        %4767 = vmatprep.subr.bf16.mxu0 0
        %4768 = vmatpush1.bf16.msra.mxu0 0
        %4769 = vmatprep.subr.bf16.mxu0 0
        %4770 = vmatpush1.bf16.msra.mxu0 0
        %4771 = vmatprep.subr.bf16.mxu0 0
        %4772 = vmatpush1.bf16.msra.mxu0 0
        %4773 = vmatprep.subr.bf16.mxu0 0
        %4774 = vmatpush1.bf16.msra.mxu0 0
        %4775 = vmatprep.subr.bf16.mxu0 0
        %4776 = vmatpush1.bf16.msra.mxu0 0
        %4777 = vmatprep.subr.bf16.mxu0 0
        %4778 = vmatpush1.bf16.msra.mxu0 0
        %4779 = vmatprep.mubr.bf16.mxu0 0
        %4780 = vmatmul.mubr.bf16.gmra.mrb[0].mxu0 %v4679
        %v4781 = vpop.f32.mrb[0].mxu0
        %v4782 = vadd.f32 0.0, %v4781
        %v4783 = vpop.f32.mrb[0].mxu0
        %v4784 = vpop.f32.mrb[0].mxu0
        %v4785 = vadd.f32 0.0, %v4784
        %v4786 = vpop.f32.mrb[0].mxu0
        %4787 = vmatprep.mubr.bf16.mxu0 0
        %4788 = vmatmul.mubr.bf16.gmra.mrb[0].mxu0 %v4680
        %v4789 = vpop.f32.mrb[0].mxu0
        %v4790 = vadd.f32 0.0, %v4789
        %v4791 = vpop.f32.mrb[0].mxu0
        %v4792 = vpop.f32.mrb[0].mxu0
        %v4793 = vadd.f32 0.0, %v4792
        %v4794 = vpop.f32.mrb[0].mxu0
        %4795 = vmatprep.mubr.bf16.mxu0 0
        %4796 = vmatmul.mubr.bf16.gmra.mrb[0].mxu0 %v4681
        %v4797 = vpop.f32.mrb[0].mxu0
        %v4798 = vadd.f32 0.0, %v4797
        %v4799 = vpop.f32.mrb[0].mxu0
        %v4800 = vpop.f32.mrb[0].mxu0
        %v4801 = vpop.f32.mrb[0].mxu0
        %4802 = vdwg.mxu0
        %v4803 = vadd.f32 %v4669, %v4782
        %v4804 = vadd.f32 %v4670, %v4785
        %v4805 = vadd.f32 %v4671, %v4790
        %v4806 = vadd.f32 %v4672, %v4793
        %v4807 = vadd.f32 %v4673, %v4798
        %v4808 = vld [vmem:[#allocation2 + $0x12] sm:$0xff]
        %v4809 = vld [vmem:[#allocation2 + $0x1a] sm:$0xff]
        %v4810 = vld [vmem:[#allocation2 + $0x22] sm:$0xff]
        %v4811 = vld [vmem:[#allocation2 + $0x2a] sm:$0xff]
        %v4812 = vld [vmem:[#allocation2 + $0x32] sm:$0xff]
        %v4813 = vpack.c.bf16 %v4809, %v4808
        %v4814 = vpack.c.bf16 %v4811, %v4810
        %v4815 = vpack.c.bf16 %v4812, %v4812
        %s4816 = scalar_lea.vmem [#allocation9], 512
        %v4817 = vld [vmem:[%s4816] sm:$0xf]
        %v4818 = vld [vmem:[%s4816 + $0x4] sm:$0xf]
        %v4819 = vld [vmem:[%s4816 + $0x8] sm:$0xf]
        %v4820 = vld [vmem:[%s4816 + $0xc] sm:$0xf]
        %v4821 = vld [vmem:[%s4816 + $0x10] sm:$0xf]
        %v4822 = vld [vmem:[%s4816 + $0x14] sm:$0xf]
        %v4823 = vld [vmem:[%s4816 + $0x18] sm:$0xf]
        %v4824 = vld [vmem:[%s4816 + $0x1c] sm:$0xf]
        %v4825 = vld [vmem:[%s4816 + $0x20] sm:$0xf]
        %v4826 = vld [vmem:[%s4816 + $0x24] sm:$0xf]
        %v4827 = vld [vmem:[%s4816 + $0x28] sm:$0xf]
        %v4828 = vld [vmem:[%s4816 + $0x2c] sm:$0xf]
        %v4829 = vld [vmem:[%s4816 + $0x30] sm:$0xf]
        %v4830 = vld [vmem:[%s4816 + $0x34] sm:$0xf]
        %v4831 = vld [vmem:[%s4816 + $0x38] sm:$0xf]
        %v4832 = vld [vmem:[%s4816 + $0x3c] sm:$0xf]
        %v4849 = vunpack.c.l.b16 %v4817
        %v4850 = vunpack.c.l.b16 %v4818
        %v4851 = vunpack.c.l.b16 %v4819
        %v4852 = vunpack.c.l.b16 %v4820
        %v4853 = vunpack.c.l.b16 %v4821
        %v4854 = vunpack.c.l.b16 %v4822
        %v4855 = vunpack.c.l.b16 %v4823
        %v4856 = vunpack.c.l.b16 %v4824
        %v4857 = vunpack.c.l.b16 %v4825
        %v4858 = vunpack.c.l.b16 %v4826
        %v4859 = vunpack.c.l.b16 %v4827
        %v4860 = vunpack.c.l.b16 %v4828
        %v4861 = vunpack.c.l.b16 %v4829
        %v4862 = vunpack.c.l.b16 %v4830
        %v4863 = vunpack.c.l.b16 %v4831
        %v4864 = vunpack.c.l.b16 %v4832
        %v4865 = vpack.c.b16 %v4850, %v4849
        %v4866 = vpack.c.b16 %v4852, %v4851
        %v4867 = vpack.c.b16 %v4854, %v4853
        %v4868 = vpack.c.b16 %v4856, %v4855
        %v4869 = vpack.c.b16 %v4858, %v4857
        %v4870 = vpack.c.b16 %v4860, %v4859
        %v4871 = vpack.c.b16 %v4862, %v4861
        %v4872 = vpack.c.b16 %v4864, %v4863
        %4881 = vmatprep.subr.bf16.mxu0 0
        %4882 = vmatpush1.bf16.msra.mxu0 %v4865
        %4883 = vmatprep.subr.bf16.mxu0 0
        %4884 = vmatpush1.bf16.msra.mxu0 %v4866
        %4885 = vmatprep.subr.bf16.mxu0 0
        %4886 = vmatpush1.bf16.msra.mxu0 %v4867
        %4887 = vmatprep.subr.bf16.mxu0 0
        %4888 = vmatpush1.bf16.msra.mxu0 %v4868
        %4889 = vmatprep.subr.bf16.mxu0 0
        %4890 = vmatpush1.bf16.msra.mxu0 %v4869
        %4891 = vmatprep.subr.bf16.mxu0 0
        %4892 = vmatpush1.bf16.msra.mxu0 %v4870
        %4893 = vmatprep.subr.bf16.mxu0 0
        %4894 = vmatpush1.bf16.msra.mxu0 %v4871
        %4895 = vmatprep.subr.bf16.mxu0 0
        %4896 = vmatpush1.bf16.msra.mxu0 %v4872
        %4897 = vmatprep.subr.bf16.mxu0 0
        %4898 = vmatpush1.bf16.msra.mxu0 0
        %4899 = vmatprep.subr.bf16.mxu0 0
        %4900 = vmatpush1.bf16.msra.mxu0 0
        %4901 = vmatprep.subr.bf16.mxu0 0
        %4902 = vmatpush1.bf16.msra.mxu0 0
        %4903 = vmatprep.subr.bf16.mxu0 0
        %4904 = vmatpush1.bf16.msra.mxu0 0
        %4905 = vmatprep.subr.bf16.mxu0 0
        %4906 = vmatpush1.bf16.msra.mxu0 0
        %4907 = vmatprep.subr.bf16.mxu0 0
        %4908 = vmatpush1.bf16.msra.mxu0 0
        %4909 = vmatprep.subr.bf16.mxu0 0
        %4910 = vmatpush1.bf16.msra.mxu0 0
        %4911 = vmatprep.subr.bf16.mxu0 0
        %4912 = vmatpush1.bf16.msra.mxu0 0
        %4913 = vmatprep.mubr.bf16.mxu0 0
        %4914 = vmatmul.mubr.bf16.gmra.mrb[0].mxu0 %v4813
        %v4915 = vpop.f32.mrb[0].mxu0
        %v4916 = vadd.f32 0.0, %v4915
        %v4917 = vpop.f32.mrb[0].mxu0
        %v4918 = vpop.f32.mrb[0].mxu0
        %v4919 = vadd.f32 0.0, %v4918
        %v4920 = vpop.f32.mrb[0].mxu0
        %4921 = vmatprep.mubr.bf16.mxu0 0
        %4922 = vmatmul.mubr.bf16.gmra.mrb[0].mxu0 %v4814
        %v4923 = vpop.f32.mrb[0].mxu0
        %v4924 = vadd.f32 0.0, %v4923
        %v4925 = vpop.f32.mrb[0].mxu0
        %v4926 = vpop.f32.mrb[0].mxu0
        %v4927 = vadd.f32 0.0, %v4926
        %v4928 = vpop.f32.mrb[0].mxu0
        %4929 = vmatprep.mubr.bf16.mxu0 0
        %4930 = vmatmul.mubr.bf16.gmra.mrb[0].mxu0 %v4815
        %v4931 = vpop.f32.mrb[0].mxu0
        %v4932 = vadd.f32 0.0, %v4931
        %v4933 = vpop.f32.mrb[0].mxu0
        %v4934 = vpop.f32.mrb[0].mxu0
        %v4935 = vpop.f32.mrb[0].mxu0
        %4936 = vdwg.mxu0
        %v4937 = vadd.f32 %v4803, %v4916
        %v4938 = vadd.f32 %v4804, %v4919
        %v4939 = vadd.f32 %v4805, %v4924
        %v4940 = vadd.f32 %v4806, %v4927
        %v4941 = vadd.f32 %v4807, %v4932
        %v4942 = vld [vmem:[#allocation13 + $0x3] sm:$0x1]
        %v4943 = vld [vmem:[#allocation13 + $0x4] sm:$0x1]
        %v4944 = vld [vmem:[#allocation13 + $0x5] sm:$0x1]
        %v4945 = vlaneseq
        %v4946 = vshrl.u32 %v4945, 7
        %v4947 = vsub.s32 0, %v4946
        %v4948 = vrot.slane %v4942, %v4947
        %v4949 = vmul.f32 %v4937, %v4948
        %v4950 = vmul.f32 %v4938, %v4948
        %v4951 = vmul.f32 %v4939, %v4948
        %v4952 = vmul.f32 %v4940, %v4948
        %v4953 = vmul.f32 %v4941, %v4948
        %v4954 = vlaneseq
        %v4955 = vshrl.u32 %v4954, 7
        %v4956 = vsub.s32 0, %v4955
        %v4957 = vrot.slane %v4943, %v4956
        %v4958 = vadd.f32 %v4949, %v4957
        %v4959 = vadd.f32 %v4950, %v4957
        %v4960 = vadd.f32 %v4951, %v4957
        %v4961 = vadd.f32 %v4952, %v4957
        %v4962 = vadd.f32 %v4953, %v4957
        %vm4963 = vcmp.ge.f32.partialorder %v4958, 0.0
        %vm4964 = vcmp.ge.f32.partialorder %v4959, 0.0
        %vm4965 = vcmp.ge.f32.partialorder %v4960, 0.0
        %vm4966 = vcmp.ge.f32.partialorder %v4961, 0.0
        %vm4967 = vcmp.ge.f32.partialorder %v4962, 0.0
        %v4968 = vlaneseq
        %v4969 = vshrl.u32 %v4968, 7
        %v4970 = vsub.s32 0, %v4969
        %v4971 = vrot.slane %v4944, %v4970
        %v4972 = vmul.f32 %v4971, %v4958
        %v4973 = vmul.f32 %v4971, %v4959
        %v4974 = vmul.f32 %v4971, %v4960
        %v4975 = vmul.f32 %v4971, %v4961
        %v4976 = vmul.f32 %v4971, %v4962
        %v4977 = vsel %vm4963, %v4958, %v4972
        %v4978 = vsel %vm4964, %v4959, %v4973
        %v4979 = vsel %vm4965, %v4960, %v4974
        %v4980 = vsel %vm4966, %v4961, %v4975
        %v4981 = vsel %vm4967, %v4962, %v4976
        %4982 = vst [vmem:[#allocation3] sm:$0xff] %v4977
        %4983 = vst [vmem:[#allocation3 + $0x8] sm:$0xff] %v4978
        %4984 = vst [vmem:[#allocation3 + $0x10] sm:$0xff] %v4979
        %4985 = vst [vmem:[#allocation3 + $0x18] sm:$0xff] %v4980
        %4986 = vst [vmem:[#allocation3 + $0x20] sm:$0xff] %v4981
        %v4987 = vld [vmem:[#allocation3] sm:$0xff]
        %v4988 = vld [vmem:[#allocation3 + $0x8] sm:$0xff]
        %v4989 = vld [vmem:[#allocation3 + $0x10] sm:$0xff]
        %v4990 = vld [vmem:[#allocation3 + $0x18] sm:$0xff]
        %v4991 = vld [vmem:[#allocation3 + $0x20] sm:$0xff]
        %v4992 = vld [vmem:[#allocation3 + $0x28] sm:$0xff]
        %v4993 = vld [vmem:[#allocation3 + $0x30] sm:$0xff]
        %v4994 = vld [vmem:[#allocation3 + $0x38] sm:$0xff]
        %v4995 = vld [vmem:[#allocation3 + $0x40] sm:$0xff]
        %v4996 = vld [vmem:[#allocation3 + $0x48] sm:$0xff]
        %v4997 = vld [vmem:[#allocation3 + $0x50] sm:$0xff]
        %v4998 = vld [vmem:[#allocation3 + $0x58] sm:$0xff]
        %v4999 = vld [vmem:[#allocation3 + $0x60] sm:$0xff]
        %v5000 = vld [vmem:[#allocation3 + $0x68] sm:$0xff]
        %v5001 = vld [vmem:[#allocation3 + $0x70] sm:$0xff]
        %v5002 = vld [vmem:[#allocation3 + $0x78] sm:$0xff]
        %v5003 = vpack.c.bf16 %v4988, %v4987
        %v5004 = vpack.c.bf16 %v4990, %v4989
        %v5005 = vpack.c.bf16 %v4992, %v4991
        %v5006 = vpack.c.bf16 %v4994, %v4993
        %v5007 = vpack.c.bf16 %v4996, %v4995
        %v5008 = vpack.c.bf16 %v4998, %v4997
        %v5009 = vpack.c.bf16 %v5000, %v4999
        %v5010 = vpack.c.bf16 %v5002, %v5001
        %v5011 = vld [vmem:[#allocation10] sm:$0xf]
        %v5012 = vld [vmem:[#allocation10 + $0x4] sm:$0xf]
        %v5013 = vld [vmem:[#allocation10 + $0x8] sm:$0xf]
        %v5014 = vld [vmem:[#allocation10 + $0xc] sm:$0xf]
        %v5015 = vld [vmem:[#allocation10 + $0x10] sm:$0xf]
        %v5016 = vld [vmem:[#allocation10 + $0x14] sm:$0xf]
        %v5017 = vld [vmem:[#allocation10 + $0x18] sm:$0xf]
        %v5018 = vld [vmem:[#allocation10 + $0x1c] sm:$0xf]
        %v5019 = vld [vmem:[#allocation10 + $0x20] sm:$0xf]
        %v5020 = vld [vmem:[#allocation10 + $0x24] sm:$0xf]
        %v5021 = vld [vmem:[#allocation10 + $0x28] sm:$0xf]
        %v5022 = vld [vmem:[#allocation10 + $0x2c] sm:$0xf]
        %v5023 = vld [vmem:[#allocation10 + $0x30] sm:$0xf]
        %v5024 = vld [vmem:[#allocation10 + $0x34] sm:$0xf]
        %v5025 = vld [vmem:[#allocation10 + $0x38] sm:$0xf]
        %v5026 = vld [vmem:[#allocation10 + $0x3c] sm:$0xf]
        %v5027 = vld [vmem:[#allocation3 + $0x1] sm:$0xff]
        %v5028 = vld [vmem:[#allocation3 + $0x9] sm:$0xff]
        %v5029 = vld [vmem:[#allocation3 + $0x11] sm:$0xff]
        %v5030 = vld [vmem:[#allocation3 + $0x19] sm:$0xff]
        %v5031 = vld [vmem:[#allocation3 + $0x21] sm:$0xff]
        %v5032 = vld [vmem:[#allocation3 + $0x29] sm:$0xff]
        %v5033 = vld [vmem:[#allocation3 + $0x31] sm:$0xff]
        %v5034 = vld [vmem:[#allocation3 + $0x39] sm:$0xff]
        %v5035 = vld [vmem:[#allocation3 + $0x41] sm:$0xff]
        %v5036 = vld [vmem:[#allocation3 + $0x49] sm:$0xff]
        %v5037 = vld [vmem:[#allocation3 + $0x51] sm:$0xff]
        %v5038 = vld [vmem:[#allocation3 + $0x59] sm:$0xff]
        %v5039 = vld [vmem:[#allocation3 + $0x61] sm:$0xff]
        %v5040 = vld [vmem:[#allocation3 + $0x69] sm:$0xff]
        %v5041 = vld [vmem:[#allocation3 + $0x71] sm:$0xff]
        %v5042 = vld [vmem:[#allocation3 + $0x79] sm:$0xff]
        %v5043 = vpack.c.bf16 %v5028, %v5027
        %v5044 = vpack.c.bf16 %v5030, %v5029
        %v5045 = vpack.c.bf16 %v5032, %v5031
        %v5046 = vpack.c.bf16 %v5034, %v5033
        %v5047 = vpack.c.bf16 %v5036, %v5035
        %v5048 = vpack.c.bf16 %v5038, %v5037
        %v5049 = vpack.c.bf16 %v5040, %v5039
        %v5050 = vpack.c.bf16 %v5042, %v5041
        %s5051 = scalar_lea.vmem [#allocation10], 64
        %v5052 = vld [vmem:[%s5051] sm:$0xf]
        %v5053 = vld [vmem:[%s5051 + $0x4] sm:$0xf]
        %v5054 = vld [vmem:[%s5051 + $0x8] sm:$0xf]
        %v5055 = vld [vmem:[%s5051 + $0xc] sm:$0xf]
        %v5056 = vld [vmem:[%s5051 + $0x10] sm:$0xf]
        %v5057 = vld [vmem:[%s5051 + $0x14] sm:$0xf]
        %v5058 = vld [vmem:[%s5051 + $0x18] sm:$0xf]
        %v5059 = vld [vmem:[%s5051 + $0x1c] sm:$0xf]
        %v5060 = vld [vmem:[%s5051 + $0x20] sm:$0xf]
        %v5061 = vld [vmem:[%s5051 + $0x24] sm:$0xf]
        %v5062 = vld [vmem:[%s5051 + $0x28] sm:$0xf]
        %v5063 = vld [vmem:[%s5051 + $0x2c] sm:$0xf]
        %v5064 = vld [vmem:[%s5051 + $0x30] sm:$0xf]
        %v5065 = vld [vmem:[%s5051 + $0x34] sm:$0xf]
        %v5066 = vld [vmem:[%s5051 + $0x38] sm:$0xf]
        %v5067 = vld [vmem:[%s5051 + $0x3c] sm:$0xf]
        %v5084 = vunpack.c.l.b16 %v5052
        %v5085 = vunpack.c.l.b16 %v5053
        %v5086 = vunpack.c.l.b16 %v5054
        %v5087 = vunpack.c.l.b16 %v5055
        %v5088 = vunpack.c.l.b16 %v5056
        %v5089 = vunpack.c.l.b16 %v5057
        %v5090 = vunpack.c.l.b16 %v5058
        %v5091 = vunpack.c.l.b16 %v5059
        %v5092 = vunpack.c.l.b16 %v5060
        %v5093 = vunpack.c.l.b16 %v5061
        %v5094 = vunpack.c.l.b16 %v5062
        %v5095 = vunpack.c.l.b16 %v5063
        %v5096 = vunpack.c.l.b16 %v5064
        %v5097 = vunpack.c.l.b16 %v5065
        %v5098 = vunpack.c.l.b16 %v5066
        %v5099 = vunpack.c.l.b16 %v5067
        %v5100 = vpack.c.b16 %v5085, %v5084
        %v5101 = vpack.c.b16 %v5087, %v5086
        %v5102 = vpack.c.b16 %v5089, %v5088
        %v5103 = vpack.c.b16 %v5091, %v5090
        %v5104 = vpack.c.b16 %v5093, %v5092
        %v5105 = vpack.c.b16 %v5095, %v5094
        %v5106 = vpack.c.b16 %v5097, %v5096
        %v5107 = vpack.c.b16 %v5099, %v5098
        %5116 = vmatprep.subr.bf16.mxu0 0
        %5117 = vmatpush1.bf16.msra.mxu0 %v5100
        %5118 = vmatprep.subr.bf16.mxu0 0
        %5119 = vmatpush1.bf16.msra.mxu0 %v5101
        %5120 = vmatprep.subr.bf16.mxu0 0
        %5121 = vmatpush1.bf16.msra.mxu0 %v5102
        %5122 = vmatprep.subr.bf16.mxu0 0
        %5123 = vmatpush1.bf16.msra.mxu0 %v5103
        %5124 = vmatprep.subr.bf16.mxu0 0
        %5125 = vmatpush1.bf16.msra.mxu0 %v5104
        %5126 = vmatprep.subr.bf16.mxu0 0
        %5127 = vmatpush1.bf16.msra.mxu0 %v5105
        %5128 = vmatprep.subr.bf16.mxu0 0
        %5129 = vmatpush1.bf16.msra.mxu0 %v5106
        %5130 = vmatprep.subr.bf16.mxu0 0
        %5131 = vmatpush1.bf16.msra.mxu0 %v5107
        %5132 = vmatprep.subr.bf16.mxu0 0
        %5133 = vmatpush1.bf16.msra.mxu0 0
        %5134 = vmatprep.subr.bf16.mxu0 0
        %5135 = vmatpush1.bf16.msra.mxu0 0
        %5136 = vmatprep.subr.bf16.mxu0 0
        %5137 = vmatpush1.bf16.msra.mxu0 0
        %5138 = vmatprep.subr.bf16.mxu0 0
        %5139 = vmatpush1.bf16.msra.mxu0 0
        %5140 = vmatprep.subr.bf16.mxu0 0
        %5141 = vmatpush1.bf16.msra.mxu0 0
        %5142 = vmatprep.subr.bf16.mxu0 0
        %5143 = vmatpush1.bf16.msra.mxu0 0
        %5144 = vmatprep.subr.bf16.mxu0 0
        %5145 = vmatpush1.bf16.msra.mxu0 0
        %5146 = vmatprep.subr.bf16.mxu0 0
        %5147 = vmatpush1.bf16.msra.mxu0 0
        %5148 = vmatprep.mubr.bf16.mxu0 0
        %5149 = vmatmul.mubr.bf16.gmra.mrb[0].mxu0 %v5043
        %v5150 = vpop.f32.mrb[0].mxu0
        %v5151 = vadd.f32 0.0, %v5150
        %v5152 = vpop.f32.mrb[0].mxu0
        %v5153 = vpop.f32.mrb[0].mxu0
        %v5154 = vadd.f32 0.0, %v5153
        %v5155 = vpop.f32.mrb[0].mxu0
        %5156 = vmatprep.mubr.bf16.mxu0 0
        %5157 = vmatmul.mubr.bf16.gmra.mrb[0].mxu0 %v5044
        %v5158 = vpop.f32.mrb[0].mxu0
        %v5159 = vadd.f32 0.0, %v5158
        %v5160 = vpop.f32.mrb[0].mxu0
        %v5161 = vpop.f32.mrb[0].mxu0
        %v5162 = vadd.f32 0.0, %v5161
        %v5163 = vpop.f32.mrb[0].mxu0
        %5164 = vmatprep.mubr.bf16.mxu0 0
        %5165 = vmatmul.mubr.bf16.gmra.mrb[0].mxu0 %v5045
        %v5166 = vpop.f32.mrb[0].mxu0
        %v5167 = vadd.f32 0.0, %v5166
        %v5168 = vpop.f32.mrb[0].mxu0
        %v5169 = vpop.f32.mrb[0].mxu0
        %v5170 = vadd.f32 0.0, %v5169
        %v5171 = vpop.f32.mrb[0].mxu0
        %5172 = vmatprep.mubr.bf16.mxu0 0
        %5173 = vmatmul.mubr.bf16.gmra.mrb[0].mxu0 %v5046
        %v5174 = vpop.f32.mrb[0].mxu0
        %v5175 = vadd.f32 0.0, %v5174
        %v5176 = vpop.f32.mrb[0].mxu0
        %v5177 = vpop.f32.mrb[0].mxu0
        %v5178 = vadd.f32 0.0, %v5177
        %v5179 = vpop.f32.mrb[0].mxu0
        %5180 = vmatprep.mubr.bf16.mxu0 0
        %5181 = vmatmul.mubr.bf16.gmra.mrb[0].mxu0 %v5047
        %v5182 = vpop.f32.mrb[0].mxu0
        %v5183 = vadd.f32 0.0, %v5182
        %v5184 = vpop.f32.mrb[0].mxu0
        %v5185 = vpop.f32.mrb[0].mxu0
        %v5186 = vadd.f32 0.0, %v5185
        %v5187 = vpop.f32.mrb[0].mxu0
        %5188 = vmatprep.mubr.bf16.mxu0 0
        %5189 = vmatmul.mubr.bf16.gmra.mrb[0].mxu0 %v5048
        %v5190 = vpop.f32.mrb[0].mxu0
        %v5191 = vadd.f32 0.0, %v5190
        %v5192 = vpop.f32.mrb[0].mxu0
        %v5193 = vpop.f32.mrb[0].mxu0
        %v5194 = vadd.f32 0.0, %v5193
        %v5195 = vpop.f32.mrb[0].mxu0
        %5196 = vmatprep.mubr.bf16.mxu0 0
        %5197 = vmatmul.mubr.bf16.gmra.mrb[0].mxu0 %v5049
        %v5198 = vpop.f32.mrb[0].mxu0
        %v5199 = vadd.f32 0.0, %v5198
        %v5200 = vpop.f32.mrb[0].mxu0
        %v5201 = vpop.f32.mrb[0].mxu0
        %v5202 = vadd.f32 0.0, %v5201
        %v5203 = vpop.f32.mrb[0].mxu0
        %5204 = vmatprep.mubr.bf16.mxu0 0
        %5205 = vmatmul.mubr.bf16.gmra.mrb[0].mxu0 %v5050
        %v5206 = vpop.f32.mrb[0].mxu0
        %v5207 = vadd.f32 0.0, %v5206
        %v5208 = vpop.f32.mrb[0].mxu0
        %v5209 = vpop.f32.mrb[0].mxu0
        %v5210 = vadd.f32 0.0, %v5209
        %v5211 = vpop.f32.mrb[0].mxu0
        %5212 = vdwg.mxu0
        %v5229 = vunpack.c.l.b16 %v5011
        %v5230 = vunpack.c.l.b16 %v5012
        %v5231 = vunpack.c.l.b16 %v5013
        %v5232 = vunpack.c.l.b16 %v5014
        %v5233 = vunpack.c.l.b16 %v5015
        %v5234 = vunpack.c.l.b16 %v5016
        %v5235 = vunpack.c.l.b16 %v5017
        %v5236 = vunpack.c.l.b16 %v5018
        %v5237 = vunpack.c.l.b16 %v5019
        %v5238 = vunpack.c.l.b16 %v5020
        %v5239 = vunpack.c.l.b16 %v5021
        %v5240 = vunpack.c.l.b16 %v5022
        %v5241 = vunpack.c.l.b16 %v5023
        %v5242 = vunpack.c.l.b16 %v5024
        %v5243 = vunpack.c.l.b16 %v5025
        %v5244 = vunpack.c.l.b16 %v5026
        %v5245 = vpack.c.b16 %v5230, %v5229
        %v5246 = vpack.c.b16 %v5232, %v5231
        %v5247 = vpack.c.b16 %v5234, %v5233
        %v5248 = vpack.c.b16 %v5236, %v5235
        %v5249 = vpack.c.b16 %v5238, %v5237
        %v5250 = vpack.c.b16 %v5240, %v5239
        %v5251 = vpack.c.b16 %v5242, %v5241
        %v5252 = vpack.c.b16 %v5244, %v5243
        %5261 = vmatprep.subr.bf16.mxu0 0
        %5262 = vmatpush1.bf16.msra.mxu0 %v5245
        %5263 = vmatprep.subr.bf16.mxu0 0
        %5264 = vmatpush1.bf16.msra.mxu0 %v5246
        %5265 = vmatprep.subr.bf16.mxu0 0
        %5266 = vmatpush1.bf16.msra.mxu0 %v5247
        %5267 = vmatprep.subr.bf16.mxu0 0
        %5268 = vmatpush1.bf16.msra.mxu0 %v5248
        %5269 = vmatprep.subr.bf16.mxu0 0
        %5270 = vmatpush1.bf16.msra.mxu0 %v5249
        %5271 = vmatprep.subr.bf16.mxu0 0
        %5272 = vmatpush1.bf16.msra.mxu0 %v5250
        %5273 = vmatprep.subr.bf16.mxu0 0
        %5274 = vmatpush1.bf16.msra.mxu0 %v5251
        %5275 = vmatprep.subr.bf16.mxu0 0
        %5276 = vmatpush1.bf16.msra.mxu0 %v5252
        %5277 = vmatprep.subr.bf16.mxu0 0
        %5278 = vmatpush1.bf16.msra.mxu0 0
        %5279 = vmatprep.subr.bf16.mxu0 0
        %5280 = vmatpush1.bf16.msra.mxu0 0
        %5281 = vmatprep.subr.bf16.mxu0 0
        %5282 = vmatpush1.bf16.msra.mxu0 0
        %5283 = vmatprep.subr.bf16.mxu0 0
        %5284 = vmatpush1.bf16.msra.mxu0 0
        %5285 = vmatprep.subr.bf16.mxu0 0
        %5286 = vmatpush1.bf16.msra.mxu0 0
        %5287 = vmatprep.subr.bf16.mxu0 0
        %5288 = vmatpush1.bf16.msra.mxu0 0
        %5289 = vmatprep.subr.bf16.mxu0 0
        %5290 = vmatpush1.bf16.msra.mxu0 0
        %5291 = vmatprep.subr.bf16.mxu0 0
        %5292 = vmatpush1.bf16.msra.mxu0 0
        %5293 = vmatprep.mubr.bf16.mxu0 0
        %5294 = vmatmul.mubr.bf16.gmra.mrb[0].mxu0 %v5003
        %v5295 = vpop.f32.mrb[0].mxu0
        %v5296 = vadd.f32 %v5151, %v5295
        %v5297 = vpop.f32.mrb[0].mxu0
        %v5298 = vpop.f32.mrb[0].mxu0
        %v5299 = vadd.f32 %v5154, %v5298
        %v5300 = vpop.f32.mrb[0].mxu0
        %5301 = vmatprep.mubr.bf16.mxu0 0
        %5302 = vmatmul.mubr.bf16.gmra.mrb[0].mxu0 %v5004
        %v5303 = vpop.f32.mrb[0].mxu0
        %v5304 = vadd.f32 %v5159, %v5303
        %v5305 = vpop.f32.mrb[0].mxu0
        %v5306 = vpop.f32.mrb[0].mxu0
        %v5307 = vadd.f32 %v5162, %v5306
        %v5308 = vpop.f32.mrb[0].mxu0
        %5309 = vmatprep.mubr.bf16.mxu0 0
        %5310 = vmatmul.mubr.bf16.gmra.mrb[0].mxu0 %v5005
        %v5311 = vpop.f32.mrb[0].mxu0
        %v5312 = vadd.f32 %v5167, %v5311
        %v5313 = vpop.f32.mrb[0].mxu0
        %v5314 = vpop.f32.mrb[0].mxu0
        %v5315 = vadd.f32 %v5170, %v5314
        %v5316 = vpop.f32.mrb[0].mxu0
        %5317 = vmatprep.mubr.bf16.mxu0 0
        %5318 = vmatmul.mubr.bf16.gmra.mrb[0].mxu0 %v5006
        %v5319 = vpop.f32.mrb[0].mxu0
        %v5320 = vadd.f32 %v5175, %v5319
        %v5321 = vpop.f32.mrb[0].mxu0
        %v5322 = vpop.f32.mrb[0].mxu0
        %v5323 = vadd.f32 %v5178, %v5322
        %v5324 = vpop.f32.mrb[0].mxu0
        %5325 = vmatprep.mubr.bf16.mxu0 0
        %5326 = vmatmul.mubr.bf16.gmra.mrb[0].mxu0 %v5007
        %v5327 = vpop.f32.mrb[0].mxu0
        %v5328 = vadd.f32 %v5183, %v5327
        %v5329 = vpop.f32.mrb[0].mxu0
        %v5330 = vpop.f32.mrb[0].mxu0
        %v5331 = vadd.f32 %v5186, %v5330
        %v5332 = vpop.f32.mrb[0].mxu0
        %5333 = vmatprep.mubr.bf16.mxu0 0
        %5334 = vmatmul.mubr.bf16.gmra.mrb[0].mxu0 %v5008
        %v5335 = vpop.f32.mrb[0].mxu0
        %v5336 = vadd.f32 %v5191, %v5335
        %v5337 = vpop.f32.mrb[0].mxu0
        %v5338 = vpop.f32.mrb[0].mxu0
        %v5339 = vadd.f32 %v5194, %v5338
        %v5340 = vpop.f32.mrb[0].mxu0
        %5341 = vmatprep.mubr.bf16.mxu0 0
        %5342 = vmatmul.mubr.bf16.gmra.mrb[0].mxu0 %v5009
        %v5343 = vpop.f32.mrb[0].mxu0
        %v5344 = vadd.f32 %v5199, %v5343
        %v5345 = vpop.f32.mrb[0].mxu0
        %v5346 = vpop.f32.mrb[0].mxu0
        %v5347 = vadd.f32 %v5202, %v5346
        %v5348 = vpop.f32.mrb[0].mxu0
        %5349 = vmatprep.mubr.bf16.mxu0 0
        %5350 = vmatmul.mubr.bf16.gmra.mrb[0].mxu0 %v5010
        %v5351 = vpop.f32.mrb[0].mxu0
        %v5352 = vadd.f32 %v5207, %v5351
        %v5353 = vpop.f32.mrb[0].mxu0
        %v5354 = vpop.f32.mrb[0].mxu0
        %v5355 = vadd.f32 %v5210, %v5354
        %v5356 = vpop.f32.mrb[0].mxu0
        %5357 = vdwg.mxu0
        %v5358 = vld [vmem:[#allocation3 + $0x2] sm:$0xff]
        %v5359 = vld [vmem:[#allocation3 + $0xa] sm:$0xff]
        %v5360 = vld [vmem:[#allocation3 + $0x12] sm:$0xff]
        %v5361 = vld [vmem:[#allocation3 + $0x1a] sm:$0xff]
        %v5362 = vld [vmem:[#allocation3 + $0x22] sm:$0xff]
        %v5363 = vld [vmem:[#allocation3 + $0x2a] sm:$0xff]
        %v5364 = vld [vmem:[#allocation3 + $0x32] sm:$0xff]
        %v5365 = vld [vmem:[#allocation3 + $0x3a] sm:$0xff]
        %v5366 = vld [vmem:[#allocation3 + $0x42] sm:$0xff]
        %v5367 = vld [vmem:[#allocation3 + $0x4a] sm:$0xff]
        %v5368 = vld [vmem:[#allocation3 + $0x52] sm:$0xff]
        %v5369 = vld [vmem:[#allocation3 + $0x5a] sm:$0xff]
        %v5370 = vld [vmem:[#allocation3 + $0x62] sm:$0xff]
        %v5371 = vld [vmem:[#allocation3 + $0x6a] sm:$0xff]
        %v5372 = vld [vmem:[#allocation3 + $0x72] sm:$0xff]
        %v5373 = vld [vmem:[#allocation3 + $0x7a] sm:$0xff]
        %v5374 = vpack.c.bf16 %v5359, %v5358
        %v5375 = vpack.c.bf16 %v5361, %v5360
        %v5376 = vpack.c.bf16 %v5363, %v5362
        %v5377 = vpack.c.bf16 %v5365, %v5364
        %v5378 = vpack.c.bf16 %v5367, %v5366
        %v5379 = vpack.c.bf16 %v5369, %v5368
        %v5380 = vpack.c.bf16 %v5371, %v5370
        %v5381 = vpack.c.bf16 %v5373, %v5372
        %s5382 = scalar_lea.vmem [#allocation10], 128
        %v5383 = vld [vmem:[%s5382] sm:$0xf]
        %v5384 = vld [vmem:[%s5382 + $0x4] sm:$0xf]
        %v5385 = vld [vmem:[%s5382 + $0x8] sm:$0xf]
        %v5386 = vld [vmem:[%s5382 + $0xc] sm:$0xf]
        %v5387 = vld [vmem:[%s5382 + $0x10] sm:$0xf]
        %v5388 = vld [vmem:[%s5382 + $0x14] sm:$0xf]
        %v5389 = vld [vmem:[%s5382 + $0x18] sm:$0xf]
        %v5390 = vld [vmem:[%s5382 + $0x1c] sm:$0xf]
        %v5391 = vld [vmem:[%s5382 + $0x20] sm:$0xf]
        %v5392 = vld [vmem:[%s5382 + $0x24] sm:$0xf]
        %v5393 = vld [vmem:[%s5382 + $0x28] sm:$0xf]
        %v5394 = vld [vmem:[%s5382 + $0x2c] sm:$0xf]
        %v5395 = vld [vmem:[%s5382 + $0x30] sm:$0xf]
        %v5396 = vld [vmem:[%s5382 + $0x34] sm:$0xf]
        %v5397 = vld [vmem:[%s5382 + $0x38] sm:$0xf]
        %v5398 = vld [vmem:[%s5382 + $0x3c] sm:$0xf]
        %v5415 = vunpack.c.l.b16 %v5383
        %v5416 = vunpack.c.l.b16 %v5384
        %v5417 = vunpack.c.l.b16 %v5385
        %v5418 = vunpack.c.l.b16 %v5386
        %v5419 = vunpack.c.l.b16 %v5387
        %v5420 = vunpack.c.l.b16 %v5388
        %v5421 = vunpack.c.l.b16 %v5389
        %v5422 = vunpack.c.l.b16 %v5390
        %v5423 = vunpack.c.l.b16 %v5391
        %v5424 = vunpack.c.l.b16 %v5392
        %v5425 = vunpack.c.l.b16 %v5393
        %v5426 = vunpack.c.l.b16 %v5394
        %v5427 = vunpack.c.l.b16 %v5395
        %v5428 = vunpack.c.l.b16 %v5396
        %v5429 = vunpack.c.l.b16 %v5397
        %v5430 = vunpack.c.l.b16 %v5398
        %v5431 = vpack.c.b16 %v5416, %v5415
        %v5432 = vpack.c.b16 %v5418, %v5417
        %v5433 = vpack.c.b16 %v5420, %v5419
        %v5434 = vpack.c.b16 %v5422, %v5421
        %v5435 = vpack.c.b16 %v5424, %v5423
        %v5436 = vpack.c.b16 %v5426, %v5425
        %v5437 = vpack.c.b16 %v5428, %v5427
        %v5438 = vpack.c.b16 %v5430, %v5429
        %5447 = vmatprep.subr.bf16.mxu0 0
        %5448 = vmatpush1.bf16.msra.mxu0 %v5431
        %5449 = vmatprep.subr.bf16.mxu0 0
        %5450 = vmatpush1.bf16.msra.mxu0 %v5432
        %5451 = vmatprep.subr.bf16.mxu0 0
        %5452 = vmatpush1.bf16.msra.mxu0 %v5433
        %5453 = vmatprep.subr.bf16.mxu0 0
        %5454 = vmatpush1.bf16.msra.mxu0 %v5434
        %5455 = vmatprep.subr.bf16.mxu0 0
        %5456 = vmatpush1.bf16.msra.mxu0 %v5435
        %5457 = vmatprep.subr.bf16.mxu0 0
        %5458 = vmatpush1.bf16.msra.mxu0 %v5436
        %5459 = vmatprep.subr.bf16.mxu0 0
        %5460 = vmatpush1.bf16.msra.mxu0 %v5437
        %5461 = vmatprep.subr.bf16.mxu0 0
        %5462 = vmatpush1.bf16.msra.mxu0 %v5438
        %5463 = vmatprep.subr.bf16.mxu0 0
        %5464 = vmatpush1.bf16.msra.mxu0 0
        %5465 = vmatprep.subr.bf16.mxu0 0
        %5466 = vmatpush1.bf16.msra.mxu0 0
        %5467 = vmatprep.subr.bf16.mxu0 0
        %5468 = vmatpush1.bf16.msra.mxu0 0
        %5469 = vmatprep.subr.bf16.mxu0 0
        %5470 = vmatpush1.bf16.msra.mxu0 0
        %5471 = vmatprep.subr.bf16.mxu0 0
        %5472 = vmatpush1.bf16.msra.mxu0 0
        %5473 = vmatprep.subr.bf16.mxu0 0
        %5474 = vmatpush1.bf16.msra.mxu0 0
        %5475 = vmatprep.subr.bf16.mxu0 0
        %5476 = vmatpush1.bf16.msra.mxu0 0
        %5477 = vmatprep.subr.bf16.mxu0 0
        %5478 = vmatpush1.bf16.msra.mxu0 0
        %5479 = vmatprep.mubr.bf16.mxu0 0
        %5480 = vmatmul.mubr.bf16.gmra.mrb[0].mxu0 %v5374
        %v5481 = vpop.f32.mrb[0].mxu0
        %v5482 = vadd.f32 0.0, %v5481
        %v5483 = vpop.f32.mrb[0].mxu0
        %v5484 = vpop.f32.mrb[0].mxu0
        %v5485 = vadd.f32 0.0, %v5484
        %v5486 = vpop.f32.mrb[0].mxu0
        %5487 = vmatprep.mubr.bf16.mxu0 0
        %5488 = vmatmul.mubr.bf16.gmra.mrb[0].mxu0 %v5375
        %v5489 = vpop.f32.mrb[0].mxu0
        %v5490 = vadd.f32 0.0, %v5489
        %v5491 = vpop.f32.mrb[0].mxu0
        %v5492 = vpop.f32.mrb[0].mxu0
        %v5493 = vadd.f32 0.0, %v5492
        %v5494 = vpop.f32.mrb[0].mxu0
        %5495 = vmatprep.mubr.bf16.mxu0 0
        %5496 = vmatmul.mubr.bf16.gmra.mrb[0].mxu0 %v5376
        %v5497 = vpop.f32.mrb[0].mxu0
        %v5498 = vadd.f32 0.0, %v5497
        %v5499 = vpop.f32.mrb[0].mxu0
        %v5500 = vpop.f32.mrb[0].mxu0
        %v5501 = vadd.f32 0.0, %v5500
        %v5502 = vpop.f32.mrb[0].mxu0
        %5503 = vmatprep.mubr.bf16.mxu0 0
        %5504 = vmatmul.mubr.bf16.gmra.mrb[0].mxu0 %v5377
        %v5505 = vpop.f32.mrb[0].mxu0
        %v5506 = vadd.f32 0.0, %v5505
        %v5507 = vpop.f32.mrb[0].mxu0
        %v5508 = vpop.f32.mrb[0].mxu0
        %v5509 = vadd.f32 0.0, %v5508
        %v5510 = vpop.f32.mrb[0].mxu0
        %5511 = vmatprep.mubr.bf16.mxu0 0
        %5512 = vmatmul.mubr.bf16.gmra.mrb[0].mxu0 %v5378
        %v5513 = vpop.f32.mrb[0].mxu0
        %v5514 = vadd.f32 0.0, %v5513
        %v5515 = vpop.f32.mrb[0].mxu0
        %v5516 = vpop.f32.mrb[0].mxu0
        %v5517 = vadd.f32 0.0, %v5516
        %v5518 = vpop.f32.mrb[0].mxu0
        %5519 = vmatprep.mubr.bf16.mxu0 0
        %5520 = vmatmul.mubr.bf16.gmra.mrb[0].mxu0 %v5379
        %v5521 = vpop.f32.mrb[0].mxu0
        %v5522 = vadd.f32 0.0, %v5521
        %v5523 = vpop.f32.mrb[0].mxu0
        %v5524 = vpop.f32.mrb[0].mxu0
        %v5525 = vadd.f32 0.0, %v5524
        %v5526 = vpop.f32.mrb[0].mxu0
        %5527 = vmatprep.mubr.bf16.mxu0 0
        %5528 = vmatmul.mubr.bf16.gmra.mrb[0].mxu0 %v5380
        %v5529 = vpop.f32.mrb[0].mxu0
        %v5530 = vadd.f32 0.0, %v5529
        %v5531 = vpop.f32.mrb[0].mxu0
        %v5532 = vpop.f32.mrb[0].mxu0
        %v5533 = vadd.f32 0.0, %v5532
        %v5534 = vpop.f32.mrb[0].mxu0
        %5535 = vmatprep.mubr.bf16.mxu0 0
        %5536 = vmatmul.mubr.bf16.gmra.mrb[0].mxu0 %v5381
        %v5537 = vpop.f32.mrb[0].mxu0
        %v5538 = vadd.f32 0.0, %v5537
        %v5539 = vpop.f32.mrb[0].mxu0
        %v5540 = vpop.f32.mrb[0].mxu0
        %v5541 = vadd.f32 0.0, %v5540
        %v5542 = vpop.f32.mrb[0].mxu0
        %5543 = vdwg.mxu0
        %v5544 = vadd.f32 %v5296, %v5482
        %v5545 = vadd.f32 %v5299, %v5485
        %v5546 = vadd.f32 %v5304, %v5490
        %v5547 = vadd.f32 %v5307, %v5493
        %v5548 = vadd.f32 %v5312, %v5498
        %v5549 = vadd.f32 %v5315, %v5501
        %v5550 = vadd.f32 %v5320, %v5506
        %v5551 = vadd.f32 %v5323, %v5509
        %v5552 = vadd.f32 %v5328, %v5514
        %v5553 = vadd.f32 %v5331, %v5517
        %v5554 = vadd.f32 %v5336, %v5522
        %v5555 = vadd.f32 %v5339, %v5525
        %v5556 = vadd.f32 %v5344, %v5530
        %v5557 = vadd.f32 %v5347, %v5533
        %v5558 = vadd.f32 %v5352, %v5538
        %v5559 = vadd.f32 %v5355, %v5541
        %v5560 = vld [vmem:[#allocation3 + $0x8] sm:$0xff]
        %v5561 = vld [vmem:[#allocation3 + $0x10] sm:$0xff]
        %v5562 = vld [vmem:[#allocation3 + $0x18] sm:$0xff]
        %v5563 = vld [vmem:[#allocation3 + $0x20] sm:$0xff]
        %v5564 = vld [vmem:[#allocation3 + $0x28] sm:$0xff]
        %v5565 = vld [vmem:[#allocation3 + $0x30] sm:$0xff]
        %v5566 = vld [vmem:[#allocation3 + $0x38] sm:$0xff]
        %v5567 = vld [vmem:[#allocation3 + $0x40] sm:$0xff]
        %v5568 = vld [vmem:[#allocation3 + $0x48] sm:$0xff]
        %v5569 = vld [vmem:[#allocation3 + $0x50] sm:$0xff]
        %v5570 = vld [vmem:[#allocation3 + $0x58] sm:$0xff]
        %v5571 = vld [vmem:[#allocation3 + $0x60] sm:$0xff]
        %v5572 = vld [vmem:[#allocation3 + $0x68] sm:$0xff]
        %v5573 = vld [vmem:[#allocation3 + $0x70] sm:$0xff]
        %v5574 = vld [vmem:[#allocation3 + $0x78] sm:$0xff]
        %v5575 = vld [vmem:[#allocation3 + $0x80] sm:$0xff]
        %v5576 = vpack.c.bf16 %v5561, %v5560
        %v5577 = vpack.c.bf16 %v5563, %v5562
        %v5578 = vpack.c.bf16 %v5565, %v5564
        %v5579 = vpack.c.bf16 %v5567, %v5566
        %v5580 = vpack.c.bf16 %v5569, %v5568
        %v5581 = vpack.c.bf16 %v5571, %v5570
        %v5582 = vpack.c.bf16 %v5573, %v5572
        %v5583 = vpack.c.bf16 %v5575, %v5574
        %s5584 = scalar_lea.vmem [#allocation10], 192
        %v5585 = vld [vmem:[%s5584] sm:$0xf]
        %v5586 = vld [vmem:[%s5584 + $0x4] sm:$0xf]
        %v5587 = vld [vmem:[%s5584 + $0x8] sm:$0xf]
        %v5588 = vld [vmem:[%s5584 + $0xc] sm:$0xf]
        %v5589 = vld [vmem:[%s5584 + $0x10] sm:$0xf]
        %v5590 = vld [vmem:[%s5584 + $0x14] sm:$0xf]
        %v5591 = vld [vmem:[%s5584 + $0x18] sm:$0xf]
        %v5592 = vld [vmem:[%s5584 + $0x1c] sm:$0xf]
        %v5593 = vld [vmem:[%s5584 + $0x20] sm:$0xf]
        %v5594 = vld [vmem:[%s5584 + $0x24] sm:$0xf]
        %v5595 = vld [vmem:[%s5584 + $0x28] sm:$0xf]
        %v5596 = vld [vmem:[%s5584 + $0x2c] sm:$0xf]
        %v5597 = vld [vmem:[%s5584 + $0x30] sm:$0xf]
        %v5598 = vld [vmem:[%s5584 + $0x34] sm:$0xf]
        %v5599 = vld [vmem:[%s5584 + $0x38] sm:$0xf]
        %v5600 = vld [vmem:[%s5584 + $0x3c] sm:$0xf]
        %v5617 = vunpack.c.l.b16 %v5585
        %v5618 = vunpack.c.l.b16 %v5586
        %v5619 = vunpack.c.l.b16 %v5587
        %v5620 = vunpack.c.l.b16 %v5588
        %v5621 = vunpack.c.l.b16 %v5589
        %v5622 = vunpack.c.l.b16 %v5590
        %v5623 = vunpack.c.l.b16 %v5591
        %v5624 = vunpack.c.l.b16 %v5592
        %v5625 = vunpack.c.l.b16 %v5593
        %v5626 = vunpack.c.l.b16 %v5594
        %v5627 = vunpack.c.l.b16 %v5595
        %v5628 = vunpack.c.l.b16 %v5596
        %v5629 = vunpack.c.l.b16 %v5597
        %v5630 = vunpack.c.l.b16 %v5598
        %v5631 = vunpack.c.l.b16 %v5599
        %v5632 = vunpack.c.l.b16 %v5600
        %v5633 = vpack.c.b16 %v5618, %v5617
        %v5634 = vpack.c.b16 %v5620, %v5619
        %v5635 = vpack.c.b16 %v5622, %v5621
        %v5636 = vpack.c.b16 %v5624, %v5623
        %v5637 = vpack.c.b16 %v5626, %v5625
        %v5638 = vpack.c.b16 %v5628, %v5627
        %v5639 = vpack.c.b16 %v5630, %v5629
        %v5640 = vpack.c.b16 %v5632, %v5631
        %5649 = vmatprep.subr.bf16.mxu0 0
        %5650 = vmatpush1.bf16.msra.mxu0 %v5633
        %5651 = vmatprep.subr.bf16.mxu0 0
        %5652 = vmatpush1.bf16.msra.mxu0 %v5634
        %5653 = vmatprep.subr.bf16.mxu0 0
        %5654 = vmatpush1.bf16.msra.mxu0 %v5635
        %5655 = vmatprep.subr.bf16.mxu0 0
        %5656 = vmatpush1.bf16.msra.mxu0 %v5636
        %5657 = vmatprep.subr.bf16.mxu0 0
        %5658 = vmatpush1.bf16.msra.mxu0 %v5637
        %5659 = vmatprep.subr.bf16.mxu0 0
        %5660 = vmatpush1.bf16.msra.mxu0 %v5638
        %5661 = vmatprep.subr.bf16.mxu0 0
        %5662 = vmatpush1.bf16.msra.mxu0 %v5639
        %5663 = vmatprep.subr.bf16.mxu0 0
        %5664 = vmatpush1.bf16.msra.mxu0 %v5640
        %5665 = vmatprep.subr.bf16.mxu0 0
        %5666 = vmatpush1.bf16.msra.mxu0 0
        %5667 = vmatprep.subr.bf16.mxu0 0
        %5668 = vmatpush1.bf16.msra.mxu0 0
        %5669 = vmatprep.subr.bf16.mxu0 0
        %5670 = vmatpush1.bf16.msra.mxu0 0
        %5671 = vmatprep.subr.bf16.mxu0 0
        %5672 = vmatpush1.bf16.msra.mxu0 0
        %5673 = vmatprep.subr.bf16.mxu0 0
        %5674 = vmatpush1.bf16.msra.mxu0 0
        %5675 = vmatprep.subr.bf16.mxu0 0
        %5676 = vmatpush1.bf16.msra.mxu0 0
        %5677 = vmatprep.subr.bf16.mxu0 0
        %5678 = vmatpush1.bf16.msra.mxu0 0
        %5679 = vmatprep.subr.bf16.mxu0 0
        %5680 = vmatpush1.bf16.msra.mxu0 0
        %5681 = vmatprep.mubr.bf16.mxu0 0
        %5682 = vmatmul.mubr.bf16.gmra.mrb[0].mxu0 %v5576
        %v5683 = vpop.f32.mrb[0].mxu0
        %v5684 = vadd.f32 0.0, %v5683
        %v5685 = vpop.f32.mrb[0].mxu0
        %v5686 = vpop.f32.mrb[0].mxu0
        %v5687 = vadd.f32 0.0, %v5686
        %v5688 = vpop.f32.mrb[0].mxu0
        %5689 = vmatprep.mubr.bf16.mxu0 0
        %5690 = vmatmul.mubr.bf16.gmra.mrb[0].mxu0 %v5577
        %v5691 = vpop.f32.mrb[0].mxu0
        %v5692 = vadd.f32 0.0, %v5691
        %v5693 = vpop.f32.mrb[0].mxu0
        %v5694 = vpop.f32.mrb[0].mxu0
        %v5695 = vadd.f32 0.0, %v5694
        %v5696 = vpop.f32.mrb[0].mxu0
        %5697 = vmatprep.mubr.bf16.mxu0 0
        %5698 = vmatmul.mubr.bf16.gmra.mrb[0].mxu0 %v5578
        %v5699 = vpop.f32.mrb[0].mxu0
        %v5700 = vadd.f32 0.0, %v5699
        %v5701 = vpop.f32.mrb[0].mxu0
        %v5702 = vpop.f32.mrb[0].mxu0
        %v5703 = vadd.f32 0.0, %v5702
        %v5704 = vpop.f32.mrb[0].mxu0
        %5705 = vmatprep.mubr.bf16.mxu0 0
        %5706 = vmatmul.mubr.bf16.gmra.mrb[0].mxu0 %v5579
        %v5707 = vpop.f32.mrb[0].mxu0
        %v5708 = vadd.f32 0.0, %v5707
        %v5709 = vpop.f32.mrb[0].mxu0
        %v5710 = vpop.f32.mrb[0].mxu0
        %v5711 = vadd.f32 0.0, %v5710
        %v5712 = vpop.f32.mrb[0].mxu0
        %5713 = vmatprep.mubr.bf16.mxu0 0
        %5714 = vmatmul.mubr.bf16.gmra.mrb[0].mxu0 %v5580
        %v5715 = vpop.f32.mrb[0].mxu0
        %v5716 = vadd.f32 0.0, %v5715
        %v5717 = vpop.f32.mrb[0].mxu0
        %v5718 = vpop.f32.mrb[0].mxu0
        %v5719 = vadd.f32 0.0, %v5718
        %v5720 = vpop.f32.mrb[0].mxu0
        %5721 = vmatprep.mubr.bf16.mxu0 0
        %5722 = vmatmul.mubr.bf16.gmra.mrb[0].mxu0 %v5581
        %v5723 = vpop.f32.mrb[0].mxu0
        %v5724 = vadd.f32 0.0, %v5723
        %v5725 = vpop.f32.mrb[0].mxu0
        %v5726 = vpop.f32.mrb[0].mxu0
        %v5727 = vadd.f32 0.0, %v5726
        %v5728 = vpop.f32.mrb[0].mxu0
        %5729 = vmatprep.mubr.bf16.mxu0 0
        %5730 = vmatmul.mubr.bf16.gmra.mrb[0].mxu0 %v5582
        %v5731 = vpop.f32.mrb[0].mxu0
        %v5732 = vadd.f32 0.0, %v5731
        %v5733 = vpop.f32.mrb[0].mxu0
        %v5734 = vpop.f32.mrb[0].mxu0
        %v5735 = vadd.f32 0.0, %v5734
        %v5736 = vpop.f32.mrb[0].mxu0
        %5737 = vmatprep.mubr.bf16.mxu0 0
        %5738 = vmatmul.mubr.bf16.gmra.mrb[0].mxu0 %v5583
        %v5739 = vpop.f32.mrb[0].mxu0
        %v5740 = vadd.f32 0.0, %v5739
        %v5741 = vpop.f32.mrb[0].mxu0
        %v5742 = vpop.f32.mrb[0].mxu0
        %v5743 = vadd.f32 0.0, %v5742
        %v5744 = vpop.f32.mrb[0].mxu0
        %5745 = vdwg.mxu0
        %v5746 = vadd.f32 %v5544, %v5684
        %v5747 = vadd.f32 %v5545, %v5687
        %v5748 = vadd.f32 %v5546, %v5692
        %v5749 = vadd.f32 %v5547, %v5695
        %v5750 = vadd.f32 %v5548, %v5700
        %v5751 = vadd.f32 %v5549, %v5703
        %v5752 = vadd.f32 %v5550, %v5708
        %v5753 = vadd.f32 %v5551, %v5711
        %v5754 = vadd.f32 %v5552, %v5716
        %v5755 = vadd.f32 %v5553, %v5719
        %v5756 = vadd.f32 %v5554, %v5724
        %v5757 = vadd.f32 %v5555, %v5727
        %v5758 = vadd.f32 %v5556, %v5732
        %v5759 = vadd.f32 %v5557, %v5735
        %v5760 = vadd.f32 %v5558, %v5740
        %v5761 = vadd.f32 %v5559, %v5743
        %v5762 = vld [vmem:[#allocation3 + $0x9] sm:$0xff]
        %v5763 = vld [vmem:[#allocation3 + $0x11] sm:$0xff]
        %v5764 = vld [vmem:[#allocation3 + $0x19] sm:$0xff]
        %v5765 = vld [vmem:[#allocation3 + $0x21] sm:$0xff]
        %v5766 = vld [vmem:[#allocation3 + $0x29] sm:$0xff]
        %v5767 = vld [vmem:[#allocation3 + $0x31] sm:$0xff]
        %v5768 = vld [vmem:[#allocation3 + $0x39] sm:$0xff]
        %v5769 = vld [vmem:[#allocation3 + $0x41] sm:$0xff]
        %v5770 = vld [vmem:[#allocation3 + $0x49] sm:$0xff]
        %v5771 = vld [vmem:[#allocation3 + $0x51] sm:$0xff]
        %v5772 = vld [vmem:[#allocation3 + $0x59] sm:$0xff]
        %v5773 = vld [vmem:[#allocation3 + $0x61] sm:$0xff]
        %v5774 = vld [vmem:[#allocation3 + $0x69] sm:$0xff]
        %v5775 = vld [vmem:[#allocation3 + $0x71] sm:$0xff]
        %v5776 = vld [vmem:[#allocation3 + $0x79] sm:$0xff]
        %v5777 = vld [vmem:[#allocation3 + $0x81] sm:$0xff]
        %v5778 = vpack.c.bf16 %v5763, %v5762
        %v5779 = vpack.c.bf16 %v5765, %v5764
        %v5780 = vpack.c.bf16 %v5767, %v5766
        %v5781 = vpack.c.bf16 %v5769, %v5768
        %v5782 = vpack.c.bf16 %v5771, %v5770
        %v5783 = vpack.c.bf16 %v5773, %v5772
        %v5784 = vpack.c.bf16 %v5775, %v5774
        %v5785 = vpack.c.bf16 %v5777, %v5776
        %s5786 = scalar_lea.vmem [#allocation10], 256
        %v5787 = vld [vmem:[%s5786] sm:$0xf]
        %v5788 = vld [vmem:[%s5786 + $0x4] sm:$0xf]
        %v5789 = vld [vmem:[%s5786 + $0x8] sm:$0xf]
        %v5790 = vld [vmem:[%s5786 + $0xc] sm:$0xf]
        %v5791 = vld [vmem:[%s5786 + $0x10] sm:$0xf]
        %v5792 = vld [vmem:[%s5786 + $0x14] sm:$0xf]
        %v5793 = vld [vmem:[%s5786 + $0x18] sm:$0xf]
        %v5794 = vld [vmem:[%s5786 + $0x1c] sm:$0xf]
        %v5795 = vld [vmem:[%s5786 + $0x20] sm:$0xf]
        %v5796 = vld [vmem:[%s5786 + $0x24] sm:$0xf]
        %v5797 = vld [vmem:[%s5786 + $0x28] sm:$0xf]
        %v5798 = vld [vmem:[%s5786 + $0x2c] sm:$0xf]
        %v5799 = vld [vmem:[%s5786 + $0x30] sm:$0xf]
        %v5800 = vld [vmem:[%s5786 + $0x34] sm:$0xf]
        %v5801 = vld [vmem:[%s5786 + $0x38] sm:$0xf]
        %v5802 = vld [vmem:[%s5786 + $0x3c] sm:$0xf]
        %v5819 = vunpack.c.l.b16 %v5787
        %v5820 = vunpack.c.l.b16 %v5788
        %v5821 = vunpack.c.l.b16 %v5789
        %v5822 = vunpack.c.l.b16 %v5790
        %v5823 = vunpack.c.l.b16 %v5791
        %v5824 = vunpack.c.l.b16 %v5792
        %v5825 = vunpack.c.l.b16 %v5793
        %v5826 = vunpack.c.l.b16 %v5794
        %v5827 = vunpack.c.l.b16 %v5795
        %v5828 = vunpack.c.l.b16 %v5796
        %v5829 = vunpack.c.l.b16 %v5797
        %v5830 = vunpack.c.l.b16 %v5798
        %v5831 = vunpack.c.l.b16 %v5799
        %v5832 = vunpack.c.l.b16 %v5800
        %v5833 = vunpack.c.l.b16 %v5801
        %v5834 = vunpack.c.l.b16 %v5802
        %v5835 = vpack.c.b16 %v5820, %v5819
        %v5836 = vpack.c.b16 %v5822, %v5821
        %v5837 = vpack.c.b16 %v5824, %v5823
        %v5838 = vpack.c.b16 %v5826, %v5825
        %v5839 = vpack.c.b16 %v5828, %v5827
        %v5840 = vpack.c.b16 %v5830, %v5829
        %v5841 = vpack.c.b16 %v5832, %v5831
        %v5842 = vpack.c.b16 %v5834, %v5833
        %5851 = vmatprep.subr.bf16.mxu0 0
        %5852 = vmatpush1.bf16.msra.mxu0 %v5835
        %5853 = vmatprep.subr.bf16.mxu0 0
        %5854 = vmatpush1.bf16.msra.mxu0 %v5836
        %5855 = vmatprep.subr.bf16.mxu0 0
        %5856 = vmatpush1.bf16.msra.mxu0 %v5837
        %5857 = vmatprep.subr.bf16.mxu0 0
        %5858 = vmatpush1.bf16.msra.mxu0 %v5838
        %5859 = vmatprep.subr.bf16.mxu0 0
        %5860 = vmatpush1.bf16.msra.mxu0 %v5839
        %5861 = vmatprep.subr.bf16.mxu0 0
        %5862 = vmatpush1.bf16.msra.mxu0 %v5840
        %5863 = vmatprep.subr.bf16.mxu0 0
        %5864 = vmatpush1.bf16.msra.mxu0 %v5841
        %5865 = vmatprep.subr.bf16.mxu0 0
        %5866 = vmatpush1.bf16.msra.mxu0 %v5842
        %5867 = vmatprep.subr.bf16.mxu0 0
        %5868 = vmatpush1.bf16.msra.mxu0 0
        %5869 = vmatprep.subr.bf16.mxu0 0
        %5870 = vmatpush1.bf16.msra.mxu0 0
        %5871 = vmatprep.subr.bf16.mxu0 0
        %5872 = vmatpush1.bf16.msra.mxu0 0
        %5873 = vmatprep.subr.bf16.mxu0 0
        %5874 = vmatpush1.bf16.msra.mxu0 0
        %5875 = vmatprep.subr.bf16.mxu0 0
        %5876 = vmatpush1.bf16.msra.mxu0 0
        %5877 = vmatprep.subr.bf16.mxu0 0
        %5878 = vmatpush1.bf16.msra.mxu0 0
        %5879 = vmatprep.subr.bf16.mxu0 0
        %5880 = vmatpush1.bf16.msra.mxu0 0
        %5881 = vmatprep.subr.bf16.mxu0 0
        %5882 = vmatpush1.bf16.msra.mxu0 0
        %5883 = vmatprep.mubr.bf16.mxu0 0
        %5884 = vmatmul.mubr.bf16.gmra.mrb[0].mxu0 %v5778
        %v5885 = vpop.f32.mrb[0].mxu0
        %v5886 = vadd.f32 0.0, %v5885
        %v5887 = vpop.f32.mrb[0].mxu0
        %v5888 = vpop.f32.mrb[0].mxu0
        %v5889 = vadd.f32 0.0, %v5888
        %v5890 = vpop.f32.mrb[0].mxu0
        %5891 = vmatprep.mubr.bf16.mxu0 0
        %5892 = vmatmul.mubr.bf16.gmra.mrb[0].mxu0 %v5779
        %v5893 = vpop.f32.mrb[0].mxu0
        %v5894 = vadd.f32 0.0, %v5893
        %v5895 = vpop.f32.mrb[0].mxu0
        %v5896 = vpop.f32.mrb[0].mxu0
        %v5897 = vadd.f32 0.0, %v5896
        %v5898 = vpop.f32.mrb[0].mxu0
        %5899 = vmatprep.mubr.bf16.mxu0 0
        %5900 = vmatmul.mubr.bf16.gmra.mrb[0].mxu0 %v5780
        %v5901 = vpop.f32.mrb[0].mxu0
        %v5902 = vadd.f32 0.0, %v5901
        %v5903 = vpop.f32.mrb[0].mxu0
        %v5904 = vpop.f32.mrb[0].mxu0
        %v5905 = vadd.f32 0.0, %v5904
        %v5906 = vpop.f32.mrb[0].mxu0
        %5907 = vmatprep.mubr.bf16.mxu0 0
        %5908 = vmatmul.mubr.bf16.gmra.mrb[0].mxu0 %v5781
        %v5909 = vpop.f32.mrb[0].mxu0
        %v5910 = vadd.f32 0.0, %v5909
        %v5911 = vpop.f32.mrb[0].mxu0
        %v5912 = vpop.f32.mrb[0].mxu0
        %v5913 = vadd.f32 0.0, %v5912
        %v5914 = vpop.f32.mrb[0].mxu0
        %5915 = vmatprep.mubr.bf16.mxu0 0
        %5916 = vmatmul.mubr.bf16.gmra.mrb[0].mxu0 %v5782
        %v5917 = vpop.f32.mrb[0].mxu0
        %v5918 = vadd.f32 0.0, %v5917
        %v5919 = vpop.f32.mrb[0].mxu0
        %v5920 = vpop.f32.mrb[0].mxu0
        %v5921 = vadd.f32 0.0, %v5920
        %v5922 = vpop.f32.mrb[0].mxu0
        %5923 = vmatprep.mubr.bf16.mxu0 0
        %5924 = vmatmul.mubr.bf16.gmra.mrb[0].mxu0 %v5783
        %v5925 = vpop.f32.mrb[0].mxu0
        %v5926 = vadd.f32 0.0, %v5925
        %v5927 = vpop.f32.mrb[0].mxu0
        %v5928 = vpop.f32.mrb[0].mxu0
        %v5929 = vadd.f32 0.0, %v5928
        %v5930 = vpop.f32.mrb[0].mxu0
        %5931 = vmatprep.mubr.bf16.mxu0 0
        %5932 = vmatmul.mubr.bf16.gmra.mrb[0].mxu0 %v5784
        %v5933 = vpop.f32.mrb[0].mxu0
        %v5934 = vadd.f32 0.0, %v5933
        %v5935 = vpop.f32.mrb[0].mxu0
        %v5936 = vpop.f32.mrb[0].mxu0
        %v5937 = vadd.f32 0.0, %v5936
        %v5938 = vpop.f32.mrb[0].mxu0
        %5939 = vmatprep.mubr.bf16.mxu0 0
        %5940 = vmatmul.mubr.bf16.gmra.mrb[0].mxu0 %v5785
        %v5941 = vpop.f32.mrb[0].mxu0
        %v5942 = vadd.f32 0.0, %v5941
        %v5943 = vpop.f32.mrb[0].mxu0
        %v5944 = vpop.f32.mrb[0].mxu0
        %v5945 = vadd.f32 0.0, %v5944
        %v5946 = vpop.f32.mrb[0].mxu0
        %5947 = vdwg.mxu0
        %v5948 = vadd.f32 %v5746, %v5886
        %v5949 = vadd.f32 %v5747, %v5889
        %v5950 = vadd.f32 %v5748, %v5894
        %v5951 = vadd.f32 %v5749, %v5897
        %v5952 = vadd.f32 %v5750, %v5902
        %v5953 = vadd.f32 %v5751, %v5905
        %v5954 = vadd.f32 %v5752, %v5910
        %v5955 = vadd.f32 %v5753, %v5913
        %v5956 = vadd.f32 %v5754, %v5918
        %v5957 = vadd.f32 %v5755, %v5921
        %v5958 = vadd.f32 %v5756, %v5926
        %v5959 = vadd.f32 %v5757, %v5929
        %v5960 = vadd.f32 %v5758, %v5934
        %v5961 = vadd.f32 %v5759, %v5937
        %v5962 = vadd.f32 %v5760, %v5942
        %v5963 = vadd.f32 %v5761, %v5945
        %v5964 = vld [vmem:[#allocation3 + $0xa] sm:$0xff]
        %v5965 = vld [vmem:[#allocation3 + $0x12] sm:$0xff]
        %v5966 = vld [vmem:[#allocation3 + $0x1a] sm:$0xff]
        %v5967 = vld [vmem:[#allocation3 + $0x22] sm:$0xff]
        %v5968 = vld [vmem:[#allocation3 + $0x2a] sm:$0xff]
        %v5969 = vld [vmem:[#allocation3 + $0x32] sm:$0xff]
        %v5970 = vld [vmem:[#allocation3 + $0x3a] sm:$0xff]
        %v5971 = vld [vmem:[#allocation3 + $0x42] sm:$0xff]
        %v5972 = vld [vmem:[#allocation3 + $0x4a] sm:$0xff]
        %v5973 = vld [vmem:[#allocation3 + $0x52] sm:$0xff]
        %v5974 = vld [vmem:[#allocation3 + $0x5a] sm:$0xff]
        %v5975 = vld [vmem:[#allocation3 + $0x62] sm:$0xff]
        %v5976 = vld [vmem:[#allocation3 + $0x6a] sm:$0xff]
        %v5977 = vld [vmem:[#allocation3 + $0x72] sm:$0xff]
        %v5978 = vld [vmem:[#allocation3 + $0x7a] sm:$0xff]
        %v5979 = vld [vmem:[#allocation3 + $0x82] sm:$0xff]
        %v5980 = vpack.c.bf16 %v5965, %v5964
        %v5981 = vpack.c.bf16 %v5967, %v5966
        %v5982 = vpack.c.bf16 %v5969, %v5968
        %v5983 = vpack.c.bf16 %v5971, %v5970
        %v5984 = vpack.c.bf16 %v5973, %v5972
        %v5985 = vpack.c.bf16 %v5975, %v5974
        %v5986 = vpack.c.bf16 %v5977, %v5976
        %v5987 = vpack.c.bf16 %v5979, %v5978
        %s5988 = scalar_lea.vmem [#allocation10], 320
        %v5989 = vld [vmem:[%s5988] sm:$0xf]
        %v5990 = vld [vmem:[%s5988 + $0x4] sm:$0xf]
        %v5991 = vld [vmem:[%s5988 + $0x8] sm:$0xf]
        %v5992 = vld [vmem:[%s5988 + $0xc] sm:$0xf]
        %v5993 = vld [vmem:[%s5988 + $0x10] sm:$0xf]
        %v5994 = vld [vmem:[%s5988 + $0x14] sm:$0xf]
        %v5995 = vld [vmem:[%s5988 + $0x18] sm:$0xf]
        %v5996 = vld [vmem:[%s5988 + $0x1c] sm:$0xf]
        %v5997 = vld [vmem:[%s5988 + $0x20] sm:$0xf]
        %v5998 = vld [vmem:[%s5988 + $0x24] sm:$0xf]
        %v5999 = vld [vmem:[%s5988 + $0x28] sm:$0xf]
        %v6000 = vld [vmem:[%s5988 + $0x2c] sm:$0xf]
        %v6001 = vld [vmem:[%s5988 + $0x30] sm:$0xf]
        %v6002 = vld [vmem:[%s5988 + $0x34] sm:$0xf]
        %v6003 = vld [vmem:[%s5988 + $0x38] sm:$0xf]
        %v6004 = vld [vmem:[%s5988 + $0x3c] sm:$0xf]
        %v6021 = vunpack.c.l.b16 %v5989
        %v6022 = vunpack.c.l.b16 %v5990
        %v6023 = vunpack.c.l.b16 %v5991
        %v6024 = vunpack.c.l.b16 %v5992
        %v6025 = vunpack.c.l.b16 %v5993
        %v6026 = vunpack.c.l.b16 %v5994
        %v6027 = vunpack.c.l.b16 %v5995
        %v6028 = vunpack.c.l.b16 %v5996
        %v6029 = vunpack.c.l.b16 %v5997
        %v6030 = vunpack.c.l.b16 %v5998
        %v6031 = vunpack.c.l.b16 %v5999
        %v6032 = vunpack.c.l.b16 %v6000
        %v6033 = vunpack.c.l.b16 %v6001
        %v6034 = vunpack.c.l.b16 %v6002
        %v6035 = vunpack.c.l.b16 %v6003
        %v6036 = vunpack.c.l.b16 %v6004
        %v6037 = vpack.c.b16 %v6022, %v6021
        %v6038 = vpack.c.b16 %v6024, %v6023
        %v6039 = vpack.c.b16 %v6026, %v6025
        %v6040 = vpack.c.b16 %v6028, %v6027
        %v6041 = vpack.c.b16 %v6030, %v6029
        %v6042 = vpack.c.b16 %v6032, %v6031
        %v6043 = vpack.c.b16 %v6034, %v6033
        %v6044 = vpack.c.b16 %v6036, %v6035
        %6053 = vmatprep.subr.bf16.mxu0 0
        %6054 = vmatpush1.bf16.msra.mxu0 %v6037
        %6055 = vmatprep.subr.bf16.mxu0 0
        %6056 = vmatpush1.bf16.msra.mxu0 %v6038
        %6057 = vmatprep.subr.bf16.mxu0 0
        %6058 = vmatpush1.bf16.msra.mxu0 %v6039
        %6059 = vmatprep.subr.bf16.mxu0 0
        %6060 = vmatpush1.bf16.msra.mxu0 %v6040
        %6061 = vmatprep.subr.bf16.mxu0 0
        %6062 = vmatpush1.bf16.msra.mxu0 %v6041
        %6063 = vmatprep.subr.bf16.mxu0 0
        %6064 = vmatpush1.bf16.msra.mxu0 %v6042
        %6065 = vmatprep.subr.bf16.mxu0 0
        %6066 = vmatpush1.bf16.msra.mxu0 %v6043
        %6067 = vmatprep.subr.bf16.mxu0 0
        %6068 = vmatpush1.bf16.msra.mxu0 %v6044
        %6069 = vmatprep.subr.bf16.mxu0 0
        %6070 = vmatpush1.bf16.msra.mxu0 0
        %6071 = vmatprep.subr.bf16.mxu0 0
        %6072 = vmatpush1.bf16.msra.mxu0 0
        %6073 = vmatprep.subr.bf16.mxu0 0
        %6074 = vmatpush1.bf16.msra.mxu0 0
        %6075 = vmatprep.subr.bf16.mxu0 0
        %6076 = vmatpush1.bf16.msra.mxu0 0
        %6077 = vmatprep.subr.bf16.mxu0 0
        %6078 = vmatpush1.bf16.msra.mxu0 0
        %6079 = vmatprep.subr.bf16.mxu0 0
        %6080 = vmatpush1.bf16.msra.mxu0 0
        %6081 = vmatprep.subr.bf16.mxu0 0
        %6082 = vmatpush1.bf16.msra.mxu0 0
        %6083 = vmatprep.subr.bf16.mxu0 0
        %6084 = vmatpush1.bf16.msra.mxu0 0
        %6085 = vmatprep.mubr.bf16.mxu0 0
        %6086 = vmatmul.mubr.bf16.gmra.mrb[0].mxu0 %v5980
        %v6087 = vpop.f32.mrb[0].mxu0
        %v6088 = vadd.f32 0.0, %v6087
        %v6089 = vpop.f32.mrb[0].mxu0
        %v6090 = vpop.f32.mrb[0].mxu0
        %v6091 = vadd.f32 0.0, %v6090
        %v6092 = vpop.f32.mrb[0].mxu0
        %6093 = vmatprep.mubr.bf16.mxu0 0
        %6094 = vmatmul.mubr.bf16.gmra.mrb[0].mxu0 %v5981
        %v6095 = vpop.f32.mrb[0].mxu0
        %v6096 = vadd.f32 0.0, %v6095
        %v6097 = vpop.f32.mrb[0].mxu0
        %v6098 = vpop.f32.mrb[0].mxu0
        %v6099 = vadd.f32 0.0, %v6098
        %v6100 = vpop.f32.mrb[0].mxu0
        %6101 = vmatprep.mubr.bf16.mxu0 0
        %6102 = vmatmul.mubr.bf16.gmra.mrb[0].mxu0 %v5982
        %v6103 = vpop.f32.mrb[0].mxu0
        %v6104 = vadd.f32 0.0, %v6103
        %v6105 = vpop.f32.mrb[0].mxu0
        %v6106 = vpop.f32.mrb[0].mxu0
        %v6107 = vadd.f32 0.0, %v6106
        %v6108 = vpop.f32.mrb[0].mxu0
        %6109 = vmatprep.mubr.bf16.mxu0 0
        %6110 = vmatmul.mubr.bf16.gmra.mrb[0].mxu0 %v5983
        %v6111 = vpop.f32.mrb[0].mxu0
        %v6112 = vadd.f32 0.0, %v6111
        %v6113 = vpop.f32.mrb[0].mxu0
        %v6114 = vpop.f32.mrb[0].mxu0
        %v6115 = vadd.f32 0.0, %v6114
        %v6116 = vpop.f32.mrb[0].mxu0
        %6117 = vmatprep.mubr.bf16.mxu0 0
        %6118 = vmatmul.mubr.bf16.gmra.mrb[0].mxu0 %v5984
        %v6119 = vpop.f32.mrb[0].mxu0
        %v6120 = vadd.f32 0.0, %v6119
        %v6121 = vpop.f32.mrb[0].mxu0
        %v6122 = vpop.f32.mrb[0].mxu0
        %v6123 = vadd.f32 0.0, %v6122
        %v6124 = vpop.f32.mrb[0].mxu0
        %6125 = vmatprep.mubr.bf16.mxu0 0
        %6126 = vmatmul.mubr.bf16.gmra.mrb[0].mxu0 %v5985
        %v6127 = vpop.f32.mrb[0].mxu0
        %v6128 = vadd.f32 0.0, %v6127
        %v6129 = vpop.f32.mrb[0].mxu0
        %v6130 = vpop.f32.mrb[0].mxu0
        %v6131 = vadd.f32 0.0, %v6130
        %v6132 = vpop.f32.mrb[0].mxu0
        %6133 = vmatprep.mubr.bf16.mxu0 0
        %6134 = vmatmul.mubr.bf16.gmra.mrb[0].mxu0 %v5986
        %v6135 = vpop.f32.mrb[0].mxu0
        %v6136 = vadd.f32 0.0, %v6135
        %v6137 = vpop.f32.mrb[0].mxu0
        %v6138 = vpop.f32.mrb[0].mxu0
        %v6139 = vadd.f32 0.0, %v6138
        %v6140 = vpop.f32.mrb[0].mxu0
        %6141 = vmatprep.mubr.bf16.mxu0 0
        %6142 = vmatmul.mubr.bf16.gmra.mrb[0].mxu0 %v5987
        %v6143 = vpop.f32.mrb[0].mxu0
        %v6144 = vadd.f32 0.0, %v6143
        %v6145 = vpop.f32.mrb[0].mxu0
        %v6146 = vpop.f32.mrb[0].mxu0
        %v6147 = vadd.f32 0.0, %v6146
        %v6148 = vpop.f32.mrb[0].mxu0
        %6149 = vdwg.mxu0
        %v6150 = vadd.f32 %v5948, %v6088
        %v6151 = vadd.f32 %v5949, %v6091
        %v6152 = vadd.f32 %v5950, %v6096
        %v6153 = vadd.f32 %v5951, %v6099
        %v6154 = vadd.f32 %v5952, %v6104
        %v6155 = vadd.f32 %v5953, %v6107
        %v6156 = vadd.f32 %v5954, %v6112
        %v6157 = vadd.f32 %v5955, %v6115
        %v6158 = vadd.f32 %v5956, %v6120
        %v6159 = vadd.f32 %v5957, %v6123
        %v6160 = vadd.f32 %v5958, %v6128
        %v6161 = vadd.f32 %v5959, %v6131
        %v6162 = vadd.f32 %v5960, %v6136
        %v6163 = vadd.f32 %v5961, %v6139
        %v6164 = vadd.f32 %v5962, %v6144
        %v6165 = vadd.f32 %v5963, %v6147
        %v6166 = vld [vmem:[#allocation3 + $0x10] sm:$0xff]
        %v6167 = vld [vmem:[#allocation3 + $0x18] sm:$0xff]
        %v6168 = vld [vmem:[#allocation3 + $0x20] sm:$0xff]
        %v6169 = vld [vmem:[#allocation3 + $0x28] sm:$0xff]
        %v6170 = vld [vmem:[#allocation3 + $0x30] sm:$0xff]
        %v6171 = vld [vmem:[#allocation3 + $0x38] sm:$0xff]
        %v6172 = vld [vmem:[#allocation3 + $0x40] sm:$0xff]
        %v6173 = vld [vmem:[#allocation3 + $0x48] sm:$0xff]
        %v6174 = vld [vmem:[#allocation3 + $0x50] sm:$0xff]
        %v6175 = vld [vmem:[#allocation3 + $0x58] sm:$0xff]
        %v6176 = vld [vmem:[#allocation3 + $0x60] sm:$0xff]
        %v6177 = vld [vmem:[#allocation3 + $0x68] sm:$0xff]
        %v6178 = vld [vmem:[#allocation3 + $0x70] sm:$0xff]
        %v6179 = vld [vmem:[#allocation3 + $0x78] sm:$0xff]
        %v6180 = vld [vmem:[#allocation3 + $0x80] sm:$0xff]
        %v6181 = vld [vmem:[#allocation3 + $0x88] sm:$0xff]
        %v6182 = vpack.c.bf16 %v6167, %v6166
        %v6183 = vpack.c.bf16 %v6169, %v6168
        %v6184 = vpack.c.bf16 %v6171, %v6170
        %v6185 = vpack.c.bf16 %v6173, %v6172
        %v6186 = vpack.c.bf16 %v6175, %v6174
        %v6187 = vpack.c.bf16 %v6177, %v6176
        %v6188 = vpack.c.bf16 %v6179, %v6178
        %v6189 = vpack.c.bf16 %v6181, %v6180
        %s6190 = scalar_lea.vmem [#allocation10], 384
        %v6191 = vld [vmem:[%s6190] sm:$0xf]
        %v6192 = vld [vmem:[%s6190 + $0x4] sm:$0xf]
        %v6193 = vld [vmem:[%s6190 + $0x8] sm:$0xf]
        %v6194 = vld [vmem:[%s6190 + $0xc] sm:$0xf]
        %v6195 = vld [vmem:[%s6190 + $0x10] sm:$0xf]
        %v6196 = vld [vmem:[%s6190 + $0x14] sm:$0xf]
        %v6197 = vld [vmem:[%s6190 + $0x18] sm:$0xf]
        %v6198 = vld [vmem:[%s6190 + $0x1c] sm:$0xf]
        %v6199 = vld [vmem:[%s6190 + $0x20] sm:$0xf]
        %v6200 = vld [vmem:[%s6190 + $0x24] sm:$0xf]
        %v6201 = vld [vmem:[%s6190 + $0x28] sm:$0xf]
        %v6202 = vld [vmem:[%s6190 + $0x2c] sm:$0xf]
        %v6203 = vld [vmem:[%s6190 + $0x30] sm:$0xf]
        %v6204 = vld [vmem:[%s6190 + $0x34] sm:$0xf]
        %v6205 = vld [vmem:[%s6190 + $0x38] sm:$0xf]
        %v6206 = vld [vmem:[%s6190 + $0x3c] sm:$0xf]
        %v6223 = vunpack.c.l.b16 %v6191
        %v6224 = vunpack.c.l.b16 %v6192
        %v6225 = vunpack.c.l.b16 %v6193
        %v6226 = vunpack.c.l.b16 %v6194
        %v6227 = vunpack.c.l.b16 %v6195
        %v6228 = vunpack.c.l.b16 %v6196
        %v6229 = vunpack.c.l.b16 %v6197
        %v6230 = vunpack.c.l.b16 %v6198
        %v6231 = vunpack.c.l.b16 %v6199
        %v6232 = vunpack.c.l.b16 %v6200
        %v6233 = vunpack.c.l.b16 %v6201
        %v6234 = vunpack.c.l.b16 %v6202
        %v6235 = vunpack.c.l.b16 %v6203
        %v6236 = vunpack.c.l.b16 %v6204
        %v6237 = vunpack.c.l.b16 %v6205
        %v6238 = vunpack.c.l.b16 %v6206
        %v6239 = vpack.c.b16 %v6224, %v6223
        %v6240 = vpack.c.b16 %v6226, %v6225
        %v6241 = vpack.c.b16 %v6228, %v6227
        %v6242 = vpack.c.b16 %v6230, %v6229
        %v6243 = vpack.c.b16 %v6232, %v6231
        %v6244 = vpack.c.b16 %v6234, %v6233
        %v6245 = vpack.c.b16 %v6236, %v6235
        %v6246 = vpack.c.b16 %v6238, %v6237
        %6255 = vmatprep.subr.bf16.mxu0 0
        %6256 = vmatpush1.bf16.msra.mxu0 %v6239
        %6257 = vmatprep.subr.bf16.mxu0 0
        %6258 = vmatpush1.bf16.msra.mxu0 %v6240
        %6259 = vmatprep.subr.bf16.mxu0 0
        %6260 = vmatpush1.bf16.msra.mxu0 %v6241
        %6261 = vmatprep.subr.bf16.mxu0 0
        %6262 = vmatpush1.bf16.msra.mxu0 %v6242
        %6263 = vmatprep.subr.bf16.mxu0 0
        %6264 = vmatpush1.bf16.msra.mxu0 %v6243
        %6265 = vmatprep.subr.bf16.mxu0 0
        %6266 = vmatpush1.bf16.msra.mxu0 %v6244
        %6267 = vmatprep.subr.bf16.mxu0 0
        %6268 = vmatpush1.bf16.msra.mxu0 %v6245
        %6269 = vmatprep.subr.bf16.mxu0 0
        %6270 = vmatpush1.bf16.msra.mxu0 %v6246
        %6271 = vmatprep.subr.bf16.mxu0 0
        %6272 = vmatpush1.bf16.msra.mxu0 0
        %6273 = vmatprep.subr.bf16.mxu0 0
        %6274 = vmatpush1.bf16.msra.mxu0 0
        %6275 = vmatprep.subr.bf16.mxu0 0
        %6276 = vmatpush1.bf16.msra.mxu0 0
        %6277 = vmatprep.subr.bf16.mxu0 0
        %6278 = vmatpush1.bf16.msra.mxu0 0
        %6279 = vmatprep.subr.bf16.mxu0 0
        %6280 = vmatpush1.bf16.msra.mxu0 0
        %6281 = vmatprep.subr.bf16.mxu0 0
        %6282 = vmatpush1.bf16.msra.mxu0 0
        %6283 = vmatprep.subr.bf16.mxu0 0
        %6284 = vmatpush1.bf16.msra.mxu0 0
        %6285 = vmatprep.subr.bf16.mxu0 0
        %6286 = vmatpush1.bf16.msra.mxu0 0
        %6287 = vmatprep.mubr.bf16.mxu0 0
        %6288 = vmatmul.mubr.bf16.gmra.mrb[0].mxu0 %v6182
        %v6289 = vpop.f32.mrb[0].mxu0
        %v6290 = vadd.f32 0.0, %v6289
        %v6291 = vpop.f32.mrb[0].mxu0
        %v6292 = vpop.f32.mrb[0].mxu0
        %v6293 = vadd.f32 0.0, %v6292
        %v6294 = vpop.f32.mrb[0].mxu0
        %6295 = vmatprep.mubr.bf16.mxu0 0
        %6296 = vmatmul.mubr.bf16.gmra.mrb[0].mxu0 %v6183
        %v6297 = vpop.f32.mrb[0].mxu0
        %v6298 = vadd.f32 0.0, %v6297
        %v6299 = vpop.f32.mrb[0].mxu0
        %v6300 = vpop.f32.mrb[0].mxu0
        %v6301 = vadd.f32 0.0, %v6300
        %v6302 = vpop.f32.mrb[0].mxu0
        %6303 = vmatprep.mubr.bf16.mxu0 0
        %6304 = vmatmul.mubr.bf16.gmra.mrb[0].mxu0 %v6184
        %v6305 = vpop.f32.mrb[0].mxu0
        %v6306 = vadd.f32 0.0, %v6305
        %v6307 = vpop.f32.mrb[0].mxu0
        %v6308 = vpop.f32.mrb[0].mxu0
        %v6309 = vadd.f32 0.0, %v6308
        %v6310 = vpop.f32.mrb[0].mxu0
        %6311 = vmatprep.mubr.bf16.mxu0 0
        %6312 = vmatmul.mubr.bf16.gmra.mrb[0].mxu0 %v6185
        %v6313 = vpop.f32.mrb[0].mxu0
        %v6314 = vadd.f32 0.0, %v6313
        %v6315 = vpop.f32.mrb[0].mxu0
        %v6316 = vpop.f32.mrb[0].mxu0
        %v6317 = vadd.f32 0.0, %v6316
        %v6318 = vpop.f32.mrb[0].mxu0
        %6319 = vmatprep.mubr.bf16.mxu0 0
        %6320 = vmatmul.mubr.bf16.gmra.mrb[0].mxu0 %v6186
        %v6321 = vpop.f32.mrb[0].mxu0
        %v6322 = vadd.f32 0.0, %v6321
        %v6323 = vpop.f32.mrb[0].mxu0
        %v6324 = vpop.f32.mrb[0].mxu0
        %v6325 = vadd.f32 0.0, %v6324
        %v6326 = vpop.f32.mrb[0].mxu0
        %6327 = vmatprep.mubr.bf16.mxu0 0
        %6328 = vmatmul.mubr.bf16.gmra.mrb[0].mxu0 %v6187
        %v6329 = vpop.f32.mrb[0].mxu0
        %v6330 = vadd.f32 0.0, %v6329
        %v6331 = vpop.f32.mrb[0].mxu0
        %v6332 = vpop.f32.mrb[0].mxu0
        %v6333 = vadd.f32 0.0, %v6332
        %v6334 = vpop.f32.mrb[0].mxu0
        %6335 = vmatprep.mubr.bf16.mxu0 0
        %6336 = vmatmul.mubr.bf16.gmra.mrb[0].mxu0 %v6188
        %v6337 = vpop.f32.mrb[0].mxu0
        %v6338 = vadd.f32 0.0, %v6337
        %v6339 = vpop.f32.mrb[0].mxu0
        %v6340 = vpop.f32.mrb[0].mxu0
        %v6341 = vadd.f32 0.0, %v6340
        %v6342 = vpop.f32.mrb[0].mxu0
        %6343 = vmatprep.mubr.bf16.mxu0 0
        %6344 = vmatmul.mubr.bf16.gmra.mrb[0].mxu0 %v6189
        %v6345 = vpop.f32.mrb[0].mxu0
        %v6346 = vadd.f32 0.0, %v6345
        %v6347 = vpop.f32.mrb[0].mxu0
        %v6348 = vpop.f32.mrb[0].mxu0
        %v6349 = vadd.f32 0.0, %v6348
        %v6350 = vpop.f32.mrb[0].mxu0
        %6351 = vdwg.mxu0
        %v6352 = vadd.f32 %v6150, %v6290
        %v6353 = vadd.f32 %v6151, %v6293
        %v6354 = vadd.f32 %v6152, %v6298
        %v6355 = vadd.f32 %v6153, %v6301
        %v6356 = vadd.f32 %v6154, %v6306
        %v6357 = vadd.f32 %v6155, %v6309
        %v6358 = vadd.f32 %v6156, %v6314
        %v6359 = vadd.f32 %v6157, %v6317
        %v6360 = vadd.f32 %v6158, %v6322
        %v6361 = vadd.f32 %v6159, %v6325
        %v6362 = vadd.f32 %v6160, %v6330
        %v6363 = vadd.f32 %v6161, %v6333
        %v6364 = vadd.f32 %v6162, %v6338
        %v6365 = vadd.f32 %v6163, %v6341
        %v6366 = vadd.f32 %v6164, %v6346
        %v6367 = vadd.f32 %v6165, %v6349
        %v6368 = vld [vmem:[#allocation3 + $0x11] sm:$0xff]
        %v6369 = vld [vmem:[#allocation3 + $0x19] sm:$0xff]
        %v6370 = vld [vmem:[#allocation3 + $0x21] sm:$0xff]
        %v6371 = vld [vmem:[#allocation3 + $0x29] sm:$0xff]
        %v6372 = vld [vmem:[#allocation3 + $0x31] sm:$0xff]
        %v6373 = vld [vmem:[#allocation3 + $0x39] sm:$0xff]
        %v6374 = vld [vmem:[#allocation3 + $0x41] sm:$0xff]
        %v6375 = vld [vmem:[#allocation3 + $0x49] sm:$0xff]
        %v6376 = vld [vmem:[#allocation3 + $0x51] sm:$0xff]
        %v6377 = vld [vmem:[#allocation3 + $0x59] sm:$0xff]
        %v6378 = vld [vmem:[#allocation3 + $0x61] sm:$0xff]
        %v6379 = vld [vmem:[#allocation3 + $0x69] sm:$0xff]
        %v6380 = vld [vmem:[#allocation3 + $0x71] sm:$0xff]
        %v6381 = vld [vmem:[#allocation3 + $0x79] sm:$0xff]
        %v6382 = vld [vmem:[#allocation3 + $0x81] sm:$0xff]
        %v6383 = vld [vmem:[#allocation3 + $0x89] sm:$0xff]
        %v6384 = vpack.c.bf16 %v6369, %v6368
        %v6385 = vpack.c.bf16 %v6371, %v6370
        %v6386 = vpack.c.bf16 %v6373, %v6372
        %v6387 = vpack.c.bf16 %v6375, %v6374
        %v6388 = vpack.c.bf16 %v6377, %v6376
        %v6389 = vpack.c.bf16 %v6379, %v6378
        %v6390 = vpack.c.bf16 %v6381, %v6380
        %v6391 = vpack.c.bf16 %v6383, %v6382
        %s6392 = scalar_lea.vmem [#allocation10], 448
        %v6393 = vld [vmem:[%s6392] sm:$0xf]
        %v6394 = vld [vmem:[%s6392 + $0x4] sm:$0xf]
        %v6395 = vld [vmem:[%s6392 + $0x8] sm:$0xf]
        %v6396 = vld [vmem:[%s6392 + $0xc] sm:$0xf]
        %v6397 = vld [vmem:[%s6392 + $0x10] sm:$0xf]
        %v6398 = vld [vmem:[%s6392 + $0x14] sm:$0xf]
        %v6399 = vld [vmem:[%s6392 + $0x18] sm:$0xf]
        %v6400 = vld [vmem:[%s6392 + $0x1c] sm:$0xf]
        %v6401 = vld [vmem:[%s6392 + $0x20] sm:$0xf]
        %v6402 = vld [vmem:[%s6392 + $0x24] sm:$0xf]
        %v6403 = vld [vmem:[%s6392 + $0x28] sm:$0xf]
        %v6404 = vld [vmem:[%s6392 + $0x2c] sm:$0xf]
        %v6405 = vld [vmem:[%s6392 + $0x30] sm:$0xf]
        %v6406 = vld [vmem:[%s6392 + $0x34] sm:$0xf]
        %v6407 = vld [vmem:[%s6392 + $0x38] sm:$0xf]
        %v6408 = vld [vmem:[%s6392 + $0x3c] sm:$0xf]
        %v6425 = vunpack.c.l.b16 %v6393
        %v6426 = vunpack.c.l.b16 %v6394
        %v6427 = vunpack.c.l.b16 %v6395
        %v6428 = vunpack.c.l.b16 %v6396
        %v6429 = vunpack.c.l.b16 %v6397
        %v6430 = vunpack.c.l.b16 %v6398
        %v6431 = vunpack.c.l.b16 %v6399
        %v6432 = vunpack.c.l.b16 %v6400
        %v6433 = vunpack.c.l.b16 %v6401
        %v6434 = vunpack.c.l.b16 %v6402
        %v6435 = vunpack.c.l.b16 %v6403
        %v6436 = vunpack.c.l.b16 %v6404
        %v6437 = vunpack.c.l.b16 %v6405
        %v6438 = vunpack.c.l.b16 %v6406
        %v6439 = vunpack.c.l.b16 %v6407
        %v6440 = vunpack.c.l.b16 %v6408
        %v6441 = vpack.c.b16 %v6426, %v6425
        %v6442 = vpack.c.b16 %v6428, %v6427
        %v6443 = vpack.c.b16 %v6430, %v6429
        %v6444 = vpack.c.b16 %v6432, %v6431
        %v6445 = vpack.c.b16 %v6434, %v6433
        %v6446 = vpack.c.b16 %v6436, %v6435
        %v6447 = vpack.c.b16 %v6438, %v6437
        %v6448 = vpack.c.b16 %v6440, %v6439
        %6457 = vmatprep.subr.bf16.mxu0 0
        %6458 = vmatpush1.bf16.msra.mxu0 %v6441
        %6459 = vmatprep.subr.bf16.mxu0 0
        %6460 = vmatpush1.bf16.msra.mxu0 %v6442
        %6461 = vmatprep.subr.bf16.mxu0 0
        %6462 = vmatpush1.bf16.msra.mxu0 %v6443
        %6463 = vmatprep.subr.bf16.mxu0 0
        %6464 = vmatpush1.bf16.msra.mxu0 %v6444
        %6465 = vmatprep.subr.bf16.mxu0 0
        %6466 = vmatpush1.bf16.msra.mxu0 %v6445
        %6467 = vmatprep.subr.bf16.mxu0 0
        %6468 = vmatpush1.bf16.msra.mxu0 %v6446
        %6469 = vmatprep.subr.bf16.mxu0 0
        %6470 = vmatpush1.bf16.msra.mxu0 %v6447
        %6471 = vmatprep.subr.bf16.mxu0 0
        %6472 = vmatpush1.bf16.msra.mxu0 %v6448
        %6473 = vmatprep.subr.bf16.mxu0 0
        %6474 = vmatpush1.bf16.msra.mxu0 0
        %6475 = vmatprep.subr.bf16.mxu0 0
        %6476 = vmatpush1.bf16.msra.mxu0 0
        %6477 = vmatprep.subr.bf16.mxu0 0
        %6478 = vmatpush1.bf16.msra.mxu0 0
        %6479 = vmatprep.subr.bf16.mxu0 0
        %6480 = vmatpush1.bf16.msra.mxu0 0
        %6481 = vmatprep.subr.bf16.mxu0 0
        %6482 = vmatpush1.bf16.msra.mxu0 0
        %6483 = vmatprep.subr.bf16.mxu0 0
        %6484 = vmatpush1.bf16.msra.mxu0 0
        %6485 = vmatprep.subr.bf16.mxu0 0
        %6486 = vmatpush1.bf16.msra.mxu0 0
        %6487 = vmatprep.subr.bf16.mxu0 0
        %6488 = vmatpush1.bf16.msra.mxu0 0
        %6489 = vmatprep.mubr.bf16.mxu0 0
        %6490 = vmatmul.mubr.bf16.gmra.mrb[0].mxu0 %v6384
        %v6491 = vpop.f32.mrb[0].mxu0
        %v6492 = vadd.f32 0.0, %v6491
        %v6493 = vpop.f32.mrb[0].mxu0
        %v6494 = vpop.f32.mrb[0].mxu0
        %v6495 = vadd.f32 0.0, %v6494
        %v6496 = vpop.f32.mrb[0].mxu0
        %6497 = vmatprep.mubr.bf16.mxu0 0
        %6498 = vmatmul.mubr.bf16.gmra.mrb[0].mxu0 %v6385
        %v6499 = vpop.f32.mrb[0].mxu0
        %v6500 = vadd.f32 0.0, %v6499
        %v6501 = vpop.f32.mrb[0].mxu0
        %v6502 = vpop.f32.mrb[0].mxu0
        %v6503 = vadd.f32 0.0, %v6502
        %v6504 = vpop.f32.mrb[0].mxu0
        %6505 = vmatprep.mubr.bf16.mxu0 0
        %6506 = vmatmul.mubr.bf16.gmra.mrb[0].mxu0 %v6386
        %v6507 = vpop.f32.mrb[0].mxu0
        %v6508 = vadd.f32 0.0, %v6507
        %v6509 = vpop.f32.mrb[0].mxu0
        %v6510 = vpop.f32.mrb[0].mxu0
        %v6511 = vadd.f32 0.0, %v6510
        %v6512 = vpop.f32.mrb[0].mxu0
        %6513 = vmatprep.mubr.bf16.mxu0 0
        %6514 = vmatmul.mubr.bf16.gmra.mrb[0].mxu0 %v6387
        %v6515 = vpop.f32.mrb[0].mxu0
        %v6516 = vadd.f32 0.0, %v6515
        %v6517 = vpop.f32.mrb[0].mxu0
        %v6518 = vpop.f32.mrb[0].mxu0
        %v6519 = vadd.f32 0.0, %v6518
        %v6520 = vpop.f32.mrb[0].mxu0
        %6521 = vmatprep.mubr.bf16.mxu0 0
        %6522 = vmatmul.mubr.bf16.gmra.mrb[0].mxu0 %v6388
        %v6523 = vpop.f32.mrb[0].mxu0
        %v6524 = vadd.f32 0.0, %v6523
        %v6525 = vpop.f32.mrb[0].mxu0
        %v6526 = vpop.f32.mrb[0].mxu0
        %v6527 = vadd.f32 0.0, %v6526
        %v6528 = vpop.f32.mrb[0].mxu0
        %6529 = vmatprep.mubr.bf16.mxu0 0
        %6530 = vmatmul.mubr.bf16.gmra.mrb[0].mxu0 %v6389
        %v6531 = vpop.f32.mrb[0].mxu0
        %v6532 = vadd.f32 0.0, %v6531
        %v6533 = vpop.f32.mrb[0].mxu0
        %v6534 = vpop.f32.mrb[0].mxu0
        %v6535 = vadd.f32 0.0, %v6534
        %v6536 = vpop.f32.mrb[0].mxu0
        %6537 = vmatprep.mubr.bf16.mxu0 0
        %6538 = vmatmul.mubr.bf16.gmra.mrb[0].mxu0 %v6390
        %v6539 = vpop.f32.mrb[0].mxu0
        %v6540 = vadd.f32 0.0, %v6539
        %v6541 = vpop.f32.mrb[0].mxu0
        %v6542 = vpop.f32.mrb[0].mxu0
        %v6543 = vadd.f32 0.0, %v6542
        %v6544 = vpop.f32.mrb[0].mxu0
        %6545 = vmatprep.mubr.bf16.mxu0 0
        %6546 = vmatmul.mubr.bf16.gmra.mrb[0].mxu0 %v6391
        %v6547 = vpop.f32.mrb[0].mxu0
        %v6548 = vadd.f32 0.0, %v6547
        %v6549 = vpop.f32.mrb[0].mxu0
        %v6550 = vpop.f32.mrb[0].mxu0
        %v6551 = vadd.f32 0.0, %v6550
        %v6552 = vpop.f32.mrb[0].mxu0
        %6553 = vdwg.mxu0
        %v6554 = vadd.f32 %v6352, %v6492
        %v6555 = vadd.f32 %v6353, %v6495
        %v6556 = vadd.f32 %v6354, %v6500
        %v6557 = vadd.f32 %v6355, %v6503
        %v6558 = vadd.f32 %v6356, %v6508
        %v6559 = vadd.f32 %v6357, %v6511
        %v6560 = vadd.f32 %v6358, %v6516
        %v6561 = vadd.f32 %v6359, %v6519
        %v6562 = vadd.f32 %v6360, %v6524
        %v6563 = vadd.f32 %v6361, %v6527
        %v6564 = vadd.f32 %v6362, %v6532
        %v6565 = vadd.f32 %v6363, %v6535
        %v6566 = vadd.f32 %v6364, %v6540
        %v6567 = vadd.f32 %v6365, %v6543
        %v6568 = vadd.f32 %v6366, %v6548
        %v6569 = vadd.f32 %v6367, %v6551
        %v6570 = vld [vmem:[#allocation3 + $0x12] sm:$0xff]
        %v6571 = vld [vmem:[#allocation3 + $0x1a] sm:$0xff]
        %v6572 = vld [vmem:[#allocation3 + $0x22] sm:$0xff]
        %v6573 = vld [vmem:[#allocation3 + $0x2a] sm:$0xff]
        %v6574 = vld [vmem:[#allocation3 + $0x32] sm:$0xff]
        %v6575 = vld [vmem:[#allocation3 + $0x3a] sm:$0xff]
        %v6576 = vld [vmem:[#allocation3 + $0x42] sm:$0xff]
        %v6577 = vld [vmem:[#allocation3 + $0x4a] sm:$0xff]
        %v6578 = vld [vmem:[#allocation3 + $0x52] sm:$0xff]
        %v6579 = vld [vmem:[#allocation3 + $0x5a] sm:$0xff]
        %v6580 = vld [vmem:[#allocation3 + $0x62] sm:$0xff]
        %v6581 = vld [vmem:[#allocation3 + $0x6a] sm:$0xff]
        %v6582 = vld [vmem:[#allocation3 + $0x72] sm:$0xff]
        %v6583 = vld [vmem:[#allocation3 + $0x7a] sm:$0xff]
        %v6584 = vld [vmem:[#allocation3 + $0x82] sm:$0xff]
        %v6585 = vld [vmem:[#allocation3 + $0x8a] sm:$0xff]
        %v6586 = vpack.c.bf16 %v6571, %v6570
        %v6587 = vpack.c.bf16 %v6573, %v6572
        %v6588 = vpack.c.bf16 %v6575, %v6574
        %v6589 = vpack.c.bf16 %v6577, %v6576
        %v6590 = vpack.c.bf16 %v6579, %v6578
        %v6591 = vpack.c.bf16 %v6581, %v6580
        %v6592 = vpack.c.bf16 %v6583, %v6582
        %v6593 = vpack.c.bf16 %v6585, %v6584
        %s6594 = scalar_lea.vmem [#allocation10], 512
        %v6595 = vld [vmem:[%s6594] sm:$0xf]
        %v6596 = vld [vmem:[%s6594 + $0x4] sm:$0xf]
        %v6597 = vld [vmem:[%s6594 + $0x8] sm:$0xf]
        %v6598 = vld [vmem:[%s6594 + $0xc] sm:$0xf]
        %v6599 = vld [vmem:[%s6594 + $0x10] sm:$0xf]
        %v6600 = vld [vmem:[%s6594 + $0x14] sm:$0xf]
        %v6601 = vld [vmem:[%s6594 + $0x18] sm:$0xf]
        %v6602 = vld [vmem:[%s6594 + $0x1c] sm:$0xf]
        %v6603 = vld [vmem:[%s6594 + $0x20] sm:$0xf]
        %v6604 = vld [vmem:[%s6594 + $0x24] sm:$0xf]
        %v6605 = vld [vmem:[%s6594 + $0x28] sm:$0xf]
        %v6606 = vld [vmem:[%s6594 + $0x2c] sm:$0xf]
        %v6607 = vld [vmem:[%s6594 + $0x30] sm:$0xf]
        %v6608 = vld [vmem:[%s6594 + $0x34] sm:$0xf]
        %v6609 = vld [vmem:[%s6594 + $0x38] sm:$0xf]
        %v6610 = vld [vmem:[%s6594 + $0x3c] sm:$0xf]
        %v6627 = vunpack.c.l.b16 %v6595
        %v6628 = vunpack.c.l.b16 %v6596
        %v6629 = vunpack.c.l.b16 %v6597
        %v6630 = vunpack.c.l.b16 %v6598
        %v6631 = vunpack.c.l.b16 %v6599
        %v6632 = vunpack.c.l.b16 %v6600
        %v6633 = vunpack.c.l.b16 %v6601
        %v6634 = vunpack.c.l.b16 %v6602
        %v6635 = vunpack.c.l.b16 %v6603
        %v6636 = vunpack.c.l.b16 %v6604
        %v6637 = vunpack.c.l.b16 %v6605
        %v6638 = vunpack.c.l.b16 %v6606
        %v6639 = vunpack.c.l.b16 %v6607
        %v6640 = vunpack.c.l.b16 %v6608
        %v6641 = vunpack.c.l.b16 %v6609
        %v6642 = vunpack.c.l.b16 %v6610
        %v6643 = vpack.c.b16 %v6628, %v6627
        %v6644 = vpack.c.b16 %v6630, %v6629
        %v6645 = vpack.c.b16 %v6632, %v6631
        %v6646 = vpack.c.b16 %v6634, %v6633
        %v6647 = vpack.c.b16 %v6636, %v6635
        %v6648 = vpack.c.b16 %v6638, %v6637
        %v6649 = vpack.c.b16 %v6640, %v6639
        %v6650 = vpack.c.b16 %v6642, %v6641
        %6659 = vmatprep.subr.bf16.mxu0 0
        %6660 = vmatpush1.bf16.msra.mxu0 %v6643
        %6661 = vmatprep.subr.bf16.mxu0 0
        %6662 = vmatpush1.bf16.msra.mxu0 %v6644
        %6663 = vmatprep.subr.bf16.mxu0 0
        %6664 = vmatpush1.bf16.msra.mxu0 %v6645
        %6665 = vmatprep.subr.bf16.mxu0 0
        %6666 = vmatpush1.bf16.msra.mxu0 %v6646
        %6667 = vmatprep.subr.bf16.mxu0 0
        %6668 = vmatpush1.bf16.msra.mxu0 %v6647
        %6669 = vmatprep.subr.bf16.mxu0 0
        %6670 = vmatpush1.bf16.msra.mxu0 %v6648
        %6671 = vmatprep.subr.bf16.mxu0 0
        %6672 = vmatpush1.bf16.msra.mxu0 %v6649
        %6673 = vmatprep.subr.bf16.mxu0 0
        %6674 = vmatpush1.bf16.msra.mxu0 %v6650
        %6675 = vmatprep.subr.bf16.mxu0 0
        %6676 = vmatpush1.bf16.msra.mxu0 0
        %6677 = vmatprep.subr.bf16.mxu0 0
        %6678 = vmatpush1.bf16.msra.mxu0 0
        %6679 = vmatprep.subr.bf16.mxu0 0
        %6680 = vmatpush1.bf16.msra.mxu0 0
        %6681 = vmatprep.subr.bf16.mxu0 0
        %6682 = vmatpush1.bf16.msra.mxu0 0
        %6683 = vmatprep.subr.bf16.mxu0 0
        %6684 = vmatpush1.bf16.msra.mxu0 0
        %6685 = vmatprep.subr.bf16.mxu0 0
        %6686 = vmatpush1.bf16.msra.mxu0 0
        %6687 = vmatprep.subr.bf16.mxu0 0
        %6688 = vmatpush1.bf16.msra.mxu0 0
        %6689 = vmatprep.subr.bf16.mxu0 0
        %6690 = vmatpush1.bf16.msra.mxu0 0
        %6691 = vmatprep.mubr.bf16.mxu0 0
        %6692 = vmatmul.mubr.bf16.gmra.mrb[0].mxu0 %v6586
        %v6693 = vpop.f32.mrb[0].mxu0
        %v6694 = vadd.f32 0.0, %v6693
        %v6695 = vpop.f32.mrb[0].mxu0
        %v6696 = vpop.f32.mrb[0].mxu0
        %v6697 = vadd.f32 0.0, %v6696
        %v6698 = vpop.f32.mrb[0].mxu0
        %6699 = vmatprep.mubr.bf16.mxu0 0
        %6700 = vmatmul.mubr.bf16.gmra.mrb[0].mxu0 %v6587
        %v6701 = vpop.f32.mrb[0].mxu0
        %v6702 = vadd.f32 0.0, %v6701
        %v6703 = vpop.f32.mrb[0].mxu0
        %v6704 = vpop.f32.mrb[0].mxu0
        %v6705 = vadd.f32 0.0, %v6704
        %v6706 = vpop.f32.mrb[0].mxu0
        %6707 = vmatprep.mubr.bf16.mxu0 0
        %6708 = vmatmul.mubr.bf16.gmra.mrb[0].mxu0 %v6588
        %v6709 = vpop.f32.mrb[0].mxu0
        %v6710 = vadd.f32 0.0, %v6709
        %v6711 = vpop.f32.mrb[0].mxu0
        %v6712 = vpop.f32.mrb[0].mxu0
        %v6713 = vadd.f32 0.0, %v6712
        %v6714 = vpop.f32.mrb[0].mxu0
        %6715 = vmatprep.mubr.bf16.mxu0 0
        %6716 = vmatmul.mubr.bf16.gmra.mrb[0].mxu0 %v6589
        %v6717 = vpop.f32.mrb[0].mxu0
        %v6718 = vadd.f32 0.0, %v6717
        %v6719 = vpop.f32.mrb[0].mxu0
        %v6720 = vpop.f32.mrb[0].mxu0
        %v6721 = vadd.f32 0.0, %v6720
        %v6722 = vpop.f32.mrb[0].mxu0
        %6723 = vmatprep.mubr.bf16.mxu0 0
        %6724 = vmatmul.mubr.bf16.gmra.mrb[0].mxu0 %v6590
        %v6725 = vpop.f32.mrb[0].mxu0
        %v6726 = vadd.f32 0.0, %v6725
        %v6727 = vpop.f32.mrb[0].mxu0
        %v6728 = vpop.f32.mrb[0].mxu0
        %v6729 = vadd.f32 0.0, %v6728
        %v6730 = vpop.f32.mrb[0].mxu0
        %6731 = vmatprep.mubr.bf16.mxu0 0
        %6732 = vmatmul.mubr.bf16.gmra.mrb[0].mxu0 %v6591
        %v6733 = vpop.f32.mrb[0].mxu0
        %v6734 = vadd.f32 0.0, %v6733
        %v6735 = vpop.f32.mrb[0].mxu0
        %v6736 = vpop.f32.mrb[0].mxu0
        %v6737 = vadd.f32 0.0, %v6736
        %v6738 = vpop.f32.mrb[0].mxu0
        %6739 = vmatprep.mubr.bf16.mxu0 0
        %6740 = vmatmul.mubr.bf16.gmra.mrb[0].mxu0 %v6592
        %v6741 = vpop.f32.mrb[0].mxu0
        %v6742 = vadd.f32 0.0, %v6741
        %v6743 = vpop.f32.mrb[0].mxu0
        %v6744 = vpop.f32.mrb[0].mxu0
        %v6745 = vadd.f32 0.0, %v6744
        %v6746 = vpop.f32.mrb[0].mxu0
        %6747 = vmatprep.mubr.bf16.mxu0 0
        %6748 = vmatmul.mubr.bf16.gmra.mrb[0].mxu0 %v6593
        %v6749 = vpop.f32.mrb[0].mxu0
        %v6750 = vadd.f32 0.0, %v6749
        %v6751 = vpop.f32.mrb[0].mxu0
        %v6752 = vpop.f32.mrb[0].mxu0
        %v6753 = vadd.f32 0.0, %v6752
        %v6754 = vpop.f32.mrb[0].mxu0
        %6755 = vdwg.mxu0
        %v6756 = vadd.f32 %v6554, %v6694
        %v6757 = vadd.f32 %v6555, %v6697
        %v6758 = vadd.f32 %v6556, %v6702
        %v6759 = vadd.f32 %v6557, %v6705
        %v6760 = vadd.f32 %v6558, %v6710
        %v6761 = vadd.f32 %v6559, %v6713
        %v6762 = vadd.f32 %v6560, %v6718
        %v6763 = vadd.f32 %v6561, %v6721
        %v6764 = vadd.f32 %v6562, %v6726
        %v6765 = vadd.f32 %v6563, %v6729
        %v6766 = vadd.f32 %v6564, %v6734
        %v6767 = vadd.f32 %v6565, %v6737
        %v6768 = vadd.f32 %v6566, %v6742
        %v6769 = vadd.f32 %v6567, %v6745
        %v6770 = vadd.f32 %v6568, %v6750
        %v6771 = vadd.f32 %v6569, %v6753
        %v6772 = vld [vmem:[#allocation13 + $0x6] sm:$0x1]
        %v6773 = vld [vmem:[#allocation13 + $0x7] sm:$0x1]
        %v6774 = vld [vmem:[#allocation13 + $0x8] sm:$0x1]
        %v6775 = vlaneseq
        %v6776 = vshrl.u32 %v6775, 7
        %v6777 = vsub.s32 0, %v6776
        %v6778 = vrot.slane %v6772, %v6777
        %v6779 = vmul.f32 %v6756, %v6778
        %v6780 = vmul.f32 %v6757, %v6778
        %v6781 = vmul.f32 %v6758, %v6778
        %v6782 = vmul.f32 %v6759, %v6778
        %v6783 = vmul.f32 %v6760, %v6778
        %v6784 = vmul.f32 %v6761, %v6778
        %v6785 = vmul.f32 %v6762, %v6778
        %v6786 = vmul.f32 %v6763, %v6778
        %v6787 = vmul.f32 %v6764, %v6778
        %v6788 = vmul.f32 %v6765, %v6778
        %v6789 = vmul.f32 %v6766, %v6778
        %v6790 = vmul.f32 %v6767, %v6778
        %v6791 = vmul.f32 %v6768, %v6778
        %v6792 = vmul.f32 %v6769, %v6778
        %v6793 = vmul.f32 %v6770, %v6778
        %v6794 = vmul.f32 %v6771, %v6778
        %v6795 = vlaneseq
        %v6796 = vshrl.u32 %v6795, 7
        %v6797 = vsub.s32 0, %v6796
        %v6798 = vrot.slane %v6773, %v6797
        %v6799 = vadd.f32 %v6779, %v6798
        %v6800 = vadd.f32 %v6780, %v6798
        %v6801 = vadd.f32 %v6781, %v6798
        %v6802 = vadd.f32 %v6782, %v6798
        %v6803 = vadd.f32 %v6783, %v6798
        %v6804 = vadd.f32 %v6784, %v6798
        %v6805 = vadd.f32 %v6785, %v6798
        %v6806 = vadd.f32 %v6786, %v6798
        %v6807 = vadd.f32 %v6787, %v6798
        %v6808 = vadd.f32 %v6788, %v6798
        %v6809 = vadd.f32 %v6789, %v6798
        %v6810 = vadd.f32 %v6790, %v6798
        %v6811 = vadd.f32 %v6791, %v6798
        %v6812 = vadd.f32 %v6792, %v6798
        %v6813 = vadd.f32 %v6793, %v6798
        %v6814 = vadd.f32 %v6794, %v6798
        %vm6815 = vcmp.ge.f32.partialorder %v6799, 0.0
        %vm6816 = vcmp.ge.f32.partialorder %v6800, 0.0
        %vm6817 = vcmp.ge.f32.partialorder %v6801, 0.0
        %vm6818 = vcmp.ge.f32.partialorder %v6802, 0.0
        %vm6819 = vcmp.ge.f32.partialorder %v6803, 0.0
        %vm6820 = vcmp.ge.f32.partialorder %v6804, 0.0
        %vm6821 = vcmp.ge.f32.partialorder %v6805, 0.0
        %vm6822 = vcmp.ge.f32.partialorder %v6806, 0.0
        %vm6823 = vcmp.ge.f32.partialorder %v6807, 0.0
        %vm6824 = vcmp.ge.f32.partialorder %v6808, 0.0
        %vm6825 = vcmp.ge.f32.partialorder %v6809, 0.0
        %vm6826 = vcmp.ge.f32.partialorder %v6810, 0.0
        %vm6827 = vcmp.ge.f32.partialorder %v6811, 0.0
        %vm6828 = vcmp.ge.f32.partialorder %v6812, 0.0
        %vm6829 = vcmp.ge.f32.partialorder %v6813, 0.0
        %vm6830 = vcmp.ge.f32.partialorder %v6814, 0.0
        %v6831 = vlaneseq
        %v6832 = vshrl.u32 %v6831, 7
        %v6833 = vsub.s32 0, %v6832
        %v6834 = vrot.slane %v6774, %v6833
        %v6835 = vmul.f32 %v6834, %v6799
        %v6836 = vmul.f32 %v6834, %v6800
        %v6837 = vmul.f32 %v6834, %v6801
        %v6838 = vmul.f32 %v6834, %v6802
        %v6839 = vmul.f32 %v6834, %v6803
        %v6840 = vmul.f32 %v6834, %v6804
        %v6841 = vmul.f32 %v6834, %v6805
        %v6842 = vmul.f32 %v6834, %v6806
        %v6843 = vmul.f32 %v6834, %v6807
        %v6844 = vmul.f32 %v6834, %v6808
        %v6845 = vmul.f32 %v6834, %v6809
        %v6846 = vmul.f32 %v6834, %v6810
        %v6847 = vmul.f32 %v6834, %v6811
        %v6848 = vmul.f32 %v6834, %v6812
        %v6849 = vmul.f32 %v6834, %v6813
        %v6850 = vmul.f32 %v6834, %v6814
        %v6851 = vsel %vm6815, %v6799, %v6835
        %v6852 = vsel %vm6816, %v6800, %v6836
        %v6853 = vsel %vm6817, %v6801, %v6837
        %v6854 = vsel %vm6818, %v6802, %v6838
        %v6855 = vsel %vm6819, %v6803, %v6839
        %v6856 = vsel %vm6820, %v6804, %v6840
        %v6857 = vsel %vm6821, %v6805, %v6841
        %v6858 = vsel %vm6822, %v6806, %v6842
        %v6859 = vsel %vm6823, %v6807, %v6843
        %v6860 = vsel %vm6824, %v6808, %v6844
        %v6861 = vsel %vm6825, %v6809, %v6845
        %v6862 = vsel %vm6826, %v6810, %v6846
        %v6863 = vsel %vm6827, %v6811, %v6847
        %v6864 = vsel %vm6828, %v6812, %v6848
        %v6865 = vsel %vm6829, %v6813, %v6849
        %v6866 = vsel %vm6830, %v6814, %v6850
        %v6867 = vld [vmem:[#allocation12] sm:$0xf]
        %v6868 = vpack.c.bf16 %v6852, %v6851
        %v6869 = vpack.c.bf16 %v6854, %v6853
        %v6870 = vpack.c.bf16 %v6856, %v6855
        %v6871 = vpack.c.bf16 %v6858, %v6857
        %v6872 = vpack.c.bf16 %v6860, %v6859
        %v6873 = vpack.c.bf16 %v6862, %v6861
        %v6874 = vpack.c.bf16 %v6864, %v6863
        %v6875 = vpack.c.bf16 %v6866, %v6865
        %6876 = vmatprep.subr.bf16.mxu0 0
        %6877 = vmatpush1.bf16.xpose.msra.mxu0 %v6868
        %6878 = vmatprep.subr.bf16.mxu0 0
        %6879 = vmatpush1.bf16.xpose.msra.mxu0 %v6869
        %6880 = vmatprep.subr.bf16.mxu0 0
        %6881 = vmatpush1.bf16.xpose.msra.mxu0 %v6870
        %6882 = vmatprep.subr.bf16.mxu0 0
        %6883 = vmatpush1.bf16.xpose.msra.mxu0 %v6871
        %6884 = vmatprep.subr.bf16.mxu0 0
        %6885 = vmatpush1.bf16.xpose.msra.mxu0 %v6872
        %6886 = vmatprep.subr.bf16.mxu0 0
        %6887 = vmatpush1.bf16.xpose.msra.mxu0 %v6873
        %6888 = vmatprep.subr.bf16.mxu0 0
        %6889 = vmatpush1.bf16.xpose.msra.mxu0 %v6874
        %6890 = vmatprep.subr.bf16.mxu0 0
        %6891 = vmatpush1.bf16.xpose.msra.mxu0 %v6875
        %6892 = vmatprep.subr.bf16.mxu0 0
        %6893 = vmatpush1.bf16.xpose.msra.mxu0 0
        %6894 = vmatprep.subr.bf16.mxu0 0
        %6895 = vmatpush1.bf16.xpose.msra.mxu0 0
        %6896 = vmatprep.subr.bf16.mxu0 0
        %6897 = vmatpush1.bf16.xpose.msra.mxu0 0
        %6898 = vmatprep.subr.bf16.mxu0 0
        %6899 = vmatpush1.bf16.xpose.msra.mxu0 0
        %6900 = vmatprep.subr.bf16.mxu0 0
        %6901 = vmatpush1.bf16.xpose.msra.mxu0 0
        %6902 = vmatprep.subr.bf16.mxu0 0
        %6903 = vmatpush1.bf16.xpose.msra.mxu0 0
        %6904 = vmatprep.subr.bf16.mxu0 0
        %6905 = vmatpush1.bf16.xpose.msra.mxu0 0
        %6906 = vmatprep.subr.bf16.mxu0 0
        %6907 = vmatpush1.bf16.xpose.msra.mxu0 0
        %6908 = vmatprep.mubr.bf16.mxu0 0
        %6909 = vmatmul.mubr.bf16.gmra.mrb[0].mxu0 %v6867
        %v6910 = vpop.f32.mrb[0].mxu0
        %v6911 = vadd.f32 0.0, %v6910
        %v6912 = vpop.f32.mrb[0].mxu0
        %v6913 = vpop.f32.mrb[0].mxu0
        %v6914 = vpop.f32.mrb[0].mxu0
        %6915 = vdwg.mxu0
        %v6916 = vlaneseq
        %v6917 = vshrl.u32 %v6916, 7
        %v6918 = vsub.f32 0.0, %v6911
        %v6919 = vmul.f32 %v6918, 1.442695
        %v6920 = vpow.pop %v6919
        %v6921 = vadd.f32 %v6920, 1.0
        %v6922 = vrcp.pop %v6921
        %v6923 = vmul.f32 1.0, %v6922
        %vm6924 = vcmp.eq.s32.totalorder %v6917, 0
        %v6925 = vsel %vm6924, %v6923, %v6911
        %6926 = vst [vmem:[%s340] sm:$0xff] %v6925
        %s6927 = sand.u32 %s165, 1
        %s6928 = scalar_lea.sflag [#allocation6], %s6927
        %s6929 = sand.u32 %s165, 1
        %s6930 = smul.addr %s6929, 8
        %s6931 = scalar_lea.vmem [#allocation15], %s6930
        // Predicated region
        $region69: #{pnet_forward.1} parent=43 // pred_check
          %p6932 = pneg %p175
        $region70: #{pnet_forward.1} parent=43 // pred_check_branch
          %6934 = sbr.rel (%p6932) target = $region72
        $region71: #{pnet_forward.1} parent=43 // pred_region
          %s6936 = ssub.s32 128, 128
          %6937 = vsyncadd %s6928, %s6936
          %s6938 = smul.addr %s26, 128
          %s6939 = scalar_lea.hbm %s6, %s6938
          %s6941 = sshll.u32 %s6931, 4
          %s6942 = int_to_ptr.vmem [resolvable:$true] %s6941
          %6944 = dma.vmem_to_hbm [thread:$0]  %s6942, 128, %s6939, %s6928
        $region72: #{pnet_forward.1} parent=43 // pred_fallthru
          _
      $region44: #{pnet_forward.1} parent=5 // pred_fallthru
        _
      %p6945 = scmp.le.s32.totalorder 2, %s21
      // Predicated region
      $region73: #{pnet_forward.1} parent=5 // pred_check
        %p6946 = pneg %p6945
      $region74: #{pnet_forward.1} parent=5 // pred_check_branch
        %6948 = sbr.rel (%p6946) target = $region76
      $region75: #{pnet_forward.1} parent=5 // pred_region
        %s6949 = ssub.s32 %s21, 2
        // Predicated region
        $region77: #{pnet_forward.1} parent=75 // pred_check
          %p6950 = pneg %p181
        $region78: #{pnet_forward.1} parent=75 // pred_check_branch
          %6952 = sbr.rel (%p6950) target = $region80
        $region79: #{pnet_forward.1} parent=75 // pred_region
          %s6953 = sand.u32 %s166, 1
          %s6954 = scalar_lea.sflag [#allocation6], %s6953
          %s6955 = sand.u32 %s166, 1
          %s6956 = smul.addr %s6955, 8
          %s6957 = scalar_lea.vmem [#allocation15], %s6956
          %6958 = dma.done %s6954, 128
        $region80: #{pnet_forward.1} parent=75 // pred_fallthru
          _
      $region76: #{pnet_forward.1} parent=5 // pred_fallthru
        _
    $region6: #{pnet_forward.1} parent=1 // loop_footer
      %s25 = sadd.s32 1, %s21
    $region7: #{pnet_forward.1} parent=1 // loop_footer_branch
      %20 = sbr.rel target = $region3
    $region8: #{pnet_forward.1} parent=1 // loop_exit
      _
    %6959 = vsyncpa [#allocation5], 1
    %s6960 = scalar_lea.sflag [#allocation5], 1
    %6961 = vsyncpa %s6960, 1
    %6962 = vsyncpa [#allocation8], 1
    %6963 = vsyncpa [#allocation11], 1
    %6964 = vsyncpa [#allocation14], 1
    %6965 = vsyncpa [#allocation6], 1
    %s6966 = scalar_lea.sflag [#allocation6], 1
    %6967 = vsyncpa %s6966, 1

</llo_original>
